<compile_context>
chip_gen: v7x
topology: tpu7x:2x2x1
jax: 0.10.0
libtpu: 0.0.40
codegen_flags: <defaults>
</compile_context>

<pallas_src>
import functools

import jax
import jax.numpy as jnp
from jax.experimental import pallas as pl
from jax.experimental.pallas import tpu as pltpu

CPAD = 128    # padded channel / matmul-N dimension (lane width)
KSIZE = 5     # LeNet conv kernel size


# ----------------------------- Pallas kernels ------------------------------

def conv_block_kernel(p_ref, w_ref, b_ref, o_ref, *, ho, wo):
    """Fused conv-as-matmul + bias + ReLU + 2x2 max-pool for one batch element.

    p_ref: (1, ho*wo, K)            bf16 im2col patches, rows in (h, w) row-major order
    w_ref: (K, CPAD)                bf16 weight, Cout zero-padded to CPAD
    b_ref: (1, CPAD)                f32 bias (zero-padded)
    o_ref: (1, ho//2, wo//2, CPAD)  f32 pooled activations
    """
    acc = jnp.dot(p_ref[0], w_ref[...], preferred_element_type=jnp.float32)
    acc = jnp.maximum(acc + b_ref[...], 0.0)                   # (ho*wo, CPAD) f32

    c = acc.shape[-1]
    # 2x2 max pool without leaving VMEM; all reshapes keep the 128-lane dim intact.
    y = acc.reshape(ho * wo // 2, 2, c)                        # pair adjacent columns
    y = jnp.max(y, axis=1)                                     # (ho*wo//2, CPAD)
    y = y.reshape(ho // 2, 2, wo // 2, c)                      # pair adjacent rows
    y = jnp.maximum(y[:, 0], y[:, 1])                          # (ho//2, wo//2, CPAD)
    o_ref[0] = y.astype(o_ref.dtype)


def fc_head_kernel(x_ref, w1_ref, b1_ref, w2_ref, b2_ref, w3_ref, b3_ref, o_ref):
    """fc1+ReLU -> fc2+ReLU -> fc3, fully fused; intermediates stay on-chip."""
    h = jnp.dot(x_ref[...], w1_ref[...], preferred_element_type=jnp.float32)
    h = jnp.maximum(h + b1_ref[...], 0.0)
    h = jnp.dot(h.astype(w2_ref.dtype), w2_ref[...], preferred_element_type=jnp.float32)
    h = jnp.maximum(h + b2_ref[...], 0.0)
    h = jnp.dot(h.astype(w3_ref.dtype), w3_ref[...], preferred_element_type=jnp.float32)
    o_ref[...] = (h + b3_ref[...]).astype(o_ref.dtype)


# ----------------------------- wrappers -------------------------------------

def conv_block(x_nhwc, w_mat, b_row, *, padding, cout):
    """Conv2d(k=5) + ReLU + MaxPool2d(2) on an NHWC input in one pallas_call."""
    B, H, W, Cin = x_nhwc.shape
    K = Cin * KSIZE * KSIZE
    Ho = H + 2 * padding - (KSIZE - 1)
    Wo = W + 2 * padding - (KSIZE - 1)
    Hp, Wp = Ho // 2, Wo // 2

    # Single XLA op for patch extraction; feature dim is (Cin, kh, kw)-major,
    # matching PyTorch's weight.view(Cout, Cin*kh*kw) flattening.
    patches = jax.lax.conv_general_dilated_patches(
        x_nhwc.astype(jnp.bfloat16),
        filter_shape=(KSIZE, KSIZE),
        window_strides=(1, 1),
        padding=((padding, padding), (padding, padding)),
        dimension_numbers=("NHWC", "HWIO", "NHWC"),
    )                                                   # (B, Ho, Wo, K) bf16
    patches = patches.reshape(B, Ho * Wo, K)            # free row-major reshape

    out = pl.pallas_call(
        functools.partial(conv_block_kernel, ho=Ho, wo=Wo),
        out_shape=jax.ShapeDtypeStruct((B, Hp, Wp, CPAD), jnp.float32),
        grid_spec=pltpu.PrefetchScalarGridSpec(
            num_scalar_prefetch=0,
            grid=(B,),
            in_specs=[
                pl.BlockSpec((1, Ho * Wo, K), lambda b: (b, 0, 0)),
                pl.BlockSpec((K, CPAD), lambda b: (0, 0)),
                pl.BlockSpec((1, CPAD), lambda b: (0, 0)),
            ],
            out_specs=pl.BlockSpec((1, Hp, Wp, CPAD), lambda b: (b, 0, 0, 0)),
        ),
        compiler_params=pltpu.CompilerParams(dimension_semantics=("parallel",)),
    )(patches, w_mat, b_row)
    return out[..., :cout]                              # (B, Hp, Wp, cout) f32


def fc_head(x_flat, kp):
    """x_flat: (B, 400) bf16 -> (B, CPAD) f32 logits (first 10 columns valid)."""
    B, K = x_flat.shape
    tm = B if B <= 256 else 256
    return pl.pallas_call(
        fc_head_kernel,
        out_shape=jax.ShapeDtypeStruct((B, CPAD), jnp.float32),
        grid_spec=pltpu.PrefetchScalarGridSpec(
            num_scalar_prefetch=0,
            grid=(pl.cdiv(B, tm),),
            in_specs=[
                pl.BlockSpec((tm, K), lambda i: (i, 0)),
                pl.BlockSpec((K, CPAD), lambda i: (0, 0)),
                pl.BlockSpec((1, CPAD), lambda i: (0, 0)),
                pl.BlockSpec((CPAD, CPAD), lambda i: (0, 0)),
                pl.BlockSpec((1, CPAD), lambda i: (0, 0)),
                pl.BlockSpec((CPAD, CPAD), lambda i: (0, 0)),
                pl.BlockSpec((1, CPAD), lambda i: (0, 0)),
            ],
            out_specs=pl.BlockSpec((tm, CPAD), lambda i: (i, 0)),
        ),
        compiler_params=pltpu.CompilerParams(dimension_semantics=("parallel",)),
    )(x_flat, kp["fc1_w"], kp["fc1_b"], kp["fc2_w"], kp["fc2_b"],
      kp["fc3_w"], kp["fc3_b"])


# ----------------------------- parameters -----------------------------------

def init_params(key):
    """PyTorch-layout LeNet parameters (deterministic random init)."""
    ks = jax.random.split(key, 10)
    s = 0.1
    return {
        "conv1_w": jax.random.normal(ks[0], (6, 1, 5, 5), jnp.float32) * s,
        "conv1_b": jax.random.normal(ks[1], (6,), jnp.float32) * s,
        "conv2_w": jax.random.normal(ks[2], (16, 6, 5, 5), jnp.float32) * s,
        "conv2_b": jax.random.normal(ks[3], (16,), jnp.float32) * s,
        "fc1_w": jax.random.normal(ks[4], (120, 400), jnp.float32) * s,
        "fc1_b": jax.random.normal(ks[5], (120,), jnp.float32) * s,
        "fc2_w": jax.random.normal(ks[6], (84, 120), jnp.float32) * s,
        "fc2_b": jax.random.normal(ks[7], (84,), jnp.float32) * s,
        "fc3_w": jax.random.normal(ks[8], (10, 84), jnp.float32) * s,
        "fc3_b": jax.random.normal(ks[9], (10,), jnp.float32) * s,
    }


def prepare_params(p):
    """One-time conversion to kernel layout: (K, N)-transposed weights with N
    zero-padded to CPAD, cast to bf16; f32 (1, CPAD) biases. Folds the NCHW->NHWC
    flatten reorder into fc1's weight so the hot path has no per-call transposes."""
    def conv_w(w):
        cout = w.shape[0]
        k = w.shape[1] * w.shape[2] * w.shape[3]
        wm = w.reshape(cout, k).T                         # (K, Cout), K is (Cin,kh,kw)
        return jnp.pad(wm, ((0, 0), (0, CPAD - cout))).astype(jnp.bfloat16)

    def fc_w(w, k_pad):
        n, k = w.shape
        wm = w.T                                          # (K, N)
        return jnp.pad(wm, ((0, k_pad - k), (0, CPAD - n))).astype(jnp.bfloat16)

    def bias(b):
        return jnp.pad(b, (0, CPAD - b.shape[0])).reshape(1, CPAD).astype(jnp.float32)

    # PyTorch flattens conv2's output as (C, H, W); our activations are NHWC (H, W, C).
    fc1_w_hwc = p["fc1_w"].reshape(120, 16, 5, 5).transpose(0, 2, 3, 1).reshape(120, 400)

    return {
        "c1_w": conv_w(p["conv1_w"]), "c1_b": bias(p["conv1_b"]),
        "c2_w": conv_w(p["conv2_w"]), "c2_b": bias(p["conv2_b"]),
        "fc1_w": fc_w(fc1_w_hwc, 400), "fc1_b": bias(p["fc1_b"]),
        "fc2_w": fc_w(p["fc2_w"], CPAD), "fc2_b": bias(p["fc2_b"]),
        "fc3_w": fc_w(p["fc3_w"], CPAD), "fc3_b": bias(p["fc3_b"]),
    }


# ----------------------------- LeNet forward --------------------------------

def lenet_forward(kp, x):
    """x: (B, 1, 28, 28) f32 -> logits (B, 10) f32."""
    B = x.shape[0]
    h = jnp.transpose(x, (0, 2, 3, 1))                                  # NHWC (B,28,28,1)
    h = conv_block(h, kp["c1_w"], kp["c1_b"], padding=2, cout=6)        # (B,14,14,6)
    h = conv_block(h, kp["c2_w"], kp["c2_b"], padding=0, cout=16)       # (B,5,5,16)
    flat = h.reshape(B, 16 * 5 * 5).astype(jnp.bfloat16)                # (H,W,C) flatten
    logits = fc_head(flat, kp)                                          # (B, CPAD)
    return logits[:, :10]


# ----------------------------- reference (for self-check) -------------------

def reference_forward(p, x):
    """Pure-JAX reference with the same bf16-operand / f32-accumulate recipe."""
    def conv(v, w, b, padding):
        o = jax.lax.conv_general_dilated(
            v.astype(jnp.bfloat16), w.astype(jnp.bfloat16), (1, 1),
            ((padding, padding), (padding, padding)),
            dimension_numbers=("NCHW", "OIHW", "NCHW"),
            preferred_element_type=jnp.float32)
        return o + b.reshape(1, -1, 1, 1)

    def pool(v):
        return jax.lax.reduce_window(v, -jnp.inf, jax.lax.max,
                                     (1, 1, 2, 2), (1, 1, 2, 2), "VALID")

    def lin(v, w, b, relu):
        o = jnp.dot(v.astype(jnp.bfloat16), w.T.astype(jnp.bfloat16),
                    preferred_element_type=jnp.float32) + b
        return jnp.maximum(o, 0.0) if relu else o

    h = pool(jnp.maximum(conv(x, p["conv1_w"], p["conv1_b"], 2), 0.0))
    h = pool(jnp.maximum(conv(h, p["conv2_w"], p["conv2_b"], 0), 0.0))
    flat = h.reshape(h.shape[0], -1)
    h = lin(flat, p["fc1_w"], p["fc1_b"], True)
    h = lin(h, p["fc2_w"], p["fc2_b"], True)
    return lin(h, p["fc3_w"], p["fc3_b"], False)


if __name__ == "__main__":
    key = jax.random.PRNGKey(0)
    pkey, xkey = jax.random.split(key)
    params = init_params(pkey)
    kparams = prepare_params(params)
    x = jax.random.normal(xkey, (2, 1, 28, 28), jnp.float32)

    logits = jax.jit(lenet_forward)(kparams, x)
    jax.block_until_ready(logits)

    assert logits.shape == (2, 10) and logits.dtype == jnp.float32
    ref = reference_forward(params, x)
    assert bool(jnp.all(jnp.isfinite(logits)))
    assert bool(jnp.allclose(logits, ref, atol=2e-2, rtol=2e-2))
    print("KERNEL_OK")
</pallas_src>

<mosaic_0001>
module attributes {stable_mosaic.version = 11 : i64} {
  func.func @conv_block_kernel(%arg0: i32, %arg1: memref<1x784x25xbf16, #tpu.memory_space<vmem>>, %arg2: memref<25x128xbf16, #tpu.memory_space<vmem>>, %arg3: memref<1x128xf32, #tpu.memory_space<vmem>>, %arg4: memref<1x14x14x128xf32, #tpu.memory_space<vmem>>) attributes {dimension_semantics = [#tpu.dimension_semantics<parallel>], iteration_bounds = array<i64: 2>, scalar_prefetch = 0 : i64, scratch_operands = 0 : i64, tpu.core_type = #tpu.core_type<tc>, window_params = [{transform_indices = @transform_0, window_bounds = array<i64: 1, 784, 25>}, {pipeline_mode = #tpu.pipeline_mode<synchronous>, transform_indices = @transform_1, window_bounds = array<i64: 25, 128>}, {pipeline_mode = #tpu.pipeline_mode<synchronous>, transform_indices = @transform_2, window_bounds = array<i64: 1, 128>}, {transform_indices = @transform_3, window_bounds = array<i64: 1, 14, 14, 128>}]} {
    %c0 = arith.constant 0 : index
    %c0_0 = arith.constant 0 : index
    %c0_1 = arith.constant 0 : index
    %0 = vector.load %arg1[%c0, %c0_0, %c0_1] : memref<1x784x25xbf16, #tpu.memory_space<vmem>>, vector<1x784x25xbf16>
    %1 = vector.shape_cast %0 : vector<1x784x25xbf16> to vector<784x25xbf16>
    %c0_2 = arith.constant 0 : index
    %c0_3 = arith.constant 0 : index
    %2 = vector.load %arg2[%c0_2, %c0_3] : memref<25x128xbf16, #tpu.memory_space<vmem>>, vector<25x128xbf16>
    %cst = arith.constant dense<0.000000e+00> : vector<784x128xf32>
    %3 = tpu.matmul %1, %2, %cst {dimension_numbers = #tpu.dot_dimension_numbers<[1], [0], [0], [1], [0, 0, 1, 1], [], []>} : vector<784x25xbf16>, vector<25x128xbf16>, vector<784x128xf32> -> vector<784x128xf32>
    %c0_4 = arith.constant 0 : index
    %c0_5 = arith.constant 0 : index
    %4 = vector.load %arg3[%c0_4, %c0_5] : memref<1x128xf32, #tpu.memory_space<vmem>>, vector<1x128xf32>
    %5 = vector.broadcast %4 : vector<1x128xf32> to vector<784x128xf32>
    %6 = arith.addf %3, %5 : vector<784x128xf32>
    %cst_6 = arith.constant 0.000000e+00 : f32
    %7 = vector.broadcast %cst_6 : f32 to vector<784x128xf32>
    %8 = arith.maximumf %6, %7 : vector<784x128xf32>
    %9 = vector.shape_cast %8 : vector<784x128xf32> to vector<392x2x128xf32>
    %cst_7 = arith.constant dense<0xFF800000> : vector<392x128xf32>
    %10 = vector.multi_reduction <maximumf>, %9, %cst_7 [1] : vector<392x2x128xf32> to vector<392x128xf32>
    %11 = vector.shape_cast %10 : vector<392x128xf32> to vector<14x2x14x128xf32>
    %12 = vector.extract_strided_slice %11 {offsets = [0, 0, 0, 0], sizes = [14, 1, 14, 128], strides = [1, 1, 1, 1]} : vector<14x2x14x128xf32> to vector<14x1x14x128xf32>
    %13 = vector.shape_cast %12 : vector<14x1x14x128xf32> to vector<14x14x128xf32>
    %14 = vector.extract_strided_slice %11 {offsets = [0, 1, 0, 0], sizes = [14, 1, 14, 128], strides = [1, 1, 1, 1]} : vector<14x2x14x128xf32> to vector<14x1x14x128xf32>
    %15 = vector.shape_cast %14 : vector<14x1x14x128xf32> to vector<14x14x128xf32>
    %16 = arith.maximumf %13, %15 : vector<14x14x128xf32>
    %c0_8 = arith.constant 0 : index
    %c0_9 = arith.constant 0 : index
    %c0_10 = arith.constant 0 : index
    %c0_11 = arith.constant 0 : index
    %17 = vector.load %arg4[%c0_8, %c0_9, %c0_10, %c0_11] : memref<1x14x14x128xf32, #tpu.memory_space<vmem>>, vector<1x14x14x128xf32>
    %18 = vector.shape_cast %17 : vector<1x14x14x128xf32> to vector<14x14x128xf32>
    %19 = vector.shape_cast %16 : vector<14x14x128xf32> to vector<1x14x14x128xf32>
    tpu.vector_store %arg4[%c0_8, %c0_9, %c0_10, %c0_11], %19 {strides = array<i32>} : memref<1x14x14x128xf32, #tpu.memory_space<vmem>>, vector<1x14x14x128xf32>,
    return
  }
  func.func @transform_0(%arg0: i32) -> (i32, i32, i32) {
    %c0_i32 = arith.constant 0 : i32
    %c0_i32_0 = arith.constant 0 : i32
    %c0_i32_1 = arith.constant 0 : i32
    return %arg0, %c0_i32, %c0_i32_0 : i32, i32, i32
  }
  func.func @transform_1(%arg0: i32) -> (i32, i32) {
    %c0_i32 = arith.constant 0 : i32
    %c0_i32_0 = arith.constant 0 : i32
    %c0_i32_1 = arith.constant 0 : i32
    return %c0_i32, %c0_i32_0 : i32, i32
  }
  func.func @transform_2(%arg0: i32) -> (i32, i32) {
    %c0_i32 = arith.constant 0 : i32
    %c0_i32_0 = arith.constant 0 : i32
    %c0_i32_1 = arith.constant 0 : i32
    return %c0_i32, %c0_i32_0 : i32, i32
  }
  func.func @transform_3(%arg0: i32) -> (i32, i32, i32, i32) {
    %c0_i32 = arith.constant 0 : i32
    %c0_i32_0 = arith.constant 0 : i32
    %c0_i32_1 = arith.constant 0 : i32
    %c0_i32_2 = arith.constant 0 : i32
    return %arg0, %c0_i32, %c0_i32_0, %c0_i32_1 : i32, i32, i32, i32
  }
}

module attributes {stable_mosaic.version = 11 : i64} {
  func.func @conv_block_kernel(%arg0: i32, %arg1: memref<1x100x150xbf16, #tpu.memory_space<vmem>>, %arg2: memref<150x128xbf16, #tpu.memory_space<vmem>>, %arg3: memref<1x128xf32, #tpu.memory_space<vmem>>, %arg4: memref<1x5x5x128xf32, #tpu.memory_space<vmem>>) attributes {dimension_semantics = [#tpu.dimension_semantics<parallel>], iteration_bounds = array<i64: 2>, scalar_prefetch = 0 : i64, scratch_operands = 0 : i64, tpu.core_type = #tpu.core_type<tc>, window_params = [{transform_indices = @transform_0, window_bounds = array<i64: 1, 100, 150>}, {pipeline_mode = #tpu.pipeline_mode<synchronous>, transform_indices = @transform_1, window_bounds = array<i64: 150, 128>}, {pipeline_mode = #tpu.pipeline_mode<synchronous>, transform_indices = @transform_2, window_bounds = array<i64: 1, 128>}, {transform_indices = @transform_3, window_bounds = array<i64: 1, 5, 5, 128>}]} {
    %c0 = arith.constant 0 : index
    %c0_0 = arith.constant 0 : index
    %c0_1 = arith.constant 0 : index
    %0 = vector.load %arg1[%c0, %c0_0, %c0_1] : memref<1x100x150xbf16, #tpu.memory_space<vmem>>, vector<1x100x150xbf16>
    %1 = vector.shape_cast %0 : vector<1x100x150xbf16> to vector<100x150xbf16>
    %c0_2 = arith.constant 0 : index
    %c0_3 = arith.constant 0 : index
    %2 = vector.load %arg2[%c0_2, %c0_3] : memref<150x128xbf16, #tpu.memory_space<vmem>>, vector<150x128xbf16>
    %cst = arith.constant dense<0.000000e+00> : vector<100x128xf32>
    %3 = tpu.matmul %1, %2, %cst {dimension_numbers = #tpu.dot_dimension_numbers<[1], [0], [0], [1], [0, 0, 1, 1], [], []>} : vector<100x150xbf16>, vector<150x128xbf16>, vector<100x128xf32> -> vector<100x128xf32>
    %c0_4 = arith.constant 0 : index
    %c0_5 = arith.constant 0 : index
    %4 = vector.load %arg3[%c0_4, %c0_5] : memref<1x128xf32, #tpu.memory_space<vmem>>, vector<1x128xf32>
    %5 = vector.broadcast %4 : vector<1x128xf32> to vector<100x128xf32>
    %6 = arith.addf %3, %5 : vector<100x128xf32>
    %cst_6 = arith.constant 0.000000e+00 : f32
    %7 = vector.broadcast %cst_6 : f32 to vector<100x128xf32>
    %8 = arith.maximumf %6, %7 : vector<100x128xf32>
    %9 = vector.shape_cast %8 : vector<100x128xf32> to vector<50x2x128xf32>
    %cst_7 = arith.constant dense<0xFF800000> : vector<50x128xf32>
    %10 = vector.multi_reduction <maximumf>, %9, %cst_7 [1] : vector<50x2x128xf32> to vector<50x128xf32>
    %11 = vector.shape_cast %10 : vector<50x128xf32> to vector<5x2x5x128xf32>
    %12 = vector.extract_strided_slice %11 {offsets = [0, 0, 0, 0], sizes = [5, 1, 5, 128], strides = [1, 1, 1, 1]} : vector<5x2x5x128xf32> to vector<5x1x5x128xf32>
    %13 = vector.shape_cast %12 : vector<5x1x5x128xf32> to vector<5x5x128xf32>
    %14 = vector.extract_strided_slice %11 {offsets = [0, 1, 0, 0], sizes = [5, 1, 5, 128], strides = [1, 1, 1, 1]} : vector<5x2x5x128xf32> to vector<5x1x5x128xf32>
    %15 = vector.shape_cast %14 : vector<5x1x5x128xf32> to vector<5x5x128xf32>
    %16 = arith.maximumf %13, %15 : vector<5x5x128xf32>
    %c0_8 = arith.constant 0 : index
    %c0_9 = arith.constant 0 : index
    %c0_10 = arith.constant 0 : index
    %c0_11 = arith.constant 0 : index
    %17 = vector.load %arg4[%c0_8, %c0_9, %c0_10, %c0_11] : memref<1x5x5x128xf32, #tpu.memory_space<vmem>>, vector<1x5x5x128xf32>
    %18 = vector.shape_cast %17 : vector<1x5x5x128xf32> to vector<5x5x128xf32>
    %19 = vector.shape_cast %16 : vector<5x5x128xf32> to vector<1x5x5x128xf32>
    tpu.vector_store %arg4[%c0_8, %c0_9, %c0_10, %c0_11], %19 {strides = array<i32>} : memref<1x5x5x128xf32, #tpu.memory_space<vmem>>, vector<1x5x5x128xf32>,
    return
  }
  func.func @transform_0(%arg0: i32) -> (i32, i32, i32) {
    %c0_i32 = arith.constant 0 : i32
    %c0_i32_0 = arith.constant 0 : i32
    %c0_i32_1 = arith.constant 0 : i32
    return %arg0, %c0_i32, %c0_i32_0 : i32, i32, i32
  }
  func.func @transform_1(%arg0: i32) -> (i32, i32) {
    %c0_i32 = arith.constant 0 : i32
    %c0_i32_0 = arith.constant 0 : i32
    %c0_i32_1 = arith.constant 0 : i32
    return %c0_i32, %c0_i32_0 : i32, i32
  }
  func.func @transform_2(%arg0: i32) -> (i32, i32) {
    %c0_i32 = arith.constant 0 : i32
    %c0_i32_0 = arith.constant 0 : i32
    %c0_i32_1 = arith.constant 0 : i32
    return %c0_i32, %c0_i32_0 : i32, i32
  }
  func.func @transform_3(%arg0: i32) -> (i32, i32, i32, i32) {
    %c0_i32 = arith.constant 0 : i32
    %c0_i32_0 = arith.constant 0 : i32
    %c0_i32_1 = arith.constant 0 : i32
    %c0_i32_2 = arith.constant 0 : i32
    return %arg0, %c0_i32, %c0_i32_0, %c0_i32_1 : i32, i32, i32, i32
  }
}

module attributes {stable_mosaic.version = 11 : i64} {
  func.func @fc_head_kernel(%arg0: i32, %arg1: memref<2x400xbf16, #tpu.memory_space<vmem>>, %arg2: memref<400x128xbf16, #tpu.memory_space<vmem>>, %arg3: memref<1x128xf32, #tpu.memory_space<vmem>>, %arg4: memref<128x128xbf16, #tpu.memory_space<vmem>>, %arg5: memref<1x128xf32, #tpu.memory_space<vmem>>, %arg6: memref<128x128xbf16, #tpu.memory_space<vmem>>, %arg7: memref<1x128xf32, #tpu.memory_space<vmem>>, %arg8: memref<2x128xf32, #tpu.memory_space<vmem>>) attributes {dimension_semantics = [#tpu.dimension_semantics<parallel>], iteration_bounds = array<i64: 1>, scalar_prefetch = 0 : i64, scratch_operands = 0 : i64, tpu.core_type = #tpu.core_type<tc>, window_params = [{transform_indices = @transform_0, window_bounds = array<i64: 2, 400>}, {pipeline_mode = #tpu.pipeline_mode<synchronous>, transform_indices = @transform_1, window_bounds = array<i64: 400, 128>}, {pipeline_mode = #tpu.pipeline_mode<synchronous>, transform_indices = @transform_2, window_bounds = array<i64: 1, 128>}, {pipeline_mode = #tpu.pipeline_mode<synchronous>, transform_indices = @transform_3, window_bounds = array<i64: 128, 128>}, {pipeline_mode = #tpu.pipeline_mode<synchronous>, transform_indices = @transform_4, window_bounds = array<i64: 1, 128>}, {pipeline_mode = #tpu.pipeline_mode<synchronous>, transform_indices = @transform_5, window_bounds = array<i64: 128, 128>}, {pipeline_mode = #tpu.pipeline_mode<synchronous>, transform_indices = @transform_6, window_bounds = array<i64: 1, 128>}, {transform_indices = @transform_7, window_bounds = array<i64: 2, 128>}]} {
    %c0 = arith.constant 0 : index
    %c0_0 = arith.constant 0 : index
    %0 = vector.load %arg1[%c0, %c0_0] : memref<2x400xbf16, #tpu.memory_space<vmem>>, vector<2x400xbf16>
    %c0_1 = arith.constant 0 : index
    %c0_2 = arith.constant 0 : index
    %1 = vector.load %arg2[%c0_1, %c0_2] : memref<400x128xbf16, #tpu.memory_space<vmem>>, vector<400x128xbf16>
    %cst = arith.constant dense<0.000000e+00> : vector<2x128xf32>
    %2 = tpu.matmul %0, %1, %cst {dimension_numbers = #tpu.dot_dimension_numbers<[1], [0], [0], [1], [0, 0, 1, 1], [], []>} : vector<2x400xbf16>, vector<400x128xbf16>, vector<2x128xf32> -> vector<2x128xf32>
    %c0_3 = arith.constant 0 : index
    %c0_4 = arith.constant 0 : index
    %3 = vector.load %arg3[%c0_3, %c0_4] : memref<1x128xf32, #tpu.memory_space<vmem>>, vector<1x128xf32>
    %4 = vector.broadcast %3 : vector<1x128xf32> to vector<2x128xf32>
    %5 = arith.addf %2, %4 : vector<2x128xf32>
    %cst_5 = arith.constant 0.000000e+00 : f32
    %6 = vector.broadcast %cst_5 : f32 to vector<2x128xf32>
    %7 = arith.maximumf %5, %6 : vector<2x128xf32>
    %8 = arith.truncf %7 : vector<2x128xf32> to vector<2x128xbf16>
    %c0_6 = arith.constant 0 : index
    %c0_7 = arith.constant 0 : index
    %9 = vector.load %arg4[%c0_6, %c0_7] : memref<128x128xbf16, #tpu.memory_space<vmem>>, vector<128x128xbf16>
    %cst_8 = arith.constant dense<0.000000e+00> : vector<2x128xf32>
    %10 = tpu.matmul %8, %9, %cst_8 {dimension_numbers = #tpu.dot_dimension_numbers<[1], [0], [0], [1], [0, 0, 1, 1], [], []>} : vector<2x128xbf16>, vector<128x128xbf16>, vector<2x128xf32> -> vector<2x128xf32>
    %c0_9 = arith.constant 0 : index
    %c0_10 = arith.constant 0 : index
    %11 = vector.load %arg5[%c0_9, %c0_10] : memref<1x128xf32, #tpu.memory_space<vmem>>, vector<1x128xf32>
    %12 = vector.broadcast %11 : vector<1x128xf32> to vector<2x128xf32>
    %13 = arith.addf %10, %12 : vector<2x128xf32>
    %cst_11 = arith.constant 0.000000e+00 : f32
    %14 = vector.broadcast %cst_11 : f32 to vector<2x128xf32>
    %15 = arith.maximumf %13, %14 : vector<2x128xf32>
    %16 = arith.truncf %15 : vector<2x128xf32> to vector<2x128xbf16>
    %c0_12 = arith.constant 0 : index
    %c0_13 = arith.constant 0 : index
    %17 = vector.load %arg6[%c0_12, %c0_13] : memref<128x128xbf16, #tpu.memory_space<vmem>>, vector<128x128xbf16>
    %cst_14 = arith.constant dense<0.000000e+00> : vector<2x128xf32>
    %18 = tpu.matmul %16, %17, %cst_14 {dimension_numbers = #tpu.dot_dimension_numbers<[1], [0], [0], [1], [0, 0, 1, 1], [], []>} : vector<2x128xbf16>, vector<128x128xbf16>, vector<2x128xf32> -> vector<2x128xf32>
    %c0_15 = arith.constant 0 : index
    %c0_16 = arith.constant 0 : index
    %19 = vector.load %arg7[%c0_15, %c0_16] : memref<1x128xf32, #tpu.memory_space<vmem>>, vector<1x128xf32>
    %20 = vector.broadcast %19 : vector<1x128xf32> to vector<2x128xf32>
    %21 = arith.addf %18, %20 : vector<2x128xf32>
    %c0_17 = arith.constant 0 : index
    %c0_18 = arith.constant 0 : index
    %22 = vector.load %arg8[%c0_17, %c0_18] : memref<2x128xf32, #tpu.memory_space<vmem>>, vector<2x128xf32>
    tpu.vector_store %arg8[%c0_17, %c0_18], %21 {strides = array<i32>} : memref<2x128xf32, #tpu.memory_space<vmem>>, vector<2x128xf32>,
    return
  }
  func.func @transform_0(%arg0: i32) -> (i32, i32) {
    %c0_i32 = arith.constant 0 : i32
    %c0_i32_0 = arith.constant 0 : i32
    return %arg0, %c0_i32 : i32, i32
  }
  func.func @transform_1(%arg0: i32) -> (i32, i32) {
    %c0_i32 = arith.constant 0 : i32
    %c0_i32_0 = arith.constant 0 : i32
    %c0_i32_1 = arith.constant 0 : i32
    return %c0_i32, %c0_i32_0 : i32, i32
  }
  func.func @transform_2(%arg0: i32) -> (i32, i32) {
    %c0_i32 = arith.constant 0 : i32
    %c0_i32_0 = arith.constant 0 : i32
    %c0_i32_1 = arith.constant 0 : i32
    return %c0_i32, %c0_i32_0 : i32, i32
  }
  func.func @transform_3(%arg0: i32) -> (i32, i32) {
    %c0_i32 = arith.constant 0 : i32
    %c0_i32_0 = arith.constant 0 : i32
    %c0_i32_1 = arith.constant 0 : i32
    return %c0_i32, %c0_i32_0 : i32, i32
  }
  func.func @transform_4(%arg0: i32) -> (i32, i32) {
    %c0_i32 = arith.constant 0 : i32
    %c0_i32_0 = arith.constant 0 : i32
    %c0_i32_1 = arith.constant 0 : i32
    return %c0_i32, %c0_i32_0 : i32, i32
  }
  func.func @transform_5(%arg0: i32) -> (i32, i32) {
    %c0_i32 = arith.constant 0 : i32
    %c0_i32_0 = arith.constant 0 : i32
    %c0_i32_1 = arith.constant 0 : i32
    return %c0_i32, %c0_i32_0 : i32, i32
  }
  func.func @transform_6(%arg0: i32) -> (i32, i32) {
    %c0_i32 = arith.constant 0 : i32
    %c0_i32_0 = arith.constant 0 : i32
    %c0_i32_1 = arith.constant 0 : i32
    return %c0_i32, %c0_i32_0 : i32, i32
  }
  func.func @transform_7(%arg0: i32) -> (i32, i32) {
    %c0_i32 = arith.constant 0 : i32
    %c0_i32_0 = arith.constant 0 : i32
    return %arg0, %c0_i32 : i32, i32
  }
}

</mosaic_0001>

<llo_original>
// kernel: lenet_forward.4
$region0: #{lenet_forward.4}
  #allocation0 [shape = 'u32[]', space=smem, size = 0x4, offset = 0x4, fixed_abs, tag = 'smem constant byte address 0x4 - core index']
  #allocation1 [shape = 'u32[144,128]{1,0:T(1,128)}', space=vmem, size = 0x12000, scoped, tag = 'internal scratch']
  %s0 = inlined_call_operand.vmem [shape: bf16[2,100,150], index: 0, kind: input, shape index: {}]
  %s1 = inlined_call_operand.vmem [shape: bf16[150,128], index: 1, kind: input, shape index: {}]
  %s2 = inlined_call_operand.vmem [shape: f32[1,128], index: 2, kind: input, shape index: {}]
  %s3 = inlined_call_operand.vmem [shape: f32[2,5,5,128], index: 3, kind: output, shape index: {}]
  %s4 = sld [smem:[#allocation0]]
  $region45: #{lenet_forward.4} parent=0
    _
  %s6 = ssub.s32 1, %s4
  %s7 = scalar_select 0, %s6, %s4
  loop: start=0, step=1, limit=4
  $region2: #{lenet_forward.4} parent=0 // loop_pre_header
    _
  $region3: #{lenet_forward.4} parent=0 // loop_header
    %s9 = sphi 0, %s13
    %p10 = scmp.ge.s32.totalorder %s9, 4
    %s19 = sphi 0, %s21
    %s22 = sphi 0, %s19
    %s23 = sphi 0, %s22
    %s39 = sphi 0, %s23
    %s43 = sphi 0, %s43
    %s45 = sphi 0, %s43
    %s46 = sphi 0, %s45
    %s60 = sphi 0, %s46
    %s64 = sphi 0, %s64
    %s66 = sphi 0, %s64
    %s67 = sphi 0, %s66
    %s81 = sphi 0, %s67
    %s87 = sphi 0, %s89
    %s90 = sphi 0, %s87
    %s91 = sphi 0, %s90
    %s107 = sphi 0, %s91
  $region4: #{lenet_forward.4} parent=0 // loop_header_branch
    %12 = sbr.rel (%p10) target = $region8
  $region5: #{lenet_forward.4} parent=0 // loop_body
    %s14 = ssub.s32 %s9, 1
    %s15 = ssub.s32 %s9, 2
    %s16 = sadd.s32 %s9, 1
    %s17 = ssub.s32 %s9, %s16
    %p18 = scmp.eq.s32.totalorder %s17, 0
    %s20 = sadd.s32 %s19, 1
    %s21 = scalar_select %p18, %s19, %s20
    %p24 = pneg %p18
    %p25 = scmp.eq.s32.totalorder %s9, 1
    %p26 = por %p24, %p25
    %p27 = scmp.ne.s32.totalorder %s19, %s22
    %p28 = scmp.eq.s32.totalorder %s9, 0
    %p29 = por %p27, %p28
    %p30 = scmp.ne.s32.totalorder %s19, %s22
    %p31 = scmp.eq.s32.totalorder %s14, 1
    %p32 = por %p30, %p31
    %p33 = scmp.ne.s32.totalorder %s22, %s23
    %p34 = scmp.eq.s32.totalorder %s14, 0
    %p35 = por %p33, %p34
    %p36 = scmp.ne.s32.totalorder %s22, %s23
    %p37 = scmp.eq.s32.totalorder %s15, 1
    %p38 = por %p36, %p37
    %p40 = scmp.ne.s32.totalorder %s23, %s39
    %p41 = scmp.eq.s32.totalorder %s15, 0
    %p42 = por %p40, %p41
    %s44 = sadd.s32 %s43, 1
    %p47 = scmp.eq.s32.totalorder %s9, 1
    %p48 = scmp.ne.s32.totalorder %s43, %s45
    %p49 = scmp.eq.s32.totalorder %s9, 0
    %p50 = por %p48, %p49
    %p51 = scmp.ne.s32.totalorder %s43, %s45
    %p52 = scmp.eq.s32.totalorder %s14, 1
    %p53 = por %p51, %p52
    %p54 = scmp.ne.s32.totalorder %s45, %s46
    %p55 = scmp.eq.s32.totalorder %s14, 0
    %p56 = por %p54, %p55
    %p57 = scmp.ne.s32.totalorder %s45, %s46
    %p58 = scmp.eq.s32.totalorder %s15, 1
    %p59 = por %p57, %p58
    %p61 = scmp.ne.s32.totalorder %s46, %s60
    %p62 = scmp.eq.s32.totalorder %s15, 0
    %p63 = por %p61, %p62
    %s65 = sadd.s32 %s64, 1
    %p68 = scmp.eq.s32.totalorder %s9, 1
    %p69 = scmp.ne.s32.totalorder %s64, %s66
    %p70 = scmp.eq.s32.totalorder %s9, 0
    %p71 = por %p69, %p70
    %p72 = scmp.ne.s32.totalorder %s64, %s66
    %p73 = scmp.eq.s32.totalorder %s14, 1
    %p74 = por %p72, %p73
    %p75 = scmp.ne.s32.totalorder %s66, %s67
    %p76 = scmp.eq.s32.totalorder %s14, 0
    %p77 = por %p75, %p76
    %p78 = scmp.ne.s32.totalorder %s66, %s67
    %p79 = scmp.eq.s32.totalorder %s15, 1
    %p80 = por %p78, %p79
    %p82 = scmp.ne.s32.totalorder %s67, %s81
    %p83 = scmp.eq.s32.totalorder %s15, 0
    %p84 = por %p82, %p83
    %s85 = ssub.s32 %s9, %s16
    %p86 = scmp.eq.s32.totalorder %s85, 0
    %s88 = sadd.s32 %s87, 1
    %s89 = scalar_select %p86, %s87, %s88
    %p92 = pneg %p86
    %p93 = scmp.eq.s32.totalorder %s9, 1
    %p94 = por %p92, %p93
    %p95 = scmp.ne.s32.totalorder %s87, %s90
    %p96 = scmp.eq.s32.totalorder %s9, 0
    %p97 = por %p95, %p96
    %p98 = scmp.ne.s32.totalorder %s87, %s90
    %p99 = scmp.eq.s32.totalorder %s14, 1
    %p100 = por %p98, %p99
    %p101 = scmp.ne.s32.totalorder %s90, %s91
    %p102 = scmp.eq.s32.totalorder %s14, 0
    %p103 = por %p101, %p102
    %p104 = scmp.ne.s32.totalorder %s90, %s91
    %p105 = scmp.eq.s32.totalorder %s15, 1
    %p106 = por %p104, %p105
    %p108 = scmp.ne.s32.totalorder %s91, %s107
    %p109 = scmp.eq.s32.totalorder %s15, 0
    %p110 = por %p108, %p109
    %p111 = scmp.le.s32.totalorder 1, %s9
    %p112 = scmp.lt.s32.totalorder %s9, 3
    %p113 = pnand %p111, %p112
    %p114 = pneg %p113
    // Predicated region
    $region9: #{lenet_forward.4} parent=5 // pred_check
      _
    $region10: #{lenet_forward.4} parent=5 // pred_check_branch
      %116 = sbr.rel (%p113) target = $region12
    $region11: #{lenet_forward.4} parent=5 // pred_region
      %s117 = ssub.s32 %s9, 1
      // Predicated region
      $region13: #{lenet_forward.4} parent=11 // pred_check
        %p118 = pneg %p56
      $region14: #{lenet_forward.4} parent=11 // pred_check_branch
        %120 = sbr.rel (%p118) target = $region16
      $region15: #{lenet_forward.4} parent=11 // pred_region
        _
      $region16: #{lenet_forward.4} parent=11 // pred_fallthru
        _
      // Predicated region
      $region17: #{lenet_forward.4} parent=11 // pred_check
        %p121 = pneg %p77
      $region18: #{lenet_forward.4} parent=11 // pred_check_branch
        %123 = sbr.rel (%p121) target = $region20
      $region19: #{lenet_forward.4} parent=11 // pred_region
        _
      $region20: #{lenet_forward.4} parent=11 // pred_fallthru
        _
    $region12: #{lenet_forward.4} parent=5 // pred_fallthru
      _
    %p124 = scmp.lt.s32.totalorder %s9, 2
    // Predicated region
    $region21: #{lenet_forward.4} parent=5 // pred_check
      %p125 = pneg %p124
    $region22: #{lenet_forward.4} parent=5 // pred_check_branch
      %127 = sbr.rel (%p125) target = $region24
    $region23: #{lenet_forward.4} parent=5 // pred_region
      // Predicated region
      $region25: #{lenet_forward.4} parent=23 // pred_check
        %p128 = pneg %p29
      $region26: #{lenet_forward.4} parent=23 // pred_check_branch
        %130 = sbr.rel (%p128) target = $region28
      $region27: #{lenet_forward.4} parent=23 // pred_region
        %p131 = scmp.lt.s32.totalorder %s9, 1
        %s132 = scalar_select %p131, %s9, 1
        %s133 = smul.addr %s132, 26
        %s134 = smul.addr %s133, 4
        %s135 = scalar_lea.vmem %s0, %s134
      $region28: #{lenet_forward.4} parent=23 // pred_fallthru
        _
    $region24: #{lenet_forward.4} parent=5 // pred_fallthru
      _
    %p136 = scmp.le.s32.totalorder 1, %s9
    %p137 = scmp.lt.s32.totalorder %s9, 3
    %p138 = pnand %p136, %p137
    %p139 = pneg %p138
    // Predicated region
    $region29: #{lenet_forward.4} parent=5 // pred_check
      _
    $region30: #{lenet_forward.4} parent=5 // pred_check_branch
      %141 = sbr.rel (%p138) target = $region32
    $region31: #{lenet_forward.4} parent=5 // pred_region
      %s142 = ssub.s32 %s9, 1
      %p143 = scmp.lt.s32.totalorder %s14, 1
      %s144 = scalar_select %p143, %s14, 1
      %s145 = smul.addr %s144, 26
      %s146 = smul.addr %s145, 4
      %s147 = scalar_lea.vmem %s0, %s146
      %p148 = pneg %p35
      %p149 = pneg %p32
      %p150 = pneg %p56
      %p151 = pneg %p53
      %p152 = pneg %p77
      %p153 = pneg %p74
      %p154 = pneg %p103
      %p155 = pneg %p100
      %p156 = scmp.lt.s32.totalorder %s14, 1
      %s157 = scalar_select %p156, %s14, 1
      %s158 = smul.addr %s157, 5
      %s159 = smul.addr %s158, 8
      %s160 = scalar_lea.vmem %s3, %s159
      %p161 = scmp.lt.s32.totalorder %s14, 1
      %s162 = scalar_select %p161, %s14, 1
      %s163 = smul.addr %s162, 26
      %s164 = smul.addr %s163, 4
      %s165 = scalar_lea.vmem %s0, %s164
      %p166 = scmp.lt.s32.totalorder %s14, 1
      %s167 = scalar_select %p166, %s14, 1
      %s168 = smul.addr %s167, 5
      %s169 = smul.addr %s168, 8
      %s170 = scalar_lea.vmem %s3, %s169
      %v172 = vld [vmem:[%s165] sm:$0xff]
      %v173 = vld [vmem:[%s165 + $0x8] sm:$0xff]
      %v174 = vld [vmem:[%s165 + $0x10] sm:$0xff]
      %v175 = vld [vmem:[%s165 + $0x18] sm:$0xff]
      %v176 = vld [vmem:[%s165 + $0x20] sm:$0xff]
      %v177 = vld [vmem:[%s165 + $0x28] sm:$0xff]
      %v178 = vld [vmem:[%s165 + $0x30] sm:$0xff]
      %v179 = vld [vmem:[%s165 + $0x38] sm:$0xff]
      %v180 = vld [vmem:[%s165 + $0x40] sm:$0xff]
      %v181 = vld [vmem:[%s165 + $0x48] sm:$0xff]
      %v182 = vld [vmem:[%s165 + $0x50] sm:$0xff]
      %v183 = vld [vmem:[%s165 + $0x58] sm:$0xff]
      %v184 = vld [vmem:[%s165 + $0x60] sm:$0x33]
      %v185 = vld [vmem:[%s1] sm:$0xf]
      %v186 = vld [vmem:[%s1 + $0x4] sm:$0xf]
      %v187 = vld [vmem:[%s1 + $0x8] sm:$0xf]
      %v188 = vld [vmem:[%s1 + $0xc] sm:$0xf]
      %v189 = vld [vmem:[%s1 + $0x10] sm:$0xf]
      %v190 = vld [vmem:[%s1 + $0x14] sm:$0xf]
      %v191 = vld [vmem:[%s1 + $0x18] sm:$0xf]
      %v192 = vld [vmem:[%s1 + $0x1c] sm:$0xf]
      %v193 = vld [vmem:[%s1 + $0x20] sm:$0xf]
      %v194 = vld [vmem:[%s1 + $0x24] sm:$0xf]
      %v195 = vld [vmem:[%s1 + $0x28] sm:$0xf]
      %v196 = vld [vmem:[%s1 + $0x2c] sm:$0xf]
      %v197 = vld [vmem:[%s1 + $0x30] sm:$0xf]
      %v198 = vld [vmem:[%s1 + $0x34] sm:$0xf]
      %v199 = vld [vmem:[%s1 + $0x38] sm:$0xf]
      %v200 = vld [vmem:[%s1 + $0x3c] sm:$0xf]
      %v201 = vld [vmem:[%s1 + $0x40] sm:$0xf]
      %v202 = vld [vmem:[%s1 + $0x44] sm:$0xf]
      %v203 = vld [vmem:[%s1 + $0x48] sm:$0x7]
      %v204 = vld [vmem:[%s2] sm:$0x1]
      %v206 = vlaneseq
      %v207 = vshrl.u32 %v206, 7
      %v208 = vsub.s32 0, %v207
      %v209 = vrot.slane %v204, %v208
      %v224 = vunpack.c.l.b16 %v172
      %v225 = vunpack.c.h.b16 %v172
      %v226 = vunpack.c.l.b16 %v173
      %v227 = vunpack.c.h.b16 %v173
      %v228 = vunpack.c.l.b16 %v174
      %v229 = vunpack.c.h.b16 %v174
      %v230 = vunpack.c.l.b16 %v175
      %v231 = vunpack.c.h.b16 %v175
      %v232 = vunpack.c.l.b16 %v176
      %v233 = vunpack.c.h.b16 %v176
      %v234 = vunpack.c.l.b16 %v177
      %v235 = vunpack.c.h.b16 %v177
      %v236 = vunpack.c.l.b16 %v178
      %v237 = vunpack.c.h.b16 %v178
      %v238 = vunpack.c.l.b16 %v179
      %v239 = vunpack.c.h.b16 %v179
      %v240 = vunpack.c.l.b16 %v180
      %v241 = vunpack.c.h.b16 %v180
      %v242 = vunpack.c.l.b16 %v181
      %v243 = vunpack.c.h.b16 %v181
      %v244 = vunpack.c.l.b16 %v182
      %v245 = vunpack.c.h.b16 %v182
      %v246 = vunpack.c.l.b16 %v183
      %v247 = vunpack.c.h.b16 %v183
      %v248 = vunpack.c.l.b16 %v184
      %v249 = vunpack.c.h.b16 %v184
      %v250 = vpack.c.b16 %v226, %v224
      %v251 = vpack.c.b16 %v227, %v225
      %v252 = vpack.c.b16 %v230, %v228
      %v253 = vpack.c.b16 %v231, %v229
      %v254 = vpack.c.b16 %v234, %v232
      %v255 = vpack.c.b16 %v235, %v233
      %v256 = vpack.c.b16 %v238, %v236
      %v257 = vpack.c.b16 %v239, %v237
      %v258 = vpack.c.b16 %v242, %v240
      %v259 = vpack.c.b16 %v243, %v241
      %v260 = vpack.c.b16 %v246, %v244
      %v261 = vpack.c.b16 %v247, %v245
      %v262 = vpack.c.b16 %v248, %v248
      %v263 = vpack.c.b16 %v249, %v249
      %v290 = vunpack.c.l.b16 %v185
      %v291 = vunpack.c.l.b16 %v186
      %v292 = vunpack.c.l.b16 %v187
      %v293 = vunpack.c.l.b16 %v188
      %v294 = vunpack.c.l.b16 %v189
      %v295 = vunpack.c.l.b16 %v190
      %v296 = vunpack.c.l.b16 %v191
      %v297 = vunpack.c.l.b16 %v192
      %v298 = vunpack.c.l.b16 %v193
      %v299 = vunpack.c.l.b16 %v194
      %v300 = vunpack.c.l.b16 %v195
      %v301 = vunpack.c.l.b16 %v196
      %v302 = vunpack.c.l.b16 %v197
      %v303 = vunpack.c.l.b16 %v198
      %v304 = vunpack.c.l.b16 %v199
      %v305 = vunpack.c.l.b16 %v200
      %v306 = vunpack.c.l.b16 %v201
      %v307 = vunpack.c.l.b16 %v202
      %v308 = vunpack.c.l.b16 %v203
      %v309 = vpack.c.b16 %v291, %v290
      %v310 = vpack.c.b16 %v293, %v292
      %v311 = vpack.c.b16 %v295, %v294
      %v312 = vpack.c.b16 %v297, %v296
      %v313 = vpack.c.b16 %v299, %v298
      %v314 = vpack.c.b16 %v301, %v300
      %v315 = vpack.c.b16 %v303, %v302
      %v316 = vpack.c.b16 %v305, %v304
      %v317 = vpack.c.b16 %v307, %v306
      %v318 = vpack.c.b16 %v308, %v308
      %vm328 = vcmask 179200
      %v330 = vsel %vm328, %v251, 0
      %v333 = vsel %vm328, %v253, 0
      %v336 = vsel %vm328, %v255, 0
      %v339 = vsel %vm328, %v257, 0
      %v342 = vsel %vm328, %v259, 0
      %v345 = vsel %vm328, %v261, 0
      %v348 = vsel %vm328, %v263, 0
      %vm350 = vcmask 1042432
      %v352 = vsel %vm350, %v318, 0
      %354 = vmatprep.subr.bf16.mxu0 0
      %355 = vmatpush1.bf16.msra.mxu0 %v309
      %356 = vmatprep.subr.bf16.mxu0 0
      %357 = vmatpush1.bf16.msra.mxu0 %v310
      %358 = vmatprep.subr.bf16.mxu0 0
      %359 = vmatpush1.bf16.msra.mxu0 %v311
      %360 = vmatprep.subr.bf16.mxu0 0
      %361 = vmatpush1.bf16.msra.mxu0 %v312
      %362 = vmatprep.subr.bf16.mxu0 0
      %363 = vmatpush1.bf16.msra.mxu0 %v313
      %364 = vmatprep.subr.bf16.mxu0 0
      %365 = vmatpush1.bf16.msra.mxu0 %v314
      %366 = vmatprep.subr.bf16.mxu0 0
      %367 = vmatpush1.bf16.msra.mxu0 %v315
      %368 = vmatprep.subr.bf16.mxu0 0
      %369 = vmatpush1.bf16.msra.mxu0 %v316
      %370 = vmatprep.subr.bf16.mxu0 0
      %371 = vmatpush1.bf16.msra.mxu0 %v317
      %372 = vmatprep.subr.bf16.mxu0 0
      %373 = vmatpush1.bf16.msra.mxu0 %v352
      %374 = vmatprep.subr.bf16.mxu0 0
      %375 = vmatpush1.bf16.msra.mxu0 0
      %376 = vmatprep.subr.bf16.mxu0 0
      %377 = vmatpush1.bf16.msra.mxu0 0
      %378 = vmatprep.subr.bf16.mxu0 0
      %379 = vmatpush1.bf16.msra.mxu0 0
      %380 = vmatprep.subr.bf16.mxu0 0
      %381 = vmatpush1.bf16.msra.mxu0 0
      %382 = vmatprep.subr.bf16.mxu0 0
      %383 = vmatpush1.bf16.msra.mxu0 0
      %384 = vmatprep.subr.bf16.mxu0 0
      %385 = vmatpush1.bf16.msra.mxu0 0
      %386 = vmatprep.mubr.bf16.mxu0 %v330
      %387 = vmatmul.mubr.bf16.gmra.mrb[0].mxu0 %v250
      %v388 = vpop.f32.mrb[0].mxu0
      %v389 = vadd.f32 %v209, %v388
      %v390 = vpop.f32.mrb[0].mxu0
      %v391 = vpop.f32.mrb[0].mxu0
      %v392 = vadd.f32 %v209, %v391
      %v393 = vpop.f32.mrb[0].mxu0
      %394 = vmatprep.mubr.bf16.mxu0 %v333
      %395 = vmatmul.mubr.bf16.gmra.mrb[0].mxu0 %v252
      %v396 = vpop.f32.mrb[0].mxu0
      %v397 = vadd.f32 %v209, %v396
      %v398 = vpop.f32.mrb[0].mxu0
      %v399 = vpop.f32.mrb[0].mxu0
      %v400 = vadd.f32 %v209, %v399
      %v401 = vpop.f32.mrb[0].mxu0
      %402 = vmatprep.mubr.bf16.mxu0 %v336
      %403 = vmatmul.mubr.bf16.gmra.mrb[0].mxu0 %v254
      %v404 = vpop.f32.mrb[0].mxu0
      %v405 = vadd.f32 %v209, %v404
      %v406 = vpop.f32.mrb[0].mxu0
      %v407 = vpop.f32.mrb[0].mxu0
      %v408 = vadd.f32 %v209, %v407
      %v409 = vpop.f32.mrb[0].mxu0
      %410 = vmatprep.mubr.bf16.mxu0 %v339
      %411 = vmatmul.mubr.bf16.gmra.mrb[0].mxu0 %v256
      %v412 = vpop.f32.mrb[0].mxu0
      %v413 = vadd.f32 %v209, %v412
      %v414 = vpop.f32.mrb[0].mxu0
      %v415 = vpop.f32.mrb[0].mxu0
      %v416 = vadd.f32 %v209, %v415
      %v417 = vpop.f32.mrb[0].mxu0
      %418 = vmatprep.mubr.bf16.mxu0 %v342
      %419 = vmatmul.mubr.bf16.gmra.mrb[0].mxu0 %v258
      %v420 = vpop.f32.mrb[0].mxu0
      %v421 = vadd.f32 %v209, %v420
      %v422 = vpop.f32.mrb[0].mxu0
      %v423 = vpop.f32.mrb[0].mxu0
      %v424 = vadd.f32 %v209, %v423
      %v425 = vpop.f32.mrb[0].mxu0
      %426 = vmatprep.mubr.bf16.mxu0 %v345
      %427 = vmatmul.mubr.bf16.gmra.mrb[0].mxu0 %v260
      %v428 = vpop.f32.mrb[0].mxu0
      %v429 = vadd.f32 %v209, %v428
      %v430 = vpop.f32.mrb[0].mxu0
      %v431 = vpop.f32.mrb[0].mxu0
      %v432 = vadd.f32 %v209, %v431
      %v433 = vpop.f32.mrb[0].mxu0
      %434 = vmatprep.mubr.bf16.mxu0 %v348
      %435 = vmatmul.mubr.bf16.gmra.mrb[0].mxu0 %v262
      %v436 = vpop.f32.mrb[0].mxu0
      %v437 = vadd.f32 %v209, %v436
      %v438 = vpop.f32.mrb[0].mxu0
      %v439 = vpop.f32.mrb[0].mxu0
      %v440 = vpop.f32.mrb[0].mxu0
      %441 = vdwg.mxu0
      %v442 = vmax.f32 %v389, 0.0
      %v443 = vmax.f32 %v392, 0.0
      %v444 = vmax.f32 %v397, 0.0
      %v445 = vmax.f32 %v400, 0.0
      %v446 = vmax.f32 %v405, 0.0
      %v447 = vmax.f32 %v408, 0.0
      %v448 = vmax.f32 %v413, 0.0
      %v449 = vmax.f32 %v416, 0.0
      %v450 = vmax.f32 %v421, 0.0
      %v451 = vmax.f32 %v424, 0.0
      %v452 = vmax.f32 %v429, 0.0
      %v453 = vmax.f32 %v432, 0.0
      %v454 = vmax.f32 %v437, 0.0
      %v468 = vcombine.high %v442, %v442
      %v470 = vunpack.c.l.s4 1983009808
      %v471 = vunpack.c.0.s8 %v470
      %v472 = vlaneseq
      %v473 = vshrl.u32 %v472, 7
      %v474 = vsub.s32 %v471, %v473
      %v475 = vrot.slane %v442, %v474
      %v477 = vunpack.c.l.s4 1983009808
      %v478 = vunpack.c.0.s8 %v477
      %v479 = vlaneseq
      %v480 = vshrl.u32 %v479, 7
      %v481 = vsub.s32 %v478, %v480
      %v482 = vrot.slane %v468, %v481
      %v483 = vcombine.high %v475, %v475
      %v484 = vcombine.high %v482, %v482
      %v485 = vcombine.high %v443, %v443
      %v487 = vunpack.c.l.s4 1983009808
      %v488 = vunpack.c.0.s8 %v487
      %v489 = vlaneseq
      %v490 = vshrl.u32 %v489, 7
      %v491 = vsub.s32 %v488, %v490
      %v492 = vrot.slane %v443, %v491
      %v494 = vunpack.c.l.s4 1983009808
      %v495 = vunpack.c.0.s8 %v494
      %v496 = vlaneseq
      %v497 = vshrl.u32 %v496, 7
      %v498 = vsub.s32 %v495, %v497
      %v499 = vrot.slane %v485, %v498
      %v500 = vcombine.high %v492, %v492
      %v501 = vcombine.high %v499, %v499
      %v502 = vcombine.high %v444, %v444
      %v504 = vunpack.c.l.s4 1983009808
      %v505 = vunpack.c.0.s8 %v504
      %v506 = vlaneseq
      %v507 = vshrl.u32 %v506, 7
      %v508 = vsub.s32 %v505, %v507
      %v509 = vrot.slane %v444, %v508
      %v511 = vunpack.c.l.s4 1983009808
      %v512 = vunpack.c.0.s8 %v511
      %v513 = vlaneseq
      %v514 = vshrl.u32 %v513, 7
      %v515 = vsub.s32 %v512, %v514
      %v516 = vrot.slane %v502, %v515
      %v517 = vcombine.high %v509, %v509
      %v518 = vcombine.high %v516, %v516
      %v519 = vcombine.high %v445, %v445
      %v521 = vunpack.c.l.s4 1983009808
      %v522 = vunpack.c.0.s8 %v521
      %v523 = vlaneseq
      %v524 = vshrl.u32 %v523, 7
      %v525 = vsub.s32 %v522, %v524
      %v526 = vrot.slane %v445, %v525
      %v528 = vunpack.c.l.s4 1983009808
      %v529 = vunpack.c.0.s8 %v528
      %v530 = vlaneseq
      %v531 = vshrl.u32 %v530, 7
      %v532 = vsub.s32 %v529, %v531
      %v533 = vrot.slane %v519, %v532
      %v534 = vcombine.high %v526, %v526
      %v535 = vcombine.high %v533, %v533
      %v536 = vcombine.high %v446, %v446
      %v538 = vunpack.c.l.s4 1983009808
      %v539 = vunpack.c.0.s8 %v538
      %v540 = vlaneseq
      %v541 = vshrl.u32 %v540, 7
      %v542 = vsub.s32 %v539, %v541
      %v543 = vrot.slane %v446, %v542
      %v545 = vunpack.c.l.s4 1983009808
      %v546 = vunpack.c.0.s8 %v545
      %v547 = vlaneseq
      %v548 = vshrl.u32 %v547, 7
      %v549 = vsub.s32 %v546, %v548
      %v550 = vrot.slane %v536, %v549
      %v551 = vcombine.high %v543, %v543
      %v552 = vcombine.high %v550, %v550
      %v553 = vcombine.high %v447, %v447
      %v555 = vunpack.c.l.s4 1983009808
      %v556 = vunpack.c.0.s8 %v555
      %v557 = vlaneseq
      %v558 = vshrl.u32 %v557, 7
      %v559 = vsub.s32 %v556, %v558
      %v560 = vrot.slane %v447, %v559
      %v562 = vunpack.c.l.s4 1983009808
      %v563 = vunpack.c.0.s8 %v562
      %v564 = vlaneseq
      %v565 = vshrl.u32 %v564, 7
      %v566 = vsub.s32 %v563, %v565
      %v567 = vrot.slane %v553, %v566
      %v568 = vcombine.high %v560, %v560
      %v569 = vcombine.high %v567, %v567
      %v570 = vcombine.high %v448, %v448
      %v572 = vunpack.c.l.s4 1983009808
      %v573 = vunpack.c.0.s8 %v572
      %v574 = vlaneseq
      %v575 = vshrl.u32 %v574, 7
      %v576 = vsub.s32 %v573, %v575
      %v577 = vrot.slane %v448, %v576
      %v579 = vunpack.c.l.s4 1983009808
      %v580 = vunpack.c.0.s8 %v579
      %v581 = vlaneseq
      %v582 = vshrl.u32 %v581, 7
      %v583 = vsub.s32 %v580, %v582
      %v584 = vrot.slane %v570, %v583
      %v585 = vcombine.high %v577, %v577
      %v586 = vcombine.high %v584, %v584
      %v587 = vcombine.high %v449, %v449
      %v589 = vunpack.c.l.s4 1983009808
      %v590 = vunpack.c.0.s8 %v589
      %v591 = vlaneseq
      %v592 = vshrl.u32 %v591, 7
      %v593 = vsub.s32 %v590, %v592
      %v594 = vrot.slane %v449, %v593
      %v596 = vunpack.c.l.s4 1983009808
      %v597 = vunpack.c.0.s8 %v596
      %v598 = vlaneseq
      %v599 = vshrl.u32 %v598, 7
      %v600 = vsub.s32 %v597, %v599
      %v601 = vrot.slane %v587, %v600
      %v602 = vcombine.high %v594, %v594
      %v603 = vcombine.high %v601, %v601
      %v604 = vcombine.high %v450, %v450
      %v606 = vunpack.c.l.s4 1983009808
      %v607 = vunpack.c.0.s8 %v606
      %v608 = vlaneseq
      %v609 = vshrl.u32 %v608, 7
      %v610 = vsub.s32 %v607, %v609
      %v611 = vrot.slane %v450, %v610
      %v613 = vunpack.c.l.s4 1983009808
      %v614 = vunpack.c.0.s8 %v613
      %v615 = vlaneseq
      %v616 = vshrl.u32 %v615, 7
      %v617 = vsub.s32 %v614, %v616
      %v618 = vrot.slane %v604, %v617
      %v619 = vcombine.high %v611, %v611
      %v620 = vcombine.high %v618, %v618
      %v621 = vcombine.high %v451, %v451
      %v623 = vunpack.c.l.s4 1983009808
      %v624 = vunpack.c.0.s8 %v623
      %v625 = vlaneseq
      %v626 = vshrl.u32 %v625, 7
      %v627 = vsub.s32 %v624, %v626
      %v628 = vrot.slane %v451, %v627
      %v630 = vunpack.c.l.s4 1983009808
      %v631 = vunpack.c.0.s8 %v630
      %v632 = vlaneseq
      %v633 = vshrl.u32 %v632, 7
      %v634 = vsub.s32 %v631, %v633
      %v635 = vrot.slane %v621, %v634
      %v636 = vcombine.high %v628, %v628
      %v637 = vcombine.high %v635, %v635
      %v638 = vcombine.high %v452, %v452
      %v640 = vunpack.c.l.s4 1983009808
      %v641 = vunpack.c.0.s8 %v640
      %v642 = vlaneseq
      %v643 = vshrl.u32 %v642, 7
      %v644 = vsub.s32 %v641, %v643
      %v645 = vrot.slane %v452, %v644
      %v647 = vunpack.c.l.s4 1983009808
      %v648 = vunpack.c.0.s8 %v647
      %v649 = vlaneseq
      %v650 = vshrl.u32 %v649, 7
      %v651 = vsub.s32 %v648, %v650
      %v652 = vrot.slane %v638, %v651
      %v653 = vcombine.high %v645, %v645
      %v654 = vcombine.high %v652, %v652
      %v655 = vcombine.high %v453, %v453
      %v657 = vunpack.c.l.s4 1983009808
      %v658 = vunpack.c.0.s8 %v657
      %v659 = vlaneseq
      %v660 = vshrl.u32 %v659, 7
      %v661 = vsub.s32 %v658, %v660
      %v662 = vrot.slane %v453, %v661
      %v664 = vunpack.c.l.s4 1983009808
      %v665 = vunpack.c.0.s8 %v664
      %v666 = vlaneseq
      %v667 = vshrl.u32 %v666, 7
      %v668 = vsub.s32 %v665, %v667
      %v669 = vrot.slane %v655, %v668
      %v670 = vcombine.high %v662, %v662
      %v671 = vcombine.high %v669, %v669
      %v673 = vunpack.c.l.s4 1983009808
      %v674 = vunpack.c.0.s8 %v673
      %v675 = vlaneseq
      %v676 = vshrl.u32 %v675, 7
      %v677 = vsub.s32 %v674, %v676
      %v678 = vrot.slane %v454, %v677
      %v679 = vcombine.high %v678, %v678
      %vm730 = vcmask 1041408
      %v731 = vsel %vm730, %v475, -inf
      %v732 = vrot.slane %v731, 4
      %v733 = vmax.f32 %v731, %v732
      %v734 = vrot.slane %v733, 2
      %v735 = vmax.f32 %v733, %v734
      %v736 = vrot.slane %v735, 1
      %v737 = vmax.f32 %v735, %v736
      %v738 = vsel %vm730, %v483, -inf
      %v739 = vrot.slane %v738, 4
      %v740 = vmax.f32 %v738, %v739
      %v741 = vrot.slane %v740, 2
      %v742 = vmax.f32 %v740, %v741
      %v743 = vrot.slane %v742, 1
      %v744 = vmax.f32 %v742, %v743
      %v745 = vsel %vm730, %v482, -inf
      %v746 = vrot.slane %v745, 4
      %v747 = vmax.f32 %v745, %v746
      %v748 = vrot.slane %v747, 2
      %v749 = vmax.f32 %v747, %v748
      %v750 = vrot.slane %v749, 1
      %v751 = vmax.f32 %v749, %v750
      %v752 = vsel %vm730, %v484, -inf
      %v753 = vrot.slane %v752, 4
      %v754 = vmax.f32 %v752, %v753
      %v755 = vrot.slane %v754, 2
      %v756 = vmax.f32 %v754, %v755
      %v757 = vrot.slane %v756, 1
      %v758 = vmax.f32 %v756, %v757
      %v759 = vsel %vm730, %v492, -inf
      %v760 = vrot.slane %v759, 4
      %v761 = vmax.f32 %v759, %v760
      %v762 = vrot.slane %v761, 2
      %v763 = vmax.f32 %v761, %v762
      %v764 = vrot.slane %v763, 1
      %v765 = vmax.f32 %v763, %v764
      %v766 = vsel %vm730, %v500, -inf
      %v767 = vrot.slane %v766, 4
      %v768 = vmax.f32 %v766, %v767
      %v769 = vrot.slane %v768, 2
      %v770 = vmax.f32 %v768, %v769
      %v771 = vrot.slane %v770, 1
      %v772 = vmax.f32 %v770, %v771
      %v773 = vsel %vm730, %v499, -inf
      %v774 = vrot.slane %v773, 4
      %v775 = vmax.f32 %v773, %v774
      %v776 = vrot.slane %v775, 2
      %v777 = vmax.f32 %v775, %v776
      %v778 = vrot.slane %v777, 1
      %v779 = vmax.f32 %v777, %v778
      %v780 = vsel %vm730, %v501, -inf
      %v781 = vrot.slane %v780, 4
      %v782 = vmax.f32 %v780, %v781
      %v783 = vrot.slane %v782, 2
      %v784 = vmax.f32 %v782, %v783
      %v785 = vrot.slane %v784, 1
      %v786 = vmax.f32 %v784, %v785
      %v787 = vsel %vm730, %v509, -inf
      %v788 = vrot.slane %v787, 4
      %v789 = vmax.f32 %v787, %v788
      %v790 = vrot.slane %v789, 2
      %v791 = vmax.f32 %v789, %v790
      %v792 = vrot.slane %v791, 1
      %v793 = vmax.f32 %v791, %v792
      %v794 = vsel %vm730, %v517, -inf
      %v795 = vrot.slane %v794, 4
      %v796 = vmax.f32 %v794, %v795
      %v797 = vrot.slane %v796, 2
      %v798 = vmax.f32 %v796, %v797
      %v799 = vrot.slane %v798, 1
      %v800 = vmax.f32 %v798, %v799
      %v801 = vsel %vm730, %v516, -inf
      %v802 = vrot.slane %v801, 4
      %v803 = vmax.f32 %v801, %v802
      %v804 = vrot.slane %v803, 2
      %v805 = vmax.f32 %v803, %v804
      %v806 = vrot.slane %v805, 1
      %v807 = vmax.f32 %v805, %v806
      %v808 = vsel %vm730, %v518, -inf
      %v809 = vrot.slane %v808, 4
      %v810 = vmax.f32 %v808, %v809
      %v811 = vrot.slane %v810, 2
      %v812 = vmax.f32 %v810, %v811
      %v813 = vrot.slane %v812, 1
      %v814 = vmax.f32 %v812, %v813
      %v815 = vsel %vm730, %v526, -inf
      %v816 = vrot.slane %v815, 4
      %v817 = vmax.f32 %v815, %v816
      %v818 = vrot.slane %v817, 2
      %v819 = vmax.f32 %v817, %v818
      %v820 = vrot.slane %v819, 1
      %v821 = vmax.f32 %v819, %v820
      %v822 = vsel %vm730, %v534, -inf
      %v823 = vrot.slane %v822, 4
      %v824 = vmax.f32 %v822, %v823
      %v825 = vrot.slane %v824, 2
      %v826 = vmax.f32 %v824, %v825
      %v827 = vrot.slane %v826, 1
      %v828 = vmax.f32 %v826, %v827
      %v829 = vsel %vm730, %v533, -inf
      %v830 = vrot.slane %v829, 4
      %v831 = vmax.f32 %v829, %v830
      %v832 = vrot.slane %v831, 2
      %v833 = vmax.f32 %v831, %v832
      %v834 = vrot.slane %v833, 1
      %v835 = vmax.f32 %v833, %v834
      %v836 = vsel %vm730, %v535, -inf
      %v837 = vrot.slane %v836, 4
      %v838 = vmax.f32 %v836, %v837
      %v839 = vrot.slane %v838, 2
      %v840 = vmax.f32 %v838, %v839
      %v841 = vrot.slane %v840, 1
      %v842 = vmax.f32 %v840, %v841
      %v843 = vsel %vm730, %v543, -inf
      %v844 = vrot.slane %v843, 4
      %v845 = vmax.f32 %v843, %v844
      %v846 = vrot.slane %v845, 2
      %v847 = vmax.f32 %v845, %v846
      %v848 = vrot.slane %v847, 1
      %v849 = vmax.f32 %v847, %v848
      %v850 = vsel %vm730, %v551, -inf
      %v851 = vrot.slane %v850, 4
      %v852 = vmax.f32 %v850, %v851
      %v853 = vrot.slane %v852, 2
      %v854 = vmax.f32 %v852, %v853
      %v855 = vrot.slane %v854, 1
      %v856 = vmax.f32 %v854, %v855
      %v857 = vsel %vm730, %v550, -inf
      %v858 = vrot.slane %v857, 4
      %v859 = vmax.f32 %v857, %v858
      %v860 = vrot.slane %v859, 2
      %v861 = vmax.f32 %v859, %v860
      %v862 = vrot.slane %v861, 1
      %v863 = vmax.f32 %v861, %v862
      %v864 = vsel %vm730, %v552, -inf
      %v865 = vrot.slane %v864, 4
      %v866 = vmax.f32 %v864, %v865
      %v867 = vrot.slane %v866, 2
      %v868 = vmax.f32 %v866, %v867
      %v869 = vrot.slane %v868, 1
      %v870 = vmax.f32 %v868, %v869
      %v871 = vsel %vm730, %v560, -inf
      %v872 = vrot.slane %v871, 4
      %v873 = vmax.f32 %v871, %v872
      %v874 = vrot.slane %v873, 2
      %v875 = vmax.f32 %v873, %v874
      %v876 = vrot.slane %v875, 1
      %v877 = vmax.f32 %v875, %v876
      %v878 = vsel %vm730, %v568, -inf
      %v879 = vrot.slane %v878, 4
      %v880 = vmax.f32 %v878, %v879
      %v881 = vrot.slane %v880, 2
      %v882 = vmax.f32 %v880, %v881
      %v883 = vrot.slane %v882, 1
      %v884 = vmax.f32 %v882, %v883
      %v885 = vsel %vm730, %v567, -inf
      %v886 = vrot.slane %v885, 4
      %v887 = vmax.f32 %v885, %v886
      %v888 = vrot.slane %v887, 2
      %v889 = vmax.f32 %v887, %v888
      %v890 = vrot.slane %v889, 1
      %v891 = vmax.f32 %v889, %v890
      %v892 = vsel %vm730, %v569, -inf
      %v893 = vrot.slane %v892, 4
      %v894 = vmax.f32 %v892, %v893
      %v895 = vrot.slane %v894, 2
      %v896 = vmax.f32 %v894, %v895
      %v897 = vrot.slane %v896, 1
      %v898 = vmax.f32 %v896, %v897
      %v899 = vsel %vm730, %v577, -inf
      %v900 = vrot.slane %v899, 4
      %v901 = vmax.f32 %v899, %v900
      %v902 = vrot.slane %v901, 2
      %v903 = vmax.f32 %v901, %v902
      %v904 = vrot.slane %v903, 1
      %v905 = vmax.f32 %v903, %v904
      %v906 = vsel %vm730, %v585, -inf
      %v907 = vrot.slane %v906, 4
      %v908 = vmax.f32 %v906, %v907
      %v909 = vrot.slane %v908, 2
      %v910 = vmax.f32 %v908, %v909
      %v911 = vrot.slane %v910, 1
      %v912 = vmax.f32 %v910, %v911
      %v913 = vsel %vm730, %v584, -inf
      %v914 = vrot.slane %v913, 4
      %v915 = vmax.f32 %v913, %v914
      %v916 = vrot.slane %v915, 2
      %v917 = vmax.f32 %v915, %v916
      %v918 = vrot.slane %v917, 1
      %v919 = vmax.f32 %v917, %v918
      %v920 = vsel %vm730, %v586, -inf
      %v921 = vrot.slane %v920, 4
      %v922 = vmax.f32 %v920, %v921
      %v923 = vrot.slane %v922, 2
      %v924 = vmax.f32 %v922, %v923
      %v925 = vrot.slane %v924, 1
      %v926 = vmax.f32 %v924, %v925
      %v927 = vsel %vm730, %v594, -inf
      %v928 = vrot.slane %v927, 4
      %v929 = vmax.f32 %v927, %v928
      %v930 = vrot.slane %v929, 2
      %v931 = vmax.f32 %v929, %v930
      %v932 = vrot.slane %v931, 1
      %v933 = vmax.f32 %v931, %v932
      %v934 = vsel %vm730, %v602, -inf
      %v935 = vrot.slane %v934, 4
      %v936 = vmax.f32 %v934, %v935
      %v937 = vrot.slane %v936, 2
      %v938 = vmax.f32 %v936, %v937
      %v939 = vrot.slane %v938, 1
      %v940 = vmax.f32 %v938, %v939
      %v941 = vsel %vm730, %v601, -inf
      %v942 = vrot.slane %v941, 4
      %v943 = vmax.f32 %v941, %v942
      %v944 = vrot.slane %v943, 2
      %v945 = vmax.f32 %v943, %v944
      %v946 = vrot.slane %v945, 1
      %v947 = vmax.f32 %v945, %v946
      %v948 = vsel %vm730, %v603, -inf
      %v949 = vrot.slane %v948, 4
      %v950 = vmax.f32 %v948, %v949
      %v951 = vrot.slane %v950, 2
      %v952 = vmax.f32 %v950, %v951
      %v953 = vrot.slane %v952, 1
      %v954 = vmax.f32 %v952, %v953
      %v955 = vsel %vm730, %v611, -inf
      %v956 = vrot.slane %v955, 4
      %v957 = vmax.f32 %v955, %v956
      %v958 = vrot.slane %v957, 2
      %v959 = vmax.f32 %v957, %v958
      %v960 = vrot.slane %v959, 1
      %v961 = vmax.f32 %v959, %v960
      %v962 = vsel %vm730, %v619, -inf
      %v963 = vrot.slane %v962, 4
      %v964 = vmax.f32 %v962, %v963
      %v965 = vrot.slane %v964, 2
      %v966 = vmax.f32 %v964, %v965
      %v967 = vrot.slane %v966, 1
      %v968 = vmax.f32 %v966, %v967
      %v969 = vsel %vm730, %v618, -inf
      %v970 = vrot.slane %v969, 4
      %v971 = vmax.f32 %v969, %v970
      %v972 = vrot.slane %v971, 2
      %v973 = vmax.f32 %v971, %v972
      %v974 = vrot.slane %v973, 1
      %v975 = vmax.f32 %v973, %v974
      %v976 = vsel %vm730, %v620, -inf
      %v977 = vrot.slane %v976, 4
      %v978 = vmax.f32 %v976, %v977
      %v979 = vrot.slane %v978, 2
      %v980 = vmax.f32 %v978, %v979
      %v981 = vrot.slane %v980, 1
      %v982 = vmax.f32 %v980, %v981
      %v983 = vsel %vm730, %v628, -inf
      %v984 = vrot.slane %v983, 4
      %v985 = vmax.f32 %v983, %v984
      %v986 = vrot.slane %v985, 2
      %v987 = vmax.f32 %v985, %v986
      %v988 = vrot.slane %v987, 1
      %v989 = vmax.f32 %v987, %v988
      %v990 = vsel %vm730, %v636, -inf
      %v991 = vrot.slane %v990, 4
      %v992 = vmax.f32 %v990, %v991
      %v993 = vrot.slane %v992, 2
      %v994 = vmax.f32 %v992, %v993
      %v995 = vrot.slane %v994, 1
      %v996 = vmax.f32 %v994, %v995
      %v997 = vsel %vm730, %v635, -inf
      %v998 = vrot.slane %v997, 4
      %v999 = vmax.f32 %v997, %v998
      %v1000 = vrot.slane %v999, 2
      %v1001 = vmax.f32 %v999, %v1000
      %v1002 = vrot.slane %v1001, 1
      %v1003 = vmax.f32 %v1001, %v1002
      %v1004 = vsel %vm730, %v637, -inf
      %v1005 = vrot.slane %v1004, 4
      %v1006 = vmax.f32 %v1004, %v1005
      %v1007 = vrot.slane %v1006, 2
      %v1008 = vmax.f32 %v1006, %v1007
      %v1009 = vrot.slane %v1008, 1
      %v1010 = vmax.f32 %v1008, %v1009
      %v1011 = vsel %vm730, %v645, -inf
      %v1012 = vrot.slane %v1011, 4
      %v1013 = vmax.f32 %v1011, %v1012
      %v1014 = vrot.slane %v1013, 2
      %v1015 = vmax.f32 %v1013, %v1014
      %v1016 = vrot.slane %v1015, 1
      %v1017 = vmax.f32 %v1015, %v1016
      %v1018 = vsel %vm730, %v653, -inf
      %v1019 = vrot.slane %v1018, 4
      %v1020 = vmax.f32 %v1018, %v1019
      %v1021 = vrot.slane %v1020, 2
      %v1022 = vmax.f32 %v1020, %v1021
      %v1023 = vrot.slane %v1022, 1
      %v1024 = vmax.f32 %v1022, %v1023
      %v1025 = vsel %vm730, %v652, -inf
      %v1026 = vrot.slane %v1025, 4
      %v1027 = vmax.f32 %v1025, %v1026
      %v1028 = vrot.slane %v1027, 2
      %v1029 = vmax.f32 %v1027, %v1028
      %v1030 = vrot.slane %v1029, 1
      %v1031 = vmax.f32 %v1029, %v1030
      %v1032 = vsel %vm730, %v654, -inf
      %v1033 = vrot.slane %v1032, 4
      %v1034 = vmax.f32 %v1032, %v1033
      %v1035 = vrot.slane %v1034, 2
      %v1036 = vmax.f32 %v1034, %v1035
      %v1037 = vrot.slane %v1036, 1
      %v1038 = vmax.f32 %v1036, %v1037
      %v1039 = vsel %vm730, %v662, -inf
      %v1040 = vrot.slane %v1039, 4
      %v1041 = vmax.f32 %v1039, %v1040
      %v1042 = vrot.slane %v1041, 2
      %v1043 = vmax.f32 %v1041, %v1042
      %v1044 = vrot.slane %v1043, 1
      %v1045 = vmax.f32 %v1043, %v1044
      %v1046 = vsel %vm730, %v670, -inf
      %v1047 = vrot.slane %v1046, 4
      %v1048 = vmax.f32 %v1046, %v1047
      %v1049 = vrot.slane %v1048, 2
      %v1050 = vmax.f32 %v1048, %v1049
      %v1051 = vrot.slane %v1050, 1
      %v1052 = vmax.f32 %v1050, %v1051
      %v1053 = vsel %vm730, %v669, -inf
      %v1054 = vrot.slane %v1053, 4
      %v1055 = vmax.f32 %v1053, %v1054
      %v1056 = vrot.slane %v1055, 2
      %v1057 = vmax.f32 %v1055, %v1056
      %v1058 = vrot.slane %v1057, 1
      %v1059 = vmax.f32 %v1057, %v1058
      %v1060 = vsel %vm730, %v671, -inf
      %v1061 = vrot.slane %v1060, 4
      %v1062 = vmax.f32 %v1060, %v1061
      %v1063 = vrot.slane %v1062, 2
      %v1064 = vmax.f32 %v1062, %v1063
      %v1065 = vrot.slane %v1064, 1
      %v1066 = vmax.f32 %v1064, %v1065
      %v1067 = vsel %vm730, %v678, -inf
      %v1068 = vrot.slane %v1067, 4
      %v1069 = vmax.f32 %v1067, %v1068
      %v1070 = vrot.slane %v1069, 2
      %v1071 = vmax.f32 %v1069, %v1070
      %v1072 = vrot.slane %v1071, 1
      %v1073 = vmax.f32 %v1071, %v1072
      %v1074 = vsel %vm730, %v679, -inf
      %v1075 = vrot.slane %v1074, 4
      %v1076 = vmax.f32 %v1074, %v1075
      %v1077 = vrot.slane %v1076, 2
      %v1078 = vmax.f32 %v1076, %v1077
      %v1079 = vrot.slane %v1078, 1
      %v1080 = vmax.f32 %v1078, %v1079
      %v1081 = vmax.f32 %v737, %v772
      %v1082 = vmax.f32 %v744, %v779
      %v1083 = vmax.f32 %v751, %v786
      %v1084 = vmax.f32 %v758, %v793
      %v1085 = vmax.f32 %v765, %v800
      %v1086 = vmax.f32 %v807, %v842
      %v1087 = vmax.f32 %v814, %v849
      %v1088 = vmax.f32 %v821, %v856
      %v1089 = vmax.f32 %v828, %v863
      %v1090 = vmax.f32 %v835, %v870
      %v1091 = vmax.f32 %v877, %v912
      %v1092 = vmax.f32 %v884, %v919
      %v1093 = vmax.f32 %v891, %v926
      %v1094 = vmax.f32 %v898, %v933
      %v1095 = vmax.f32 %v905, %v940
      %v1096 = vmax.f32 %v947, %v982
      %v1097 = vmax.f32 %v954, %v989
      %v1098 = vmax.f32 %v961, %v996
      %v1099 = vmax.f32 %v968, %v1003
      %v1100 = vmax.f32 %v975, %v1010
      %v1101 = vmax.f32 %v1017, %v1052
      %v1102 = vmax.f32 %v1024, %v1059
      %v1103 = vmax.f32 %v1031, %v1066
      %v1104 = vmax.f32 %v1038, %v1073
      %v1105 = vmax.f32 %v1045, %v1080
      %vm1131 = vcmask 1041409
      %v1132 = vsel %vm1131, %v1082, %v1081
      %vm1133 = vcmask 1042434
      %v1134 = vsel %vm1133, %v1083, %v1132
      %vm1135 = vcmask 1043459
      %v1136 = vsel %vm1135, %v1084, %v1134
      %vm1137 = vcmask 1044484
      %v1138 = vsel %vm1137, %v1085, %v1136
      %v1139 = vsel %vm1131, %v1087, %v1086
      %v1140 = vsel %vm1133, %v1088, %v1139
      %v1141 = vsel %vm1135, %v1089, %v1140
      %v1142 = vsel %vm1137, %v1090, %v1141
      %v1143 = vsel %vm1131, %v1092, %v1091
      %v1144 = vsel %vm1133, %v1093, %v1143
      %v1145 = vsel %vm1135, %v1094, %v1144
      %v1146 = vsel %vm1137, %v1095, %v1145
      %v1147 = vsel %vm1131, %v1097, %v1096
      %v1148 = vsel %vm1133, %v1098, %v1147
      %v1149 = vsel %vm1135, %v1099, %v1148
      %v1150 = vsel %vm1137, %v1100, %v1149
      %v1151 = vsel %vm1131, %v1102, %v1101
      %v1152 = vsel %vm1133, %v1103, %v1151
      %v1153 = vsel %vm1135, %v1104, %v1152
      %v1154 = vsel %vm1137, %v1105, %v1153
      %1160 = vst [vmem:[%s170] sm:$0x1f] %v1138
      %1161 = vst [vmem:[%s170 + $0x8] sm:$0x1f] %v1142
      %1162 = vst [vmem:[%s170 + $0x10] sm:$0x1f] %v1146
      %1163 = vst [vmem:[%s170 + $0x18] sm:$0x1f] %v1150
      %1164 = vst [vmem:[%s170 + $0x20] sm:$0x1f] %v1154
      %p1165 = scmp.lt.s32.totalorder %s14, 1
      %s1166 = scalar_select %p1165, %s14, 1
      %s1167 = smul.addr %s1166, 5
      %s1168 = smul.addr %s1167, 8
      %s1169 = scalar_lea.vmem %s3, %s1168
      // Predicated region
      $region33: #{lenet_forward.4} parent=31 // pred_check
        %p1170 = pneg %p100
      $region34: #{lenet_forward.4} parent=31 // pred_check_branch
        %1172 = sbr.rel (%p1170) target = $region36
      $region35: #{lenet_forward.4} parent=31 // pred_region
        _
      $region36: #{lenet_forward.4} parent=31 // pred_fallthru
        _
    $region32: #{lenet_forward.4} parent=5 // pred_fallthru
      _
    %p1173 = scmp.le.s32.totalorder 2, %s9
    // Predicated region
    $region37: #{lenet_forward.4} parent=5 // pred_check
      %p1174 = pneg %p1173
    $region38: #{lenet_forward.4} parent=5 // pred_check_branch
      %1176 = sbr.rel (%p1174) target = $region40
    $region39: #{lenet_forward.4} parent=5 // pred_region
      %s1177 = ssub.s32 %s9, 2
      // Predicated region
      $region41: #{lenet_forward.4} parent=39 // pred_check
        %p1178 = pneg %p106
      $region42: #{lenet_forward.4} parent=39 // pred_check_branch
        %1180 = sbr.rel (%p1178) target = $region44
      $region43: #{lenet_forward.4} parent=39 // pred_region
        %p1181 = scmp.lt.s32.totalorder %s15, 1
        %s1182 = scalar_select %p1181, %s15, 1
        %s1183 = smul.addr %s1182, 5
        %s1184 = smul.addr %s1183, 8
        %s1185 = scalar_lea.vmem %s3, %s1184
      $region44: #{lenet_forward.4} parent=39 // pred_fallthru
        _
    $region40: #{lenet_forward.4} parent=5 // pred_fallthru
      _
  $region6: #{lenet_forward.4} parent=0 // loop_footer
    %s13 = sadd.s32 1, %s9
  $region7: #{lenet_forward.4} parent=0 // loop_footer_branch
    %8 = sbr.rel target = $region3
  $region8: #{lenet_forward.4} parent=0 // loop_exit
    _

// kernel: lenet_forward.3
$region0: #{lenet_forward.3}
  #allocation0 [shape = 'u32[]', space=smem, size = 0x4, offset = 0x4, fixed_abs, tag = 'smem constant byte address 0x4 - core index']
  #allocation1 [shape = 'u32[144,128]{1,0:T(1,128)}', space=vmem, size = 0x12000, scoped, tag = 'internal scratch']
  %s0 = inlined_call_operand.vmem [shape: bf16[2,784,25], index: 0, kind: input, shape index: {}]
  %s1 = inlined_call_operand.vmem [shape: bf16[25,128], index: 1, kind: input, shape index: {}]
  %s2 = inlined_call_operand.vmem [shape: f32[1,128], index: 2, kind: input, shape index: {}]
  %s3 = inlined_call_operand.vmem [shape: f32[2,14,14,128], index: 3, kind: output, shape index: {}]
  %s4 = sld [smem:[#allocation0]]
  $region45: #{lenet_forward.3} parent=0
    _
  %s6 = ssub.s32 1, %s4
  %s7 = scalar_select 0, %s6, %s4
  loop: start=0, step=1, limit=4
  $region2: #{lenet_forward.3} parent=0 // loop_pre_header
    _
  $region3: #{lenet_forward.3} parent=0 // loop_header
    %s9 = sphi 0, %s13
    %p10 = scmp.ge.s32.totalorder %s9, 4
    %s19 = sphi 0, %s21
    %s22 = sphi 0, %s19
    %s23 = sphi 0, %s22
    %s39 = sphi 0, %s23
    %s43 = sphi 0, %s43
    %s45 = sphi 0, %s43
    %s46 = sphi 0, %s45
    %s60 = sphi 0, %s46
    %s64 = sphi 0, %s64
    %s66 = sphi 0, %s64
    %s67 = sphi 0, %s66
    %s81 = sphi 0, %s67
    %s87 = sphi 0, %s89
    %s90 = sphi 0, %s87
    %s91 = sphi 0, %s90
    %s107 = sphi 0, %s91
  $region4: #{lenet_forward.3} parent=0 // loop_header_branch
    %12 = sbr.rel (%p10) target = $region8
  $region5: #{lenet_forward.3} parent=0 // loop_body
    %s14 = ssub.s32 %s9, 1
    %s15 = ssub.s32 %s9, 2
    %s16 = sadd.s32 %s9, 1
    %s17 = ssub.s32 %s9, %s16
    %p18 = scmp.eq.s32.totalorder %s17, 0
    %s20 = sadd.s32 %s19, 1
    %s21 = scalar_select %p18, %s19, %s20
    %p24 = pneg %p18
    %p25 = scmp.eq.s32.totalorder %s9, 1
    %p26 = por %p24, %p25
    %p27 = scmp.ne.s32.totalorder %s19, %s22
    %p28 = scmp.eq.s32.totalorder %s9, 0
    %p29 = por %p27, %p28
    %p30 = scmp.ne.s32.totalorder %s19, %s22
    %p31 = scmp.eq.s32.totalorder %s14, 1
    %p32 = por %p30, %p31
    %p33 = scmp.ne.s32.totalorder %s22, %s23
    %p34 = scmp.eq.s32.totalorder %s14, 0
    %p35 = por %p33, %p34
    %p36 = scmp.ne.s32.totalorder %s22, %s23
    %p37 = scmp.eq.s32.totalorder %s15, 1
    %p38 = por %p36, %p37
    %p40 = scmp.ne.s32.totalorder %s23, %s39
    %p41 = scmp.eq.s32.totalorder %s15, 0
    %p42 = por %p40, %p41
    %s44 = sadd.s32 %s43, 1
    %p47 = scmp.eq.s32.totalorder %s9, 1
    %p48 = scmp.ne.s32.totalorder %s43, %s45
    %p49 = scmp.eq.s32.totalorder %s9, 0
    %p50 = por %p48, %p49
    %p51 = scmp.ne.s32.totalorder %s43, %s45
    %p52 = scmp.eq.s32.totalorder %s14, 1
    %p53 = por %p51, %p52
    %p54 = scmp.ne.s32.totalorder %s45, %s46
    %p55 = scmp.eq.s32.totalorder %s14, 0
    %p56 = por %p54, %p55
    %p57 = scmp.ne.s32.totalorder %s45, %s46
    %p58 = scmp.eq.s32.totalorder %s15, 1
    %p59 = por %p57, %p58
    %p61 = scmp.ne.s32.totalorder %s46, %s60
    %p62 = scmp.eq.s32.totalorder %s15, 0
    %p63 = por %p61, %p62
    %s65 = sadd.s32 %s64, 1
    %p68 = scmp.eq.s32.totalorder %s9, 1
    %p69 = scmp.ne.s32.totalorder %s64, %s66
    %p70 = scmp.eq.s32.totalorder %s9, 0
    %p71 = por %p69, %p70
    %p72 = scmp.ne.s32.totalorder %s64, %s66
    %p73 = scmp.eq.s32.totalorder %s14, 1
    %p74 = por %p72, %p73
    %p75 = scmp.ne.s32.totalorder %s66, %s67
    %p76 = scmp.eq.s32.totalorder %s14, 0
    %p77 = por %p75, %p76
    %p78 = scmp.ne.s32.totalorder %s66, %s67
    %p79 = scmp.eq.s32.totalorder %s15, 1
    %p80 = por %p78, %p79
    %p82 = scmp.ne.s32.totalorder %s67, %s81
    %p83 = scmp.eq.s32.totalorder %s15, 0
    %p84 = por %p82, %p83
    %s85 = ssub.s32 %s9, %s16
    %p86 = scmp.eq.s32.totalorder %s85, 0
    %s88 = sadd.s32 %s87, 1
    %s89 = scalar_select %p86, %s87, %s88
    %p92 = pneg %p86
    %p93 = scmp.eq.s32.totalorder %s9, 1
    %p94 = por %p92, %p93
    %p95 = scmp.ne.s32.totalorder %s87, %s90
    %p96 = scmp.eq.s32.totalorder %s9, 0
    %p97 = por %p95, %p96
    %p98 = scmp.ne.s32.totalorder %s87, %s90
    %p99 = scmp.eq.s32.totalorder %s14, 1
    %p100 = por %p98, %p99
    %p101 = scmp.ne.s32.totalorder %s90, %s91
    %p102 = scmp.eq.s32.totalorder %s14, 0
    %p103 = por %p101, %p102
    %p104 = scmp.ne.s32.totalorder %s90, %s91
    %p105 = scmp.eq.s32.totalorder %s15, 1
    %p106 = por %p104, %p105
    %p108 = scmp.ne.s32.totalorder %s91, %s107
    %p109 = scmp.eq.s32.totalorder %s15, 0
    %p110 = por %p108, %p109
    %p111 = scmp.le.s32.totalorder 1, %s9
    %p112 = scmp.lt.s32.totalorder %s9, 3
    %p113 = pnand %p111, %p112
    %p114 = pneg %p113
    // Predicated region
    $region9: #{lenet_forward.3} parent=5 // pred_check
      _
    $region10: #{lenet_forward.3} parent=5 // pred_check_branch
      %116 = sbr.rel (%p113) target = $region12
    $region11: #{lenet_forward.3} parent=5 // pred_region
      %s117 = ssub.s32 %s9, 1
      // Predicated region
      $region13: #{lenet_forward.3} parent=11 // pred_check
        %p118 = pneg %p56
      $region14: #{lenet_forward.3} parent=11 // pred_check_branch
        %120 = sbr.rel (%p118) target = $region16
      $region15: #{lenet_forward.3} parent=11 // pred_region
        _
      $region16: #{lenet_forward.3} parent=11 // pred_fallthru
        _
      // Predicated region
      $region17: #{lenet_forward.3} parent=11 // pred_check
        %p121 = pneg %p77
      $region18: #{lenet_forward.3} parent=11 // pred_check_branch
        %123 = sbr.rel (%p121) target = $region20
      $region19: #{lenet_forward.3} parent=11 // pred_region
        _
      $region20: #{lenet_forward.3} parent=11 // pred_fallthru
        _
    $region12: #{lenet_forward.3} parent=5 // pred_fallthru
      _
    %p124 = scmp.lt.s32.totalorder %s9, 2
    // Predicated region
    $region21: #{lenet_forward.3} parent=5 // pred_check
      %p125 = pneg %p124
    $region22: #{lenet_forward.3} parent=5 // pred_check_branch
      %127 = sbr.rel (%p125) target = $region24
    $region23: #{lenet_forward.3} parent=5 // pred_region
      // Predicated region
      $region25: #{lenet_forward.3} parent=23 // pred_check
        %p128 = pneg %p29
      $region26: #{lenet_forward.3} parent=23 // pred_check_branch
        %130 = sbr.rel (%p128) target = $region28
      $region27: #{lenet_forward.3} parent=23 // pred_region
        %p131 = scmp.lt.s32.totalorder %s9, 1
        %s132 = scalar_select %p131, %s9, 1
        %s133 = smul.addr %s132, 98
        %s134 = smul.addr %s133, 4
        %s135 = scalar_lea.vmem %s0, %s134
      $region28: #{lenet_forward.3} parent=23 // pred_fallthru
        _
    $region24: #{lenet_forward.3} parent=5 // pred_fallthru
      _
    %p136 = scmp.le.s32.totalorder 1, %s9
    %p137 = scmp.lt.s32.totalorder %s9, 3
    %p138 = pnand %p136, %p137
    %p139 = pneg %p138
    // Predicated region
    $region29: #{lenet_forward.3} parent=5 // pred_check
      _
    $region30: #{lenet_forward.3} parent=5 // pred_check_branch
      %141 = sbr.rel (%p138) target = $region32
    $region31: #{lenet_forward.3} parent=5 // pred_region
      %s142 = ssub.s32 %s9, 1
      %p143 = scmp.lt.s32.totalorder %s14, 1
      %s144 = scalar_select %p143, %s14, 1
      %s145 = smul.addr %s144, 98
      %s146 = smul.addr %s145, 4
      %s147 = scalar_lea.vmem %s0, %s146
      %p148 = pneg %p35
      %p149 = pneg %p32
      %p150 = pneg %p56
      %p151 = pneg %p53
      %p152 = pneg %p77
      %p153 = pneg %p74
      %p154 = pneg %p103
      %p155 = pneg %p100
      %p156 = scmp.lt.s32.totalorder %s14, 1
      %s157 = scalar_select %p156, %s14, 1
      %s158 = smul.addr %s157, 28
      %s159 = smul.addr %s158, 8
      %s160 = scalar_lea.vmem %s3, %s159
      %p161 = scmp.lt.s32.totalorder %s14, 1
      %s162 = scalar_select %p161, %s14, 1
      %s163 = smul.addr %s162, 98
      %s164 = smul.addr %s163, 4
      %s165 = scalar_lea.vmem %s0, %s164
      %p166 = scmp.lt.s32.totalorder %s14, 1
      %s167 = scalar_select %p166, %s14, 1
      %s168 = smul.addr %s167, 28
      %s169 = smul.addr %s168, 8
      %s170 = scalar_lea.vmem %s3, %s169
      %v172 = vld [vmem:[%s165] sm:$0xf]
      %v173 = vld [vmem:[%s165 + $0x4] sm:$0xf]
      %v174 = vld [vmem:[%s165 + $0x8] sm:$0xf]
      %v175 = vld [vmem:[%s165 + $0xc] sm:$0xf]
      %v176 = vld [vmem:[%s165 + $0x10] sm:$0xf]
      %v177 = vld [vmem:[%s165 + $0x14] sm:$0xf]
      %v178 = vld [vmem:[%s165 + $0x18] sm:$0xf]
      %v179 = vld [vmem:[%s165 + $0x1c] sm:$0xf]
      %v180 = vld [vmem:[%s165 + $0x20] sm:$0xf]
      %v181 = vld [vmem:[%s165 + $0x24] sm:$0xf]
      %v182 = vld [vmem:[%s165 + $0x28] sm:$0xf]
      %v183 = vld [vmem:[%s165 + $0x2c] sm:$0xf]
      %v184 = vld [vmem:[%s165 + $0x30] sm:$0xf]
      %v185 = vld [vmem:[%s165 + $0x34] sm:$0xf]
      %v186 = vld [vmem:[%s165 + $0x38] sm:$0xf]
      %v187 = vld [vmem:[%s165 + $0x3c] sm:$0xf]
      %v188 = vld [vmem:[%s165 + $0x40] sm:$0xf]
      %v189 = vld [vmem:[%s165 + $0x44] sm:$0xf]
      %v190 = vld [vmem:[%s165 + $0x48] sm:$0xf]
      %v191 = vld [vmem:[%s165 + $0x4c] sm:$0xf]
      %v192 = vld [vmem:[%s165 + $0x50] sm:$0xf]
      %v193 = vld [vmem:[%s165 + $0x54] sm:$0xf]
      %v194 = vld [vmem:[%s165 + $0x58] sm:$0xf]
      %v195 = vld [vmem:[%s165 + $0x5c] sm:$0xf]
      %v196 = vld [vmem:[%s165 + $0x60] sm:$0xf]
      %v197 = vld [vmem:[%s165 + $0x64] sm:$0xf]
      %v198 = vld [vmem:[%s165 + $0x68] sm:$0xf]
      %v199 = vld [vmem:[%s165 + $0x6c] sm:$0xf]
      %v200 = vld [vmem:[%s165 + $0x70] sm:$0xf]
      %v201 = vld [vmem:[%s165 + $0x74] sm:$0xf]
      %v202 = vld [vmem:[%s165 + $0x78] sm:$0xf]
      %v203 = vld [vmem:[%s165 + $0x7c] sm:$0xf]
      %v204 = vld [vmem:[%s165 + $0x80] sm:$0xf]
      %v205 = vld [vmem:[%s165 + $0x84] sm:$0xf]
      %v206 = vld [vmem:[%s165 + $0x88] sm:$0xf]
      %v207 = vld [vmem:[%s165 + $0x8c] sm:$0xf]
      %v208 = vld [vmem:[%s165 + $0x90] sm:$0xf]
      %v209 = vld [vmem:[%s165 + $0x94] sm:$0xf]
      %v210 = vld [vmem:[%s165 + $0x98] sm:$0xf]
      %v211 = vld [vmem:[%s165 + $0x9c] sm:$0xf]
      %v212 = vld [vmem:[%s165 + $0xa0] sm:$0xf]
      %v213 = vld [vmem:[%s165 + $0xa4] sm:$0xf]
      %v214 = vld [vmem:[%s165 + $0xa8] sm:$0xf]
      %v215 = vld [vmem:[%s165 + $0xac] sm:$0xf]
      %v216 = vld [vmem:[%s165 + $0xb0] sm:$0xf]
      %v217 = vld [vmem:[%s165 + $0xb4] sm:$0xf]
      %v218 = vld [vmem:[%s165 + $0xb8] sm:$0xf]
      %v219 = vld [vmem:[%s165 + $0xbc] sm:$0xf]
      %v220 = vld [vmem:[%s165 + $0xc0] sm:$0xf]
      %v221 = vld [vmem:[%s165 + $0xc4] sm:$0xf]
      %v222 = vld [vmem:[%s165 + $0xc8] sm:$0xf]
      %v223 = vld [vmem:[%s165 + $0xcc] sm:$0xf]
      %v224 = vld [vmem:[%s165 + $0xd0] sm:$0xf]
      %v225 = vld [vmem:[%s165 + $0xd4] sm:$0xf]
      %v226 = vld [vmem:[%s165 + $0xd8] sm:$0xf]
      %v227 = vld [vmem:[%s165 + $0xdc] sm:$0xf]
      %v228 = vld [vmem:[%s165 + $0xe0] sm:$0xf]
      %v229 = vld [vmem:[%s165 + $0xe4] sm:$0xf]
      %v230 = vld [vmem:[%s165 + $0xe8] sm:$0xf]
      %v231 = vld [vmem:[%s165 + $0xec] sm:$0xf]
      %v232 = vld [vmem:[%s165 + $0xf0] sm:$0xf]
      %v233 = vld [vmem:[%s165 + $0xf4] sm:$0xf]
      %v234 = vld [vmem:[%s165 + $0xf8] sm:$0xf]
      %v235 = vld [vmem:[%s165 + $0xfc] sm:$0xf]
      %v236 = vld [vmem:[%s165 + $0x100] sm:$0xf]
      %v237 = vld [vmem:[%s165 + $0x104] sm:$0xf]
      %v238 = vld [vmem:[%s165 + $0x108] sm:$0xf]
      %v239 = vld [vmem:[%s165 + $0x10c] sm:$0xf]
      %v240 = vld [vmem:[%s165 + $0x110] sm:$0xf]
      %v241 = vld [vmem:[%s165 + $0x114] sm:$0xf]
      %v242 = vld [vmem:[%s165 + $0x118] sm:$0xf]
      %v243 = vld [vmem:[%s165 + $0x11c] sm:$0xf]
      %v244 = vld [vmem:[%s165 + $0x120] sm:$0xf]
      %v245 = vld [vmem:[%s165 + $0x124] sm:$0xf]
      %v246 = vld [vmem:[%s165 + $0x128] sm:$0xf]
      %v247 = vld [vmem:[%s165 + $0x12c] sm:$0xf]
      %v248 = vld [vmem:[%s165 + $0x130] sm:$0xf]
      %v249 = vld [vmem:[%s165 + $0x134] sm:$0xf]
      %v250 = vld [vmem:[%s165 + $0x138] sm:$0xf]
      %v251 = vld [vmem:[%s165 + $0x13c] sm:$0xf]
      %v252 = vld [vmem:[%s165 + $0x140] sm:$0xf]
      %v253 = vld [vmem:[%s165 + $0x144] sm:$0xf]
      %v254 = vld [vmem:[%s165 + $0x148] sm:$0xf]
      %v255 = vld [vmem:[%s165 + $0x14c] sm:$0xf]
      %v256 = vld [vmem:[%s165 + $0x150] sm:$0xf]
      %v257 = vld [vmem:[%s165 + $0x154] sm:$0xf]
      %v258 = vld [vmem:[%s165 + $0x158] sm:$0xf]
      %v259 = vld [vmem:[%s165 + $0x15c] sm:$0xf]
      %v260 = vld [vmem:[%s165 + $0x160] sm:$0xf]
      %v261 = vld [vmem:[%s165 + $0x164] sm:$0xf]
      %v262 = vld [vmem:[%s165 + $0x168] sm:$0xf]
      %v263 = vld [vmem:[%s165 + $0x16c] sm:$0xf]
      %v264 = vld [vmem:[%s165 + $0x170] sm:$0xf]
      %v265 = vld [vmem:[%s165 + $0x174] sm:$0xf]
      %v266 = vld [vmem:[%s165 + $0x178] sm:$0xf]
      %v267 = vld [vmem:[%s165 + $0x17c] sm:$0xf]
      %v268 = vld [vmem:[%s165 + $0x180] sm:$0xf]
      %v269 = vld [vmem:[%s165 + $0x184] sm:$0xf]
      %v270 = vld [vmem:[%s1] sm:$0xf]
      %v271 = vld [vmem:[%s1 + $0x4] sm:$0xf]
      %v272 = vld [vmem:[%s1 + $0x8] sm:$0xf]
      %v273 = vld [vmem:[%s1 + $0xc] sm:$0x1]
      %v274 = vld [vmem:[%s2] sm:$0x1]
      %v276 = vlaneseq
      %v277 = vshrl.u32 %v276, 7
      %v278 = vsub.s32 0, %v277
      %v279 = vrot.slane %v274, %v278
      %v379 = vunpack.c.l.b16 %v172
      %v380 = vunpack.c.l.b16 %v173
      %v381 = vunpack.c.l.b16 %v174
      %v382 = vunpack.c.l.b16 %v175
      %v383 = vunpack.c.l.b16 %v176
      %v384 = vunpack.c.l.b16 %v177
      %v385 = vunpack.c.l.b16 %v178
      %v386 = vunpack.c.l.b16 %v179
      %v387 = vunpack.c.l.b16 %v180
      %v388 = vunpack.c.l.b16 %v181
      %v389 = vunpack.c.l.b16 %v182
      %v390 = vunpack.c.l.b16 %v183
      %v391 = vunpack.c.l.b16 %v184
      %v392 = vunpack.c.l.b16 %v185
      %v393 = vunpack.c.l.b16 %v186
      %v394 = vunpack.c.l.b16 %v187
      %v395 = vunpack.c.l.b16 %v188
      %v396 = vunpack.c.l.b16 %v189
      %v397 = vunpack.c.l.b16 %v190
      %v398 = vunpack.c.l.b16 %v191
      %v399 = vunpack.c.l.b16 %v192
      %v400 = vunpack.c.l.b16 %v193
      %v401 = vunpack.c.l.b16 %v194
      %v402 = vunpack.c.l.b16 %v195
      %v403 = vunpack.c.l.b16 %v196
      %v404 = vunpack.c.l.b16 %v197
      %v405 = vunpack.c.l.b16 %v198
      %v406 = vunpack.c.l.b16 %v199
      %v407 = vunpack.c.l.b16 %v200
      %v408 = vunpack.c.l.b16 %v201
      %v409 = vunpack.c.l.b16 %v202
      %v410 = vunpack.c.l.b16 %v203
      %v411 = vunpack.c.l.b16 %v204
      %v412 = vunpack.c.l.b16 %v205
      %v413 = vunpack.c.l.b16 %v206
      %v414 = vunpack.c.l.b16 %v207
      %v415 = vunpack.c.l.b16 %v208
      %v416 = vunpack.c.l.b16 %v209
      %v417 = vunpack.c.l.b16 %v210
      %v418 = vunpack.c.l.b16 %v211
      %v419 = vunpack.c.l.b16 %v212
      %v420 = vunpack.c.l.b16 %v213
      %v421 = vunpack.c.l.b16 %v214
      %v422 = vunpack.c.l.b16 %v215
      %v423 = vunpack.c.l.b16 %v216
      %v424 = vunpack.c.l.b16 %v217
      %v425 = vunpack.c.l.b16 %v218
      %v426 = vunpack.c.l.b16 %v219
      %v427 = vunpack.c.l.b16 %v220
      %v428 = vunpack.c.l.b16 %v221
      %v429 = vunpack.c.l.b16 %v222
      %v430 = vunpack.c.l.b16 %v223
      %v431 = vunpack.c.l.b16 %v224
      %v432 = vunpack.c.l.b16 %v225
      %v433 = vunpack.c.l.b16 %v226
      %v434 = vunpack.c.l.b16 %v227
      %v435 = vunpack.c.l.b16 %v228
      %v436 = vunpack.c.l.b16 %v229
      %v437 = vunpack.c.l.b16 %v230
      %v438 = vunpack.c.l.b16 %v231
      %v439 = vunpack.c.l.b16 %v232
      %v440 = vunpack.c.l.b16 %v233
      %v441 = vunpack.c.l.b16 %v234
      %v442 = vunpack.c.l.b16 %v235
      %v443 = vunpack.c.l.b16 %v236
      %v444 = vunpack.c.l.b16 %v237
      %v445 = vunpack.c.l.b16 %v238
      %v446 = vunpack.c.l.b16 %v239
      %v447 = vunpack.c.l.b16 %v240
      %v448 = vunpack.c.l.b16 %v241
      %v449 = vunpack.c.l.b16 %v242
      %v450 = vunpack.c.l.b16 %v243
      %v451 = vunpack.c.l.b16 %v244
      %v452 = vunpack.c.l.b16 %v245
      %v453 = vunpack.c.l.b16 %v246
      %v454 = vunpack.c.l.b16 %v247
      %v455 = vunpack.c.l.b16 %v248
      %v456 = vunpack.c.l.b16 %v249
      %v457 = vunpack.c.l.b16 %v250
      %v458 = vunpack.c.l.b16 %v251
      %v459 = vunpack.c.l.b16 %v252
      %v460 = vunpack.c.l.b16 %v253
      %v461 = vunpack.c.l.b16 %v254
      %v462 = vunpack.c.l.b16 %v255
      %v463 = vunpack.c.l.b16 %v256
      %v464 = vunpack.c.l.b16 %v257
      %v465 = vunpack.c.l.b16 %v258
      %v466 = vunpack.c.l.b16 %v259
      %v467 = vunpack.c.l.b16 %v260
      %v468 = vunpack.c.l.b16 %v261
      %v469 = vunpack.c.l.b16 %v262
      %v470 = vunpack.c.l.b16 %v263
      %v471 = vunpack.c.l.b16 %v264
      %v472 = vunpack.c.l.b16 %v265
      %v473 = vunpack.c.l.b16 %v266
      %v474 = vunpack.c.l.b16 %v267
      %v475 = vunpack.c.l.b16 %v268
      %v476 = vunpack.c.l.b16 %v269
      %v477 = vpack.c.b16 %v380, %v379
      %v478 = vpack.c.b16 %v382, %v381
      %v479 = vpack.c.b16 %v384, %v383
      %v480 = vpack.c.b16 %v386, %v385
      %v481 = vpack.c.b16 %v388, %v387
      %v482 = vpack.c.b16 %v390, %v389
      %v483 = vpack.c.b16 %v392, %v391
      %v484 = vpack.c.b16 %v394, %v393
      %v485 = vpack.c.b16 %v396, %v395
      %v486 = vpack.c.b16 %v398, %v397
      %v487 = vpack.c.b16 %v400, %v399
      %v488 = vpack.c.b16 %v402, %v401
      %v489 = vpack.c.b16 %v404, %v403
      %v490 = vpack.c.b16 %v406, %v405
      %v491 = vpack.c.b16 %v408, %v407
      %v492 = vpack.c.b16 %v410, %v409
      %v493 = vpack.c.b16 %v412, %v411
      %v494 = vpack.c.b16 %v414, %v413
      %v495 = vpack.c.b16 %v416, %v415
      %v496 = vpack.c.b16 %v418, %v417
      %v497 = vpack.c.b16 %v420, %v419
      %v498 = vpack.c.b16 %v422, %v421
      %v499 = vpack.c.b16 %v424, %v423
      %v500 = vpack.c.b16 %v426, %v425
      %v501 = vpack.c.b16 %v428, %v427
      %v502 = vpack.c.b16 %v430, %v429
      %v503 = vpack.c.b16 %v432, %v431
      %v504 = vpack.c.b16 %v434, %v433
      %v505 = vpack.c.b16 %v436, %v435
      %v506 = vpack.c.b16 %v438, %v437
      %v507 = vpack.c.b16 %v440, %v439
      %v508 = vpack.c.b16 %v442, %v441
      %v509 = vpack.c.b16 %v444, %v443
      %v510 = vpack.c.b16 %v446, %v445
      %v511 = vpack.c.b16 %v448, %v447
      %v512 = vpack.c.b16 %v450, %v449
      %v513 = vpack.c.b16 %v452, %v451
      %v514 = vpack.c.b16 %v454, %v453
      %v515 = vpack.c.b16 %v456, %v455
      %v516 = vpack.c.b16 %v458, %v457
      %v517 = vpack.c.b16 %v460, %v459
      %v518 = vpack.c.b16 %v462, %v461
      %v519 = vpack.c.b16 %v464, %v463
      %v520 = vpack.c.b16 %v466, %v465
      %v521 = vpack.c.b16 %v468, %v467
      %v522 = vpack.c.b16 %v470, %v469
      %v523 = vpack.c.b16 %v472, %v471
      %v524 = vpack.c.b16 %v474, %v473
      %v525 = vpack.c.b16 %v476, %v475
      %v530 = vunpack.c.l.b16 %v270
      %v531 = vunpack.c.l.b16 %v271
      %v532 = vunpack.c.l.b16 %v272
      %v533 = vunpack.c.l.b16 %v273
      %v534 = vpack.c.b16 %v531, %v530
      %v535 = vpack.c.b16 %v533, %v532
      %vm537 = vcmask 203776
      %v539 = vsel %vm537, %v477, 0
      %v542 = vsel %vm537, %v478, 0
      %v545 = vsel %vm537, %v479, 0
      %v548 = vsel %vm537, %v480, 0
      %v551 = vsel %vm537, %v481, 0
      %v554 = vsel %vm537, %v482, 0
      %v557 = vsel %vm537, %v483, 0
      %v560 = vsel %vm537, %v484, 0
      %v563 = vsel %vm537, %v485, 0
      %v566 = vsel %vm537, %v486, 0
      %v569 = vsel %vm537, %v487, 0
      %v572 = vsel %vm537, %v488, 0
      %v575 = vsel %vm537, %v489, 0
      %v578 = vsel %vm537, %v490, 0
      %v581 = vsel %vm537, %v491, 0
      %v584 = vsel %vm537, %v492, 0
      %v587 = vsel %vm537, %v493, 0
      %v590 = vsel %vm537, %v494, 0
      %v593 = vsel %vm537, %v495, 0
      %v596 = vsel %vm537, %v496, 0
      %v599 = vsel %vm537, %v497, 0
      %v602 = vsel %vm537, %v498, 0
      %v605 = vsel %vm537, %v499, 0
      %v608 = vsel %vm537, %v500, 0
      %v611 = vsel %vm537, %v501, 0
      %v614 = vsel %vm537, %v502, 0
      %v617 = vsel %vm537, %v503, 0
      %v620 = vsel %vm537, %v504, 0
      %v623 = vsel %vm537, %v505, 0
      %v626 = vsel %vm537, %v506, 0
      %v629 = vsel %vm537, %v507, 0
      %v632 = vsel %vm537, %v508, 0
      %v635 = vsel %vm537, %v509, 0
      %v638 = vsel %vm537, %v510, 0
      %v641 = vsel %vm537, %v511, 0
      %v644 = vsel %vm537, %v512, 0
      %v647 = vsel %vm537, %v513, 0
      %v650 = vsel %vm537, %v514, 0
      %v653 = vsel %vm537, %v515, 0
      %v656 = vsel %vm537, %v516, 0
      %v659 = vsel %vm537, %v517, 0
      %v662 = vsel %vm537, %v518, 0
      %v665 = vsel %vm537, %v519, 0
      %v668 = vsel %vm537, %v520, 0
      %v671 = vsel %vm537, %v521, 0
      %v674 = vsel %vm537, %v522, 0
      %v677 = vsel %vm537, %v523, 0
      %v680 = vsel %vm537, %v524, 0
      %v683 = vsel %vm537, %v525, 0
      %vm685 = vcmask 1043456
      %vm686 = vcmask 1044480
      %v687 = vsel %vm685, 4294967295, 65535
      %v688 = vsel %vm686, %v687, 0
      %v690 = vand.u32 %v535, %v688
      %692 = vmatprep.subr.bf16.mxu0 0
      %693 = vmatpush1.bf16.msra.mxu0 %v534
      %694 = vmatprep.subr.bf16.mxu0 0
      %695 = vmatpush1.bf16.msra.mxu0 %v690
      %696 = vmatprep.subr.bf16.mxu0 0
      %697 = vmatpush1.bf16.msra.mxu0 0
      %698 = vmatprep.subr.bf16.mxu0 0
      %699 = vmatpush1.bf16.msra.mxu0 0
      %700 = vmatprep.subr.bf16.mxu0 0
      %701 = vmatpush1.bf16.msra.mxu0 0
      %702 = vmatprep.subr.bf16.mxu0 0
      %703 = vmatpush1.bf16.msra.mxu0 0
      %704 = vmatprep.subr.bf16.mxu0 0
      %705 = vmatpush1.bf16.msra.mxu0 0
      %706 = vmatprep.subr.bf16.mxu0 0
      %707 = vmatpush1.bf16.msra.mxu0 0
      %708 = vmatprep.subr.bf16.mxu0 0
      %709 = vmatpush1.bf16.msra.mxu0 0
      %710 = vmatprep.subr.bf16.mxu0 0
      %711 = vmatpush1.bf16.msra.mxu0 0
      %712 = vmatprep.subr.bf16.mxu0 0
      %713 = vmatpush1.bf16.msra.mxu0 0
      %714 = vmatprep.subr.bf16.mxu0 0
      %715 = vmatpush1.bf16.msra.mxu0 0
      %716 = vmatprep.subr.bf16.mxu0 0
      %717 = vmatpush1.bf16.msra.mxu0 0
      %718 = vmatprep.subr.bf16.mxu0 0
      %719 = vmatpush1.bf16.msra.mxu0 0
      %720 = vmatprep.subr.bf16.mxu0 0
      %721 = vmatpush1.bf16.msra.mxu0 0
      %722 = vmatprep.subr.bf16.mxu0 0
      %723 = vmatpush1.bf16.msra.mxu0 0
      %724 = vmatprep.mubr.bf16.mxu0 0
      %725 = vmatmul.mubr.bf16.gmra.mrb[0].mxu0 %v539
      %v726 = vpop.f32.mrb[0].mxu0
      %v727 = vadd.f32 %v279, %v726
      %v728 = vpop.f32.mrb[0].mxu0
      %v729 = vpop.f32.mrb[0].mxu0
      %v730 = vadd.f32 %v279, %v729
      %v731 = vpop.f32.mrb[0].mxu0
      %732 = vmatprep.mubr.bf16.mxu0 0
      %733 = vmatmul.mubr.bf16.gmra.mrb[0].mxu0 %v542
      %v734 = vpop.f32.mrb[0].mxu0
      %v735 = vadd.f32 %v279, %v734
      %v736 = vpop.f32.mrb[0].mxu0
      %v737 = vpop.f32.mrb[0].mxu0
      %v738 = vadd.f32 %v279, %v737
      %v739 = vpop.f32.mrb[0].mxu0
      %740 = vmatprep.mubr.bf16.mxu0 0
      %741 = vmatmul.mubr.bf16.gmra.mrb[0].mxu0 %v545
      %v742 = vpop.f32.mrb[0].mxu0
      %v743 = vadd.f32 %v279, %v742
      %v744 = vpop.f32.mrb[0].mxu0
      %v745 = vpop.f32.mrb[0].mxu0
      %v746 = vadd.f32 %v279, %v745
      %v747 = vpop.f32.mrb[0].mxu0
      %748 = vmatprep.mubr.bf16.mxu0 0
      %749 = vmatmul.mubr.bf16.gmra.mrb[0].mxu0 %v548
      %v750 = vpop.f32.mrb[0].mxu0
      %v751 = vadd.f32 %v279, %v750
      %v752 = vpop.f32.mrb[0].mxu0
      %v753 = vpop.f32.mrb[0].mxu0
      %v754 = vadd.f32 %v279, %v753
      %v755 = vpop.f32.mrb[0].mxu0
      %756 = vmatprep.mubr.bf16.mxu0 0
      %757 = vmatmul.mubr.bf16.gmra.mrb[0].mxu0 %v551
      %v758 = vpop.f32.mrb[0].mxu0
      %v759 = vadd.f32 %v279, %v758
      %v760 = vpop.f32.mrb[0].mxu0
      %v761 = vpop.f32.mrb[0].mxu0
      %v762 = vadd.f32 %v279, %v761
      %v763 = vpop.f32.mrb[0].mxu0
      %764 = vmatprep.mubr.bf16.mxu0 0
      %765 = vmatmul.mubr.bf16.gmra.mrb[0].mxu0 %v554
      %v766 = vpop.f32.mrb[0].mxu0
      %v767 = vadd.f32 %v279, %v766
      %v768 = vpop.f32.mrb[0].mxu0
      %v769 = vpop.f32.mrb[0].mxu0
      %v770 = vadd.f32 %v279, %v769
      %v771 = vpop.f32.mrb[0].mxu0
      %772 = vmatprep.mubr.bf16.mxu0 0
      %773 = vmatmul.mubr.bf16.gmra.mrb[0].mxu0 %v557
      %v774 = vpop.f32.mrb[0].mxu0
      %v775 = vadd.f32 %v279, %v774
      %v776 = vpop.f32.mrb[0].mxu0
      %v777 = vpop.f32.mrb[0].mxu0
      %v778 = vadd.f32 %v279, %v777
      %v779 = vpop.f32.mrb[0].mxu0
      %780 = vmatprep.mubr.bf16.mxu0 0
      %781 = vmatmul.mubr.bf16.gmra.mrb[0].mxu0 %v560
      %v782 = vpop.f32.mrb[0].mxu0
      %v783 = vadd.f32 %v279, %v782
      %v784 = vpop.f32.mrb[0].mxu0
      %v785 = vpop.f32.mrb[0].mxu0
      %v786 = vadd.f32 %v279, %v785
      %v787 = vpop.f32.mrb[0].mxu0
      %788 = vmatprep.mubr.bf16.mxu0 0
      %789 = vmatmul.mubr.bf16.gmra.mrb[0].mxu0 %v563
      %v790 = vpop.f32.mrb[0].mxu0
      %v791 = vadd.f32 %v279, %v790
      %v792 = vpop.f32.mrb[0].mxu0
      %v793 = vpop.f32.mrb[0].mxu0
      %v794 = vadd.f32 %v279, %v793
      %v795 = vpop.f32.mrb[0].mxu0
      %796 = vmatprep.mubr.bf16.mxu0 0
      %797 = vmatmul.mubr.bf16.gmra.mrb[0].mxu0 %v566
      %v798 = vpop.f32.mrb[0].mxu0
      %v799 = vadd.f32 %v279, %v798
      %v800 = vpop.f32.mrb[0].mxu0
      %v801 = vpop.f32.mrb[0].mxu0
      %v802 = vadd.f32 %v279, %v801
      %v803 = vpop.f32.mrb[0].mxu0
      %804 = vmatprep.mubr.bf16.mxu0 0
      %805 = vmatmul.mubr.bf16.gmra.mrb[0].mxu0 %v569
      %v806 = vpop.f32.mrb[0].mxu0
      %v807 = vadd.f32 %v279, %v806
      %v808 = vpop.f32.mrb[0].mxu0
      %v809 = vpop.f32.mrb[0].mxu0
      %v810 = vadd.f32 %v279, %v809
      %v811 = vpop.f32.mrb[0].mxu0
      %812 = vmatprep.mubr.bf16.mxu0 0
      %813 = vmatmul.mubr.bf16.gmra.mrb[0].mxu0 %v572
      %v814 = vpop.f32.mrb[0].mxu0
      %v815 = vadd.f32 %v279, %v814
      %v816 = vpop.f32.mrb[0].mxu0
      %v817 = vpop.f32.mrb[0].mxu0
      %v818 = vadd.f32 %v279, %v817
      %v819 = vpop.f32.mrb[0].mxu0
      %820 = vmatprep.mubr.bf16.mxu0 0
      %821 = vmatmul.mubr.bf16.gmra.mrb[0].mxu0 %v575
      %v822 = vpop.f32.mrb[0].mxu0
      %v823 = vadd.f32 %v279, %v822
      %v824 = vpop.f32.mrb[0].mxu0
      %v825 = vpop.f32.mrb[0].mxu0
      %v826 = vadd.f32 %v279, %v825
      %v827 = vpop.f32.mrb[0].mxu0
      %828 = vmatprep.mubr.bf16.mxu0 0
      %829 = vmatmul.mubr.bf16.gmra.mrb[0].mxu0 %v578
      %v830 = vpop.f32.mrb[0].mxu0
      %v831 = vadd.f32 %v279, %v830
      %v832 = vpop.f32.mrb[0].mxu0
      %v833 = vpop.f32.mrb[0].mxu0
      %v834 = vadd.f32 %v279, %v833
      %v835 = vpop.f32.mrb[0].mxu0
      %836 = vmatprep.mubr.bf16.mxu0 0
      %837 = vmatmul.mubr.bf16.gmra.mrb[0].mxu0 %v581
      %v838 = vpop.f32.mrb[0].mxu0
      %v839 = vadd.f32 %v279, %v838
      %v840 = vpop.f32.mrb[0].mxu0
      %v841 = vpop.f32.mrb[0].mxu0
      %v842 = vadd.f32 %v279, %v841
      %v843 = vpop.f32.mrb[0].mxu0
      %844 = vmatprep.mubr.bf16.mxu0 0
      %845 = vmatmul.mubr.bf16.gmra.mrb[0].mxu0 %v584
      %v846 = vpop.f32.mrb[0].mxu0
      %v847 = vadd.f32 %v279, %v846
      %v848 = vpop.f32.mrb[0].mxu0
      %v849 = vpop.f32.mrb[0].mxu0
      %v850 = vadd.f32 %v279, %v849
      %v851 = vpop.f32.mrb[0].mxu0
      %852 = vmatprep.mubr.bf16.mxu0 0
      %853 = vmatmul.mubr.bf16.gmra.mrb[0].mxu0 %v587
      %v854 = vpop.f32.mrb[0].mxu0
      %v855 = vadd.f32 %v279, %v854
      %v856 = vpop.f32.mrb[0].mxu0
      %v857 = vpop.f32.mrb[0].mxu0
      %v858 = vadd.f32 %v279, %v857
      %v859 = vpop.f32.mrb[0].mxu0
      %860 = vmatprep.mubr.bf16.mxu0 0
      %861 = vmatmul.mubr.bf16.gmra.mrb[0].mxu0 %v590
      %v862 = vpop.f32.mrb[0].mxu0
      %v863 = vadd.f32 %v279, %v862
      %v864 = vpop.f32.mrb[0].mxu0
      %v865 = vpop.f32.mrb[0].mxu0
      %v866 = vadd.f32 %v279, %v865
      %v867 = vpop.f32.mrb[0].mxu0
      %868 = vmatprep.mubr.bf16.mxu0 0
      %869 = vmatmul.mubr.bf16.gmra.mrb[0].mxu0 %v593
      %v870 = vpop.f32.mrb[0].mxu0
      %v871 = vadd.f32 %v279, %v870
      %v872 = vpop.f32.mrb[0].mxu0
      %v873 = vpop.f32.mrb[0].mxu0
      %v874 = vadd.f32 %v279, %v873
      %v875 = vpop.f32.mrb[0].mxu0
      %876 = vmatprep.mubr.bf16.mxu0 0
      %877 = vmatmul.mubr.bf16.gmra.mrb[0].mxu0 %v596
      %v878 = vpop.f32.mrb[0].mxu0
      %v879 = vadd.f32 %v279, %v878
      %v880 = vpop.f32.mrb[0].mxu0
      %v881 = vpop.f32.mrb[0].mxu0
      %v882 = vadd.f32 %v279, %v881
      %v883 = vpop.f32.mrb[0].mxu0
      %884 = vmatprep.mubr.bf16.mxu0 0
      %885 = vmatmul.mubr.bf16.gmra.mrb[0].mxu0 %v599
      %v886 = vpop.f32.mrb[0].mxu0
      %v887 = vadd.f32 %v279, %v886
      %v888 = vpop.f32.mrb[0].mxu0
      %v889 = vpop.f32.mrb[0].mxu0
      %v890 = vadd.f32 %v279, %v889
      %v891 = vpop.f32.mrb[0].mxu0
      %892 = vmatprep.mubr.bf16.mxu0 0
      %893 = vmatmul.mubr.bf16.gmra.mrb[0].mxu0 %v602
      %v894 = vpop.f32.mrb[0].mxu0
      %v895 = vadd.f32 %v279, %v894
      %v896 = vpop.f32.mrb[0].mxu0
      %v897 = vpop.f32.mrb[0].mxu0
      %v898 = vadd.f32 %v279, %v897
      %v899 = vpop.f32.mrb[0].mxu0
      %900 = vmatprep.mubr.bf16.mxu0 0
      %901 = vmatmul.mubr.bf16.gmra.mrb[0].mxu0 %v605
      %v902 = vpop.f32.mrb[0].mxu0
      %v903 = vadd.f32 %v279, %v902
      %v904 = vpop.f32.mrb[0].mxu0
      %v905 = vpop.f32.mrb[0].mxu0
      %v906 = vadd.f32 %v279, %v905
      %v907 = vpop.f32.mrb[0].mxu0
      %908 = vmatprep.mubr.bf16.mxu0 0
      %909 = vmatmul.mubr.bf16.gmra.mrb[0].mxu0 %v608
      %v910 = vpop.f32.mrb[0].mxu0
      %v911 = vadd.f32 %v279, %v910
      %v912 = vpop.f32.mrb[0].mxu0
      %v913 = vpop.f32.mrb[0].mxu0
      %v914 = vadd.f32 %v279, %v913
      %v915 = vpop.f32.mrb[0].mxu0
      %916 = vmatprep.mubr.bf16.mxu0 0
      %917 = vmatmul.mubr.bf16.gmra.mrb[0].mxu0 %v611
      %v918 = vpop.f32.mrb[0].mxu0
      %v919 = vadd.f32 %v279, %v918
      %v920 = vpop.f32.mrb[0].mxu0
      %v921 = vpop.f32.mrb[0].mxu0
      %v922 = vadd.f32 %v279, %v921
      %v923 = vpop.f32.mrb[0].mxu0
      %924 = vmatprep.mubr.bf16.mxu0 0
      %925 = vmatmul.mubr.bf16.gmra.mrb[0].mxu0 %v614
      %v926 = vpop.f32.mrb[0].mxu0
      %v927 = vadd.f32 %v279, %v926
      %v928 = vpop.f32.mrb[0].mxu0
      %v929 = vpop.f32.mrb[0].mxu0
      %v930 = vadd.f32 %v279, %v929
      %v931 = vpop.f32.mrb[0].mxu0
      %932 = vmatprep.mubr.bf16.mxu0 0
      %933 = vmatmul.mubr.bf16.gmra.mrb[0].mxu0 %v617
      %v934 = vpop.f32.mrb[0].mxu0
      %v935 = vadd.f32 %v279, %v934
      %v936 = vpop.f32.mrb[0].mxu0
      %v937 = vpop.f32.mrb[0].mxu0
      %v938 = vadd.f32 %v279, %v937
      %v939 = vpop.f32.mrb[0].mxu0
      %940 = vmatprep.mubr.bf16.mxu0 0
      %941 = vmatmul.mubr.bf16.gmra.mrb[0].mxu0 %v620
      %v942 = vpop.f32.mrb[0].mxu0
      %v943 = vadd.f32 %v279, %v942
      %v944 = vpop.f32.mrb[0].mxu0
      %v945 = vpop.f32.mrb[0].mxu0
      %v946 = vadd.f32 %v279, %v945
      %v947 = vpop.f32.mrb[0].mxu0
      %948 = vmatprep.mubr.bf16.mxu0 0
      %949 = vmatmul.mubr.bf16.gmra.mrb[0].mxu0 %v623
      %v950 = vpop.f32.mrb[0].mxu0
      %v951 = vadd.f32 %v279, %v950
      %v952 = vpop.f32.mrb[0].mxu0
      %v953 = vpop.f32.mrb[0].mxu0
      %v954 = vadd.f32 %v279, %v953
      %v955 = vpop.f32.mrb[0].mxu0
      %956 = vmatprep.mubr.bf16.mxu0 0
      %957 = vmatmul.mubr.bf16.gmra.mrb[0].mxu0 %v626
      %v958 = vpop.f32.mrb[0].mxu0
      %v959 = vadd.f32 %v279, %v958
      %v960 = vpop.f32.mrb[0].mxu0
      %v961 = vpop.f32.mrb[0].mxu0
      %v962 = vadd.f32 %v279, %v961
      %v963 = vpop.f32.mrb[0].mxu0
      %964 = vmatprep.mubr.bf16.mxu0 0
      %965 = vmatmul.mubr.bf16.gmra.mrb[0].mxu0 %v629
      %v966 = vpop.f32.mrb[0].mxu0
      %v967 = vadd.f32 %v279, %v966
      %v968 = vpop.f32.mrb[0].mxu0
      %v969 = vpop.f32.mrb[0].mxu0
      %v970 = vadd.f32 %v279, %v969
      %v971 = vpop.f32.mrb[0].mxu0
      %972 = vmatprep.mubr.bf16.mxu0 0
      %973 = vmatmul.mubr.bf16.gmra.mrb[0].mxu0 %v632
      %v974 = vpop.f32.mrb[0].mxu0
      %v975 = vadd.f32 %v279, %v974
      %v976 = vpop.f32.mrb[0].mxu0
      %v977 = vpop.f32.mrb[0].mxu0
      %v978 = vadd.f32 %v279, %v977
      %v979 = vpop.f32.mrb[0].mxu0
      %980 = vmatprep.mubr.bf16.mxu0 0
      %981 = vmatmul.mubr.bf16.gmra.mrb[0].mxu0 %v635
      %v982 = vpop.f32.mrb[0].mxu0
      %v983 = vadd.f32 %v279, %v982
      %v984 = vpop.f32.mrb[0].mxu0
      %v985 = vpop.f32.mrb[0].mxu0
      %v986 = vadd.f32 %v279, %v985
      %v987 = vpop.f32.mrb[0].mxu0
      %988 = vmatprep.mubr.bf16.mxu0 0
      %989 = vmatmul.mubr.bf16.gmra.mrb[0].mxu0 %v638
      %v990 = vpop.f32.mrb[0].mxu0
      %v991 = vadd.f32 %v279, %v990
      %v992 = vpop.f32.mrb[0].mxu0
      %v993 = vpop.f32.mrb[0].mxu0
      %v994 = vadd.f32 %v279, %v993
      %v995 = vpop.f32.mrb[0].mxu0
      %996 = vmatprep.mubr.bf16.mxu0 0
      %997 = vmatmul.mubr.bf16.gmra.mrb[0].mxu0 %v641
      %v998 = vpop.f32.mrb[0].mxu0
      %v999 = vadd.f32 %v279, %v998
      %v1000 = vpop.f32.mrb[0].mxu0
      %v1001 = vpop.f32.mrb[0].mxu0
      %v1002 = vadd.f32 %v279, %v1001
      %v1003 = vpop.f32.mrb[0].mxu0
      %1004 = vmatprep.mubr.bf16.mxu0 0
      %1005 = vmatmul.mubr.bf16.gmra.mrb[0].mxu0 %v644
      %v1006 = vpop.f32.mrb[0].mxu0
      %v1007 = vadd.f32 %v279, %v1006
      %v1008 = vpop.f32.mrb[0].mxu0
      %v1009 = vpop.f32.mrb[0].mxu0
      %v1010 = vadd.f32 %v279, %v1009
      %v1011 = vpop.f32.mrb[0].mxu0
      %1012 = vmatprep.mubr.bf16.mxu0 0
      %1013 = vmatmul.mubr.bf16.gmra.mrb[0].mxu0 %v647
      %v1014 = vpop.f32.mrb[0].mxu0
      %v1015 = vadd.f32 %v279, %v1014
      %v1016 = vpop.f32.mrb[0].mxu0
      %v1017 = vpop.f32.mrb[0].mxu0
      %v1018 = vadd.f32 %v279, %v1017
      %v1019 = vpop.f32.mrb[0].mxu0
      %1020 = vmatprep.mubr.bf16.mxu0 0
      %1021 = vmatmul.mubr.bf16.gmra.mrb[0].mxu0 %v650
      %v1022 = vpop.f32.mrb[0].mxu0
      %v1023 = vadd.f32 %v279, %v1022
      %v1024 = vpop.f32.mrb[0].mxu0
      %v1025 = vpop.f32.mrb[0].mxu0
      %v1026 = vadd.f32 %v279, %v1025
      %v1027 = vpop.f32.mrb[0].mxu0
      %1028 = vmatprep.mubr.bf16.mxu0 0
      %1029 = vmatmul.mubr.bf16.gmra.mrb[0].mxu0 %v653
      %v1030 = vpop.f32.mrb[0].mxu0
      %v1031 = vadd.f32 %v279, %v1030
      %v1032 = vpop.f32.mrb[0].mxu0
      %v1033 = vpop.f32.mrb[0].mxu0
      %v1034 = vadd.f32 %v279, %v1033
      %v1035 = vpop.f32.mrb[0].mxu0
      %1036 = vmatprep.mubr.bf16.mxu0 0
      %1037 = vmatmul.mubr.bf16.gmra.mrb[0].mxu0 %v656
      %v1038 = vpop.f32.mrb[0].mxu0
      %v1039 = vadd.f32 %v279, %v1038
      %v1040 = vpop.f32.mrb[0].mxu0
      %v1041 = vpop.f32.mrb[0].mxu0
      %v1042 = vadd.f32 %v279, %v1041
      %v1043 = vpop.f32.mrb[0].mxu0
      %1044 = vmatprep.mubr.bf16.mxu0 0
      %1045 = vmatmul.mubr.bf16.gmra.mrb[0].mxu0 %v659
      %v1046 = vpop.f32.mrb[0].mxu0
      %v1047 = vadd.f32 %v279, %v1046
      %v1048 = vpop.f32.mrb[0].mxu0
      %v1049 = vpop.f32.mrb[0].mxu0
      %v1050 = vadd.f32 %v279, %v1049
      %v1051 = vpop.f32.mrb[0].mxu0
      %1052 = vmatprep.mubr.bf16.mxu0 0
      %1053 = vmatmul.mubr.bf16.gmra.mrb[0].mxu0 %v662
      %v1054 = vpop.f32.mrb[0].mxu0
      %v1055 = vadd.f32 %v279, %v1054
      %v1056 = vpop.f32.mrb[0].mxu0
      %v1057 = vpop.f32.mrb[0].mxu0
      %v1058 = vadd.f32 %v279, %v1057
      %v1059 = vpop.f32.mrb[0].mxu0
      %1060 = vmatprep.mubr.bf16.mxu0 0
      %1061 = vmatmul.mubr.bf16.gmra.mrb[0].mxu0 %v665
      %v1062 = vpop.f32.mrb[0].mxu0
      %v1063 = vadd.f32 %v279, %v1062
      %v1064 = vpop.f32.mrb[0].mxu0
      %v1065 = vpop.f32.mrb[0].mxu0
      %v1066 = vadd.f32 %v279, %v1065
      %v1067 = vpop.f32.mrb[0].mxu0
      %1068 = vmatprep.mubr.bf16.mxu0 0
      %1069 = vmatmul.mubr.bf16.gmra.mrb[0].mxu0 %v668
      %v1070 = vpop.f32.mrb[0].mxu0
      %v1071 = vadd.f32 %v279, %v1070
      %v1072 = vpop.f32.mrb[0].mxu0
      %v1073 = vpop.f32.mrb[0].mxu0
      %v1074 = vadd.f32 %v279, %v1073
      %v1075 = vpop.f32.mrb[0].mxu0
      %1076 = vmatprep.mubr.bf16.mxu0 0
      %1077 = vmatmul.mubr.bf16.gmra.mrb[0].mxu0 %v671
      %v1078 = vpop.f32.mrb[0].mxu0
      %v1079 = vadd.f32 %v279, %v1078
      %v1080 = vpop.f32.mrb[0].mxu0
      %v1081 = vpop.f32.mrb[0].mxu0
      %v1082 = vadd.f32 %v279, %v1081
      %v1083 = vpop.f32.mrb[0].mxu0
      %1084 = vmatprep.mubr.bf16.mxu0 0
      %1085 = vmatmul.mubr.bf16.gmra.mrb[0].mxu0 %v674
      %v1086 = vpop.f32.mrb[0].mxu0
      %v1087 = vadd.f32 %v279, %v1086
      %v1088 = vpop.f32.mrb[0].mxu0
      %v1089 = vpop.f32.mrb[0].mxu0
      %v1090 = vadd.f32 %v279, %v1089
      %v1091 = vpop.f32.mrb[0].mxu0
      %1092 = vmatprep.mubr.bf16.mxu0 0
      %1093 = vmatmul.mubr.bf16.gmra.mrb[0].mxu0 %v677
      %v1094 = vpop.f32.mrb[0].mxu0
      %v1095 = vadd.f32 %v279, %v1094
      %v1096 = vpop.f32.mrb[0].mxu0
      %v1097 = vpop.f32.mrb[0].mxu0
      %v1098 = vadd.f32 %v279, %v1097
      %v1099 = vpop.f32.mrb[0].mxu0
      %1100 = vmatprep.mubr.bf16.mxu0 0
      %1101 = vmatmul.mubr.bf16.gmra.mrb[0].mxu0 %v680
      %v1102 = vpop.f32.mrb[0].mxu0
      %v1103 = vadd.f32 %v279, %v1102
      %v1104 = vpop.f32.mrb[0].mxu0
      %v1105 = vpop.f32.mrb[0].mxu0
      %v1106 = vadd.f32 %v279, %v1105
      %v1107 = vpop.f32.mrb[0].mxu0
      %1108 = vmatprep.mubr.bf16.mxu0 0
      %1109 = vmatmul.mubr.bf16.gmra.mrb[0].mxu0 %v683
      %v1110 = vpop.f32.mrb[0].mxu0
      %v1111 = vadd.f32 %v279, %v1110
      %v1112 = vpop.f32.mrb[0].mxu0
      %v1113 = vpop.f32.mrb[0].mxu0
      %v1114 = vadd.f32 %v279, %v1113
      %v1115 = vpop.f32.mrb[0].mxu0
      %1116 = vdwg.mxu0
      %v1117 = vmax.f32 %v727, 0.0
      %v1118 = vmax.f32 %v730, 0.0
      %v1119 = vmax.f32 %v735, 0.0
      %v1120 = vmax.f32 %v738, 0.0
      %v1121 = vmax.f32 %v743, 0.0
      %v1122 = vmax.f32 %v746, 0.0
      %v1123 = vmax.f32 %v751, 0.0
      %v1124 = vmax.f32 %v754, 0.0
      %v1125 = vmax.f32 %v759, 0.0
      %v1126 = vmax.f32 %v762, 0.0
      %v1127 = vmax.f32 %v767, 0.0
      %v1128 = vmax.f32 %v770, 0.0
      %v1129 = vmax.f32 %v775, 0.0
      %v1130 = vmax.f32 %v778, 0.0
      %v1131 = vmax.f32 %v783, 0.0
      %v1132 = vmax.f32 %v786, 0.0
      %v1133 = vmax.f32 %v791, 0.0
      %v1134 = vmax.f32 %v794, 0.0
      %v1135 = vmax.f32 %v799, 0.0
      %v1136 = vmax.f32 %v802, 0.0
      %v1137 = vmax.f32 %v807, 0.0
      %v1138 = vmax.f32 %v810, 0.0
      %v1139 = vmax.f32 %v815, 0.0
      %v1140 = vmax.f32 %v818, 0.0
      %v1141 = vmax.f32 %v823, 0.0
      %v1142 = vmax.f32 %v826, 0.0
      %v1143 = vmax.f32 %v831, 0.0
      %v1144 = vmax.f32 %v834, 0.0
      %v1145 = vmax.f32 %v839, 0.0
      %v1146 = vmax.f32 %v842, 0.0
      %v1147 = vmax.f32 %v847, 0.0
      %v1148 = vmax.f32 %v850, 0.0
      %v1149 = vmax.f32 %v855, 0.0
      %v1150 = vmax.f32 %v858, 0.0
      %v1151 = vmax.f32 %v863, 0.0
      %v1152 = vmax.f32 %v866, 0.0
      %v1153 = vmax.f32 %v871, 0.0
      %v1154 = vmax.f32 %v874, 0.0
      %v1155 = vmax.f32 %v879, 0.0
      %v1156 = vmax.f32 %v882, 0.0
      %v1157 = vmax.f32 %v887, 0.0
      %v1158 = vmax.f32 %v890, 0.0
      %v1159 = vmax.f32 %v895, 0.0
      %v1160 = vmax.f32 %v898, 0.0
      %v1161 = vmax.f32 %v903, 0.0
      %v1162 = vmax.f32 %v906, 0.0
      %v1163 = vmax.f32 %v911, 0.0
      %v1164 = vmax.f32 %v914, 0.0
      %v1165 = vmax.f32 %v919, 0.0
      %v1166 = vmax.f32 %v922, 0.0
      %v1167 = vmax.f32 %v927, 0.0
      %v1168 = vmax.f32 %v930, 0.0
      %v1169 = vmax.f32 %v935, 0.0
      %v1170 = vmax.f32 %v938, 0.0
      %v1171 = vmax.f32 %v943, 0.0
      %v1172 = vmax.f32 %v946, 0.0
      %v1173 = vmax.f32 %v951, 0.0
      %v1174 = vmax.f32 %v954, 0.0
      %v1175 = vmax.f32 %v959, 0.0
      %v1176 = vmax.f32 %v962, 0.0
      %v1177 = vmax.f32 %v967, 0.0
      %v1178 = vmax.f32 %v970, 0.0
      %v1179 = vmax.f32 %v975, 0.0
      %v1180 = vmax.f32 %v978, 0.0
      %v1181 = vmax.f32 %v983, 0.0
      %v1182 = vmax.f32 %v986, 0.0
      %v1183 = vmax.f32 %v991, 0.0
      %v1184 = vmax.f32 %v994, 0.0
      %v1185 = vmax.f32 %v999, 0.0
      %v1186 = vmax.f32 %v1002, 0.0
      %v1187 = vmax.f32 %v1007, 0.0
      %v1188 = vmax.f32 %v1010, 0.0
      %v1189 = vmax.f32 %v1015, 0.0
      %v1190 = vmax.f32 %v1018, 0.0
      %v1191 = vmax.f32 %v1023, 0.0
      %v1192 = vmax.f32 %v1026, 0.0
      %v1193 = vmax.f32 %v1031, 0.0
      %v1194 = vmax.f32 %v1034, 0.0
      %v1195 = vmax.f32 %v1039, 0.0
      %v1196 = vmax.f32 %v1042, 0.0
      %v1197 = vmax.f32 %v1047, 0.0
      %v1198 = vmax.f32 %v1050, 0.0
      %v1199 = vmax.f32 %v1055, 0.0
      %v1200 = vmax.f32 %v1058, 0.0
      %v1201 = vmax.f32 %v1063, 0.0
      %v1202 = vmax.f32 %v1066, 0.0
      %v1203 = vmax.f32 %v1071, 0.0
      %v1204 = vmax.f32 %v1074, 0.0
      %v1205 = vmax.f32 %v1079, 0.0
      %v1206 = vmax.f32 %v1082, 0.0
      %v1207 = vmax.f32 %v1087, 0.0
      %v1208 = vmax.f32 %v1090, 0.0
      %v1209 = vmax.f32 %v1095, 0.0
      %v1210 = vmax.f32 %v1098, 0.0
      %v1211 = vmax.f32 %v1103, 0.0
      %v1212 = vmax.f32 %v1106, 0.0
      %v1213 = vmax.f32 %v1111, 0.0
      %v1214 = vmax.f32 %v1114, 0.0
      %v1313 = vcombine.high %v1117, %v1117
      %v1315 = vunpack.c.l.s4 1983009808
      %v1316 = vunpack.c.0.s8 %v1315
      %v1317 = vlaneseq
      %v1318 = vshrl.u32 %v1317, 7
      %v1319 = vsub.s32 %v1316, %v1318
      %v1320 = vrot.slane %v1117, %v1319
      %v1322 = vunpack.c.l.s4 1983009808
      %v1323 = vunpack.c.0.s8 %v1322
      %v1324 = vlaneseq
      %v1325 = vshrl.u32 %v1324, 7
      %v1326 = vsub.s32 %v1323, %v1325
      %v1327 = vrot.slane %v1313, %v1326
      %v1328 = vcombine.high %v1320, %v1320
      %v1329 = vcombine.high %v1327, %v1327
      %v1330 = vcombine.high %v1118, %v1118
      %v1332 = vunpack.c.l.s4 1983009808
      %v1333 = vunpack.c.0.s8 %v1332
      %v1334 = vlaneseq
      %v1335 = vshrl.u32 %v1334, 7
      %v1336 = vsub.s32 %v1333, %v1335
      %v1337 = vrot.slane %v1118, %v1336
      %v1339 = vunpack.c.l.s4 1983009808
      %v1340 = vunpack.c.0.s8 %v1339
      %v1341 = vlaneseq
      %v1342 = vshrl.u32 %v1341, 7
      %v1343 = vsub.s32 %v1340, %v1342
      %v1344 = vrot.slane %v1330, %v1343
      %v1345 = vcombine.high %v1337, %v1337
      %v1346 = vcombine.high %v1344, %v1344
      %v1347 = vcombine.high %v1119, %v1119
      %v1349 = vunpack.c.l.s4 1983009808
      %v1350 = vunpack.c.0.s8 %v1349
      %v1351 = vlaneseq
      %v1352 = vshrl.u32 %v1351, 7
      %v1353 = vsub.s32 %v1350, %v1352
      %v1354 = vrot.slane %v1119, %v1353
      %v1356 = vunpack.c.l.s4 1983009808
      %v1357 = vunpack.c.0.s8 %v1356
      %v1358 = vlaneseq
      %v1359 = vshrl.u32 %v1358, 7
      %v1360 = vsub.s32 %v1357, %v1359
      %v1361 = vrot.slane %v1347, %v1360
      %v1362 = vcombine.high %v1354, %v1354
      %v1363 = vcombine.high %v1361, %v1361
      %v1364 = vcombine.high %v1120, %v1120
      %v1366 = vunpack.c.l.s4 1983009808
      %v1367 = vunpack.c.0.s8 %v1366
      %v1368 = vlaneseq
      %v1369 = vshrl.u32 %v1368, 7
      %v1370 = vsub.s32 %v1367, %v1369
      %v1371 = vrot.slane %v1120, %v1370
      %v1373 = vunpack.c.l.s4 1983009808
      %v1374 = vunpack.c.0.s8 %v1373
      %v1375 = vlaneseq
      %v1376 = vshrl.u32 %v1375, 7
      %v1377 = vsub.s32 %v1374, %v1376
      %v1378 = vrot.slane %v1364, %v1377
      %v1379 = vcombine.high %v1371, %v1371
      %v1380 = vcombine.high %v1378, %v1378
      %v1381 = vcombine.high %v1121, %v1121
      %v1383 = vunpack.c.l.s4 1983009808
      %v1384 = vunpack.c.0.s8 %v1383
      %v1385 = vlaneseq
      %v1386 = vshrl.u32 %v1385, 7
      %v1387 = vsub.s32 %v1384, %v1386
      %v1388 = vrot.slane %v1121, %v1387
      %v1390 = vunpack.c.l.s4 1983009808
      %v1391 = vunpack.c.0.s8 %v1390
      %v1392 = vlaneseq
      %v1393 = vshrl.u32 %v1392, 7
      %v1394 = vsub.s32 %v1391, %v1393
      %v1395 = vrot.slane %v1381, %v1394
      %v1396 = vcombine.high %v1388, %v1388
      %v1397 = vcombine.high %v1395, %v1395
      %v1398 = vcombine.high %v1122, %v1122
      %v1400 = vunpack.c.l.s4 1983009808
      %v1401 = vunpack.c.0.s8 %v1400
      %v1402 = vlaneseq
      %v1403 = vshrl.u32 %v1402, 7
      %v1404 = vsub.s32 %v1401, %v1403
      %v1405 = vrot.slane %v1122, %v1404
      %v1407 = vunpack.c.l.s4 1983009808
      %v1408 = vunpack.c.0.s8 %v1407
      %v1409 = vlaneseq
      %v1410 = vshrl.u32 %v1409, 7
      %v1411 = vsub.s32 %v1408, %v1410
      %v1412 = vrot.slane %v1398, %v1411
      %v1413 = vcombine.high %v1405, %v1405
      %v1414 = vcombine.high %v1412, %v1412
      %v1415 = vcombine.high %v1123, %v1123
      %v1417 = vunpack.c.l.s4 1983009808
      %v1418 = vunpack.c.0.s8 %v1417
      %v1419 = vlaneseq
      %v1420 = vshrl.u32 %v1419, 7
      %v1421 = vsub.s32 %v1418, %v1420
      %v1422 = vrot.slane %v1123, %v1421
      %v1424 = vunpack.c.l.s4 1983009808
      %v1425 = vunpack.c.0.s8 %v1424
      %v1426 = vlaneseq
      %v1427 = vshrl.u32 %v1426, 7
      %v1428 = vsub.s32 %v1425, %v1427
      %v1429 = vrot.slane %v1415, %v1428
      %v1430 = vcombine.high %v1422, %v1422
      %v1431 = vcombine.high %v1429, %v1429
      %v1432 = vcombine.high %v1124, %v1124
      %v1434 = vunpack.c.l.s4 1983009808
      %v1435 = vunpack.c.0.s8 %v1434
      %v1436 = vlaneseq
      %v1437 = vshrl.u32 %v1436, 7
      %v1438 = vsub.s32 %v1435, %v1437
      %v1439 = vrot.slane %v1124, %v1438
      %v1441 = vunpack.c.l.s4 1983009808
      %v1442 = vunpack.c.0.s8 %v1441
      %v1443 = vlaneseq
      %v1444 = vshrl.u32 %v1443, 7
      %v1445 = vsub.s32 %v1442, %v1444
      %v1446 = vrot.slane %v1432, %v1445
      %v1447 = vcombine.high %v1439, %v1439
      %v1448 = vcombine.high %v1446, %v1446
      %v1449 = vcombine.high %v1125, %v1125
      %v1451 = vunpack.c.l.s4 1983009808
      %v1452 = vunpack.c.0.s8 %v1451
      %v1453 = vlaneseq
      %v1454 = vshrl.u32 %v1453, 7
      %v1455 = vsub.s32 %v1452, %v1454
      %v1456 = vrot.slane %v1125, %v1455
      %v1458 = vunpack.c.l.s4 1983009808
      %v1459 = vunpack.c.0.s8 %v1458
      %v1460 = vlaneseq
      %v1461 = vshrl.u32 %v1460, 7
      %v1462 = vsub.s32 %v1459, %v1461
      %v1463 = vrot.slane %v1449, %v1462
      %v1464 = vcombine.high %v1456, %v1456
      %v1465 = vcombine.high %v1463, %v1463
      %v1466 = vcombine.high %v1126, %v1126
      %v1468 = vunpack.c.l.s4 1983009808
      %v1469 = vunpack.c.0.s8 %v1468
      %v1470 = vlaneseq
      %v1471 = vshrl.u32 %v1470, 7
      %v1472 = vsub.s32 %v1469, %v1471
      %v1473 = vrot.slane %v1126, %v1472
      %v1475 = vunpack.c.l.s4 1983009808
      %v1476 = vunpack.c.0.s8 %v1475
      %v1477 = vlaneseq
      %v1478 = vshrl.u32 %v1477, 7
      %v1479 = vsub.s32 %v1476, %v1478
      %v1480 = vrot.slane %v1466, %v1479
      %v1481 = vcombine.high %v1473, %v1473
      %v1482 = vcombine.high %v1480, %v1480
      %v1483 = vcombine.high %v1127, %v1127
      %v1485 = vunpack.c.l.s4 1983009808
      %v1486 = vunpack.c.0.s8 %v1485
      %v1487 = vlaneseq
      %v1488 = vshrl.u32 %v1487, 7
      %v1489 = vsub.s32 %v1486, %v1488
      %v1490 = vrot.slane %v1127, %v1489
      %v1492 = vunpack.c.l.s4 1983009808
      %v1493 = vunpack.c.0.s8 %v1492
      %v1494 = vlaneseq
      %v1495 = vshrl.u32 %v1494, 7
      %v1496 = vsub.s32 %v1493, %v1495
      %v1497 = vrot.slane %v1483, %v1496
      %v1498 = vcombine.high %v1490, %v1490
      %v1499 = vcombine.high %v1497, %v1497
      %v1500 = vcombine.high %v1128, %v1128
      %v1502 = vunpack.c.l.s4 1983009808
      %v1503 = vunpack.c.0.s8 %v1502
      %v1504 = vlaneseq
      %v1505 = vshrl.u32 %v1504, 7
      %v1506 = vsub.s32 %v1503, %v1505
      %v1507 = vrot.slane %v1128, %v1506
      %v1509 = vunpack.c.l.s4 1983009808
      %v1510 = vunpack.c.0.s8 %v1509
      %v1511 = vlaneseq
      %v1512 = vshrl.u32 %v1511, 7
      %v1513 = vsub.s32 %v1510, %v1512
      %v1514 = vrot.slane %v1500, %v1513
      %v1515 = vcombine.high %v1507, %v1507
      %v1516 = vcombine.high %v1514, %v1514
      %v1517 = vcombine.high %v1129, %v1129
      %v1519 = vunpack.c.l.s4 1983009808
      %v1520 = vunpack.c.0.s8 %v1519
      %v1521 = vlaneseq
      %v1522 = vshrl.u32 %v1521, 7
      %v1523 = vsub.s32 %v1520, %v1522
      %v1524 = vrot.slane %v1129, %v1523
      %v1526 = vunpack.c.l.s4 1983009808
      %v1527 = vunpack.c.0.s8 %v1526
      %v1528 = vlaneseq
      %v1529 = vshrl.u32 %v1528, 7
      %v1530 = vsub.s32 %v1527, %v1529
      %v1531 = vrot.slane %v1517, %v1530
      %v1532 = vcombine.high %v1524, %v1524
      %v1533 = vcombine.high %v1531, %v1531
      %v1534 = vcombine.high %v1130, %v1130
      %v1536 = vunpack.c.l.s4 1983009808
      %v1537 = vunpack.c.0.s8 %v1536
      %v1538 = vlaneseq
      %v1539 = vshrl.u32 %v1538, 7
      %v1540 = vsub.s32 %v1537, %v1539
      %v1541 = vrot.slane %v1130, %v1540
      %v1543 = vunpack.c.l.s4 1983009808
      %v1544 = vunpack.c.0.s8 %v1543
      %v1545 = vlaneseq
      %v1546 = vshrl.u32 %v1545, 7
      %v1547 = vsub.s32 %v1544, %v1546
      %v1548 = vrot.slane %v1534, %v1547
      %v1549 = vcombine.high %v1541, %v1541
      %v1550 = vcombine.high %v1548, %v1548
      %v1551 = vcombine.high %v1131, %v1131
      %v1553 = vunpack.c.l.s4 1983009808
      %v1554 = vunpack.c.0.s8 %v1553
      %v1555 = vlaneseq
      %v1556 = vshrl.u32 %v1555, 7
      %v1557 = vsub.s32 %v1554, %v1556
      %v1558 = vrot.slane %v1131, %v1557
      %v1560 = vunpack.c.l.s4 1983009808
      %v1561 = vunpack.c.0.s8 %v1560
      %v1562 = vlaneseq
      %v1563 = vshrl.u32 %v1562, 7
      %v1564 = vsub.s32 %v1561, %v1563
      %v1565 = vrot.slane %v1551, %v1564
      %v1566 = vcombine.high %v1558, %v1558
      %v1567 = vcombine.high %v1565, %v1565
      %v1568 = vcombine.high %v1132, %v1132
      %v1570 = vunpack.c.l.s4 1983009808
      %v1571 = vunpack.c.0.s8 %v1570
      %v1572 = vlaneseq
      %v1573 = vshrl.u32 %v1572, 7
      %v1574 = vsub.s32 %v1571, %v1573
      %v1575 = vrot.slane %v1132, %v1574
      %v1577 = vunpack.c.l.s4 1983009808
      %v1578 = vunpack.c.0.s8 %v1577
      %v1579 = vlaneseq
      %v1580 = vshrl.u32 %v1579, 7
      %v1581 = vsub.s32 %v1578, %v1580
      %v1582 = vrot.slane %v1568, %v1581
      %v1583 = vcombine.high %v1575, %v1575
      %v1584 = vcombine.high %v1582, %v1582
      %v1585 = vcombine.high %v1133, %v1133
      %v1587 = vunpack.c.l.s4 1983009808
      %v1588 = vunpack.c.0.s8 %v1587
      %v1589 = vlaneseq
      %v1590 = vshrl.u32 %v1589, 7
      %v1591 = vsub.s32 %v1588, %v1590
      %v1592 = vrot.slane %v1133, %v1591
      %v1594 = vunpack.c.l.s4 1983009808
      %v1595 = vunpack.c.0.s8 %v1594
      %v1596 = vlaneseq
      %v1597 = vshrl.u32 %v1596, 7
      %v1598 = vsub.s32 %v1595, %v1597
      %v1599 = vrot.slane %v1585, %v1598
      %v1600 = vcombine.high %v1592, %v1592
      %v1601 = vcombine.high %v1599, %v1599
      %v1602 = vcombine.high %v1134, %v1134
      %v1604 = vunpack.c.l.s4 1983009808
      %v1605 = vunpack.c.0.s8 %v1604
      %v1606 = vlaneseq
      %v1607 = vshrl.u32 %v1606, 7
      %v1608 = vsub.s32 %v1605, %v1607
      %v1609 = vrot.slane %v1134, %v1608
      %v1611 = vunpack.c.l.s4 1983009808
      %v1612 = vunpack.c.0.s8 %v1611
      %v1613 = vlaneseq
      %v1614 = vshrl.u32 %v1613, 7
      %v1615 = vsub.s32 %v1612, %v1614
      %v1616 = vrot.slane %v1602, %v1615
      %v1617 = vcombine.high %v1609, %v1609
      %v1618 = vcombine.high %v1616, %v1616
      %v1619 = vcombine.high %v1135, %v1135
      %v1621 = vunpack.c.l.s4 1983009808
      %v1622 = vunpack.c.0.s8 %v1621
      %v1623 = vlaneseq
      %v1624 = vshrl.u32 %v1623, 7
      %v1625 = vsub.s32 %v1622, %v1624
      %v1626 = vrot.slane %v1135, %v1625
      %v1628 = vunpack.c.l.s4 1983009808
      %v1629 = vunpack.c.0.s8 %v1628
      %v1630 = vlaneseq
      %v1631 = vshrl.u32 %v1630, 7
      %v1632 = vsub.s32 %v1629, %v1631
      %v1633 = vrot.slane %v1619, %v1632
      %v1634 = vcombine.high %v1626, %v1626
      %v1635 = vcombine.high %v1633, %v1633
      %v1636 = vcombine.high %v1136, %v1136
      %v1638 = vunpack.c.l.s4 1983009808
      %v1639 = vunpack.c.0.s8 %v1638
      %v1640 = vlaneseq
      %v1641 = vshrl.u32 %v1640, 7
      %v1642 = vsub.s32 %v1639, %v1641
      %v1643 = vrot.slane %v1136, %v1642
      %v1645 = vunpack.c.l.s4 1983009808
      %v1646 = vunpack.c.0.s8 %v1645
      %v1647 = vlaneseq
      %v1648 = vshrl.u32 %v1647, 7
      %v1649 = vsub.s32 %v1646, %v1648
      %v1650 = vrot.slane %v1636, %v1649
      %v1651 = vcombine.high %v1643, %v1643
      %v1652 = vcombine.high %v1650, %v1650
      %v1653 = vcombine.high %v1137, %v1137
      %v1655 = vunpack.c.l.s4 1983009808
      %v1656 = vunpack.c.0.s8 %v1655
      %v1657 = vlaneseq
      %v1658 = vshrl.u32 %v1657, 7
      %v1659 = vsub.s32 %v1656, %v1658
      %v1660 = vrot.slane %v1137, %v1659
      %v1662 = vunpack.c.l.s4 1983009808
      %v1663 = vunpack.c.0.s8 %v1662
      %v1664 = vlaneseq
      %v1665 = vshrl.u32 %v1664, 7
      %v1666 = vsub.s32 %v1663, %v1665
      %v1667 = vrot.slane %v1653, %v1666
      %v1668 = vcombine.high %v1660, %v1660
      %v1669 = vcombine.high %v1667, %v1667
      %v1670 = vcombine.high %v1138, %v1138
      %v1672 = vunpack.c.l.s4 1983009808
      %v1673 = vunpack.c.0.s8 %v1672
      %v1674 = vlaneseq
      %v1675 = vshrl.u32 %v1674, 7
      %v1676 = vsub.s32 %v1673, %v1675
      %v1677 = vrot.slane %v1138, %v1676
      %v1679 = vunpack.c.l.s4 1983009808
      %v1680 = vunpack.c.0.s8 %v1679
      %v1681 = vlaneseq
      %v1682 = vshrl.u32 %v1681, 7
      %v1683 = vsub.s32 %v1680, %v1682
      %v1684 = vrot.slane %v1670, %v1683
      %v1685 = vcombine.high %v1677, %v1677
      %v1686 = vcombine.high %v1684, %v1684
      %v1687 = vcombine.high %v1139, %v1139
      %v1689 = vunpack.c.l.s4 1983009808
      %v1690 = vunpack.c.0.s8 %v1689
      %v1691 = vlaneseq
      %v1692 = vshrl.u32 %v1691, 7
      %v1693 = vsub.s32 %v1690, %v1692
      %v1694 = vrot.slane %v1139, %v1693
      %v1696 = vunpack.c.l.s4 1983009808
      %v1697 = vunpack.c.0.s8 %v1696
      %v1698 = vlaneseq
      %v1699 = vshrl.u32 %v1698, 7
      %v1700 = vsub.s32 %v1697, %v1699
      %v1701 = vrot.slane %v1687, %v1700
      %v1702 = vcombine.high %v1694, %v1694
      %v1703 = vcombine.high %v1701, %v1701
      %v1704 = vcombine.high %v1140, %v1140
      %v1706 = vunpack.c.l.s4 1983009808
      %v1707 = vunpack.c.0.s8 %v1706
      %v1708 = vlaneseq
      %v1709 = vshrl.u32 %v1708, 7
      %v1710 = vsub.s32 %v1707, %v1709
      %v1711 = vrot.slane %v1140, %v1710
      %v1713 = vunpack.c.l.s4 1983009808
      %v1714 = vunpack.c.0.s8 %v1713
      %v1715 = vlaneseq
      %v1716 = vshrl.u32 %v1715, 7
      %v1717 = vsub.s32 %v1714, %v1716
      %v1718 = vrot.slane %v1704, %v1717
      %v1719 = vcombine.high %v1711, %v1711
      %v1720 = vcombine.high %v1718, %v1718
      %v1721 = vcombine.high %v1141, %v1141
      %v1723 = vunpack.c.l.s4 1983009808
      %v1724 = vunpack.c.0.s8 %v1723
      %v1725 = vlaneseq
      %v1726 = vshrl.u32 %v1725, 7
      %v1727 = vsub.s32 %v1724, %v1726
      %v1728 = vrot.slane %v1141, %v1727
      %v1730 = vunpack.c.l.s4 1983009808
      %v1731 = vunpack.c.0.s8 %v1730
      %v1732 = vlaneseq
      %v1733 = vshrl.u32 %v1732, 7
      %v1734 = vsub.s32 %v1731, %v1733
      %v1735 = vrot.slane %v1721, %v1734
      %v1736 = vcombine.high %v1728, %v1728
      %v1737 = vcombine.high %v1735, %v1735
      %v1738 = vcombine.high %v1142, %v1142
      %v1740 = vunpack.c.l.s4 1983009808
      %v1741 = vunpack.c.0.s8 %v1740
      %v1742 = vlaneseq
      %v1743 = vshrl.u32 %v1742, 7
      %v1744 = vsub.s32 %v1741, %v1743
      %v1745 = vrot.slane %v1142, %v1744
      %v1747 = vunpack.c.l.s4 1983009808
      %v1748 = vunpack.c.0.s8 %v1747
      %v1749 = vlaneseq
      %v1750 = vshrl.u32 %v1749, 7
      %v1751 = vsub.s32 %v1748, %v1750
      %v1752 = vrot.slane %v1738, %v1751
      %v1753 = vcombine.high %v1745, %v1745
      %v1754 = vcombine.high %v1752, %v1752
      %v1755 = vcombine.high %v1143, %v1143
      %v1757 = vunpack.c.l.s4 1983009808
      %v1758 = vunpack.c.0.s8 %v1757
      %v1759 = vlaneseq
      %v1760 = vshrl.u32 %v1759, 7
      %v1761 = vsub.s32 %v1758, %v1760
      %v1762 = vrot.slane %v1143, %v1761
      %v1764 = vunpack.c.l.s4 1983009808
      %v1765 = vunpack.c.0.s8 %v1764
      %v1766 = vlaneseq
      %v1767 = vshrl.u32 %v1766, 7
      %v1768 = vsub.s32 %v1765, %v1767
      %v1769 = vrot.slane %v1755, %v1768
      %v1770 = vcombine.high %v1762, %v1762
      %v1771 = vcombine.high %v1769, %v1769
      %v1772 = vcombine.high %v1144, %v1144
      %v1774 = vunpack.c.l.s4 1983009808
      %v1775 = vunpack.c.0.s8 %v1774
      %v1776 = vlaneseq
      %v1777 = vshrl.u32 %v1776, 7
      %v1778 = vsub.s32 %v1775, %v1777
      %v1779 = vrot.slane %v1144, %v1778
      %v1781 = vunpack.c.l.s4 1983009808
      %v1782 = vunpack.c.0.s8 %v1781
      %v1783 = vlaneseq
      %v1784 = vshrl.u32 %v1783, 7
      %v1785 = vsub.s32 %v1782, %v1784
      %v1786 = vrot.slane %v1772, %v1785
      %v1787 = vcombine.high %v1779, %v1779
      %v1788 = vcombine.high %v1786, %v1786
      %v1789 = vcombine.high %v1145, %v1145
      %v1791 = vunpack.c.l.s4 1983009808
      %v1792 = vunpack.c.0.s8 %v1791
      %v1793 = vlaneseq
      %v1794 = vshrl.u32 %v1793, 7
      %v1795 = vsub.s32 %v1792, %v1794
      %v1796 = vrot.slane %v1145, %v1795
      %v1798 = vunpack.c.l.s4 1983009808
      %v1799 = vunpack.c.0.s8 %v1798
      %v1800 = vlaneseq
      %v1801 = vshrl.u32 %v1800, 7
      %v1802 = vsub.s32 %v1799, %v1801
      %v1803 = vrot.slane %v1789, %v1802
      %v1804 = vcombine.high %v1796, %v1796
      %v1805 = vcombine.high %v1803, %v1803
      %v1806 = vcombine.high %v1146, %v1146
      %v1808 = vunpack.c.l.s4 1983009808
      %v1809 = vunpack.c.0.s8 %v1808
      %v1810 = vlaneseq
      %v1811 = vshrl.u32 %v1810, 7
      %v1812 = vsub.s32 %v1809, %v1811
      %v1813 = vrot.slane %v1146, %v1812
      %v1815 = vunpack.c.l.s4 1983009808
      %v1816 = vunpack.c.0.s8 %v1815
      %v1817 = vlaneseq
      %v1818 = vshrl.u32 %v1817, 7
      %v1819 = vsub.s32 %v1816, %v1818
      %v1820 = vrot.slane %v1806, %v1819
      %v1821 = vcombine.high %v1813, %v1813
      %v1822 = vcombine.high %v1820, %v1820
      %v1823 = vcombine.high %v1147, %v1147
      %v1825 = vunpack.c.l.s4 1983009808
      %v1826 = vunpack.c.0.s8 %v1825
      %v1827 = vlaneseq
      %v1828 = vshrl.u32 %v1827, 7
      %v1829 = vsub.s32 %v1826, %v1828
      %v1830 = vrot.slane %v1147, %v1829
      %v1832 = vunpack.c.l.s4 1983009808
      %v1833 = vunpack.c.0.s8 %v1832
      %v1834 = vlaneseq
      %v1835 = vshrl.u32 %v1834, 7
      %v1836 = vsub.s32 %v1833, %v1835
      %v1837 = vrot.slane %v1823, %v1836
      %v1838 = vcombine.high %v1830, %v1830
      %v1839 = vcombine.high %v1837, %v1837
      %v1840 = vcombine.high %v1148, %v1148
      %v1842 = vunpack.c.l.s4 1983009808
      %v1843 = vunpack.c.0.s8 %v1842
      %v1844 = vlaneseq
      %v1845 = vshrl.u32 %v1844, 7
      %v1846 = vsub.s32 %v1843, %v1845
      %v1847 = vrot.slane %v1148, %v1846
      %v1849 = vunpack.c.l.s4 1983009808
      %v1850 = vunpack.c.0.s8 %v1849
      %v1851 = vlaneseq
      %v1852 = vshrl.u32 %v1851, 7
      %v1853 = vsub.s32 %v1850, %v1852
      %v1854 = vrot.slane %v1840, %v1853
      %v1855 = vcombine.high %v1847, %v1847
      %v1856 = vcombine.high %v1854, %v1854
      %v1857 = vcombine.high %v1149, %v1149
      %v1859 = vunpack.c.l.s4 1983009808
      %v1860 = vunpack.c.0.s8 %v1859
      %v1861 = vlaneseq
      %v1862 = vshrl.u32 %v1861, 7
      %v1863 = vsub.s32 %v1860, %v1862
      %v1864 = vrot.slane %v1149, %v1863
      %v1866 = vunpack.c.l.s4 1983009808
      %v1867 = vunpack.c.0.s8 %v1866
      %v1868 = vlaneseq
      %v1869 = vshrl.u32 %v1868, 7
      %v1870 = vsub.s32 %v1867, %v1869
      %v1871 = vrot.slane %v1857, %v1870
      %v1872 = vcombine.high %v1864, %v1864
      %v1873 = vcombine.high %v1871, %v1871
      %v1874 = vcombine.high %v1150, %v1150
      %v1876 = vunpack.c.l.s4 1983009808
      %v1877 = vunpack.c.0.s8 %v1876
      %v1878 = vlaneseq
      %v1879 = vshrl.u32 %v1878, 7
      %v1880 = vsub.s32 %v1877, %v1879
      %v1881 = vrot.slane %v1150, %v1880
      %v1883 = vunpack.c.l.s4 1983009808
      %v1884 = vunpack.c.0.s8 %v1883
      %v1885 = vlaneseq
      %v1886 = vshrl.u32 %v1885, 7
      %v1887 = vsub.s32 %v1884, %v1886
      %v1888 = vrot.slane %v1874, %v1887
      %v1889 = vcombine.high %v1881, %v1881
      %v1890 = vcombine.high %v1888, %v1888
      %v1891 = vcombine.high %v1151, %v1151
      %v1893 = vunpack.c.l.s4 1983009808
      %v1894 = vunpack.c.0.s8 %v1893
      %v1895 = vlaneseq
      %v1896 = vshrl.u32 %v1895, 7
      %v1897 = vsub.s32 %v1894, %v1896
      %v1898 = vrot.slane %v1151, %v1897
      %v1900 = vunpack.c.l.s4 1983009808
      %v1901 = vunpack.c.0.s8 %v1900
      %v1902 = vlaneseq
      %v1903 = vshrl.u32 %v1902, 7
      %v1904 = vsub.s32 %v1901, %v1903
      %v1905 = vrot.slane %v1891, %v1904
      %v1906 = vcombine.high %v1898, %v1898
      %v1907 = vcombine.high %v1905, %v1905
      %v1908 = vcombine.high %v1152, %v1152
      %v1910 = vunpack.c.l.s4 1983009808
      %v1911 = vunpack.c.0.s8 %v1910
      %v1912 = vlaneseq
      %v1913 = vshrl.u32 %v1912, 7
      %v1914 = vsub.s32 %v1911, %v1913
      %v1915 = vrot.slane %v1152, %v1914
      %v1917 = vunpack.c.l.s4 1983009808
      %v1918 = vunpack.c.0.s8 %v1917
      %v1919 = vlaneseq
      %v1920 = vshrl.u32 %v1919, 7
      %v1921 = vsub.s32 %v1918, %v1920
      %v1922 = vrot.slane %v1908, %v1921
      %v1923 = vcombine.high %v1915, %v1915
      %v1924 = vcombine.high %v1922, %v1922
      %v1925 = vcombine.high %v1153, %v1153
      %v1927 = vunpack.c.l.s4 1983009808
      %v1928 = vunpack.c.0.s8 %v1927
      %v1929 = vlaneseq
      %v1930 = vshrl.u32 %v1929, 7
      %v1931 = vsub.s32 %v1928, %v1930
      %v1932 = vrot.slane %v1153, %v1931
      %v1934 = vunpack.c.l.s4 1983009808
      %v1935 = vunpack.c.0.s8 %v1934
      %v1936 = vlaneseq
      %v1937 = vshrl.u32 %v1936, 7
      %v1938 = vsub.s32 %v1935, %v1937
      %v1939 = vrot.slane %v1925, %v1938
      %v1940 = vcombine.high %v1932, %v1932
      %v1941 = vcombine.high %v1939, %v1939
      %v1942 = vcombine.high %v1154, %v1154
      %v1944 = vunpack.c.l.s4 1983009808
      %v1945 = vunpack.c.0.s8 %v1944
      %v1946 = vlaneseq
      %v1947 = vshrl.u32 %v1946, 7
      %v1948 = vsub.s32 %v1945, %v1947
      %v1949 = vrot.slane %v1154, %v1948
      %v1951 = vunpack.c.l.s4 1983009808
      %v1952 = vunpack.c.0.s8 %v1951
      %v1953 = vlaneseq
      %v1954 = vshrl.u32 %v1953, 7
      %v1955 = vsub.s32 %v1952, %v1954
      %v1956 = vrot.slane %v1942, %v1955
      %v1957 = vcombine.high %v1949, %v1949
      %v1958 = vcombine.high %v1956, %v1956
      %v1959 = vcombine.high %v1155, %v1155
      %v1961 = vunpack.c.l.s4 1983009808
      %v1962 = vunpack.c.0.s8 %v1961
      %v1963 = vlaneseq
      %v1964 = vshrl.u32 %v1963, 7
      %v1965 = vsub.s32 %v1962, %v1964
      %v1966 = vrot.slane %v1155, %v1965
      %v1968 = vunpack.c.l.s4 1983009808
      %v1969 = vunpack.c.0.s8 %v1968
      %v1970 = vlaneseq
      %v1971 = vshrl.u32 %v1970, 7
      %v1972 = vsub.s32 %v1969, %v1971
      %v1973 = vrot.slane %v1959, %v1972
      %v1974 = vcombine.high %v1966, %v1966
      %v1975 = vcombine.high %v1973, %v1973
      %v1976 = vcombine.high %v1156, %v1156
      %v1978 = vunpack.c.l.s4 1983009808
      %v1979 = vunpack.c.0.s8 %v1978
      %v1980 = vlaneseq
      %v1981 = vshrl.u32 %v1980, 7
      %v1982 = vsub.s32 %v1979, %v1981
      %v1983 = vrot.slane %v1156, %v1982
      %v1985 = vunpack.c.l.s4 1983009808
      %v1986 = vunpack.c.0.s8 %v1985
      %v1987 = vlaneseq
      %v1988 = vshrl.u32 %v1987, 7
      %v1989 = vsub.s32 %v1986, %v1988
      %v1990 = vrot.slane %v1976, %v1989
      %v1991 = vcombine.high %v1983, %v1983
      %v1992 = vcombine.high %v1990, %v1990
      %v1993 = vcombine.high %v1157, %v1157
      %v1995 = vunpack.c.l.s4 1983009808
      %v1996 = vunpack.c.0.s8 %v1995
      %v1997 = vlaneseq
      %v1998 = vshrl.u32 %v1997, 7
      %v1999 = vsub.s32 %v1996, %v1998
      %v2000 = vrot.slane %v1157, %v1999
      %v2002 = vunpack.c.l.s4 1983009808
      %v2003 = vunpack.c.0.s8 %v2002
      %v2004 = vlaneseq
      %v2005 = vshrl.u32 %v2004, 7
      %v2006 = vsub.s32 %v2003, %v2005
      %v2007 = vrot.slane %v1993, %v2006
      %v2008 = vcombine.high %v2000, %v2000
      %v2009 = vcombine.high %v2007, %v2007
      %v2010 = vcombine.high %v1158, %v1158
      %v2012 = vunpack.c.l.s4 1983009808
      %v2013 = vunpack.c.0.s8 %v2012
      %v2014 = vlaneseq
      %v2015 = vshrl.u32 %v2014, 7
      %v2016 = vsub.s32 %v2013, %v2015
      %v2017 = vrot.slane %v1158, %v2016
      %v2019 = vunpack.c.l.s4 1983009808
      %v2020 = vunpack.c.0.s8 %v2019
      %v2021 = vlaneseq
      %v2022 = vshrl.u32 %v2021, 7
      %v2023 = vsub.s32 %v2020, %v2022
      %v2024 = vrot.slane %v2010, %v2023
      %v2025 = vcombine.high %v2017, %v2017
      %v2026 = vcombine.high %v2024, %v2024
      %v2027 = vcombine.high %v1159, %v1159
      %v2029 = vunpack.c.l.s4 1983009808
      %v2030 = vunpack.c.0.s8 %v2029
      %v2031 = vlaneseq
      %v2032 = vshrl.u32 %v2031, 7
      %v2033 = vsub.s32 %v2030, %v2032
      %v2034 = vrot.slane %v1159, %v2033
      %v2036 = vunpack.c.l.s4 1983009808
      %v2037 = vunpack.c.0.s8 %v2036
      %v2038 = vlaneseq
      %v2039 = vshrl.u32 %v2038, 7
      %v2040 = vsub.s32 %v2037, %v2039
      %v2041 = vrot.slane %v2027, %v2040
      %v2042 = vcombine.high %v2034, %v2034
      %v2043 = vcombine.high %v2041, %v2041
      %v2044 = vcombine.high %v1160, %v1160
      %v2046 = vunpack.c.l.s4 1983009808
      %v2047 = vunpack.c.0.s8 %v2046
      %v2048 = vlaneseq
      %v2049 = vshrl.u32 %v2048, 7
      %v2050 = vsub.s32 %v2047, %v2049
      %v2051 = vrot.slane %v1160, %v2050
      %v2053 = vunpack.c.l.s4 1983009808
      %v2054 = vunpack.c.0.s8 %v2053
      %v2055 = vlaneseq
      %v2056 = vshrl.u32 %v2055, 7
      %v2057 = vsub.s32 %v2054, %v2056
      %v2058 = vrot.slane %v2044, %v2057
      %v2059 = vcombine.high %v2051, %v2051
      %v2060 = vcombine.high %v2058, %v2058
      %v2061 = vcombine.high %v1161, %v1161
      %v2063 = vunpack.c.l.s4 1983009808
      %v2064 = vunpack.c.0.s8 %v2063
      %v2065 = vlaneseq
      %v2066 = vshrl.u32 %v2065, 7
      %v2067 = vsub.s32 %v2064, %v2066
      %v2068 = vrot.slane %v1161, %v2067
      %v2070 = vunpack.c.l.s4 1983009808
      %v2071 = vunpack.c.0.s8 %v2070
      %v2072 = vlaneseq
      %v2073 = vshrl.u32 %v2072, 7
      %v2074 = vsub.s32 %v2071, %v2073
      %v2075 = vrot.slane %v2061, %v2074
      %v2076 = vcombine.high %v2068, %v2068
      %v2077 = vcombine.high %v2075, %v2075
      %v2078 = vcombine.high %v1162, %v1162
      %v2080 = vunpack.c.l.s4 1983009808
      %v2081 = vunpack.c.0.s8 %v2080
      %v2082 = vlaneseq
      %v2083 = vshrl.u32 %v2082, 7
      %v2084 = vsub.s32 %v2081, %v2083
      %v2085 = vrot.slane %v1162, %v2084
      %v2087 = vunpack.c.l.s4 1983009808
      %v2088 = vunpack.c.0.s8 %v2087
      %v2089 = vlaneseq
      %v2090 = vshrl.u32 %v2089, 7
      %v2091 = vsub.s32 %v2088, %v2090
      %v2092 = vrot.slane %v2078, %v2091
      %v2093 = vcombine.high %v2085, %v2085
      %v2094 = vcombine.high %v2092, %v2092
      %v2095 = vcombine.high %v1163, %v1163
      %v2097 = vunpack.c.l.s4 1983009808
      %v2098 = vunpack.c.0.s8 %v2097
      %v2099 = vlaneseq
      %v2100 = vshrl.u32 %v2099, 7
      %v2101 = vsub.s32 %v2098, %v2100
      %v2102 = vrot.slane %v1163, %v2101
      %v2104 = vunpack.c.l.s4 1983009808
      %v2105 = vunpack.c.0.s8 %v2104
      %v2106 = vlaneseq
      %v2107 = vshrl.u32 %v2106, 7
      %v2108 = vsub.s32 %v2105, %v2107
      %v2109 = vrot.slane %v2095, %v2108
      %v2110 = vcombine.high %v2102, %v2102
      %v2111 = vcombine.high %v2109, %v2109
      %v2112 = vcombine.high %v1164, %v1164
      %v2114 = vunpack.c.l.s4 1983009808
      %v2115 = vunpack.c.0.s8 %v2114
      %v2116 = vlaneseq
      %v2117 = vshrl.u32 %v2116, 7
      %v2118 = vsub.s32 %v2115, %v2117
      %v2119 = vrot.slane %v1164, %v2118
      %v2121 = vunpack.c.l.s4 1983009808
      %v2122 = vunpack.c.0.s8 %v2121
      %v2123 = vlaneseq
      %v2124 = vshrl.u32 %v2123, 7
      %v2125 = vsub.s32 %v2122, %v2124
      %v2126 = vrot.slane %v2112, %v2125
      %v2127 = vcombine.high %v2119, %v2119
      %v2128 = vcombine.high %v2126, %v2126
      %v2129 = vcombine.high %v1165, %v1165
      %v2131 = vunpack.c.l.s4 1983009808
      %v2132 = vunpack.c.0.s8 %v2131
      %v2133 = vlaneseq
      %v2134 = vshrl.u32 %v2133, 7
      %v2135 = vsub.s32 %v2132, %v2134
      %v2136 = vrot.slane %v1165, %v2135
      %v2138 = vunpack.c.l.s4 1983009808
      %v2139 = vunpack.c.0.s8 %v2138
      %v2140 = vlaneseq
      %v2141 = vshrl.u32 %v2140, 7
      %v2142 = vsub.s32 %v2139, %v2141
      %v2143 = vrot.slane %v2129, %v2142
      %v2144 = vcombine.high %v2136, %v2136
      %v2145 = vcombine.high %v2143, %v2143
      %v2146 = vcombine.high %v1166, %v1166
      %v2148 = vunpack.c.l.s4 1983009808
      %v2149 = vunpack.c.0.s8 %v2148
      %v2150 = vlaneseq
      %v2151 = vshrl.u32 %v2150, 7
      %v2152 = vsub.s32 %v2149, %v2151
      %v2153 = vrot.slane %v1166, %v2152
      %v2155 = vunpack.c.l.s4 1983009808
      %v2156 = vunpack.c.0.s8 %v2155
      %v2157 = vlaneseq
      %v2158 = vshrl.u32 %v2157, 7
      %v2159 = vsub.s32 %v2156, %v2158
      %v2160 = vrot.slane %v2146, %v2159
      %v2161 = vcombine.high %v2153, %v2153
      %v2162 = vcombine.high %v2160, %v2160
      %v2163 = vcombine.high %v1167, %v1167
      %v2165 = vunpack.c.l.s4 1983009808
      %v2166 = vunpack.c.0.s8 %v2165
      %v2167 = vlaneseq
      %v2168 = vshrl.u32 %v2167, 7
      %v2169 = vsub.s32 %v2166, %v2168
      %v2170 = vrot.slane %v1167, %v2169
      %v2172 = vunpack.c.l.s4 1983009808
      %v2173 = vunpack.c.0.s8 %v2172
      %v2174 = vlaneseq
      %v2175 = vshrl.u32 %v2174, 7
      %v2176 = vsub.s32 %v2173, %v2175
      %v2177 = vrot.slane %v2163, %v2176
      %v2178 = vcombine.high %v2170, %v2170
      %v2179 = vcombine.high %v2177, %v2177
      %v2180 = vcombine.high %v1168, %v1168
      %v2182 = vunpack.c.l.s4 1983009808
      %v2183 = vunpack.c.0.s8 %v2182
      %v2184 = vlaneseq
      %v2185 = vshrl.u32 %v2184, 7
      %v2186 = vsub.s32 %v2183, %v2185
      %v2187 = vrot.slane %v1168, %v2186
      %v2189 = vunpack.c.l.s4 1983009808
      %v2190 = vunpack.c.0.s8 %v2189
      %v2191 = vlaneseq
      %v2192 = vshrl.u32 %v2191, 7
      %v2193 = vsub.s32 %v2190, %v2192
      %v2194 = vrot.slane %v2180, %v2193
      %v2195 = vcombine.high %v2187, %v2187
      %v2196 = vcombine.high %v2194, %v2194
      %v2197 = vcombine.high %v1169, %v1169
      %v2199 = vunpack.c.l.s4 1983009808
      %v2200 = vunpack.c.0.s8 %v2199
      %v2201 = vlaneseq
      %v2202 = vshrl.u32 %v2201, 7
      %v2203 = vsub.s32 %v2200, %v2202
      %v2204 = vrot.slane %v1169, %v2203
      %v2206 = vunpack.c.l.s4 1983009808
      %v2207 = vunpack.c.0.s8 %v2206
      %v2208 = vlaneseq
      %v2209 = vshrl.u32 %v2208, 7
      %v2210 = vsub.s32 %v2207, %v2209
      %v2211 = vrot.slane %v2197, %v2210
      %v2212 = vcombine.high %v2204, %v2204
      %v2213 = vcombine.high %v2211, %v2211
      %v2214 = vcombine.high %v1170, %v1170
      %v2216 = vunpack.c.l.s4 1983009808
      %v2217 = vunpack.c.0.s8 %v2216
      %v2218 = vlaneseq
      %v2219 = vshrl.u32 %v2218, 7
      %v2220 = vsub.s32 %v2217, %v2219
      %v2221 = vrot.slane %v1170, %v2220
      %v2223 = vunpack.c.l.s4 1983009808
      %v2224 = vunpack.c.0.s8 %v2223
      %v2225 = vlaneseq
      %v2226 = vshrl.u32 %v2225, 7
      %v2227 = vsub.s32 %v2224, %v2226
      %v2228 = vrot.slane %v2214, %v2227
      %v2229 = vcombine.high %v2221, %v2221
      %v2230 = vcombine.high %v2228, %v2228
      %v2231 = vcombine.high %v1171, %v1171
      %v2233 = vunpack.c.l.s4 1983009808
      %v2234 = vunpack.c.0.s8 %v2233
      %v2235 = vlaneseq
      %v2236 = vshrl.u32 %v2235, 7
      %v2237 = vsub.s32 %v2234, %v2236
      %v2238 = vrot.slane %v1171, %v2237
      %v2240 = vunpack.c.l.s4 1983009808
      %v2241 = vunpack.c.0.s8 %v2240
      %v2242 = vlaneseq
      %v2243 = vshrl.u32 %v2242, 7
      %v2244 = vsub.s32 %v2241, %v2243
      %v2245 = vrot.slane %v2231, %v2244
      %v2246 = vcombine.high %v2238, %v2238
      %v2247 = vcombine.high %v2245, %v2245
      %v2248 = vcombine.high %v1172, %v1172
      %v2250 = vunpack.c.l.s4 1983009808
      %v2251 = vunpack.c.0.s8 %v2250
      %v2252 = vlaneseq
      %v2253 = vshrl.u32 %v2252, 7
      %v2254 = vsub.s32 %v2251, %v2253
      %v2255 = vrot.slane %v1172, %v2254
      %v2257 = vunpack.c.l.s4 1983009808
      %v2258 = vunpack.c.0.s8 %v2257
      %v2259 = vlaneseq
      %v2260 = vshrl.u32 %v2259, 7
      %v2261 = vsub.s32 %v2258, %v2260
      %v2262 = vrot.slane %v2248, %v2261
      %v2263 = vcombine.high %v2255, %v2255
      %v2264 = vcombine.high %v2262, %v2262
      %v2265 = vcombine.high %v1173, %v1173
      %v2267 = vunpack.c.l.s4 1983009808
      %v2268 = vunpack.c.0.s8 %v2267
      %v2269 = vlaneseq
      %v2270 = vshrl.u32 %v2269, 7
      %v2271 = vsub.s32 %v2268, %v2270
      %v2272 = vrot.slane %v1173, %v2271
      %v2274 = vunpack.c.l.s4 1983009808
      %v2275 = vunpack.c.0.s8 %v2274
      %v2276 = vlaneseq
      %v2277 = vshrl.u32 %v2276, 7
      %v2278 = vsub.s32 %v2275, %v2277
      %v2279 = vrot.slane %v2265, %v2278
      %v2280 = vcombine.high %v2272, %v2272
      %v2281 = vcombine.high %v2279, %v2279
      %v2282 = vcombine.high %v1174, %v1174
      %v2284 = vunpack.c.l.s4 1983009808
      %v2285 = vunpack.c.0.s8 %v2284
      %v2286 = vlaneseq
      %v2287 = vshrl.u32 %v2286, 7
      %v2288 = vsub.s32 %v2285, %v2287
      %v2289 = vrot.slane %v1174, %v2288
      %v2291 = vunpack.c.l.s4 1983009808
      %v2292 = vunpack.c.0.s8 %v2291
      %v2293 = vlaneseq
      %v2294 = vshrl.u32 %v2293, 7
      %v2295 = vsub.s32 %v2292, %v2294
      %v2296 = vrot.slane %v2282, %v2295
      %v2297 = vcombine.high %v2289, %v2289
      %v2298 = vcombine.high %v2296, %v2296
      %v2299 = vcombine.high %v1175, %v1175
      %v2301 = vunpack.c.l.s4 1983009808
      %v2302 = vunpack.c.0.s8 %v2301
      %v2303 = vlaneseq
      %v2304 = vshrl.u32 %v2303, 7
      %v2305 = vsub.s32 %v2302, %v2304
      %v2306 = vrot.slane %v1175, %v2305
      %v2308 = vunpack.c.l.s4 1983009808
      %v2309 = vunpack.c.0.s8 %v2308
      %v2310 = vlaneseq
      %v2311 = vshrl.u32 %v2310, 7
      %v2312 = vsub.s32 %v2309, %v2311
      %v2313 = vrot.slane %v2299, %v2312
      %v2314 = vcombine.high %v2306, %v2306
      %v2315 = vcombine.high %v2313, %v2313
      %v2316 = vcombine.high %v1176, %v1176
      %v2318 = vunpack.c.l.s4 1983009808
      %v2319 = vunpack.c.0.s8 %v2318
      %v2320 = vlaneseq
      %v2321 = vshrl.u32 %v2320, 7
      %v2322 = vsub.s32 %v2319, %v2321
      %v2323 = vrot.slane %v1176, %v2322
      %v2325 = vunpack.c.l.s4 1983009808
      %v2326 = vunpack.c.0.s8 %v2325
      %v2327 = vlaneseq
      %v2328 = vshrl.u32 %v2327, 7
      %v2329 = vsub.s32 %v2326, %v2328
      %v2330 = vrot.slane %v2316, %v2329
      %v2331 = vcombine.high %v2323, %v2323
      %v2332 = vcombine.high %v2330, %v2330
      %v2333 = vcombine.high %v1177, %v1177
      %v2335 = vunpack.c.l.s4 1983009808
      %v2336 = vunpack.c.0.s8 %v2335
      %v2337 = vlaneseq
      %v2338 = vshrl.u32 %v2337, 7
      %v2339 = vsub.s32 %v2336, %v2338
      %v2340 = vrot.slane %v1177, %v2339
      %v2342 = vunpack.c.l.s4 1983009808
      %v2343 = vunpack.c.0.s8 %v2342
      %v2344 = vlaneseq
      %v2345 = vshrl.u32 %v2344, 7
      %v2346 = vsub.s32 %v2343, %v2345
      %v2347 = vrot.slane %v2333, %v2346
      %v2348 = vcombine.high %v2340, %v2340
      %v2349 = vcombine.high %v2347, %v2347
      %v2350 = vcombine.high %v1178, %v1178
      %v2352 = vunpack.c.l.s4 1983009808
      %v2353 = vunpack.c.0.s8 %v2352
      %v2354 = vlaneseq
      %v2355 = vshrl.u32 %v2354, 7
      %v2356 = vsub.s32 %v2353, %v2355
      %v2357 = vrot.slane %v1178, %v2356
      %v2359 = vunpack.c.l.s4 1983009808
      %v2360 = vunpack.c.0.s8 %v2359
      %v2361 = vlaneseq
      %v2362 = vshrl.u32 %v2361, 7
      %v2363 = vsub.s32 %v2360, %v2362
      %v2364 = vrot.slane %v2350, %v2363
      %v2365 = vcombine.high %v2357, %v2357
      %v2366 = vcombine.high %v2364, %v2364
      %v2367 = vcombine.high %v1179, %v1179
      %v2369 = vunpack.c.l.s4 1983009808
      %v2370 = vunpack.c.0.s8 %v2369
      %v2371 = vlaneseq
      %v2372 = vshrl.u32 %v2371, 7
      %v2373 = vsub.s32 %v2370, %v2372
      %v2374 = vrot.slane %v1179, %v2373
      %v2376 = vunpack.c.l.s4 1983009808
      %v2377 = vunpack.c.0.s8 %v2376
      %v2378 = vlaneseq
      %v2379 = vshrl.u32 %v2378, 7
      %v2380 = vsub.s32 %v2377, %v2379
      %v2381 = vrot.slane %v2367, %v2380
      %v2382 = vcombine.high %v2374, %v2374
      %v2383 = vcombine.high %v2381, %v2381
      %v2384 = vcombine.high %v1180, %v1180
      %v2386 = vunpack.c.l.s4 1983009808
      %v2387 = vunpack.c.0.s8 %v2386
      %v2388 = vlaneseq
      %v2389 = vshrl.u32 %v2388, 7
      %v2390 = vsub.s32 %v2387, %v2389
      %v2391 = vrot.slane %v1180, %v2390
      %v2393 = vunpack.c.l.s4 1983009808
      %v2394 = vunpack.c.0.s8 %v2393
      %v2395 = vlaneseq
      %v2396 = vshrl.u32 %v2395, 7
      %v2397 = vsub.s32 %v2394, %v2396
      %v2398 = vrot.slane %v2384, %v2397
      %v2399 = vcombine.high %v2391, %v2391
      %v2400 = vcombine.high %v2398, %v2398
      %v2401 = vcombine.high %v1181, %v1181
      %v2403 = vunpack.c.l.s4 1983009808
      %v2404 = vunpack.c.0.s8 %v2403
      %v2405 = vlaneseq
      %v2406 = vshrl.u32 %v2405, 7
      %v2407 = vsub.s32 %v2404, %v2406
      %v2408 = vrot.slane %v1181, %v2407
      %v2410 = vunpack.c.l.s4 1983009808
      %v2411 = vunpack.c.0.s8 %v2410
      %v2412 = vlaneseq
      %v2413 = vshrl.u32 %v2412, 7
      %v2414 = vsub.s32 %v2411, %v2413
      %v2415 = vrot.slane %v2401, %v2414
      %v2416 = vcombine.high %v2408, %v2408
      %v2417 = vcombine.high %v2415, %v2415
      %v2418 = vcombine.high %v1182, %v1182
      %v2420 = vunpack.c.l.s4 1983009808
      %v2421 = vunpack.c.0.s8 %v2420
      %v2422 = vlaneseq
      %v2423 = vshrl.u32 %v2422, 7
      %v2424 = vsub.s32 %v2421, %v2423
      %v2425 = vrot.slane %v1182, %v2424
      %v2427 = vunpack.c.l.s4 1983009808
      %v2428 = vunpack.c.0.s8 %v2427
      %v2429 = vlaneseq
      %v2430 = vshrl.u32 %v2429, 7
      %v2431 = vsub.s32 %v2428, %v2430
      %v2432 = vrot.slane %v2418, %v2431
      %v2433 = vcombine.high %v2425, %v2425
      %v2434 = vcombine.high %v2432, %v2432
      %v2435 = vcombine.high %v1183, %v1183
      %v2437 = vunpack.c.l.s4 1983009808
      %v2438 = vunpack.c.0.s8 %v2437
      %v2439 = vlaneseq
      %v2440 = vshrl.u32 %v2439, 7
      %v2441 = vsub.s32 %v2438, %v2440
      %v2442 = vrot.slane %v1183, %v2441
      %v2444 = vunpack.c.l.s4 1983009808
      %v2445 = vunpack.c.0.s8 %v2444
      %v2446 = vlaneseq
      %v2447 = vshrl.u32 %v2446, 7
      %v2448 = vsub.s32 %v2445, %v2447
      %v2449 = vrot.slane %v2435, %v2448
      %v2450 = vcombine.high %v2442, %v2442
      %v2451 = vcombine.high %v2449, %v2449
      %v2452 = vcombine.high %v1184, %v1184
      %v2454 = vunpack.c.l.s4 1983009808
      %v2455 = vunpack.c.0.s8 %v2454
      %v2456 = vlaneseq
      %v2457 = vshrl.u32 %v2456, 7
      %v2458 = vsub.s32 %v2455, %v2457
      %v2459 = vrot.slane %v1184, %v2458
      %v2461 = vunpack.c.l.s4 1983009808
      %v2462 = vunpack.c.0.s8 %v2461
      %v2463 = vlaneseq
      %v2464 = vshrl.u32 %v2463, 7
      %v2465 = vsub.s32 %v2462, %v2464
      %v2466 = vrot.slane %v2452, %v2465
      %v2467 = vcombine.high %v2459, %v2459
      %v2468 = vcombine.high %v2466, %v2466
      %v2469 = vcombine.high %v1185, %v1185
      %v2471 = vunpack.c.l.s4 1983009808
      %v2472 = vunpack.c.0.s8 %v2471
      %v2473 = vlaneseq
      %v2474 = vshrl.u32 %v2473, 7
      %v2475 = vsub.s32 %v2472, %v2474
      %v2476 = vrot.slane %v1185, %v2475
      %v2478 = vunpack.c.l.s4 1983009808
      %v2479 = vunpack.c.0.s8 %v2478
      %v2480 = vlaneseq
      %v2481 = vshrl.u32 %v2480, 7
      %v2482 = vsub.s32 %v2479, %v2481
      %v2483 = vrot.slane %v2469, %v2482
      %v2484 = vcombine.high %v2476, %v2476
      %v2485 = vcombine.high %v2483, %v2483
      %v2486 = vcombine.high %v1186, %v1186
      %v2488 = vunpack.c.l.s4 1983009808
      %v2489 = vunpack.c.0.s8 %v2488
      %v2490 = vlaneseq
      %v2491 = vshrl.u32 %v2490, 7
      %v2492 = vsub.s32 %v2489, %v2491
      %v2493 = vrot.slane %v1186, %v2492
      %v2495 = vunpack.c.l.s4 1983009808
      %v2496 = vunpack.c.0.s8 %v2495
      %v2497 = vlaneseq
      %v2498 = vshrl.u32 %v2497, 7
      %v2499 = vsub.s32 %v2496, %v2498
      %v2500 = vrot.slane %v2486, %v2499
      %v2501 = vcombine.high %v2493, %v2493
      %v2502 = vcombine.high %v2500, %v2500
      %v2503 = vcombine.high %v1187, %v1187
      %v2505 = vunpack.c.l.s4 1983009808
      %v2506 = vunpack.c.0.s8 %v2505
      %v2507 = vlaneseq
      %v2508 = vshrl.u32 %v2507, 7
      %v2509 = vsub.s32 %v2506, %v2508
      %v2510 = vrot.slane %v1187, %v2509
      %v2512 = vunpack.c.l.s4 1983009808
      %v2513 = vunpack.c.0.s8 %v2512
      %v2514 = vlaneseq
      %v2515 = vshrl.u32 %v2514, 7
      %v2516 = vsub.s32 %v2513, %v2515
      %v2517 = vrot.slane %v2503, %v2516
      %v2518 = vcombine.high %v2510, %v2510
      %v2519 = vcombine.high %v2517, %v2517
      %v2520 = vcombine.high %v1188, %v1188
      %v2522 = vunpack.c.l.s4 1983009808
      %v2523 = vunpack.c.0.s8 %v2522
      %v2524 = vlaneseq
      %v2525 = vshrl.u32 %v2524, 7
      %v2526 = vsub.s32 %v2523, %v2525
      %v2527 = vrot.slane %v1188, %v2526
      %v2529 = vunpack.c.l.s4 1983009808
      %v2530 = vunpack.c.0.s8 %v2529
      %v2531 = vlaneseq
      %v2532 = vshrl.u32 %v2531, 7
      %v2533 = vsub.s32 %v2530, %v2532
      %v2534 = vrot.slane %v2520, %v2533
      %v2535 = vcombine.high %v2527, %v2527
      %v2536 = vcombine.high %v2534, %v2534
      %v2537 = vcombine.high %v1189, %v1189
      %v2539 = vunpack.c.l.s4 1983009808
      %v2540 = vunpack.c.0.s8 %v2539
      %v2541 = vlaneseq
      %v2542 = vshrl.u32 %v2541, 7
      %v2543 = vsub.s32 %v2540, %v2542
      %v2544 = vrot.slane %v1189, %v2543
      %v2546 = vunpack.c.l.s4 1983009808
      %v2547 = vunpack.c.0.s8 %v2546
      %v2548 = vlaneseq
      %v2549 = vshrl.u32 %v2548, 7
      %v2550 = vsub.s32 %v2547, %v2549
      %v2551 = vrot.slane %v2537, %v2550
      %v2552 = vcombine.high %v2544, %v2544
      %v2553 = vcombine.high %v2551, %v2551
      %v2554 = vcombine.high %v1190, %v1190
      %v2556 = vunpack.c.l.s4 1983009808
      %v2557 = vunpack.c.0.s8 %v2556
      %v2558 = vlaneseq
      %v2559 = vshrl.u32 %v2558, 7
      %v2560 = vsub.s32 %v2557, %v2559
      %v2561 = vrot.slane %v1190, %v2560
      %v2563 = vunpack.c.l.s4 1983009808
      %v2564 = vunpack.c.0.s8 %v2563
      %v2565 = vlaneseq
      %v2566 = vshrl.u32 %v2565, 7
      %v2567 = vsub.s32 %v2564, %v2566
      %v2568 = vrot.slane %v2554, %v2567
      %v2569 = vcombine.high %v2561, %v2561
      %v2570 = vcombine.high %v2568, %v2568
      %v2571 = vcombine.high %v1191, %v1191
      %v2573 = vunpack.c.l.s4 1983009808
      %v2574 = vunpack.c.0.s8 %v2573
      %v2575 = vlaneseq
      %v2576 = vshrl.u32 %v2575, 7
      %v2577 = vsub.s32 %v2574, %v2576
      %v2578 = vrot.slane %v1191, %v2577
      %v2580 = vunpack.c.l.s4 1983009808
      %v2581 = vunpack.c.0.s8 %v2580
      %v2582 = vlaneseq
      %v2583 = vshrl.u32 %v2582, 7
      %v2584 = vsub.s32 %v2581, %v2583
      %v2585 = vrot.slane %v2571, %v2584
      %v2586 = vcombine.high %v2578, %v2578
      %v2587 = vcombine.high %v2585, %v2585
      %v2588 = vcombine.high %v1192, %v1192
      %v2590 = vunpack.c.l.s4 1983009808
      %v2591 = vunpack.c.0.s8 %v2590
      %v2592 = vlaneseq
      %v2593 = vshrl.u32 %v2592, 7
      %v2594 = vsub.s32 %v2591, %v2593
      %v2595 = vrot.slane %v1192, %v2594
      %v2597 = vunpack.c.l.s4 1983009808
      %v2598 = vunpack.c.0.s8 %v2597
      %v2599 = vlaneseq
      %v2600 = vshrl.u32 %v2599, 7
      %v2601 = vsub.s32 %v2598, %v2600
      %v2602 = vrot.slane %v2588, %v2601
      %v2603 = vcombine.high %v2595, %v2595
      %v2604 = vcombine.high %v2602, %v2602
      %v2605 = vcombine.high %v1193, %v1193
      %v2607 = vunpack.c.l.s4 1983009808
      %v2608 = vunpack.c.0.s8 %v2607
      %v2609 = vlaneseq
      %v2610 = vshrl.u32 %v2609, 7
      %v2611 = vsub.s32 %v2608, %v2610
      %v2612 = vrot.slane %v1193, %v2611
      %v2614 = vunpack.c.l.s4 1983009808
      %v2615 = vunpack.c.0.s8 %v2614
      %v2616 = vlaneseq
      %v2617 = vshrl.u32 %v2616, 7
      %v2618 = vsub.s32 %v2615, %v2617
      %v2619 = vrot.slane %v2605, %v2618
      %v2620 = vcombine.high %v2612, %v2612
      %v2621 = vcombine.high %v2619, %v2619
      %v2622 = vcombine.high %v1194, %v1194
      %v2624 = vunpack.c.l.s4 1983009808
      %v2625 = vunpack.c.0.s8 %v2624
      %v2626 = vlaneseq
      %v2627 = vshrl.u32 %v2626, 7
      %v2628 = vsub.s32 %v2625, %v2627
      %v2629 = vrot.slane %v1194, %v2628
      %v2631 = vunpack.c.l.s4 1983009808
      %v2632 = vunpack.c.0.s8 %v2631
      %v2633 = vlaneseq
      %v2634 = vshrl.u32 %v2633, 7
      %v2635 = vsub.s32 %v2632, %v2634
      %v2636 = vrot.slane %v2622, %v2635
      %v2637 = vcombine.high %v2629, %v2629
      %v2638 = vcombine.high %v2636, %v2636
      %v2639 = vcombine.high %v1195, %v1195
      %v2641 = vunpack.c.l.s4 1983009808
      %v2642 = vunpack.c.0.s8 %v2641
      %v2643 = vlaneseq
      %v2644 = vshrl.u32 %v2643, 7
      %v2645 = vsub.s32 %v2642, %v2644
      %v2646 = vrot.slane %v1195, %v2645
      %v2648 = vunpack.c.l.s4 1983009808
      %v2649 = vunpack.c.0.s8 %v2648
      %v2650 = vlaneseq
      %v2651 = vshrl.u32 %v2650, 7
      %v2652 = vsub.s32 %v2649, %v2651
      %v2653 = vrot.slane %v2639, %v2652
      %v2654 = vcombine.high %v2646, %v2646
      %v2655 = vcombine.high %v2653, %v2653
      %v2656 = vcombine.high %v1196, %v1196
      %v2658 = vunpack.c.l.s4 1983009808
      %v2659 = vunpack.c.0.s8 %v2658
      %v2660 = vlaneseq
      %v2661 = vshrl.u32 %v2660, 7
      %v2662 = vsub.s32 %v2659, %v2661
      %v2663 = vrot.slane %v1196, %v2662
      %v2665 = vunpack.c.l.s4 1983009808
      %v2666 = vunpack.c.0.s8 %v2665
      %v2667 = vlaneseq
      %v2668 = vshrl.u32 %v2667, 7
      %v2669 = vsub.s32 %v2666, %v2668
      %v2670 = vrot.slane %v2656, %v2669
      %v2671 = vcombine.high %v2663, %v2663
      %v2672 = vcombine.high %v2670, %v2670
      %v2673 = vcombine.high %v1197, %v1197
      %v2675 = vunpack.c.l.s4 1983009808
      %v2676 = vunpack.c.0.s8 %v2675
      %v2677 = vlaneseq
      %v2678 = vshrl.u32 %v2677, 7
      %v2679 = vsub.s32 %v2676, %v2678
      %v2680 = vrot.slane %v1197, %v2679
      %v2682 = vunpack.c.l.s4 1983009808
      %v2683 = vunpack.c.0.s8 %v2682
      %v2684 = vlaneseq
      %v2685 = vshrl.u32 %v2684, 7
      %v2686 = vsub.s32 %v2683, %v2685
      %v2687 = vrot.slane %v2673, %v2686
      %v2688 = vcombine.high %v2680, %v2680
      %v2689 = vcombine.high %v2687, %v2687
      %v2690 = vcombine.high %v1198, %v1198
      %v2692 = vunpack.c.l.s4 1983009808
      %v2693 = vunpack.c.0.s8 %v2692
      %v2694 = vlaneseq
      %v2695 = vshrl.u32 %v2694, 7
      %v2696 = vsub.s32 %v2693, %v2695
      %v2697 = vrot.slane %v1198, %v2696
      %v2699 = vunpack.c.l.s4 1983009808
      %v2700 = vunpack.c.0.s8 %v2699
      %v2701 = vlaneseq
      %v2702 = vshrl.u32 %v2701, 7
      %v2703 = vsub.s32 %v2700, %v2702
      %v2704 = vrot.slane %v2690, %v2703
      %v2705 = vcombine.high %v2697, %v2697
      %v2706 = vcombine.high %v2704, %v2704
      %v2707 = vcombine.high %v1199, %v1199
      %v2709 = vunpack.c.l.s4 1983009808
      %v2710 = vunpack.c.0.s8 %v2709
      %v2711 = vlaneseq
      %v2712 = vshrl.u32 %v2711, 7
      %v2713 = vsub.s32 %v2710, %v2712
      %v2714 = vrot.slane %v1199, %v2713
      %v2716 = vunpack.c.l.s4 1983009808
      %v2717 = vunpack.c.0.s8 %v2716
      %v2718 = vlaneseq
      %v2719 = vshrl.u32 %v2718, 7
      %v2720 = vsub.s32 %v2717, %v2719
      %v2721 = vrot.slane %v2707, %v2720
      %v2722 = vcombine.high %v2714, %v2714
      %v2723 = vcombine.high %v2721, %v2721
      %v2724 = vcombine.high %v1200, %v1200
      %v2726 = vunpack.c.l.s4 1983009808
      %v2727 = vunpack.c.0.s8 %v2726
      %v2728 = vlaneseq
      %v2729 = vshrl.u32 %v2728, 7
      %v2730 = vsub.s32 %v2727, %v2729
      %v2731 = vrot.slane %v1200, %v2730
      %v2733 = vunpack.c.l.s4 1983009808
      %v2734 = vunpack.c.0.s8 %v2733
      %v2735 = vlaneseq
      %v2736 = vshrl.u32 %v2735, 7
      %v2737 = vsub.s32 %v2734, %v2736
      %v2738 = vrot.slane %v2724, %v2737
      %v2739 = vcombine.high %v2731, %v2731
      %v2740 = vcombine.high %v2738, %v2738
      %v2741 = vcombine.high %v1201, %v1201
      %v2743 = vunpack.c.l.s4 1983009808
      %v2744 = vunpack.c.0.s8 %v2743
      %v2745 = vlaneseq
      %v2746 = vshrl.u32 %v2745, 7
      %v2747 = vsub.s32 %v2744, %v2746
      %v2748 = vrot.slane %v1201, %v2747
      %v2750 = vunpack.c.l.s4 1983009808
      %v2751 = vunpack.c.0.s8 %v2750
      %v2752 = vlaneseq
      %v2753 = vshrl.u32 %v2752, 7
      %v2754 = vsub.s32 %v2751, %v2753
      %v2755 = vrot.slane %v2741, %v2754
      %v2756 = vcombine.high %v2748, %v2748
      %v2757 = vcombine.high %v2755, %v2755
      %v2758 = vcombine.high %v1202, %v1202
      %v2760 = vunpack.c.l.s4 1983009808
      %v2761 = vunpack.c.0.s8 %v2760
      %v2762 = vlaneseq
      %v2763 = vshrl.u32 %v2762, 7
      %v2764 = vsub.s32 %v2761, %v2763
      %v2765 = vrot.slane %v1202, %v2764
      %v2767 = vunpack.c.l.s4 1983009808
      %v2768 = vunpack.c.0.s8 %v2767
      %v2769 = vlaneseq
      %v2770 = vshrl.u32 %v2769, 7
      %v2771 = vsub.s32 %v2768, %v2770
      %v2772 = vrot.slane %v2758, %v2771
      %v2773 = vcombine.high %v2765, %v2765
      %v2774 = vcombine.high %v2772, %v2772
      %v2775 = vcombine.high %v1203, %v1203
      %v2777 = vunpack.c.l.s4 1983009808
      %v2778 = vunpack.c.0.s8 %v2777
      %v2779 = vlaneseq
      %v2780 = vshrl.u32 %v2779, 7
      %v2781 = vsub.s32 %v2778, %v2780
      %v2782 = vrot.slane %v1203, %v2781
      %v2784 = vunpack.c.l.s4 1983009808
      %v2785 = vunpack.c.0.s8 %v2784
      %v2786 = vlaneseq
      %v2787 = vshrl.u32 %v2786, 7
      %v2788 = vsub.s32 %v2785, %v2787
      %v2789 = vrot.slane %v2775, %v2788
      %v2790 = vcombine.high %v2782, %v2782
      %v2791 = vcombine.high %v2789, %v2789
      %v2792 = vcombine.high %v1204, %v1204
      %v2794 = vunpack.c.l.s4 1983009808
      %v2795 = vunpack.c.0.s8 %v2794
      %v2796 = vlaneseq
      %v2797 = vshrl.u32 %v2796, 7
      %v2798 = vsub.s32 %v2795, %v2797
      %v2799 = vrot.slane %v1204, %v2798
      %v2801 = vunpack.c.l.s4 1983009808
      %v2802 = vunpack.c.0.s8 %v2801
      %v2803 = vlaneseq
      %v2804 = vshrl.u32 %v2803, 7
      %v2805 = vsub.s32 %v2802, %v2804
      %v2806 = vrot.slane %v2792, %v2805
      %v2807 = vcombine.high %v2799, %v2799
      %v2808 = vcombine.high %v2806, %v2806
      %v2809 = vcombine.high %v1205, %v1205
      %v2811 = vunpack.c.l.s4 1983009808
      %v2812 = vunpack.c.0.s8 %v2811
      %v2813 = vlaneseq
      %v2814 = vshrl.u32 %v2813, 7
      %v2815 = vsub.s32 %v2812, %v2814
      %v2816 = vrot.slane %v1205, %v2815
      %v2818 = vunpack.c.l.s4 1983009808
      %v2819 = vunpack.c.0.s8 %v2818
      %v2820 = vlaneseq
      %v2821 = vshrl.u32 %v2820, 7
      %v2822 = vsub.s32 %v2819, %v2821
      %v2823 = vrot.slane %v2809, %v2822
      %v2824 = vcombine.high %v2816, %v2816
      %v2825 = vcombine.high %v2823, %v2823
      %v2826 = vcombine.high %v1206, %v1206
      %v2828 = vunpack.c.l.s4 1983009808
      %v2829 = vunpack.c.0.s8 %v2828
      %v2830 = vlaneseq
      %v2831 = vshrl.u32 %v2830, 7
      %v2832 = vsub.s32 %v2829, %v2831
      %v2833 = vrot.slane %v1206, %v2832
      %v2835 = vunpack.c.l.s4 1983009808
      %v2836 = vunpack.c.0.s8 %v2835
      %v2837 = vlaneseq
      %v2838 = vshrl.u32 %v2837, 7
      %v2839 = vsub.s32 %v2836, %v2838
      %v2840 = vrot.slane %v2826, %v2839
      %v2841 = vcombine.high %v2833, %v2833
      %v2842 = vcombine.high %v2840, %v2840
      %v2843 = vcombine.high %v1207, %v1207
      %v2845 = vunpack.c.l.s4 1983009808
      %v2846 = vunpack.c.0.s8 %v2845
      %v2847 = vlaneseq
      %v2848 = vshrl.u32 %v2847, 7
      %v2849 = vsub.s32 %v2846, %v2848
      %v2850 = vrot.slane %v1207, %v2849
      %v2852 = vunpack.c.l.s4 1983009808
      %v2853 = vunpack.c.0.s8 %v2852
      %v2854 = vlaneseq
      %v2855 = vshrl.u32 %v2854, 7
      %v2856 = vsub.s32 %v2853, %v2855
      %v2857 = vrot.slane %v2843, %v2856
      %v2858 = vcombine.high %v2850, %v2850
      %v2859 = vcombine.high %v2857, %v2857
      %v2860 = vcombine.high %v1208, %v1208
      %v2862 = vunpack.c.l.s4 1983009808
      %v2863 = vunpack.c.0.s8 %v2862
      %v2864 = vlaneseq
      %v2865 = vshrl.u32 %v2864, 7
      %v2866 = vsub.s32 %v2863, %v2865
      %v2867 = vrot.slane %v1208, %v2866
      %v2869 = vunpack.c.l.s4 1983009808
      %v2870 = vunpack.c.0.s8 %v2869
      %v2871 = vlaneseq
      %v2872 = vshrl.u32 %v2871, 7
      %v2873 = vsub.s32 %v2870, %v2872
      %v2874 = vrot.slane %v2860, %v2873
      %v2875 = vcombine.high %v2867, %v2867
      %v2876 = vcombine.high %v2874, %v2874
      %v2877 = vcombine.high %v1209, %v1209
      %v2879 = vunpack.c.l.s4 1983009808
      %v2880 = vunpack.c.0.s8 %v2879
      %v2881 = vlaneseq
      %v2882 = vshrl.u32 %v2881, 7
      %v2883 = vsub.s32 %v2880, %v2882
      %v2884 = vrot.slane %v1209, %v2883
      %v2886 = vunpack.c.l.s4 1983009808
      %v2887 = vunpack.c.0.s8 %v2886
      %v2888 = vlaneseq
      %v2889 = vshrl.u32 %v2888, 7
      %v2890 = vsub.s32 %v2887, %v2889
      %v2891 = vrot.slane %v2877, %v2890
      %v2892 = vcombine.high %v2884, %v2884
      %v2893 = vcombine.high %v2891, %v2891
      %v2894 = vcombine.high %v1210, %v1210
      %v2896 = vunpack.c.l.s4 1983009808
      %v2897 = vunpack.c.0.s8 %v2896
      %v2898 = vlaneseq
      %v2899 = vshrl.u32 %v2898, 7
      %v2900 = vsub.s32 %v2897, %v2899
      %v2901 = vrot.slane %v1210, %v2900
      %v2903 = vunpack.c.l.s4 1983009808
      %v2904 = vunpack.c.0.s8 %v2903
      %v2905 = vlaneseq
      %v2906 = vshrl.u32 %v2905, 7
      %v2907 = vsub.s32 %v2904, %v2906
      %v2908 = vrot.slane %v2894, %v2907
      %v2909 = vcombine.high %v2901, %v2901
      %v2910 = vcombine.high %v2908, %v2908
      %v2911 = vcombine.high %v1211, %v1211
      %v2913 = vunpack.c.l.s4 1983009808
      %v2914 = vunpack.c.0.s8 %v2913
      %v2915 = vlaneseq
      %v2916 = vshrl.u32 %v2915, 7
      %v2917 = vsub.s32 %v2914, %v2916
      %v2918 = vrot.slane %v1211, %v2917
      %v2920 = vunpack.c.l.s4 1983009808
      %v2921 = vunpack.c.0.s8 %v2920
      %v2922 = vlaneseq
      %v2923 = vshrl.u32 %v2922, 7
      %v2924 = vsub.s32 %v2921, %v2923
      %v2925 = vrot.slane %v2911, %v2924
      %v2926 = vcombine.high %v2918, %v2918
      %v2927 = vcombine.high %v2925, %v2925
      %v2928 = vcombine.high %v1212, %v1212
      %v2930 = vunpack.c.l.s4 1983009808
      %v2931 = vunpack.c.0.s8 %v2930
      %v2932 = vlaneseq
      %v2933 = vshrl.u32 %v2932, 7
      %v2934 = vsub.s32 %v2931, %v2933
      %v2935 = vrot.slane %v1212, %v2934
      %v2937 = vunpack.c.l.s4 1983009808
      %v2938 = vunpack.c.0.s8 %v2937
      %v2939 = vlaneseq
      %v2940 = vshrl.u32 %v2939, 7
      %v2941 = vsub.s32 %v2938, %v2940
      %v2942 = vrot.slane %v2928, %v2941
      %v2943 = vcombine.high %v2935, %v2935
      %v2944 = vcombine.high %v2942, %v2942
      %v2945 = vcombine.high %v1213, %v1213
      %v2947 = vunpack.c.l.s4 1983009808
      %v2948 = vunpack.c.0.s8 %v2947
      %v2949 = vlaneseq
      %v2950 = vshrl.u32 %v2949, 7
      %v2951 = vsub.s32 %v2948, %v2950
      %v2952 = vrot.slane %v1213, %v2951
      %v2954 = vunpack.c.l.s4 1983009808
      %v2955 = vunpack.c.0.s8 %v2954
      %v2956 = vlaneseq
      %v2957 = vshrl.u32 %v2956, 7
      %v2958 = vsub.s32 %v2955, %v2957
      %v2959 = vrot.slane %v2945, %v2958
      %v2960 = vcombine.high %v2952, %v2952
      %v2961 = vcombine.high %v2959, %v2959
      %v2962 = vcombine.high %v1214, %v1214
      %v2964 = vunpack.c.l.s4 1983009808
      %v2965 = vunpack.c.0.s8 %v2964
      %v2966 = vlaneseq
      %v2967 = vshrl.u32 %v2966, 7
      %v2968 = vsub.s32 %v2965, %v2967
      %v2969 = vrot.slane %v1214, %v2968
      %v2971 = vunpack.c.l.s4 1983009808
      %v2972 = vunpack.c.0.s8 %v2971
      %v2973 = vlaneseq
      %v2974 = vshrl.u32 %v2973, 7
      %v2975 = vsub.s32 %v2972, %v2974
      %v2976 = vrot.slane %v2962, %v2975
      %v2977 = vcombine.high %v2969, %v2969
      %v2978 = vcombine.high %v2976, %v2976
      %vm3371 = vcmask 1041408
      %v3372 = vsel %vm3371, %v1320, -inf
      %v3373 = vrot.slane %v3372, 4
      %v3374 = vmax.f32 %v3372, %v3373
      %v3375 = vrot.slane %v3374, 2
      %v3376 = vmax.f32 %v3374, %v3375
      %v3377 = vrot.slane %v3376, 1
      %v3378 = vmax.f32 %v3376, %v3377
      %v3379 = vsel %vm3371, %v1328, -inf
      %v3380 = vrot.slane %v3379, 4
      %v3381 = vmax.f32 %v3379, %v3380
      %v3382 = vrot.slane %v3381, 2
      %v3383 = vmax.f32 %v3381, %v3382
      %v3384 = vrot.slane %v3383, 1
      %v3385 = vmax.f32 %v3383, %v3384
      %v3386 = vsel %vm3371, %v1327, -inf
      %v3387 = vrot.slane %v3386, 4
      %v3388 = vmax.f32 %v3386, %v3387
      %v3389 = vrot.slane %v3388, 2
      %v3390 = vmax.f32 %v3388, %v3389
      %v3391 = vrot.slane %v3390, 1
      %v3392 = vmax.f32 %v3390, %v3391
      %v3393 = vsel %vm3371, %v1329, -inf
      %v3394 = vrot.slane %v3393, 4
      %v3395 = vmax.f32 %v3393, %v3394
      %v3396 = vrot.slane %v3395, 2
      %v3397 = vmax.f32 %v3395, %v3396
      %v3398 = vrot.slane %v3397, 1
      %v3399 = vmax.f32 %v3397, %v3398
      %v3400 = vsel %vm3371, %v1337, -inf
      %v3401 = vrot.slane %v3400, 4
      %v3402 = vmax.f32 %v3400, %v3401
      %v3403 = vrot.slane %v3402, 2
      %v3404 = vmax.f32 %v3402, %v3403
      %v3405 = vrot.slane %v3404, 1
      %v3406 = vmax.f32 %v3404, %v3405
      %v3407 = vsel %vm3371, %v1345, -inf
      %v3408 = vrot.slane %v3407, 4
      %v3409 = vmax.f32 %v3407, %v3408
      %v3410 = vrot.slane %v3409, 2
      %v3411 = vmax.f32 %v3409, %v3410
      %v3412 = vrot.slane %v3411, 1
      %v3413 = vmax.f32 %v3411, %v3412
      %v3414 = vsel %vm3371, %v1344, -inf
      %v3415 = vrot.slane %v3414, 4
      %v3416 = vmax.f32 %v3414, %v3415
      %v3417 = vrot.slane %v3416, 2
      %v3418 = vmax.f32 %v3416, %v3417
      %v3419 = vrot.slane %v3418, 1
      %v3420 = vmax.f32 %v3418, %v3419
      %v3421 = vsel %vm3371, %v1346, -inf
      %v3422 = vrot.slane %v3421, 4
      %v3423 = vmax.f32 %v3421, %v3422
      %v3424 = vrot.slane %v3423, 2
      %v3425 = vmax.f32 %v3423, %v3424
      %v3426 = vrot.slane %v3425, 1
      %v3427 = vmax.f32 %v3425, %v3426
      %v3428 = vsel %vm3371, %v1354, -inf
      %v3429 = vrot.slane %v3428, 4
      %v3430 = vmax.f32 %v3428, %v3429
      %v3431 = vrot.slane %v3430, 2
      %v3432 = vmax.f32 %v3430, %v3431
      %v3433 = vrot.slane %v3432, 1
      %v3434 = vmax.f32 %v3432, %v3433
      %v3435 = vsel %vm3371, %v1362, -inf
      %v3436 = vrot.slane %v3435, 4
      %v3437 = vmax.f32 %v3435, %v3436
      %v3438 = vrot.slane %v3437, 2
      %v3439 = vmax.f32 %v3437, %v3438
      %v3440 = vrot.slane %v3439, 1
      %v3441 = vmax.f32 %v3439, %v3440
      %v3442 = vsel %vm3371, %v1361, -inf
      %v3443 = vrot.slane %v3442, 4
      %v3444 = vmax.f32 %v3442, %v3443
      %v3445 = vrot.slane %v3444, 2
      %v3446 = vmax.f32 %v3444, %v3445
      %v3447 = vrot.slane %v3446, 1
      %v3448 = vmax.f32 %v3446, %v3447
      %v3449 = vsel %vm3371, %v1363, -inf
      %v3450 = vrot.slane %v3449, 4
      %v3451 = vmax.f32 %v3449, %v3450
      %v3452 = vrot.slane %v3451, 2
      %v3453 = vmax.f32 %v3451, %v3452
      %v3454 = vrot.slane %v3453, 1
      %v3455 = vmax.f32 %v3453, %v3454
      %v3456 = vsel %vm3371, %v1371, -inf
      %v3457 = vrot.slane %v3456, 4
      %v3458 = vmax.f32 %v3456, %v3457
      %v3459 = vrot.slane %v3458, 2
      %v3460 = vmax.f32 %v3458, %v3459
      %v3461 = vrot.slane %v3460, 1
      %v3462 = vmax.f32 %v3460, %v3461
      %v3463 = vsel %vm3371, %v1379, -inf
      %v3464 = vrot.slane %v3463, 4
      %v3465 = vmax.f32 %v3463, %v3464
      %v3466 = vrot.slane %v3465, 2
      %v3467 = vmax.f32 %v3465, %v3466
      %v3468 = vrot.slane %v3467, 1
      %v3469 = vmax.f32 %v3467, %v3468
      %v3470 = vsel %vm3371, %v1378, -inf
      %v3471 = vrot.slane %v3470, 4
      %v3472 = vmax.f32 %v3470, %v3471
      %v3473 = vrot.slane %v3472, 2
      %v3474 = vmax.f32 %v3472, %v3473
      %v3475 = vrot.slane %v3474, 1
      %v3476 = vmax.f32 %v3474, %v3475
      %v3477 = vsel %vm3371, %v1380, -inf
      %v3478 = vrot.slane %v3477, 4
      %v3479 = vmax.f32 %v3477, %v3478
      %v3480 = vrot.slane %v3479, 2
      %v3481 = vmax.f32 %v3479, %v3480
      %v3482 = vrot.slane %v3481, 1
      %v3483 = vmax.f32 %v3481, %v3482
      %v3484 = vsel %vm3371, %v1388, -inf
      %v3485 = vrot.slane %v3484, 4
      %v3486 = vmax.f32 %v3484, %v3485
      %v3487 = vrot.slane %v3486, 2
      %v3488 = vmax.f32 %v3486, %v3487
      %v3489 = vrot.slane %v3488, 1
      %v3490 = vmax.f32 %v3488, %v3489
      %v3491 = vsel %vm3371, %v1396, -inf
      %v3492 = vrot.slane %v3491, 4
      %v3493 = vmax.f32 %v3491, %v3492
      %v3494 = vrot.slane %v3493, 2
      %v3495 = vmax.f32 %v3493, %v3494
      %v3496 = vrot.slane %v3495, 1
      %v3497 = vmax.f32 %v3495, %v3496
      %v3498 = vsel %vm3371, %v1395, -inf
      %v3499 = vrot.slane %v3498, 4
      %v3500 = vmax.f32 %v3498, %v3499
      %v3501 = vrot.slane %v3500, 2
      %v3502 = vmax.f32 %v3500, %v3501
      %v3503 = vrot.slane %v3502, 1
      %v3504 = vmax.f32 %v3502, %v3503
      %v3505 = vsel %vm3371, %v1397, -inf
      %v3506 = vrot.slane %v3505, 4
      %v3507 = vmax.f32 %v3505, %v3506
      %v3508 = vrot.slane %v3507, 2
      %v3509 = vmax.f32 %v3507, %v3508
      %v3510 = vrot.slane %v3509, 1
      %v3511 = vmax.f32 %v3509, %v3510
      %v3512 = vsel %vm3371, %v1405, -inf
      %v3513 = vrot.slane %v3512, 4
      %v3514 = vmax.f32 %v3512, %v3513
      %v3515 = vrot.slane %v3514, 2
      %v3516 = vmax.f32 %v3514, %v3515
      %v3517 = vrot.slane %v3516, 1
      %v3518 = vmax.f32 %v3516, %v3517
      %v3519 = vsel %vm3371, %v1413, -inf
      %v3520 = vrot.slane %v3519, 4
      %v3521 = vmax.f32 %v3519, %v3520
      %v3522 = vrot.slane %v3521, 2
      %v3523 = vmax.f32 %v3521, %v3522
      %v3524 = vrot.slane %v3523, 1
      %v3525 = vmax.f32 %v3523, %v3524
      %v3526 = vsel %vm3371, %v1412, -inf
      %v3527 = vrot.slane %v3526, 4
      %v3528 = vmax.f32 %v3526, %v3527
      %v3529 = vrot.slane %v3528, 2
      %v3530 = vmax.f32 %v3528, %v3529
      %v3531 = vrot.slane %v3530, 1
      %v3532 = vmax.f32 %v3530, %v3531
      %v3533 = vsel %vm3371, %v1414, -inf
      %v3534 = vrot.slane %v3533, 4
      %v3535 = vmax.f32 %v3533, %v3534
      %v3536 = vrot.slane %v3535, 2
      %v3537 = vmax.f32 %v3535, %v3536
      %v3538 = vrot.slane %v3537, 1
      %v3539 = vmax.f32 %v3537, %v3538
      %v3540 = vsel %vm3371, %v1422, -inf
      %v3541 = vrot.slane %v3540, 4
      %v3542 = vmax.f32 %v3540, %v3541
      %v3543 = vrot.slane %v3542, 2
      %v3544 = vmax.f32 %v3542, %v3543
      %v3545 = vrot.slane %v3544, 1
      %v3546 = vmax.f32 %v3544, %v3545
      %v3547 = vsel %vm3371, %v1430, -inf
      %v3548 = vrot.slane %v3547, 4
      %v3549 = vmax.f32 %v3547, %v3548
      %v3550 = vrot.slane %v3549, 2
      %v3551 = vmax.f32 %v3549, %v3550
      %v3552 = vrot.slane %v3551, 1
      %v3553 = vmax.f32 %v3551, %v3552
      %v3554 = vsel %vm3371, %v1429, -inf
      %v3555 = vrot.slane %v3554, 4
      %v3556 = vmax.f32 %v3554, %v3555
      %v3557 = vrot.slane %v3556, 2
      %v3558 = vmax.f32 %v3556, %v3557
      %v3559 = vrot.slane %v3558, 1
      %v3560 = vmax.f32 %v3558, %v3559
      %v3561 = vsel %vm3371, %v1431, -inf
      %v3562 = vrot.slane %v3561, 4
      %v3563 = vmax.f32 %v3561, %v3562
      %v3564 = vrot.slane %v3563, 2
      %v3565 = vmax.f32 %v3563, %v3564
      %v3566 = vrot.slane %v3565, 1
      %v3567 = vmax.f32 %v3565, %v3566
      %v3568 = vsel %vm3371, %v1439, -inf
      %v3569 = vrot.slane %v3568, 4
      %v3570 = vmax.f32 %v3568, %v3569
      %v3571 = vrot.slane %v3570, 2
      %v3572 = vmax.f32 %v3570, %v3571
      %v3573 = vrot.slane %v3572, 1
      %v3574 = vmax.f32 %v3572, %v3573
      %v3575 = vsel %vm3371, %v1447, -inf
      %v3576 = vrot.slane %v3575, 4
      %v3577 = vmax.f32 %v3575, %v3576
      %v3578 = vrot.slane %v3577, 2
      %v3579 = vmax.f32 %v3577, %v3578
      %v3580 = vrot.slane %v3579, 1
      %v3581 = vmax.f32 %v3579, %v3580
      %v3582 = vsel %vm3371, %v1446, -inf
      %v3583 = vrot.slane %v3582, 4
      %v3584 = vmax.f32 %v3582, %v3583
      %v3585 = vrot.slane %v3584, 2
      %v3586 = vmax.f32 %v3584, %v3585
      %v3587 = vrot.slane %v3586, 1
      %v3588 = vmax.f32 %v3586, %v3587
      %v3589 = vsel %vm3371, %v1448, -inf
      %v3590 = vrot.slane %v3589, 4
      %v3591 = vmax.f32 %v3589, %v3590
      %v3592 = vrot.slane %v3591, 2
      %v3593 = vmax.f32 %v3591, %v3592
      %v3594 = vrot.slane %v3593, 1
      %v3595 = vmax.f32 %v3593, %v3594
      %v3596 = vsel %vm3371, %v1456, -inf
      %v3597 = vrot.slane %v3596, 4
      %v3598 = vmax.f32 %v3596, %v3597
      %v3599 = vrot.slane %v3598, 2
      %v3600 = vmax.f32 %v3598, %v3599
      %v3601 = vrot.slane %v3600, 1
      %v3602 = vmax.f32 %v3600, %v3601
      %v3603 = vsel %vm3371, %v1464, -inf
      %v3604 = vrot.slane %v3603, 4
      %v3605 = vmax.f32 %v3603, %v3604
      %v3606 = vrot.slane %v3605, 2
      %v3607 = vmax.f32 %v3605, %v3606
      %v3608 = vrot.slane %v3607, 1
      %v3609 = vmax.f32 %v3607, %v3608
      %v3610 = vsel %vm3371, %v1463, -inf
      %v3611 = vrot.slane %v3610, 4
      %v3612 = vmax.f32 %v3610, %v3611
      %v3613 = vrot.slane %v3612, 2
      %v3614 = vmax.f32 %v3612, %v3613
      %v3615 = vrot.slane %v3614, 1
      %v3616 = vmax.f32 %v3614, %v3615
      %v3617 = vsel %vm3371, %v1465, -inf
      %v3618 = vrot.slane %v3617, 4
      %v3619 = vmax.f32 %v3617, %v3618
      %v3620 = vrot.slane %v3619, 2
      %v3621 = vmax.f32 %v3619, %v3620
      %v3622 = vrot.slane %v3621, 1
      %v3623 = vmax.f32 %v3621, %v3622
      %v3624 = vsel %vm3371, %v1473, -inf
      %v3625 = vrot.slane %v3624, 4
      %v3626 = vmax.f32 %v3624, %v3625
      %v3627 = vrot.slane %v3626, 2
      %v3628 = vmax.f32 %v3626, %v3627
      %v3629 = vrot.slane %v3628, 1
      %v3630 = vmax.f32 %v3628, %v3629
      %v3631 = vsel %vm3371, %v1481, -inf
      %v3632 = vrot.slane %v3631, 4
      %v3633 = vmax.f32 %v3631, %v3632
      %v3634 = vrot.slane %v3633, 2
      %v3635 = vmax.f32 %v3633, %v3634
      %v3636 = vrot.slane %v3635, 1
      %v3637 = vmax.f32 %v3635, %v3636
      %v3638 = vsel %vm3371, %v1480, -inf
      %v3639 = vrot.slane %v3638, 4
      %v3640 = vmax.f32 %v3638, %v3639
      %v3641 = vrot.slane %v3640, 2
      %v3642 = vmax.f32 %v3640, %v3641
      %v3643 = vrot.slane %v3642, 1
      %v3644 = vmax.f32 %v3642, %v3643
      %v3645 = vsel %vm3371, %v1482, -inf
      %v3646 = vrot.slane %v3645, 4
      %v3647 = vmax.f32 %v3645, %v3646
      %v3648 = vrot.slane %v3647, 2
      %v3649 = vmax.f32 %v3647, %v3648
      %v3650 = vrot.slane %v3649, 1
      %v3651 = vmax.f32 %v3649, %v3650
      %v3652 = vsel %vm3371, %v1490, -inf
      %v3653 = vrot.slane %v3652, 4
      %v3654 = vmax.f32 %v3652, %v3653
      %v3655 = vrot.slane %v3654, 2
      %v3656 = vmax.f32 %v3654, %v3655
      %v3657 = vrot.slane %v3656, 1
      %v3658 = vmax.f32 %v3656, %v3657
      %v3659 = vsel %vm3371, %v1498, -inf
      %v3660 = vrot.slane %v3659, 4
      %v3661 = vmax.f32 %v3659, %v3660
      %v3662 = vrot.slane %v3661, 2
      %v3663 = vmax.f32 %v3661, %v3662
      %v3664 = vrot.slane %v3663, 1
      %v3665 = vmax.f32 %v3663, %v3664
      %v3666 = vsel %vm3371, %v1497, -inf
      %v3667 = vrot.slane %v3666, 4
      %v3668 = vmax.f32 %v3666, %v3667
      %v3669 = vrot.slane %v3668, 2
      %v3670 = vmax.f32 %v3668, %v3669
      %v3671 = vrot.slane %v3670, 1
      %v3672 = vmax.f32 %v3670, %v3671
      %v3673 = vsel %vm3371, %v1499, -inf
      %v3674 = vrot.slane %v3673, 4
      %v3675 = vmax.f32 %v3673, %v3674
      %v3676 = vrot.slane %v3675, 2
      %v3677 = vmax.f32 %v3675, %v3676
      %v3678 = vrot.slane %v3677, 1
      %v3679 = vmax.f32 %v3677, %v3678
      %v3680 = vsel %vm3371, %v1507, -inf
      %v3681 = vrot.slane %v3680, 4
      %v3682 = vmax.f32 %v3680, %v3681
      %v3683 = vrot.slane %v3682, 2
      %v3684 = vmax.f32 %v3682, %v3683
      %v3685 = vrot.slane %v3684, 1
      %v3686 = vmax.f32 %v3684, %v3685
      %v3687 = vsel %vm3371, %v1515, -inf
      %v3688 = vrot.slane %v3687, 4
      %v3689 = vmax.f32 %v3687, %v3688
      %v3690 = vrot.slane %v3689, 2
      %v3691 = vmax.f32 %v3689, %v3690
      %v3692 = vrot.slane %v3691, 1
      %v3693 = vmax.f32 %v3691, %v3692
      %v3694 = vsel %vm3371, %v1514, -inf
      %v3695 = vrot.slane %v3694, 4
      %v3696 = vmax.f32 %v3694, %v3695
      %v3697 = vrot.slane %v3696, 2
      %v3698 = vmax.f32 %v3696, %v3697
      %v3699 = vrot.slane %v3698, 1
      %v3700 = vmax.f32 %v3698, %v3699
      %v3701 = vsel %vm3371, %v1516, -inf
      %v3702 = vrot.slane %v3701, 4
      %v3703 = vmax.f32 %v3701, %v3702
      %v3704 = vrot.slane %v3703, 2
      %v3705 = vmax.f32 %v3703, %v3704
      %v3706 = vrot.slane %v3705, 1
      %v3707 = vmax.f32 %v3705, %v3706
      %v3708 = vsel %vm3371, %v1524, -inf
      %v3709 = vrot.slane %v3708, 4
      %v3710 = vmax.f32 %v3708, %v3709
      %v3711 = vrot.slane %v3710, 2
      %v3712 = vmax.f32 %v3710, %v3711
      %v3713 = vrot.slane %v3712, 1
      %v3714 = vmax.f32 %v3712, %v3713
      %v3715 = vsel %vm3371, %v1532, -inf
      %v3716 = vrot.slane %v3715, 4
      %v3717 = vmax.f32 %v3715, %v3716
      %v3718 = vrot.slane %v3717, 2
      %v3719 = vmax.f32 %v3717, %v3718
      %v3720 = vrot.slane %v3719, 1
      %v3721 = vmax.f32 %v3719, %v3720
      %v3722 = vsel %vm3371, %v1531, -inf
      %v3723 = vrot.slane %v3722, 4
      %v3724 = vmax.f32 %v3722, %v3723
      %v3725 = vrot.slane %v3724, 2
      %v3726 = vmax.f32 %v3724, %v3725
      %v3727 = vrot.slane %v3726, 1
      %v3728 = vmax.f32 %v3726, %v3727
      %v3729 = vsel %vm3371, %v1533, -inf
      %v3730 = vrot.slane %v3729, 4
      %v3731 = vmax.f32 %v3729, %v3730
      %v3732 = vrot.slane %v3731, 2
      %v3733 = vmax.f32 %v3731, %v3732
      %v3734 = vrot.slane %v3733, 1
      %v3735 = vmax.f32 %v3733, %v3734
      %v3736 = vsel %vm3371, %v1541, -inf
      %v3737 = vrot.slane %v3736, 4
      %v3738 = vmax.f32 %v3736, %v3737
      %v3739 = vrot.slane %v3738, 2
      %v3740 = vmax.f32 %v3738, %v3739
      %v3741 = vrot.slane %v3740, 1
      %v3742 = vmax.f32 %v3740, %v3741
      %v3743 = vsel %vm3371, %v1549, -inf
      %v3744 = vrot.slane %v3743, 4
      %v3745 = vmax.f32 %v3743, %v3744
      %v3746 = vrot.slane %v3745, 2
      %v3747 = vmax.f32 %v3745, %v3746
      %v3748 = vrot.slane %v3747, 1
      %v3749 = vmax.f32 %v3747, %v3748
      %v3750 = vsel %vm3371, %v1548, -inf
      %v3751 = vrot.slane %v3750, 4
      %v3752 = vmax.f32 %v3750, %v3751
      %v3753 = vrot.slane %v3752, 2
      %v3754 = vmax.f32 %v3752, %v3753
      %v3755 = vrot.slane %v3754, 1
      %v3756 = vmax.f32 %v3754, %v3755
      %v3757 = vsel %vm3371, %v1550, -inf
      %v3758 = vrot.slane %v3757, 4
      %v3759 = vmax.f32 %v3757, %v3758
      %v3760 = vrot.slane %v3759, 2
      %v3761 = vmax.f32 %v3759, %v3760
      %v3762 = vrot.slane %v3761, 1
      %v3763 = vmax.f32 %v3761, %v3762
      %v3764 = vsel %vm3371, %v1558, -inf
      %v3765 = vrot.slane %v3764, 4
      %v3766 = vmax.f32 %v3764, %v3765
      %v3767 = vrot.slane %v3766, 2
      %v3768 = vmax.f32 %v3766, %v3767
      %v3769 = vrot.slane %v3768, 1
      %v3770 = vmax.f32 %v3768, %v3769
      %v3771 = vsel %vm3371, %v1566, -inf
      %v3772 = vrot.slane %v3771, 4
      %v3773 = vmax.f32 %v3771, %v3772
      %v3774 = vrot.slane %v3773, 2
      %v3775 = vmax.f32 %v3773, %v3774
      %v3776 = vrot.slane %v3775, 1
      %v3777 = vmax.f32 %v3775, %v3776
      %v3778 = vsel %vm3371, %v1565, -inf
      %v3779 = vrot.slane %v3778, 4
      %v3780 = vmax.f32 %v3778, %v3779
      %v3781 = vrot.slane %v3780, 2
      %v3782 = vmax.f32 %v3780, %v3781
      %v3783 = vrot.slane %v3782, 1
      %v3784 = vmax.f32 %v3782, %v3783
      %v3785 = vsel %vm3371, %v1567, -inf
      %v3786 = vrot.slane %v3785, 4
      %v3787 = vmax.f32 %v3785, %v3786
      %v3788 = vrot.slane %v3787, 2
      %v3789 = vmax.f32 %v3787, %v3788
      %v3790 = vrot.slane %v3789, 1
      %v3791 = vmax.f32 %v3789, %v3790
      %v3792 = vsel %vm3371, %v1575, -inf
      %v3793 = vrot.slane %v3792, 4
      %v3794 = vmax.f32 %v3792, %v3793
      %v3795 = vrot.slane %v3794, 2
      %v3796 = vmax.f32 %v3794, %v3795
      %v3797 = vrot.slane %v3796, 1
      %v3798 = vmax.f32 %v3796, %v3797
      %v3799 = vsel %vm3371, %v1583, -inf
      %v3800 = vrot.slane %v3799, 4
      %v3801 = vmax.f32 %v3799, %v3800
      %v3802 = vrot.slane %v3801, 2
      %v3803 = vmax.f32 %v3801, %v3802
      %v3804 = vrot.slane %v3803, 1
      %v3805 = vmax.f32 %v3803, %v3804
      %v3806 = vsel %vm3371, %v1582, -inf
      %v3807 = vrot.slane %v3806, 4
      %v3808 = vmax.f32 %v3806, %v3807
      %v3809 = vrot.slane %v3808, 2
      %v3810 = vmax.f32 %v3808, %v3809
      %v3811 = vrot.slane %v3810, 1
      %v3812 = vmax.f32 %v3810, %v3811
      %v3813 = vsel %vm3371, %v1584, -inf
      %v3814 = vrot.slane %v3813, 4
      %v3815 = vmax.f32 %v3813, %v3814
      %v3816 = vrot.slane %v3815, 2
      %v3817 = vmax.f32 %v3815, %v3816
      %v3818 = vrot.slane %v3817, 1
      %v3819 = vmax.f32 %v3817, %v3818
      %v3820 = vsel %vm3371, %v1592, -inf
      %v3821 = vrot.slane %v3820, 4
      %v3822 = vmax.f32 %v3820, %v3821
      %v3823 = vrot.slane %v3822, 2
      %v3824 = vmax.f32 %v3822, %v3823
      %v3825 = vrot.slane %v3824, 1
      %v3826 = vmax.f32 %v3824, %v3825
      %v3827 = vsel %vm3371, %v1600, -inf
      %v3828 = vrot.slane %v3827, 4
      %v3829 = vmax.f32 %v3827, %v3828
      %v3830 = vrot.slane %v3829, 2
      %v3831 = vmax.f32 %v3829, %v3830
      %v3832 = vrot.slane %v3831, 1
      %v3833 = vmax.f32 %v3831, %v3832
      %v3834 = vsel %vm3371, %v1599, -inf
      %v3835 = vrot.slane %v3834, 4
      %v3836 = vmax.f32 %v3834, %v3835
      %v3837 = vrot.slane %v3836, 2
      %v3838 = vmax.f32 %v3836, %v3837
      %v3839 = vrot.slane %v3838, 1
      %v3840 = vmax.f32 %v3838, %v3839
      %v3841 = vsel %vm3371, %v1601, -inf
      %v3842 = vrot.slane %v3841, 4
      %v3843 = vmax.f32 %v3841, %v3842
      %v3844 = vrot.slane %v3843, 2
      %v3845 = vmax.f32 %v3843, %v3844
      %v3846 = vrot.slane %v3845, 1
      %v3847 = vmax.f32 %v3845, %v3846
      %v3848 = vsel %vm3371, %v1609, -inf
      %v3849 = vrot.slane %v3848, 4
      %v3850 = vmax.f32 %v3848, %v3849
      %v3851 = vrot.slane %v3850, 2
      %v3852 = vmax.f32 %v3850, %v3851
      %v3853 = vrot.slane %v3852, 1
      %v3854 = vmax.f32 %v3852, %v3853
      %v3855 = vsel %vm3371, %v1617, -inf
      %v3856 = vrot.slane %v3855, 4
      %v3857 = vmax.f32 %v3855, %v3856
      %v3858 = vrot.slane %v3857, 2
      %v3859 = vmax.f32 %v3857, %v3858
      %v3860 = vrot.slane %v3859, 1
      %v3861 = vmax.f32 %v3859, %v3860
      %v3862 = vsel %vm3371, %v1616, -inf
      %v3863 = vrot.slane %v3862, 4
      %v3864 = vmax.f32 %v3862, %v3863
      %v3865 = vrot.slane %v3864, 2
      %v3866 = vmax.f32 %v3864, %v3865
      %v3867 = vrot.slane %v3866, 1
      %v3868 = vmax.f32 %v3866, %v3867
      %v3869 = vsel %vm3371, %v1618, -inf
      %v3870 = vrot.slane %v3869, 4
      %v3871 = vmax.f32 %v3869, %v3870
      %v3872 = vrot.slane %v3871, 2
      %v3873 = vmax.f32 %v3871, %v3872
      %v3874 = vrot.slane %v3873, 1
      %v3875 = vmax.f32 %v3873, %v3874
      %v3876 = vsel %vm3371, %v1626, -inf
      %v3877 = vrot.slane %v3876, 4
      %v3878 = vmax.f32 %v3876, %v3877
      %v3879 = vrot.slane %v3878, 2
      %v3880 = vmax.f32 %v3878, %v3879
      %v3881 = vrot.slane %v3880, 1
      %v3882 = vmax.f32 %v3880, %v3881
      %v3883 = vsel %vm3371, %v1634, -inf
      %v3884 = vrot.slane %v3883, 4
      %v3885 = vmax.f32 %v3883, %v3884
      %v3886 = vrot.slane %v3885, 2
      %v3887 = vmax.f32 %v3885, %v3886
      %v3888 = vrot.slane %v3887, 1
      %v3889 = vmax.f32 %v3887, %v3888
      %v3890 = vsel %vm3371, %v1633, -inf
      %v3891 = vrot.slane %v3890, 4
      %v3892 = vmax.f32 %v3890, %v3891
      %v3893 = vrot.slane %v3892, 2
      %v3894 = vmax.f32 %v3892, %v3893
      %v3895 = vrot.slane %v3894, 1
      %v3896 = vmax.f32 %v3894, %v3895
      %v3897 = vsel %vm3371, %v1635, -inf
      %v3898 = vrot.slane %v3897, 4
      %v3899 = vmax.f32 %v3897, %v3898
      %v3900 = vrot.slane %v3899, 2
      %v3901 = vmax.f32 %v3899, %v3900
      %v3902 = vrot.slane %v3901, 1
      %v3903 = vmax.f32 %v3901, %v3902
      %v3904 = vsel %vm3371, %v1643, -inf
      %v3905 = vrot.slane %v3904, 4
      %v3906 = vmax.f32 %v3904, %v3905
      %v3907 = vrot.slane %v3906, 2
      %v3908 = vmax.f32 %v3906, %v3907
      %v3909 = vrot.slane %v3908, 1
      %v3910 = vmax.f32 %v3908, %v3909
      %v3911 = vsel %vm3371, %v1651, -inf
      %v3912 = vrot.slane %v3911, 4
      %v3913 = vmax.f32 %v3911, %v3912
      %v3914 = vrot.slane %v3913, 2
      %v3915 = vmax.f32 %v3913, %v3914
      %v3916 = vrot.slane %v3915, 1
      %v3917 = vmax.f32 %v3915, %v3916
      %v3918 = vsel %vm3371, %v1650, -inf
      %v3919 = vrot.slane %v3918, 4
      %v3920 = vmax.f32 %v3918, %v3919
      %v3921 = vrot.slane %v3920, 2
      %v3922 = vmax.f32 %v3920, %v3921
      %v3923 = vrot.slane %v3922, 1
      %v3924 = vmax.f32 %v3922, %v3923
      %v3925 = vsel %vm3371, %v1652, -inf
      %v3926 = vrot.slane %v3925, 4
      %v3927 = vmax.f32 %v3925, %v3926
      %v3928 = vrot.slane %v3927, 2
      %v3929 = vmax.f32 %v3927, %v3928
      %v3930 = vrot.slane %v3929, 1
      %v3931 = vmax.f32 %v3929, %v3930
      %v3932 = vsel %vm3371, %v1660, -inf
      %v3933 = vrot.slane %v3932, 4
      %v3934 = vmax.f32 %v3932, %v3933
      %v3935 = vrot.slane %v3934, 2
      %v3936 = vmax.f32 %v3934, %v3935
      %v3937 = vrot.slane %v3936, 1
      %v3938 = vmax.f32 %v3936, %v3937
      %v3939 = vsel %vm3371, %v1668, -inf
      %v3940 = vrot.slane %v3939, 4
      %v3941 = vmax.f32 %v3939, %v3940
      %v3942 = vrot.slane %v3941, 2
      %v3943 = vmax.f32 %v3941, %v3942
      %v3944 = vrot.slane %v3943, 1
      %v3945 = vmax.f32 %v3943, %v3944
      %v3946 = vsel %vm3371, %v1667, -inf
      %v3947 = vrot.slane %v3946, 4
      %v3948 = vmax.f32 %v3946, %v3947
      %v3949 = vrot.slane %v3948, 2
      %v3950 = vmax.f32 %v3948, %v3949
      %v3951 = vrot.slane %v3950, 1
      %v3952 = vmax.f32 %v3950, %v3951
      %v3953 = vsel %vm3371, %v1669, -inf
      %v3954 = vrot.slane %v3953, 4
      %v3955 = vmax.f32 %v3953, %v3954
      %v3956 = vrot.slane %v3955, 2
      %v3957 = vmax.f32 %v3955, %v3956
      %v3958 = vrot.slane %v3957, 1
      %v3959 = vmax.f32 %v3957, %v3958
      %v3960 = vsel %vm3371, %v1677, -inf
      %v3961 = vrot.slane %v3960, 4
      %v3962 = vmax.f32 %v3960, %v3961
      %v3963 = vrot.slane %v3962, 2
      %v3964 = vmax.f32 %v3962, %v3963
      %v3965 = vrot.slane %v3964, 1
      %v3966 = vmax.f32 %v3964, %v3965
      %v3967 = vsel %vm3371, %v1685, -inf
      %v3968 = vrot.slane %v3967, 4
      %v3969 = vmax.f32 %v3967, %v3968
      %v3970 = vrot.slane %v3969, 2
      %v3971 = vmax.f32 %v3969, %v3970
      %v3972 = vrot.slane %v3971, 1
      %v3973 = vmax.f32 %v3971, %v3972
      %v3974 = vsel %vm3371, %v1684, -inf
      %v3975 = vrot.slane %v3974, 4
      %v3976 = vmax.f32 %v3974, %v3975
      %v3977 = vrot.slane %v3976, 2
      %v3978 = vmax.f32 %v3976, %v3977
      %v3979 = vrot.slane %v3978, 1
      %v3980 = vmax.f32 %v3978, %v3979
      %v3981 = vsel %vm3371, %v1686, -inf
      %v3982 = vrot.slane %v3981, 4
      %v3983 = vmax.f32 %v3981, %v3982
      %v3984 = vrot.slane %v3983, 2
      %v3985 = vmax.f32 %v3983, %v3984
      %v3986 = vrot.slane %v3985, 1
      %v3987 = vmax.f32 %v3985, %v3986
      %v3988 = vsel %vm3371, %v1694, -inf
      %v3989 = vrot.slane %v3988, 4
      %v3990 = vmax.f32 %v3988, %v3989
      %v3991 = vrot.slane %v3990, 2
      %v3992 = vmax.f32 %v3990, %v3991
      %v3993 = vrot.slane %v3992, 1
      %v3994 = vmax.f32 %v3992, %v3993
      %v3995 = vsel %vm3371, %v1702, -inf
      %v3996 = vrot.slane %v3995, 4
      %v3997 = vmax.f32 %v3995, %v3996
      %v3998 = vrot.slane %v3997, 2
      %v3999 = vmax.f32 %v3997, %v3998
      %v4000 = vrot.slane %v3999, 1
      %v4001 = vmax.f32 %v3999, %v4000
      %v4002 = vsel %vm3371, %v1701, -inf
      %v4003 = vrot.slane %v4002, 4
      %v4004 = vmax.f32 %v4002, %v4003
      %v4005 = vrot.slane %v4004, 2
      %v4006 = vmax.f32 %v4004, %v4005
      %v4007 = vrot.slane %v4006, 1
      %v4008 = vmax.f32 %v4006, %v4007
      %v4009 = vsel %vm3371, %v1703, -inf
      %v4010 = vrot.slane %v4009, 4
      %v4011 = vmax.f32 %v4009, %v4010
      %v4012 = vrot.slane %v4011, 2
      %v4013 = vmax.f32 %v4011, %v4012
      %v4014 = vrot.slane %v4013, 1
      %v4015 = vmax.f32 %v4013, %v4014
      %v4016 = vsel %vm3371, %v1711, -inf
      %v4017 = vrot.slane %v4016, 4
      %v4018 = vmax.f32 %v4016, %v4017
      %v4019 = vrot.slane %v4018, 2
      %v4020 = vmax.f32 %v4018, %v4019
      %v4021 = vrot.slane %v4020, 1
      %v4022 = vmax.f32 %v4020, %v4021
      %v4023 = vsel %vm3371, %v1719, -inf
      %v4024 = vrot.slane %v4023, 4
      %v4025 = vmax.f32 %v4023, %v4024
      %v4026 = vrot.slane %v4025, 2
      %v4027 = vmax.f32 %v4025, %v4026
      %v4028 = vrot.slane %v4027, 1
      %v4029 = vmax.f32 %v4027, %v4028
      %v4030 = vsel %vm3371, %v1718, -inf
      %v4031 = vrot.slane %v4030, 4
      %v4032 = vmax.f32 %v4030, %v4031
      %v4033 = vrot.slane %v4032, 2
      %v4034 = vmax.f32 %v4032, %v4033
      %v4035 = vrot.slane %v4034, 1
      %v4036 = vmax.f32 %v4034, %v4035
      %v4037 = vsel %vm3371, %v1720, -inf
      %v4038 = vrot.slane %v4037, 4
      %v4039 = vmax.f32 %v4037, %v4038
      %v4040 = vrot.slane %v4039, 2
      %v4041 = vmax.f32 %v4039, %v4040
      %v4042 = vrot.slane %v4041, 1
      %v4043 = vmax.f32 %v4041, %v4042
      %v4044 = vsel %vm3371, %v1728, -inf
      %v4045 = vrot.slane %v4044, 4
      %v4046 = vmax.f32 %v4044, %v4045
      %v4047 = vrot.slane %v4046, 2
      %v4048 = vmax.f32 %v4046, %v4047
      %v4049 = vrot.slane %v4048, 1
      %v4050 = vmax.f32 %v4048, %v4049
      %v4051 = vsel %vm3371, %v1736, -inf
      %v4052 = vrot.slane %v4051, 4
      %v4053 = vmax.f32 %v4051, %v4052
      %v4054 = vrot.slane %v4053, 2
      %v4055 = vmax.f32 %v4053, %v4054
      %v4056 = vrot.slane %v4055, 1
      %v4057 = vmax.f32 %v4055, %v4056
      %v4058 = vsel %vm3371, %v1735, -inf
      %v4059 = vrot.slane %v4058, 4
      %v4060 = vmax.f32 %v4058, %v4059
      %v4061 = vrot.slane %v4060, 2
      %v4062 = vmax.f32 %v4060, %v4061
      %v4063 = vrot.slane %v4062, 1
      %v4064 = vmax.f32 %v4062, %v4063
      %v4065 = vsel %vm3371, %v1737, -inf
      %v4066 = vrot.slane %v4065, 4
      %v4067 = vmax.f32 %v4065, %v4066
      %v4068 = vrot.slane %v4067, 2
      %v4069 = vmax.f32 %v4067, %v4068
      %v4070 = vrot.slane %v4069, 1
      %v4071 = vmax.f32 %v4069, %v4070
      %v4072 = vsel %vm3371, %v1745, -inf
      %v4073 = vrot.slane %v4072, 4
      %v4074 = vmax.f32 %v4072, %v4073
      %v4075 = vrot.slane %v4074, 2
      %v4076 = vmax.f32 %v4074, %v4075
      %v4077 = vrot.slane %v4076, 1
      %v4078 = vmax.f32 %v4076, %v4077
      %v4079 = vsel %vm3371, %v1753, -inf
      %v4080 = vrot.slane %v4079, 4
      %v4081 = vmax.f32 %v4079, %v4080
      %v4082 = vrot.slane %v4081, 2
      %v4083 = vmax.f32 %v4081, %v4082
      %v4084 = vrot.slane %v4083, 1
      %v4085 = vmax.f32 %v4083, %v4084
      %v4086 = vsel %vm3371, %v1752, -inf
      %v4087 = vrot.slane %v4086, 4
      %v4088 = vmax.f32 %v4086, %v4087
      %v4089 = vrot.slane %v4088, 2
      %v4090 = vmax.f32 %v4088, %v4089
      %v4091 = vrot.slane %v4090, 1
      %v4092 = vmax.f32 %v4090, %v4091
      %v4093 = vsel %vm3371, %v1754, -inf
      %v4094 = vrot.slane %v4093, 4
      %v4095 = vmax.f32 %v4093, %v4094
      %v4096 = vrot.slane %v4095, 2
      %v4097 = vmax.f32 %v4095, %v4096
      %v4098 = vrot.slane %v4097, 1
      %v4099 = vmax.f32 %v4097, %v4098
      %v4100 = vsel %vm3371, %v1762, -inf
      %v4101 = vrot.slane %v4100, 4
      %v4102 = vmax.f32 %v4100, %v4101
      %v4103 = vrot.slane %v4102, 2
      %v4104 = vmax.f32 %v4102, %v4103
      %v4105 = vrot.slane %v4104, 1
      %v4106 = vmax.f32 %v4104, %v4105
      %v4107 = vsel %vm3371, %v1770, -inf
      %v4108 = vrot.slane %v4107, 4
      %v4109 = vmax.f32 %v4107, %v4108
      %v4110 = vrot.slane %v4109, 2
      %v4111 = vmax.f32 %v4109, %v4110
      %v4112 = vrot.slane %v4111, 1
      %v4113 = vmax.f32 %v4111, %v4112
      %v4114 = vsel %vm3371, %v1769, -inf
      %v4115 = vrot.slane %v4114, 4
      %v4116 = vmax.f32 %v4114, %v4115
      %v4117 = vrot.slane %v4116, 2
      %v4118 = vmax.f32 %v4116, %v4117
      %v4119 = vrot.slane %v4118, 1
      %v4120 = vmax.f32 %v4118, %v4119
      %v4121 = vsel %vm3371, %v1771, -inf
      %v4122 = vrot.slane %v4121, 4
      %v4123 = vmax.f32 %v4121, %v4122
      %v4124 = vrot.slane %v4123, 2
      %v4125 = vmax.f32 %v4123, %v4124
      %v4126 = vrot.slane %v4125, 1
      %v4127 = vmax.f32 %v4125, %v4126
      %v4128 = vsel %vm3371, %v1779, -inf
      %v4129 = vrot.slane %v4128, 4
      %v4130 = vmax.f32 %v4128, %v4129
      %v4131 = vrot.slane %v4130, 2
      %v4132 = vmax.f32 %v4130, %v4131
      %v4133 = vrot.slane %v4132, 1
      %v4134 = vmax.f32 %v4132, %v4133
      %v4135 = vsel %vm3371, %v1787, -inf
      %v4136 = vrot.slane %v4135, 4
      %v4137 = vmax.f32 %v4135, %v4136
      %v4138 = vrot.slane %v4137, 2
      %v4139 = vmax.f32 %v4137, %v4138
      %v4140 = vrot.slane %v4139, 1
      %v4141 = vmax.f32 %v4139, %v4140
      %v4142 = vsel %vm3371, %v1786, -inf
      %v4143 = vrot.slane %v4142, 4
      %v4144 = vmax.f32 %v4142, %v4143
      %v4145 = vrot.slane %v4144, 2
      %v4146 = vmax.f32 %v4144, %v4145
      %v4147 = vrot.slane %v4146, 1
      %v4148 = vmax.f32 %v4146, %v4147
      %v4149 = vsel %vm3371, %v1788, -inf
      %v4150 = vrot.slane %v4149, 4
      %v4151 = vmax.f32 %v4149, %v4150
      %v4152 = vrot.slane %v4151, 2
      %v4153 = vmax.f32 %v4151, %v4152
      %v4154 = vrot.slane %v4153, 1
      %v4155 = vmax.f32 %v4153, %v4154
      %v4156 = vsel %vm3371, %v1796, -inf
      %v4157 = vrot.slane %v4156, 4
      %v4158 = vmax.f32 %v4156, %v4157
      %v4159 = vrot.slane %v4158, 2
      %v4160 = vmax.f32 %v4158, %v4159
      %v4161 = vrot.slane %v4160, 1
      %v4162 = vmax.f32 %v4160, %v4161
      %v4163 = vsel %vm3371, %v1804, -inf
      %v4164 = vrot.slane %v4163, 4
      %v4165 = vmax.f32 %v4163, %v4164
      %v4166 = vrot.slane %v4165, 2
      %v4167 = vmax.f32 %v4165, %v4166
      %v4168 = vrot.slane %v4167, 1
      %v4169 = vmax.f32 %v4167, %v4168
      %v4170 = vsel %vm3371, %v1803, -inf
      %v4171 = vrot.slane %v4170, 4
      %v4172 = vmax.f32 %v4170, %v4171
      %v4173 = vrot.slane %v4172, 2
      %v4174 = vmax.f32 %v4172, %v4173
      %v4175 = vrot.slane %v4174, 1
      %v4176 = vmax.f32 %v4174, %v4175
      %v4177 = vsel %vm3371, %v1805, -inf
      %v4178 = vrot.slane %v4177, 4
      %v4179 = vmax.f32 %v4177, %v4178
      %v4180 = vrot.slane %v4179, 2
      %v4181 = vmax.f32 %v4179, %v4180
      %v4182 = vrot.slane %v4181, 1
      %v4183 = vmax.f32 %v4181, %v4182
      %v4184 = vsel %vm3371, %v1813, -inf
      %v4185 = vrot.slane %v4184, 4
      %v4186 = vmax.f32 %v4184, %v4185
      %v4187 = vrot.slane %v4186, 2
      %v4188 = vmax.f32 %v4186, %v4187
      %v4189 = vrot.slane %v4188, 1
      %v4190 = vmax.f32 %v4188, %v4189
      %v4191 = vsel %vm3371, %v1821, -inf
      %v4192 = vrot.slane %v4191, 4
      %v4193 = vmax.f32 %v4191, %v4192
      %v4194 = vrot.slane %v4193, 2
      %v4195 = vmax.f32 %v4193, %v4194
      %v4196 = vrot.slane %v4195, 1
      %v4197 = vmax.f32 %v4195, %v4196
      %v4198 = vsel %vm3371, %v1820, -inf
      %v4199 = vrot.slane %v4198, 4
      %v4200 = vmax.f32 %v4198, %v4199
      %v4201 = vrot.slane %v4200, 2
      %v4202 = vmax.f32 %v4200, %v4201
      %v4203 = vrot.slane %v4202, 1
      %v4204 = vmax.f32 %v4202, %v4203
      %v4205 = vsel %vm3371, %v1822, -inf
      %v4206 = vrot.slane %v4205, 4
      %v4207 = vmax.f32 %v4205, %v4206
      %v4208 = vrot.slane %v4207, 2
      %v4209 = vmax.f32 %v4207, %v4208
      %v4210 = vrot.slane %v4209, 1
      %v4211 = vmax.f32 %v4209, %v4210
      %v4212 = vsel %vm3371, %v1830, -inf
      %v4213 = vrot.slane %v4212, 4
      %v4214 = vmax.f32 %v4212, %v4213
      %v4215 = vrot.slane %v4214, 2
      %v4216 = vmax.f32 %v4214, %v4215
      %v4217 = vrot.slane %v4216, 1
      %v4218 = vmax.f32 %v4216, %v4217
      %v4219 = vsel %vm3371, %v1838, -inf
      %v4220 = vrot.slane %v4219, 4
      %v4221 = vmax.f32 %v4219, %v4220
      %v4222 = vrot.slane %v4221, 2
      %v4223 = vmax.f32 %v4221, %v4222
      %v4224 = vrot.slane %v4223, 1
      %v4225 = vmax.f32 %v4223, %v4224
      %v4226 = vsel %vm3371, %v1837, -inf
      %v4227 = vrot.slane %v4226, 4
      %v4228 = vmax.f32 %v4226, %v4227
      %v4229 = vrot.slane %v4228, 2
      %v4230 = vmax.f32 %v4228, %v4229
      %v4231 = vrot.slane %v4230, 1
      %v4232 = vmax.f32 %v4230, %v4231
      %v4233 = vsel %vm3371, %v1839, -inf
      %v4234 = vrot.slane %v4233, 4
      %v4235 = vmax.f32 %v4233, %v4234
      %v4236 = vrot.slane %v4235, 2
      %v4237 = vmax.f32 %v4235, %v4236
      %v4238 = vrot.slane %v4237, 1
      %v4239 = vmax.f32 %v4237, %v4238
      %v4240 = vsel %vm3371, %v1847, -inf
      %v4241 = vrot.slane %v4240, 4
      %v4242 = vmax.f32 %v4240, %v4241
      %v4243 = vrot.slane %v4242, 2
      %v4244 = vmax.f32 %v4242, %v4243
      %v4245 = vrot.slane %v4244, 1
      %v4246 = vmax.f32 %v4244, %v4245
      %v4247 = vsel %vm3371, %v1855, -inf
      %v4248 = vrot.slane %v4247, 4
      %v4249 = vmax.f32 %v4247, %v4248
      %v4250 = vrot.slane %v4249, 2
      %v4251 = vmax.f32 %v4249, %v4250
      %v4252 = vrot.slane %v4251, 1
      %v4253 = vmax.f32 %v4251, %v4252
      %v4254 = vsel %vm3371, %v1854, -inf
      %v4255 = vrot.slane %v4254, 4
      %v4256 = vmax.f32 %v4254, %v4255
      %v4257 = vrot.slane %v4256, 2
      %v4258 = vmax.f32 %v4256, %v4257
      %v4259 = vrot.slane %v4258, 1
      %v4260 = vmax.f32 %v4258, %v4259
      %v4261 = vsel %vm3371, %v1856, -inf
      %v4262 = vrot.slane %v4261, 4
      %v4263 = vmax.f32 %v4261, %v4262
      %v4264 = vrot.slane %v4263, 2
      %v4265 = vmax.f32 %v4263, %v4264
      %v4266 = vrot.slane %v4265, 1
      %v4267 = vmax.f32 %v4265, %v4266
      %v4268 = vsel %vm3371, %v1864, -inf
      %v4269 = vrot.slane %v4268, 4
      %v4270 = vmax.f32 %v4268, %v4269
      %v4271 = vrot.slane %v4270, 2
      %v4272 = vmax.f32 %v4270, %v4271
      %v4273 = vrot.slane %v4272, 1
      %v4274 = vmax.f32 %v4272, %v4273
      %v4275 = vsel %vm3371, %v1872, -inf
      %v4276 = vrot.slane %v4275, 4
      %v4277 = vmax.f32 %v4275, %v4276
      %v4278 = vrot.slane %v4277, 2
      %v4279 = vmax.f32 %v4277, %v4278
      %v4280 = vrot.slane %v4279, 1
      %v4281 = vmax.f32 %v4279, %v4280
      %v4282 = vsel %vm3371, %v1871, -inf
      %v4283 = vrot.slane %v4282, 4
      %v4284 = vmax.f32 %v4282, %v4283
      %v4285 = vrot.slane %v4284, 2
      %v4286 = vmax.f32 %v4284, %v4285
      %v4287 = vrot.slane %v4286, 1
      %v4288 = vmax.f32 %v4286, %v4287
      %v4289 = vsel %vm3371, %v1873, -inf
      %v4290 = vrot.slane %v4289, 4
      %v4291 = vmax.f32 %v4289, %v4290
      %v4292 = vrot.slane %v4291, 2
      %v4293 = vmax.f32 %v4291, %v4292
      %v4294 = vrot.slane %v4293, 1
      %v4295 = vmax.f32 %v4293, %v4294
      %v4296 = vsel %vm3371, %v1881, -inf
      %v4297 = vrot.slane %v4296, 4
      %v4298 = vmax.f32 %v4296, %v4297
      %v4299 = vrot.slane %v4298, 2
      %v4300 = vmax.f32 %v4298, %v4299
      %v4301 = vrot.slane %v4300, 1
      %v4302 = vmax.f32 %v4300, %v4301
      %v4303 = vsel %vm3371, %v1889, -inf
      %v4304 = vrot.slane %v4303, 4
      %v4305 = vmax.f32 %v4303, %v4304
      %v4306 = vrot.slane %v4305, 2
      %v4307 = vmax.f32 %v4305, %v4306
      %v4308 = vrot.slane %v4307, 1
      %v4309 = vmax.f32 %v4307, %v4308
      %v4310 = vsel %vm3371, %v1888, -inf
      %v4311 = vrot.slane %v4310, 4
      %v4312 = vmax.f32 %v4310, %v4311
      %v4313 = vrot.slane %v4312, 2
      %v4314 = vmax.f32 %v4312, %v4313
      %v4315 = vrot.slane %v4314, 1
      %v4316 = vmax.f32 %v4314, %v4315
      %v4317 = vsel %vm3371, %v1890, -inf
      %v4318 = vrot.slane %v4317, 4
      %v4319 = vmax.f32 %v4317, %v4318
      %v4320 = vrot.slane %v4319, 2
      %v4321 = vmax.f32 %v4319, %v4320
      %v4322 = vrot.slane %v4321, 1
      %v4323 = vmax.f32 %v4321, %v4322
      %v4324 = vsel %vm3371, %v1898, -inf
      %v4325 = vrot.slane %v4324, 4
      %v4326 = vmax.f32 %v4324, %v4325
      %v4327 = vrot.slane %v4326, 2
      %v4328 = vmax.f32 %v4326, %v4327
      %v4329 = vrot.slane %v4328, 1
      %v4330 = vmax.f32 %v4328, %v4329
      %v4331 = vsel %vm3371, %v1906, -inf
      %v4332 = vrot.slane %v4331, 4
      %v4333 = vmax.f32 %v4331, %v4332
      %v4334 = vrot.slane %v4333, 2
      %v4335 = vmax.f32 %v4333, %v4334
      %v4336 = vrot.slane %v4335, 1
      %v4337 = vmax.f32 %v4335, %v4336
      %v4338 = vsel %vm3371, %v1905, -inf
      %v4339 = vrot.slane %v4338, 4
      %v4340 = vmax.f32 %v4338, %v4339
      %v4341 = vrot.slane %v4340, 2
      %v4342 = vmax.f32 %v4340, %v4341
      %v4343 = vrot.slane %v4342, 1
      %v4344 = vmax.f32 %v4342, %v4343
      %v4345 = vsel %vm3371, %v1907, -inf
      %v4346 = vrot.slane %v4345, 4
      %v4347 = vmax.f32 %v4345, %v4346
      %v4348 = vrot.slane %v4347, 2
      %v4349 = vmax.f32 %v4347, %v4348
      %v4350 = vrot.slane %v4349, 1
      %v4351 = vmax.f32 %v4349, %v4350
      %v4352 = vsel %vm3371, %v1915, -inf
      %v4353 = vrot.slane %v4352, 4
      %v4354 = vmax.f32 %v4352, %v4353
      %v4355 = vrot.slane %v4354, 2
      %v4356 = vmax.f32 %v4354, %v4355
      %v4357 = vrot.slane %v4356, 1
      %v4358 = vmax.f32 %v4356, %v4357
      %v4359 = vsel %vm3371, %v1923, -inf
      %v4360 = vrot.slane %v4359, 4
      %v4361 = vmax.f32 %v4359, %v4360
      %v4362 = vrot.slane %v4361, 2
      %v4363 = vmax.f32 %v4361, %v4362
      %v4364 = vrot.slane %v4363, 1
      %v4365 = vmax.f32 %v4363, %v4364
      %v4366 = vsel %vm3371, %v1922, -inf
      %v4367 = vrot.slane %v4366, 4
      %v4368 = vmax.f32 %v4366, %v4367
      %v4369 = vrot.slane %v4368, 2
      %v4370 = vmax.f32 %v4368, %v4369
      %v4371 = vrot.slane %v4370, 1
      %v4372 = vmax.f32 %v4370, %v4371
      %v4373 = vsel %vm3371, %v1924, -inf
      %v4374 = vrot.slane %v4373, 4
      %v4375 = vmax.f32 %v4373, %v4374
      %v4376 = vrot.slane %v4375, 2
      %v4377 = vmax.f32 %v4375, %v4376
      %v4378 = vrot.slane %v4377, 1
      %v4379 = vmax.f32 %v4377, %v4378
      %v4380 = vsel %vm3371, %v1932, -inf
      %v4381 = vrot.slane %v4380, 4
      %v4382 = vmax.f32 %v4380, %v4381
      %v4383 = vrot.slane %v4382, 2
      %v4384 = vmax.f32 %v4382, %v4383
      %v4385 = vrot.slane %v4384, 1
      %v4386 = vmax.f32 %v4384, %v4385
      %v4387 = vsel %vm3371, %v1940, -inf
      %v4388 = vrot.slane %v4387, 4
      %v4389 = vmax.f32 %v4387, %v4388
      %v4390 = vrot.slane %v4389, 2
      %v4391 = vmax.f32 %v4389, %v4390
      %v4392 = vrot.slane %v4391, 1
      %v4393 = vmax.f32 %v4391, %v4392
      %v4394 = vsel %vm3371, %v1939, -inf
      %v4395 = vrot.slane %v4394, 4
      %v4396 = vmax.f32 %v4394, %v4395
      %v4397 = vrot.slane %v4396, 2
      %v4398 = vmax.f32 %v4396, %v4397
      %v4399 = vrot.slane %v4398, 1
      %v4400 = vmax.f32 %v4398, %v4399
      %v4401 = vsel %vm3371, %v1941, -inf
      %v4402 = vrot.slane %v4401, 4
      %v4403 = vmax.f32 %v4401, %v4402
      %v4404 = vrot.slane %v4403, 2
      %v4405 = vmax.f32 %v4403, %v4404
      %v4406 = vrot.slane %v4405, 1
      %v4407 = vmax.f32 %v4405, %v4406
      %v4408 = vsel %vm3371, %v1949, -inf
      %v4409 = vrot.slane %v4408, 4
      %v4410 = vmax.f32 %v4408, %v4409
      %v4411 = vrot.slane %v4410, 2
      %v4412 = vmax.f32 %v4410, %v4411
      %v4413 = vrot.slane %v4412, 1
      %v4414 = vmax.f32 %v4412, %v4413
      %v4415 = vsel %vm3371, %v1957, -inf
      %v4416 = vrot.slane %v4415, 4
      %v4417 = vmax.f32 %v4415, %v4416
      %v4418 = vrot.slane %v4417, 2
      %v4419 = vmax.f32 %v4417, %v4418
      %v4420 = vrot.slane %v4419, 1
      %v4421 = vmax.f32 %v4419, %v4420
      %v4422 = vsel %vm3371, %v1956, -inf
      %v4423 = vrot.slane %v4422, 4
      %v4424 = vmax.f32 %v4422, %v4423
      %v4425 = vrot.slane %v4424, 2
      %v4426 = vmax.f32 %v4424, %v4425
      %v4427 = vrot.slane %v4426, 1
      %v4428 = vmax.f32 %v4426, %v4427
      %v4429 = vsel %vm3371, %v1958, -inf
      %v4430 = vrot.slane %v4429, 4
      %v4431 = vmax.f32 %v4429, %v4430
      %v4432 = vrot.slane %v4431, 2
      %v4433 = vmax.f32 %v4431, %v4432
      %v4434 = vrot.slane %v4433, 1
      %v4435 = vmax.f32 %v4433, %v4434
      %v4436 = vsel %vm3371, %v1966, -inf
      %v4437 = vrot.slane %v4436, 4
      %v4438 = vmax.f32 %v4436, %v4437
      %v4439 = vrot.slane %v4438, 2
      %v4440 = vmax.f32 %v4438, %v4439
      %v4441 = vrot.slane %v4440, 1
      %v4442 = vmax.f32 %v4440, %v4441
      %v4443 = vsel %vm3371, %v1974, -inf
      %v4444 = vrot.slane %v4443, 4
      %v4445 = vmax.f32 %v4443, %v4444
      %v4446 = vrot.slane %v4445, 2
      %v4447 = vmax.f32 %v4445, %v4446
      %v4448 = vrot.slane %v4447, 1
      %v4449 = vmax.f32 %v4447, %v4448
      %v4450 = vsel %vm3371, %v1973, -inf
      %v4451 = vrot.slane %v4450, 4
      %v4452 = vmax.f32 %v4450, %v4451
      %v4453 = vrot.slane %v4452, 2
      %v4454 = vmax.f32 %v4452, %v4453
      %v4455 = vrot.slane %v4454, 1
      %v4456 = vmax.f32 %v4454, %v4455
      %v4457 = vsel %vm3371, %v1975, -inf
      %v4458 = vrot.slane %v4457, 4
      %v4459 = vmax.f32 %v4457, %v4458
      %v4460 = vrot.slane %v4459, 2
      %v4461 = vmax.f32 %v4459, %v4460
      %v4462 = vrot.slane %v4461, 1
      %v4463 = vmax.f32 %v4461, %v4462
      %v4464 = vsel %vm3371, %v1983, -inf
      %v4465 = vrot.slane %v4464, 4
      %v4466 = vmax.f32 %v4464, %v4465
      %v4467 = vrot.slane %v4466, 2
      %v4468 = vmax.f32 %v4466, %v4467
      %v4469 = vrot.slane %v4468, 1
      %v4470 = vmax.f32 %v4468, %v4469
      %v4471 = vsel %vm3371, %v1991, -inf
      %v4472 = vrot.slane %v4471, 4
      %v4473 = vmax.f32 %v4471, %v4472
      %v4474 = vrot.slane %v4473, 2
      %v4475 = vmax.f32 %v4473, %v4474
      %v4476 = vrot.slane %v4475, 1
      %v4477 = vmax.f32 %v4475, %v4476
      %v4478 = vsel %vm3371, %v1990, -inf
      %v4479 = vrot.slane %v4478, 4
      %v4480 = vmax.f32 %v4478, %v4479
      %v4481 = vrot.slane %v4480, 2
      %v4482 = vmax.f32 %v4480, %v4481
      %v4483 = vrot.slane %v4482, 1
      %v4484 = vmax.f32 %v4482, %v4483
      %v4485 = vsel %vm3371, %v1992, -inf
      %v4486 = vrot.slane %v4485, 4
      %v4487 = vmax.f32 %v4485, %v4486
      %v4488 = vrot.slane %v4487, 2
      %v4489 = vmax.f32 %v4487, %v4488
      %v4490 = vrot.slane %v4489, 1
      %v4491 = vmax.f32 %v4489, %v4490
      %v4492 = vsel %vm3371, %v2000, -inf
      %v4493 = vrot.slane %v4492, 4
      %v4494 = vmax.f32 %v4492, %v4493
      %v4495 = vrot.slane %v4494, 2
      %v4496 = vmax.f32 %v4494, %v4495
      %v4497 = vrot.slane %v4496, 1
      %v4498 = vmax.f32 %v4496, %v4497
      %v4499 = vsel %vm3371, %v2008, -inf
      %v4500 = vrot.slane %v4499, 4
      %v4501 = vmax.f32 %v4499, %v4500
      %v4502 = vrot.slane %v4501, 2
      %v4503 = vmax.f32 %v4501, %v4502
      %v4504 = vrot.slane %v4503, 1
      %v4505 = vmax.f32 %v4503, %v4504
      %v4506 = vsel %vm3371, %v2007, -inf
      %v4507 = vrot.slane %v4506, 4
      %v4508 = vmax.f32 %v4506, %v4507
      %v4509 = vrot.slane %v4508, 2
      %v4510 = vmax.f32 %v4508, %v4509
      %v4511 = vrot.slane %v4510, 1
      %v4512 = vmax.f32 %v4510, %v4511
      %v4513 = vsel %vm3371, %v2009, -inf
      %v4514 = vrot.slane %v4513, 4
      %v4515 = vmax.f32 %v4513, %v4514
      %v4516 = vrot.slane %v4515, 2
      %v4517 = vmax.f32 %v4515, %v4516
      %v4518 = vrot.slane %v4517, 1
      %v4519 = vmax.f32 %v4517, %v4518
      %v4520 = vsel %vm3371, %v2017, -inf
      %v4521 = vrot.slane %v4520, 4
      %v4522 = vmax.f32 %v4520, %v4521
      %v4523 = vrot.slane %v4522, 2
      %v4524 = vmax.f32 %v4522, %v4523
      %v4525 = vrot.slane %v4524, 1
      %v4526 = vmax.f32 %v4524, %v4525
      %v4527 = vsel %vm3371, %v2025, -inf
      %v4528 = vrot.slane %v4527, 4
      %v4529 = vmax.f32 %v4527, %v4528
      %v4530 = vrot.slane %v4529, 2
      %v4531 = vmax.f32 %v4529, %v4530
      %v4532 = vrot.slane %v4531, 1
      %v4533 = vmax.f32 %v4531, %v4532
      %v4534 = vsel %vm3371, %v2024, -inf
      %v4535 = vrot.slane %v4534, 4
      %v4536 = vmax.f32 %v4534, %v4535
      %v4537 = vrot.slane %v4536, 2
      %v4538 = vmax.f32 %v4536, %v4537
      %v4539 = vrot.slane %v4538, 1
      %v4540 = vmax.f32 %v4538, %v4539
      %v4541 = vsel %vm3371, %v2026, -inf
      %v4542 = vrot.slane %v4541, 4
      %v4543 = vmax.f32 %v4541, %v4542
      %v4544 = vrot.slane %v4543, 2
      %v4545 = vmax.f32 %v4543, %v4544
      %v4546 = vrot.slane %v4545, 1
      %v4547 = vmax.f32 %v4545, %v4546
      %v4548 = vsel %vm3371, %v2034, -inf
      %v4549 = vrot.slane %v4548, 4
      %v4550 = vmax.f32 %v4548, %v4549
      %v4551 = vrot.slane %v4550, 2
      %v4552 = vmax.f32 %v4550, %v4551
      %v4553 = vrot.slane %v4552, 1
      %v4554 = vmax.f32 %v4552, %v4553
      %v4555 = vsel %vm3371, %v2042, -inf
      %v4556 = vrot.slane %v4555, 4
      %v4557 = vmax.f32 %v4555, %v4556
      %v4558 = vrot.slane %v4557, 2
      %v4559 = vmax.f32 %v4557, %v4558
      %v4560 = vrot.slane %v4559, 1
      %v4561 = vmax.f32 %v4559, %v4560
      %v4562 = vsel %vm3371, %v2041, -inf
      %v4563 = vrot.slane %v4562, 4
      %v4564 = vmax.f32 %v4562, %v4563
      %v4565 = vrot.slane %v4564, 2
      %v4566 = vmax.f32 %v4564, %v4565
      %v4567 = vrot.slane %v4566, 1
      %v4568 = vmax.f32 %v4566, %v4567
      %v4569 = vsel %vm3371, %v2043, -inf
      %v4570 = vrot.slane %v4569, 4
      %v4571 = vmax.f32 %v4569, %v4570
      %v4572 = vrot.slane %v4571, 2
      %v4573 = vmax.f32 %v4571, %v4572
      %v4574 = vrot.slane %v4573, 1
      %v4575 = vmax.f32 %v4573, %v4574
      %v4576 = vsel %vm3371, %v2051, -inf
      %v4577 = vrot.slane %v4576, 4
      %v4578 = vmax.f32 %v4576, %v4577
      %v4579 = vrot.slane %v4578, 2
      %v4580 = vmax.f32 %v4578, %v4579
      %v4581 = vrot.slane %v4580, 1
      %v4582 = vmax.f32 %v4580, %v4581
      %v4583 = vsel %vm3371, %v2059, -inf
      %v4584 = vrot.slane %v4583, 4
      %v4585 = vmax.f32 %v4583, %v4584
      %v4586 = vrot.slane %v4585, 2
      %v4587 = vmax.f32 %v4585, %v4586
      %v4588 = vrot.slane %v4587, 1
      %v4589 = vmax.f32 %v4587, %v4588
      %v4590 = vsel %vm3371, %v2058, -inf
      %v4591 = vrot.slane %v4590, 4
      %v4592 = vmax.f32 %v4590, %v4591
      %v4593 = vrot.slane %v4592, 2
      %v4594 = vmax.f32 %v4592, %v4593
      %v4595 = vrot.slane %v4594, 1
      %v4596 = vmax.f32 %v4594, %v4595
      %v4597 = vsel %vm3371, %v2060, -inf
      %v4598 = vrot.slane %v4597, 4
      %v4599 = vmax.f32 %v4597, %v4598
      %v4600 = vrot.slane %v4599, 2
      %v4601 = vmax.f32 %v4599, %v4600
      %v4602 = vrot.slane %v4601, 1
      %v4603 = vmax.f32 %v4601, %v4602
      %v4604 = vsel %vm3371, %v2068, -inf
      %v4605 = vrot.slane %v4604, 4
      %v4606 = vmax.f32 %v4604, %v4605
      %v4607 = vrot.slane %v4606, 2
      %v4608 = vmax.f32 %v4606, %v4607
      %v4609 = vrot.slane %v4608, 1
      %v4610 = vmax.f32 %v4608, %v4609
      %v4611 = vsel %vm3371, %v2076, -inf
      %v4612 = vrot.slane %v4611, 4
      %v4613 = vmax.f32 %v4611, %v4612
      %v4614 = vrot.slane %v4613, 2
      %v4615 = vmax.f32 %v4613, %v4614
      %v4616 = vrot.slane %v4615, 1
      %v4617 = vmax.f32 %v4615, %v4616
      %v4618 = vsel %vm3371, %v2075, -inf
      %v4619 = vrot.slane %v4618, 4
      %v4620 = vmax.f32 %v4618, %v4619
      %v4621 = vrot.slane %v4620, 2
      %v4622 = vmax.f32 %v4620, %v4621
      %v4623 = vrot.slane %v4622, 1
      %v4624 = vmax.f32 %v4622, %v4623
      %v4625 = vsel %vm3371, %v2077, -inf
      %v4626 = vrot.slane %v4625, 4
      %v4627 = vmax.f32 %v4625, %v4626
      %v4628 = vrot.slane %v4627, 2
      %v4629 = vmax.f32 %v4627, %v4628
      %v4630 = vrot.slane %v4629, 1
      %v4631 = vmax.f32 %v4629, %v4630
      %v4632 = vsel %vm3371, %v2085, -inf
      %v4633 = vrot.slane %v4632, 4
      %v4634 = vmax.f32 %v4632, %v4633
      %v4635 = vrot.slane %v4634, 2
      %v4636 = vmax.f32 %v4634, %v4635
      %v4637 = vrot.slane %v4636, 1
      %v4638 = vmax.f32 %v4636, %v4637
      %v4639 = vsel %vm3371, %v2093, -inf
      %v4640 = vrot.slane %v4639, 4
      %v4641 = vmax.f32 %v4639, %v4640
      %v4642 = vrot.slane %v4641, 2
      %v4643 = vmax.f32 %v4641, %v4642
      %v4644 = vrot.slane %v4643, 1
      %v4645 = vmax.f32 %v4643, %v4644
      %v4646 = vsel %vm3371, %v2092, -inf
      %v4647 = vrot.slane %v4646, 4
      %v4648 = vmax.f32 %v4646, %v4647
      %v4649 = vrot.slane %v4648, 2
      %v4650 = vmax.f32 %v4648, %v4649
      %v4651 = vrot.slane %v4650, 1
      %v4652 = vmax.f32 %v4650, %v4651
      %v4653 = vsel %vm3371, %v2094, -inf
      %v4654 = vrot.slane %v4653, 4
      %v4655 = vmax.f32 %v4653, %v4654
      %v4656 = vrot.slane %v4655, 2
      %v4657 = vmax.f32 %v4655, %v4656
      %v4658 = vrot.slane %v4657, 1
      %v4659 = vmax.f32 %v4657, %v4658
      %v4660 = vsel %vm3371, %v2102, -inf
      %v4661 = vrot.slane %v4660, 4
      %v4662 = vmax.f32 %v4660, %v4661
      %v4663 = vrot.slane %v4662, 2
      %v4664 = vmax.f32 %v4662, %v4663
      %v4665 = vrot.slane %v4664, 1
      %v4666 = vmax.f32 %v4664, %v4665
      %v4667 = vsel %vm3371, %v2110, -inf
      %v4668 = vrot.slane %v4667, 4
      %v4669 = vmax.f32 %v4667, %v4668
      %v4670 = vrot.slane %v4669, 2
      %v4671 = vmax.f32 %v4669, %v4670
      %v4672 = vrot.slane %v4671, 1
      %v4673 = vmax.f32 %v4671, %v4672
      %v4674 = vsel %vm3371, %v2109, -inf
      %v4675 = vrot.slane %v4674, 4
      %v4676 = vmax.f32 %v4674, %v4675
      %v4677 = vrot.slane %v4676, 2
      %v4678 = vmax.f32 %v4676, %v4677
      %v4679 = vrot.slane %v4678, 1
      %v4680 = vmax.f32 %v4678, %v4679
      %v4681 = vsel %vm3371, %v2111, -inf
      %v4682 = vrot.slane %v4681, 4
      %v4683 = vmax.f32 %v4681, %v4682
      %v4684 = vrot.slane %v4683, 2
      %v4685 = vmax.f32 %v4683, %v4684
      %v4686 = vrot.slane %v4685, 1
      %v4687 = vmax.f32 %v4685, %v4686
      %v4688 = vsel %vm3371, %v2119, -inf
      %v4689 = vrot.slane %v4688, 4
      %v4690 = vmax.f32 %v4688, %v4689
      %v4691 = vrot.slane %v4690, 2
      %v4692 = vmax.f32 %v4690, %v4691
      %v4693 = vrot.slane %v4692, 1
      %v4694 = vmax.f32 %v4692, %v4693
      %v4695 = vsel %vm3371, %v2127, -inf
      %v4696 = vrot.slane %v4695, 4
      %v4697 = vmax.f32 %v4695, %v4696
      %v4698 = vrot.slane %v4697, 2
      %v4699 = vmax.f32 %v4697, %v4698
      %v4700 = vrot.slane %v4699, 1
      %v4701 = vmax.f32 %v4699, %v4700
      %v4702 = vsel %vm3371, %v2126, -inf
      %v4703 = vrot.slane %v4702, 4
      %v4704 = vmax.f32 %v4702, %v4703
      %v4705 = vrot.slane %v4704, 2
      %v4706 = vmax.f32 %v4704, %v4705
      %v4707 = vrot.slane %v4706, 1
      %v4708 = vmax.f32 %v4706, %v4707
      %v4709 = vsel %vm3371, %v2128, -inf
      %v4710 = vrot.slane %v4709, 4
      %v4711 = vmax.f32 %v4709, %v4710
      %v4712 = vrot.slane %v4711, 2
      %v4713 = vmax.f32 %v4711, %v4712
      %v4714 = vrot.slane %v4713, 1
      %v4715 = vmax.f32 %v4713, %v4714
      %v4716 = vsel %vm3371, %v2136, -inf
      %v4717 = vrot.slane %v4716, 4
      %v4718 = vmax.f32 %v4716, %v4717
      %v4719 = vrot.slane %v4718, 2
      %v4720 = vmax.f32 %v4718, %v4719
      %v4721 = vrot.slane %v4720, 1
      %v4722 = vmax.f32 %v4720, %v4721
      %v4723 = vsel %vm3371, %v2144, -inf
      %v4724 = vrot.slane %v4723, 4
      %v4725 = vmax.f32 %v4723, %v4724
      %v4726 = vrot.slane %v4725, 2
      %v4727 = vmax.f32 %v4725, %v4726
      %v4728 = vrot.slane %v4727, 1
      %v4729 = vmax.f32 %v4727, %v4728
      %v4730 = vsel %vm3371, %v2143, -inf
      %v4731 = vrot.slane %v4730, 4
      %v4732 = vmax.f32 %v4730, %v4731
      %v4733 = vrot.slane %v4732, 2
      %v4734 = vmax.f32 %v4732, %v4733
      %v4735 = vrot.slane %v4734, 1
      %v4736 = vmax.f32 %v4734, %v4735
      %v4737 = vsel %vm3371, %v2145, -inf
      %v4738 = vrot.slane %v4737, 4
      %v4739 = vmax.f32 %v4737, %v4738
      %v4740 = vrot.slane %v4739, 2
      %v4741 = vmax.f32 %v4739, %v4740
      %v4742 = vrot.slane %v4741, 1
      %v4743 = vmax.f32 %v4741, %v4742
      %v4744 = vsel %vm3371, %v2153, -inf
      %v4745 = vrot.slane %v4744, 4
      %v4746 = vmax.f32 %v4744, %v4745
      %v4747 = vrot.slane %v4746, 2
      %v4748 = vmax.f32 %v4746, %v4747
      %v4749 = vrot.slane %v4748, 1
      %v4750 = vmax.f32 %v4748, %v4749
      %v4751 = vsel %vm3371, %v2161, -inf
      %v4752 = vrot.slane %v4751, 4
      %v4753 = vmax.f32 %v4751, %v4752
      %v4754 = vrot.slane %v4753, 2
      %v4755 = vmax.f32 %v4753, %v4754
      %v4756 = vrot.slane %v4755, 1
      %v4757 = vmax.f32 %v4755, %v4756
      %v4758 = vsel %vm3371, %v2160, -inf
      %v4759 = vrot.slane %v4758, 4
      %v4760 = vmax.f32 %v4758, %v4759
      %v4761 = vrot.slane %v4760, 2
      %v4762 = vmax.f32 %v4760, %v4761
      %v4763 = vrot.slane %v4762, 1
      %v4764 = vmax.f32 %v4762, %v4763
      %v4765 = vsel %vm3371, %v2162, -inf
      %v4766 = vrot.slane %v4765, 4
      %v4767 = vmax.f32 %v4765, %v4766
      %v4768 = vrot.slane %v4767, 2
      %v4769 = vmax.f32 %v4767, %v4768
      %v4770 = vrot.slane %v4769, 1
      %v4771 = vmax.f32 %v4769, %v4770
      %v4772 = vsel %vm3371, %v2170, -inf
      %v4773 = vrot.slane %v4772, 4
      %v4774 = vmax.f32 %v4772, %v4773
      %v4775 = vrot.slane %v4774, 2
      %v4776 = vmax.f32 %v4774, %v4775
      %v4777 = vrot.slane %v4776, 1
      %v4778 = vmax.f32 %v4776, %v4777
      %v4779 = vsel %vm3371, %v2178, -inf
      %v4780 = vrot.slane %v4779, 4
      %v4781 = vmax.f32 %v4779, %v4780
      %v4782 = vrot.slane %v4781, 2
      %v4783 = vmax.f32 %v4781, %v4782
      %v4784 = vrot.slane %v4783, 1
      %v4785 = vmax.f32 %v4783, %v4784
      %v4786 = vsel %vm3371, %v2177, -inf
      %v4787 = vrot.slane %v4786, 4
      %v4788 = vmax.f32 %v4786, %v4787
      %v4789 = vrot.slane %v4788, 2
      %v4790 = vmax.f32 %v4788, %v4789
      %v4791 = vrot.slane %v4790, 1
      %v4792 = vmax.f32 %v4790, %v4791
      %v4793 = vsel %vm3371, %v2179, -inf
      %v4794 = vrot.slane %v4793, 4
      %v4795 = vmax.f32 %v4793, %v4794
      %v4796 = vrot.slane %v4795, 2
      %v4797 = vmax.f32 %v4795, %v4796
      %v4798 = vrot.slane %v4797, 1
      %v4799 = vmax.f32 %v4797, %v4798
      %v4800 = vsel %vm3371, %v2187, -inf
      %v4801 = vrot.slane %v4800, 4
      %v4802 = vmax.f32 %v4800, %v4801
      %v4803 = vrot.slane %v4802, 2
      %v4804 = vmax.f32 %v4802, %v4803
      %v4805 = vrot.slane %v4804, 1
      %v4806 = vmax.f32 %v4804, %v4805
      %v4807 = vsel %vm3371, %v2195, -inf
      %v4808 = vrot.slane %v4807, 4
      %v4809 = vmax.f32 %v4807, %v4808
      %v4810 = vrot.slane %v4809, 2
      %v4811 = vmax.f32 %v4809, %v4810
      %v4812 = vrot.slane %v4811, 1
      %v4813 = vmax.f32 %v4811, %v4812
      %v4814 = vsel %vm3371, %v2194, -inf
      %v4815 = vrot.slane %v4814, 4
      %v4816 = vmax.f32 %v4814, %v4815
      %v4817 = vrot.slane %v4816, 2
      %v4818 = vmax.f32 %v4816, %v4817
      %v4819 = vrot.slane %v4818, 1
      %v4820 = vmax.f32 %v4818, %v4819
      %v4821 = vsel %vm3371, %v2196, -inf
      %v4822 = vrot.slane %v4821, 4
      %v4823 = vmax.f32 %v4821, %v4822
      %v4824 = vrot.slane %v4823, 2
      %v4825 = vmax.f32 %v4823, %v4824
      %v4826 = vrot.slane %v4825, 1
      %v4827 = vmax.f32 %v4825, %v4826
      %v4828 = vsel %vm3371, %v2204, -inf
      %v4829 = vrot.slane %v4828, 4
      %v4830 = vmax.f32 %v4828, %v4829
      %v4831 = vrot.slane %v4830, 2
      %v4832 = vmax.f32 %v4830, %v4831
      %v4833 = vrot.slane %v4832, 1
      %v4834 = vmax.f32 %v4832, %v4833
      %v4835 = vsel %vm3371, %v2212, -inf
      %v4836 = vrot.slane %v4835, 4
      %v4837 = vmax.f32 %v4835, %v4836
      %v4838 = vrot.slane %v4837, 2
      %v4839 = vmax.f32 %v4837, %v4838
      %v4840 = vrot.slane %v4839, 1
      %v4841 = vmax.f32 %v4839, %v4840
      %v4842 = vsel %vm3371, %v2211, -inf
      %v4843 = vrot.slane %v4842, 4
      %v4844 = vmax.f32 %v4842, %v4843
      %v4845 = vrot.slane %v4844, 2
      %v4846 = vmax.f32 %v4844, %v4845
      %v4847 = vrot.slane %v4846, 1
      %v4848 = vmax.f32 %v4846, %v4847
      %v4849 = vsel %vm3371, %v2213, -inf
      %v4850 = vrot.slane %v4849, 4
      %v4851 = vmax.f32 %v4849, %v4850
      %v4852 = vrot.slane %v4851, 2
      %v4853 = vmax.f32 %v4851, %v4852
      %v4854 = vrot.slane %v4853, 1
      %v4855 = vmax.f32 %v4853, %v4854
      %v4856 = vsel %vm3371, %v2221, -inf
      %v4857 = vrot.slane %v4856, 4
      %v4858 = vmax.f32 %v4856, %v4857
      %v4859 = vrot.slane %v4858, 2
      %v4860 = vmax.f32 %v4858, %v4859
      %v4861 = vrot.slane %v4860, 1
      %v4862 = vmax.f32 %v4860, %v4861
      %v4863 = vsel %vm3371, %v2229, -inf
      %v4864 = vrot.slane %v4863, 4
      %v4865 = vmax.f32 %v4863, %v4864
      %v4866 = vrot.slane %v4865, 2
      %v4867 = vmax.f32 %v4865, %v4866
      %v4868 = vrot.slane %v4867, 1
      %v4869 = vmax.f32 %v4867, %v4868
      %v4870 = vsel %vm3371, %v2228, -inf
      %v4871 = vrot.slane %v4870, 4
      %v4872 = vmax.f32 %v4870, %v4871
      %v4873 = vrot.slane %v4872, 2
      %v4874 = vmax.f32 %v4872, %v4873
      %v4875 = vrot.slane %v4874, 1
      %v4876 = vmax.f32 %v4874, %v4875
      %v4877 = vsel %vm3371, %v2230, -inf
      %v4878 = vrot.slane %v4877, 4
      %v4879 = vmax.f32 %v4877, %v4878
      %v4880 = vrot.slane %v4879, 2
      %v4881 = vmax.f32 %v4879, %v4880
      %v4882 = vrot.slane %v4881, 1
      %v4883 = vmax.f32 %v4881, %v4882
      %v4884 = vsel %vm3371, %v2238, -inf
      %v4885 = vrot.slane %v4884, 4
      %v4886 = vmax.f32 %v4884, %v4885
      %v4887 = vrot.slane %v4886, 2
      %v4888 = vmax.f32 %v4886, %v4887
      %v4889 = vrot.slane %v4888, 1
      %v4890 = vmax.f32 %v4888, %v4889
      %v4891 = vsel %vm3371, %v2246, -inf
      %v4892 = vrot.slane %v4891, 4
      %v4893 = vmax.f32 %v4891, %v4892
      %v4894 = vrot.slane %v4893, 2
      %v4895 = vmax.f32 %v4893, %v4894
      %v4896 = vrot.slane %v4895, 1
      %v4897 = vmax.f32 %v4895, %v4896
      %v4898 = vsel %vm3371, %v2245, -inf
      %v4899 = vrot.slane %v4898, 4
      %v4900 = vmax.f32 %v4898, %v4899
      %v4901 = vrot.slane %v4900, 2
      %v4902 = vmax.f32 %v4900, %v4901
      %v4903 = vrot.slane %v4902, 1
      %v4904 = vmax.f32 %v4902, %v4903
      %v4905 = vsel %vm3371, %v2247, -inf
      %v4906 = vrot.slane %v4905, 4
      %v4907 = vmax.f32 %v4905, %v4906
      %v4908 = vrot.slane %v4907, 2
      %v4909 = vmax.f32 %v4907, %v4908
      %v4910 = vrot.slane %v4909, 1
      %v4911 = vmax.f32 %v4909, %v4910
      %v4912 = vsel %vm3371, %v2255, -inf
      %v4913 = vrot.slane %v4912, 4
      %v4914 = vmax.f32 %v4912, %v4913
      %v4915 = vrot.slane %v4914, 2
      %v4916 = vmax.f32 %v4914, %v4915
      %v4917 = vrot.slane %v4916, 1
      %v4918 = vmax.f32 %v4916, %v4917
      %v4919 = vsel %vm3371, %v2263, -inf
      %v4920 = vrot.slane %v4919, 4
      %v4921 = vmax.f32 %v4919, %v4920
      %v4922 = vrot.slane %v4921, 2
      %v4923 = vmax.f32 %v4921, %v4922
      %v4924 = vrot.slane %v4923, 1
      %v4925 = vmax.f32 %v4923, %v4924
      %v4926 = vsel %vm3371, %v2262, -inf
      %v4927 = vrot.slane %v4926, 4
      %v4928 = vmax.f32 %v4926, %v4927
      %v4929 = vrot.slane %v4928, 2
      %v4930 = vmax.f32 %v4928, %v4929
      %v4931 = vrot.slane %v4930, 1
      %v4932 = vmax.f32 %v4930, %v4931
      %v4933 = vsel %vm3371, %v2264, -inf
      %v4934 = vrot.slane %v4933, 4
      %v4935 = vmax.f32 %v4933, %v4934
      %v4936 = vrot.slane %v4935, 2
      %v4937 = vmax.f32 %v4935, %v4936
      %v4938 = vrot.slane %v4937, 1
      %v4939 = vmax.f32 %v4937, %v4938
      %v4940 = vsel %vm3371, %v2272, -inf
      %v4941 = vrot.slane %v4940, 4
      %v4942 = vmax.f32 %v4940, %v4941
      %v4943 = vrot.slane %v4942, 2
      %v4944 = vmax.f32 %v4942, %v4943
      %v4945 = vrot.slane %v4944, 1
      %v4946 = vmax.f32 %v4944, %v4945
      %v4947 = vsel %vm3371, %v2280, -inf
      %v4948 = vrot.slane %v4947, 4
      %v4949 = vmax.f32 %v4947, %v4948
      %v4950 = vrot.slane %v4949, 2
      %v4951 = vmax.f32 %v4949, %v4950
      %v4952 = vrot.slane %v4951, 1
      %v4953 = vmax.f32 %v4951, %v4952
      %v4954 = vsel %vm3371, %v2279, -inf
      %v4955 = vrot.slane %v4954, 4
      %v4956 = vmax.f32 %v4954, %v4955
      %v4957 = vrot.slane %v4956, 2
      %v4958 = vmax.f32 %v4956, %v4957
      %v4959 = vrot.slane %v4958, 1
      %v4960 = vmax.f32 %v4958, %v4959
      %v4961 = vsel %vm3371, %v2281, -inf
      %v4962 = vrot.slane %v4961, 4
      %v4963 = vmax.f32 %v4961, %v4962
      %v4964 = vrot.slane %v4963, 2
      %v4965 = vmax.f32 %v4963, %v4964
      %v4966 = vrot.slane %v4965, 1
      %v4967 = vmax.f32 %v4965, %v4966
      %v4968 = vsel %vm3371, %v2289, -inf
      %v4969 = vrot.slane %v4968, 4
      %v4970 = vmax.f32 %v4968, %v4969
      %v4971 = vrot.slane %v4970, 2
      %v4972 = vmax.f32 %v4970, %v4971
      %v4973 = vrot.slane %v4972, 1
      %v4974 = vmax.f32 %v4972, %v4973
      %v4975 = vsel %vm3371, %v2297, -inf
      %v4976 = vrot.slane %v4975, 4
      %v4977 = vmax.f32 %v4975, %v4976
      %v4978 = vrot.slane %v4977, 2
      %v4979 = vmax.f32 %v4977, %v4978
      %v4980 = vrot.slane %v4979, 1
      %v4981 = vmax.f32 %v4979, %v4980
      %v4982 = vsel %vm3371, %v2296, -inf
      %v4983 = vrot.slane %v4982, 4
      %v4984 = vmax.f32 %v4982, %v4983
      %v4985 = vrot.slane %v4984, 2
      %v4986 = vmax.f32 %v4984, %v4985
      %v4987 = vrot.slane %v4986, 1
      %v4988 = vmax.f32 %v4986, %v4987
      %v4989 = vsel %vm3371, %v2298, -inf
      %v4990 = vrot.slane %v4989, 4
      %v4991 = vmax.f32 %v4989, %v4990
      %v4992 = vrot.slane %v4991, 2
      %v4993 = vmax.f32 %v4991, %v4992
      %v4994 = vrot.slane %v4993, 1
      %v4995 = vmax.f32 %v4993, %v4994
      %v4996 = vsel %vm3371, %v2306, -inf
      %v4997 = vrot.slane %v4996, 4
      %v4998 = vmax.f32 %v4996, %v4997
      %v4999 = vrot.slane %v4998, 2
      %v5000 = vmax.f32 %v4998, %v4999
      %v5001 = vrot.slane %v5000, 1
      %v5002 = vmax.f32 %v5000, %v5001
      %v5003 = vsel %vm3371, %v2314, -inf
      %v5004 = vrot.slane %v5003, 4
      %v5005 = vmax.f32 %v5003, %v5004
      %v5006 = vrot.slane %v5005, 2
      %v5007 = vmax.f32 %v5005, %v5006
      %v5008 = vrot.slane %v5007, 1
      %v5009 = vmax.f32 %v5007, %v5008
      %v5010 = vsel %vm3371, %v2313, -inf
      %v5011 = vrot.slane %v5010, 4
      %v5012 = vmax.f32 %v5010, %v5011
      %v5013 = vrot.slane %v5012, 2
      %v5014 = vmax.f32 %v5012, %v5013
      %v5015 = vrot.slane %v5014, 1
      %v5016 = vmax.f32 %v5014, %v5015
      %v5017 = vsel %vm3371, %v2315, -inf
      %v5018 = vrot.slane %v5017, 4
      %v5019 = vmax.f32 %v5017, %v5018
      %v5020 = vrot.slane %v5019, 2
      %v5021 = vmax.f32 %v5019, %v5020
      %v5022 = vrot.slane %v5021, 1
      %v5023 = vmax.f32 %v5021, %v5022
      %v5024 = vsel %vm3371, %v2323, -inf
      %v5025 = vrot.slane %v5024, 4
      %v5026 = vmax.f32 %v5024, %v5025
      %v5027 = vrot.slane %v5026, 2
      %v5028 = vmax.f32 %v5026, %v5027
      %v5029 = vrot.slane %v5028, 1
      %v5030 = vmax.f32 %v5028, %v5029
      %v5031 = vsel %vm3371, %v2331, -inf
      %v5032 = vrot.slane %v5031, 4
      %v5033 = vmax.f32 %v5031, %v5032
      %v5034 = vrot.slane %v5033, 2
      %v5035 = vmax.f32 %v5033, %v5034
      %v5036 = vrot.slane %v5035, 1
      %v5037 = vmax.f32 %v5035, %v5036
      %v5038 = vsel %vm3371, %v2330, -inf
      %v5039 = vrot.slane %v5038, 4
      %v5040 = vmax.f32 %v5038, %v5039
      %v5041 = vrot.slane %v5040, 2
      %v5042 = vmax.f32 %v5040, %v5041
      %v5043 = vrot.slane %v5042, 1
      %v5044 = vmax.f32 %v5042, %v5043
      %v5045 = vsel %vm3371, %v2332, -inf
      %v5046 = vrot.slane %v5045, 4
      %v5047 = vmax.f32 %v5045, %v5046
      %v5048 = vrot.slane %v5047, 2
      %v5049 = vmax.f32 %v5047, %v5048
      %v5050 = vrot.slane %v5049, 1
      %v5051 = vmax.f32 %v5049, %v5050
      %v5052 = vsel %vm3371, %v2340, -inf
      %v5053 = vrot.slane %v5052, 4
      %v5054 = vmax.f32 %v5052, %v5053
      %v5055 = vrot.slane %v5054, 2
      %v5056 = vmax.f32 %v5054, %v5055
      %v5057 = vrot.slane %v5056, 1
      %v5058 = vmax.f32 %v5056, %v5057
      %v5059 = vsel %vm3371, %v2348, -inf
      %v5060 = vrot.slane %v5059, 4
      %v5061 = vmax.f32 %v5059, %v5060
      %v5062 = vrot.slane %v5061, 2
      %v5063 = vmax.f32 %v5061, %v5062
      %v5064 = vrot.slane %v5063, 1
      %v5065 = vmax.f32 %v5063, %v5064
      %v5066 = vsel %vm3371, %v2347, -inf
      %v5067 = vrot.slane %v5066, 4
      %v5068 = vmax.f32 %v5066, %v5067
      %v5069 = vrot.slane %v5068, 2
      %v5070 = vmax.f32 %v5068, %v5069
      %v5071 = vrot.slane %v5070, 1
      %v5072 = vmax.f32 %v5070, %v5071
      %v5073 = vsel %vm3371, %v2349, -inf
      %v5074 = vrot.slane %v5073, 4
      %v5075 = vmax.f32 %v5073, %v5074
      %v5076 = vrot.slane %v5075, 2
      %v5077 = vmax.f32 %v5075, %v5076
      %v5078 = vrot.slane %v5077, 1
      %v5079 = vmax.f32 %v5077, %v5078
      %v5080 = vsel %vm3371, %v2357, -inf
      %v5081 = vrot.slane %v5080, 4
      %v5082 = vmax.f32 %v5080, %v5081
      %v5083 = vrot.slane %v5082, 2
      %v5084 = vmax.f32 %v5082, %v5083
      %v5085 = vrot.slane %v5084, 1
      %v5086 = vmax.f32 %v5084, %v5085
      %v5087 = vsel %vm3371, %v2365, -inf
      %v5088 = vrot.slane %v5087, 4
      %v5089 = vmax.f32 %v5087, %v5088
      %v5090 = vrot.slane %v5089, 2
      %v5091 = vmax.f32 %v5089, %v5090
      %v5092 = vrot.slane %v5091, 1
      %v5093 = vmax.f32 %v5091, %v5092
      %v5094 = vsel %vm3371, %v2364, -inf
      %v5095 = vrot.slane %v5094, 4
      %v5096 = vmax.f32 %v5094, %v5095
      %v5097 = vrot.slane %v5096, 2
      %v5098 = vmax.f32 %v5096, %v5097
      %v5099 = vrot.slane %v5098, 1
      %v5100 = vmax.f32 %v5098, %v5099
      %v5101 = vsel %vm3371, %v2366, -inf
      %v5102 = vrot.slane %v5101, 4
      %v5103 = vmax.f32 %v5101, %v5102
      %v5104 = vrot.slane %v5103, 2
      %v5105 = vmax.f32 %v5103, %v5104
      %v5106 = vrot.slane %v5105, 1
      %v5107 = vmax.f32 %v5105, %v5106
      %v5108 = vsel %vm3371, %v2374, -inf
      %v5109 = vrot.slane %v5108, 4
      %v5110 = vmax.f32 %v5108, %v5109
      %v5111 = vrot.slane %v5110, 2
      %v5112 = vmax.f32 %v5110, %v5111
      %v5113 = vrot.slane %v5112, 1
      %v5114 = vmax.f32 %v5112, %v5113
      %v5115 = vsel %vm3371, %v2382, -inf
      %v5116 = vrot.slane %v5115, 4
      %v5117 = vmax.f32 %v5115, %v5116
      %v5118 = vrot.slane %v5117, 2
      %v5119 = vmax.f32 %v5117, %v5118
      %v5120 = vrot.slane %v5119, 1
      %v5121 = vmax.f32 %v5119, %v5120
      %v5122 = vsel %vm3371, %v2381, -inf
      %v5123 = vrot.slane %v5122, 4
      %v5124 = vmax.f32 %v5122, %v5123
      %v5125 = vrot.slane %v5124, 2
      %v5126 = vmax.f32 %v5124, %v5125
      %v5127 = vrot.slane %v5126, 1
      %v5128 = vmax.f32 %v5126, %v5127
      %v5129 = vsel %vm3371, %v2383, -inf
      %v5130 = vrot.slane %v5129, 4
      %v5131 = vmax.f32 %v5129, %v5130
      %v5132 = vrot.slane %v5131, 2
      %v5133 = vmax.f32 %v5131, %v5132
      %v5134 = vrot.slane %v5133, 1
      %v5135 = vmax.f32 %v5133, %v5134
      %v5136 = vsel %vm3371, %v2391, -inf
      %v5137 = vrot.slane %v5136, 4
      %v5138 = vmax.f32 %v5136, %v5137
      %v5139 = vrot.slane %v5138, 2
      %v5140 = vmax.f32 %v5138, %v5139
      %v5141 = vrot.slane %v5140, 1
      %v5142 = vmax.f32 %v5140, %v5141
      %v5143 = vsel %vm3371, %v2399, -inf
      %v5144 = vrot.slane %v5143, 4
      %v5145 = vmax.f32 %v5143, %v5144
      %v5146 = vrot.slane %v5145, 2
      %v5147 = vmax.f32 %v5145, %v5146
      %v5148 = vrot.slane %v5147, 1
      %v5149 = vmax.f32 %v5147, %v5148
      %v5150 = vsel %vm3371, %v2398, -inf
      %v5151 = vrot.slane %v5150, 4
      %v5152 = vmax.f32 %v5150, %v5151
      %v5153 = vrot.slane %v5152, 2
      %v5154 = vmax.f32 %v5152, %v5153
      %v5155 = vrot.slane %v5154, 1
      %v5156 = vmax.f32 %v5154, %v5155
      %v5157 = vsel %vm3371, %v2400, -inf
      %v5158 = vrot.slane %v5157, 4
      %v5159 = vmax.f32 %v5157, %v5158
      %v5160 = vrot.slane %v5159, 2
      %v5161 = vmax.f32 %v5159, %v5160
      %v5162 = vrot.slane %v5161, 1
      %v5163 = vmax.f32 %v5161, %v5162
      %v5164 = vsel %vm3371, %v2408, -inf
      %v5165 = vrot.slane %v5164, 4
      %v5166 = vmax.f32 %v5164, %v5165
      %v5167 = vrot.slane %v5166, 2
      %v5168 = vmax.f32 %v5166, %v5167
      %v5169 = vrot.slane %v5168, 1
      %v5170 = vmax.f32 %v5168, %v5169
      %v5171 = vsel %vm3371, %v2416, -inf
      %v5172 = vrot.slane %v5171, 4
      %v5173 = vmax.f32 %v5171, %v5172
      %v5174 = vrot.slane %v5173, 2
      %v5175 = vmax.f32 %v5173, %v5174
      %v5176 = vrot.slane %v5175, 1
      %v5177 = vmax.f32 %v5175, %v5176
      %v5178 = vsel %vm3371, %v2415, -inf
      %v5179 = vrot.slane %v5178, 4
      %v5180 = vmax.f32 %v5178, %v5179
      %v5181 = vrot.slane %v5180, 2
      %v5182 = vmax.f32 %v5180, %v5181
      %v5183 = vrot.slane %v5182, 1
      %v5184 = vmax.f32 %v5182, %v5183
      %v5185 = vsel %vm3371, %v2417, -inf
      %v5186 = vrot.slane %v5185, 4
      %v5187 = vmax.f32 %v5185, %v5186
      %v5188 = vrot.slane %v5187, 2
      %v5189 = vmax.f32 %v5187, %v5188
      %v5190 = vrot.slane %v5189, 1
      %v5191 = vmax.f32 %v5189, %v5190
      %v5192 = vsel %vm3371, %v2425, -inf
      %v5193 = vrot.slane %v5192, 4
      %v5194 = vmax.f32 %v5192, %v5193
      %v5195 = vrot.slane %v5194, 2
      %v5196 = vmax.f32 %v5194, %v5195
      %v5197 = vrot.slane %v5196, 1
      %v5198 = vmax.f32 %v5196, %v5197
      %v5199 = vsel %vm3371, %v2433, -inf
      %v5200 = vrot.slane %v5199, 4
      %v5201 = vmax.f32 %v5199, %v5200
      %v5202 = vrot.slane %v5201, 2
      %v5203 = vmax.f32 %v5201, %v5202
      %v5204 = vrot.slane %v5203, 1
      %v5205 = vmax.f32 %v5203, %v5204
      %v5206 = vsel %vm3371, %v2432, -inf
      %v5207 = vrot.slane %v5206, 4
      %v5208 = vmax.f32 %v5206, %v5207
      %v5209 = vrot.slane %v5208, 2
      %v5210 = vmax.f32 %v5208, %v5209
      %v5211 = vrot.slane %v5210, 1
      %v5212 = vmax.f32 %v5210, %v5211
      %v5213 = vsel %vm3371, %v2434, -inf
      %v5214 = vrot.slane %v5213, 4
      %v5215 = vmax.f32 %v5213, %v5214
      %v5216 = vrot.slane %v5215, 2
      %v5217 = vmax.f32 %v5215, %v5216
      %v5218 = vrot.slane %v5217, 1
      %v5219 = vmax.f32 %v5217, %v5218
      %v5220 = vsel %vm3371, %v2442, -inf
      %v5221 = vrot.slane %v5220, 4
      %v5222 = vmax.f32 %v5220, %v5221
      %v5223 = vrot.slane %v5222, 2
      %v5224 = vmax.f32 %v5222, %v5223
      %v5225 = vrot.slane %v5224, 1
      %v5226 = vmax.f32 %v5224, %v5225
      %v5227 = vsel %vm3371, %v2450, -inf
      %v5228 = vrot.slane %v5227, 4
      %v5229 = vmax.f32 %v5227, %v5228
      %v5230 = vrot.slane %v5229, 2
      %v5231 = vmax.f32 %v5229, %v5230
      %v5232 = vrot.slane %v5231, 1
      %v5233 = vmax.f32 %v5231, %v5232
      %v5234 = vsel %vm3371, %v2449, -inf
      %v5235 = vrot.slane %v5234, 4
      %v5236 = vmax.f32 %v5234, %v5235
      %v5237 = vrot.slane %v5236, 2
      %v5238 = vmax.f32 %v5236, %v5237
      %v5239 = vrot.slane %v5238, 1
      %v5240 = vmax.f32 %v5238, %v5239
      %v5241 = vsel %vm3371, %v2451, -inf
      %v5242 = vrot.slane %v5241, 4
      %v5243 = vmax.f32 %v5241, %v5242
      %v5244 = vrot.slane %v5243, 2
      %v5245 = vmax.f32 %v5243, %v5244
      %v5246 = vrot.slane %v5245, 1
      %v5247 = vmax.f32 %v5245, %v5246
      %v5248 = vsel %vm3371, %v2459, -inf
      %v5249 = vrot.slane %v5248, 4
      %v5250 = vmax.f32 %v5248, %v5249
      %v5251 = vrot.slane %v5250, 2
      %v5252 = vmax.f32 %v5250, %v5251
      %v5253 = vrot.slane %v5252, 1
      %v5254 = vmax.f32 %v5252, %v5253
      %v5255 = vsel %vm3371, %v2467, -inf
      %v5256 = vrot.slane %v5255, 4
      %v5257 = vmax.f32 %v5255, %v5256
      %v5258 = vrot.slane %v5257, 2
      %v5259 = vmax.f32 %v5257, %v5258
      %v5260 = vrot.slane %v5259, 1
      %v5261 = vmax.f32 %v5259, %v5260
      %v5262 = vsel %vm3371, %v2466, -inf
      %v5263 = vrot.slane %v5262, 4
      %v5264 = vmax.f32 %v5262, %v5263
      %v5265 = vrot.slane %v5264, 2
      %v5266 = vmax.f32 %v5264, %v5265
      %v5267 = vrot.slane %v5266, 1
      %v5268 = vmax.f32 %v5266, %v5267
      %v5269 = vsel %vm3371, %v2468, -inf
      %v5270 = vrot.slane %v5269, 4
      %v5271 = vmax.f32 %v5269, %v5270
      %v5272 = vrot.slane %v5271, 2
      %v5273 = vmax.f32 %v5271, %v5272
      %v5274 = vrot.slane %v5273, 1
      %v5275 = vmax.f32 %v5273, %v5274
      %v5276 = vsel %vm3371, %v2476, -inf
      %v5277 = vrot.slane %v5276, 4
      %v5278 = vmax.f32 %v5276, %v5277
      %v5279 = vrot.slane %v5278, 2
      %v5280 = vmax.f32 %v5278, %v5279
      %v5281 = vrot.slane %v5280, 1
      %v5282 = vmax.f32 %v5280, %v5281
      %v5283 = vsel %vm3371, %v2484, -inf
      %v5284 = vrot.slane %v5283, 4
      %v5285 = vmax.f32 %v5283, %v5284
      %v5286 = vrot.slane %v5285, 2
      %v5287 = vmax.f32 %v5285, %v5286
      %v5288 = vrot.slane %v5287, 1
      %v5289 = vmax.f32 %v5287, %v5288
      %v5290 = vsel %vm3371, %v2483, -inf
      %v5291 = vrot.slane %v5290, 4
      %v5292 = vmax.f32 %v5290, %v5291
      %v5293 = vrot.slane %v5292, 2
      %v5294 = vmax.f32 %v5292, %v5293
      %v5295 = vrot.slane %v5294, 1
      %v5296 = vmax.f32 %v5294, %v5295
      %v5297 = vsel %vm3371, %v2485, -inf
      %v5298 = vrot.slane %v5297, 4
      %v5299 = vmax.f32 %v5297, %v5298
      %v5300 = vrot.slane %v5299, 2
      %v5301 = vmax.f32 %v5299, %v5300
      %v5302 = vrot.slane %v5301, 1
      %v5303 = vmax.f32 %v5301, %v5302
      %v5304 = vsel %vm3371, %v2493, -inf
      %v5305 = vrot.slane %v5304, 4
      %v5306 = vmax.f32 %v5304, %v5305
      %v5307 = vrot.slane %v5306, 2
      %v5308 = vmax.f32 %v5306, %v5307
      %v5309 = vrot.slane %v5308, 1
      %v5310 = vmax.f32 %v5308, %v5309
      %v5311 = vsel %vm3371, %v2501, -inf
      %v5312 = vrot.slane %v5311, 4
      %v5313 = vmax.f32 %v5311, %v5312
      %v5314 = vrot.slane %v5313, 2
      %v5315 = vmax.f32 %v5313, %v5314
      %v5316 = vrot.slane %v5315, 1
      %v5317 = vmax.f32 %v5315, %v5316
      %v5318 = vsel %vm3371, %v2500, -inf
      %v5319 = vrot.slane %v5318, 4
      %v5320 = vmax.f32 %v5318, %v5319
      %v5321 = vrot.slane %v5320, 2
      %v5322 = vmax.f32 %v5320, %v5321
      %v5323 = vrot.slane %v5322, 1
      %v5324 = vmax.f32 %v5322, %v5323
      %v5325 = vsel %vm3371, %v2502, -inf
      %v5326 = vrot.slane %v5325, 4
      %v5327 = vmax.f32 %v5325, %v5326
      %v5328 = vrot.slane %v5327, 2
      %v5329 = vmax.f32 %v5327, %v5328
      %v5330 = vrot.slane %v5329, 1
      %v5331 = vmax.f32 %v5329, %v5330
      %v5332 = vsel %vm3371, %v2510, -inf
      %v5333 = vrot.slane %v5332, 4
      %v5334 = vmax.f32 %v5332, %v5333
      %v5335 = vrot.slane %v5334, 2
      %v5336 = vmax.f32 %v5334, %v5335
      %v5337 = vrot.slane %v5336, 1
      %v5338 = vmax.f32 %v5336, %v5337
      %v5339 = vsel %vm3371, %v2518, -inf
      %v5340 = vrot.slane %v5339, 4
      %v5341 = vmax.f32 %v5339, %v5340
      %v5342 = vrot.slane %v5341, 2
      %v5343 = vmax.f32 %v5341, %v5342
      %v5344 = vrot.slane %v5343, 1
      %v5345 = vmax.f32 %v5343, %v5344
      %v5346 = vsel %vm3371, %v2517, -inf
      %v5347 = vrot.slane %v5346, 4
      %v5348 = vmax.f32 %v5346, %v5347
      %v5349 = vrot.slane %v5348, 2
      %v5350 = vmax.f32 %v5348, %v5349
      %v5351 = vrot.slane %v5350, 1
      %v5352 = vmax.f32 %v5350, %v5351
      %v5353 = vsel %vm3371, %v2519, -inf
      %v5354 = vrot.slane %v5353, 4
      %v5355 = vmax.f32 %v5353, %v5354
      %v5356 = vrot.slane %v5355, 2
      %v5357 = vmax.f32 %v5355, %v5356
      %v5358 = vrot.slane %v5357, 1
      %v5359 = vmax.f32 %v5357, %v5358
      %v5360 = vsel %vm3371, %v2527, -inf
      %v5361 = vrot.slane %v5360, 4
      %v5362 = vmax.f32 %v5360, %v5361
      %v5363 = vrot.slane %v5362, 2
      %v5364 = vmax.f32 %v5362, %v5363
      %v5365 = vrot.slane %v5364, 1
      %v5366 = vmax.f32 %v5364, %v5365
      %v5367 = vsel %vm3371, %v2535, -inf
      %v5368 = vrot.slane %v5367, 4
      %v5369 = vmax.f32 %v5367, %v5368
      %v5370 = vrot.slane %v5369, 2
      %v5371 = vmax.f32 %v5369, %v5370
      %v5372 = vrot.slane %v5371, 1
      %v5373 = vmax.f32 %v5371, %v5372
      %v5374 = vsel %vm3371, %v2534, -inf
      %v5375 = vrot.slane %v5374, 4
      %v5376 = vmax.f32 %v5374, %v5375
      %v5377 = vrot.slane %v5376, 2
      %v5378 = vmax.f32 %v5376, %v5377
      %v5379 = vrot.slane %v5378, 1
      %v5380 = vmax.f32 %v5378, %v5379
      %v5381 = vsel %vm3371, %v2536, -inf
      %v5382 = vrot.slane %v5381, 4
      %v5383 = vmax.f32 %v5381, %v5382
      %v5384 = vrot.slane %v5383, 2
      %v5385 = vmax.f32 %v5383, %v5384
      %v5386 = vrot.slane %v5385, 1
      %v5387 = vmax.f32 %v5385, %v5386
      %v5388 = vsel %vm3371, %v2544, -inf
      %v5389 = vrot.slane %v5388, 4
      %v5390 = vmax.f32 %v5388, %v5389
      %v5391 = vrot.slane %v5390, 2
      %v5392 = vmax.f32 %v5390, %v5391
      %v5393 = vrot.slane %v5392, 1
      %v5394 = vmax.f32 %v5392, %v5393
      %v5395 = vsel %vm3371, %v2552, -inf
      %v5396 = vrot.slane %v5395, 4
      %v5397 = vmax.f32 %v5395, %v5396
      %v5398 = vrot.slane %v5397, 2
      %v5399 = vmax.f32 %v5397, %v5398
      %v5400 = vrot.slane %v5399, 1
      %v5401 = vmax.f32 %v5399, %v5400
      %v5402 = vsel %vm3371, %v2551, -inf
      %v5403 = vrot.slane %v5402, 4
      %v5404 = vmax.f32 %v5402, %v5403
      %v5405 = vrot.slane %v5404, 2
      %v5406 = vmax.f32 %v5404, %v5405
      %v5407 = vrot.slane %v5406, 1
      %v5408 = vmax.f32 %v5406, %v5407
      %v5409 = vsel %vm3371, %v2553, -inf
      %v5410 = vrot.slane %v5409, 4
      %v5411 = vmax.f32 %v5409, %v5410
      %v5412 = vrot.slane %v5411, 2
      %v5413 = vmax.f32 %v5411, %v5412
      %v5414 = vrot.slane %v5413, 1
      %v5415 = vmax.f32 %v5413, %v5414
      %v5416 = vsel %vm3371, %v2561, -inf
      %v5417 = vrot.slane %v5416, 4
      %v5418 = vmax.f32 %v5416, %v5417
      %v5419 = vrot.slane %v5418, 2
      %v5420 = vmax.f32 %v5418, %v5419
      %v5421 = vrot.slane %v5420, 1
      %v5422 = vmax.f32 %v5420, %v5421
      %v5423 = vsel %vm3371, %v2569, -inf
      %v5424 = vrot.slane %v5423, 4
      %v5425 = vmax.f32 %v5423, %v5424
      %v5426 = vrot.slane %v5425, 2
      %v5427 = vmax.f32 %v5425, %v5426
      %v5428 = vrot.slane %v5427, 1
      %v5429 = vmax.f32 %v5427, %v5428
      %v5430 = vsel %vm3371, %v2568, -inf
      %v5431 = vrot.slane %v5430, 4
      %v5432 = vmax.f32 %v5430, %v5431
      %v5433 = vrot.slane %v5432, 2
      %v5434 = vmax.f32 %v5432, %v5433
      %v5435 = vrot.slane %v5434, 1
      %v5436 = vmax.f32 %v5434, %v5435
      %v5437 = vsel %vm3371, %v2570, -inf
      %v5438 = vrot.slane %v5437, 4
      %v5439 = vmax.f32 %v5437, %v5438
      %v5440 = vrot.slane %v5439, 2
      %v5441 = vmax.f32 %v5439, %v5440
      %v5442 = vrot.slane %v5441, 1
      %v5443 = vmax.f32 %v5441, %v5442
      %v5444 = vsel %vm3371, %v2578, -inf
      %v5445 = vrot.slane %v5444, 4
      %v5446 = vmax.f32 %v5444, %v5445
      %v5447 = vrot.slane %v5446, 2
      %v5448 = vmax.f32 %v5446, %v5447
      %v5449 = vrot.slane %v5448, 1
      %v5450 = vmax.f32 %v5448, %v5449
      %v5451 = vsel %vm3371, %v2586, -inf
      %v5452 = vrot.slane %v5451, 4
      %v5453 = vmax.f32 %v5451, %v5452
      %v5454 = vrot.slane %v5453, 2
      %v5455 = vmax.f32 %v5453, %v5454
      %v5456 = vrot.slane %v5455, 1
      %v5457 = vmax.f32 %v5455, %v5456
      %v5458 = vsel %vm3371, %v2585, -inf
      %v5459 = vrot.slane %v5458, 4
      %v5460 = vmax.f32 %v5458, %v5459
      %v5461 = vrot.slane %v5460, 2
      %v5462 = vmax.f32 %v5460, %v5461
      %v5463 = vrot.slane %v5462, 1
      %v5464 = vmax.f32 %v5462, %v5463
      %v5465 = vsel %vm3371, %v2587, -inf
      %v5466 = vrot.slane %v5465, 4
      %v5467 = vmax.f32 %v5465, %v5466
      %v5468 = vrot.slane %v5467, 2
      %v5469 = vmax.f32 %v5467, %v5468
      %v5470 = vrot.slane %v5469, 1
      %v5471 = vmax.f32 %v5469, %v5470
      %v5472 = vsel %vm3371, %v2595, -inf
      %v5473 = vrot.slane %v5472, 4
      %v5474 = vmax.f32 %v5472, %v5473
      %v5475 = vrot.slane %v5474, 2
      %v5476 = vmax.f32 %v5474, %v5475
      %v5477 = vrot.slane %v5476, 1
      %v5478 = vmax.f32 %v5476, %v5477
      %v5479 = vsel %vm3371, %v2603, -inf
      %v5480 = vrot.slane %v5479, 4
      %v5481 = vmax.f32 %v5479, %v5480
      %v5482 = vrot.slane %v5481, 2
      %v5483 = vmax.f32 %v5481, %v5482
      %v5484 = vrot.slane %v5483, 1
      %v5485 = vmax.f32 %v5483, %v5484
      %v5486 = vsel %vm3371, %v2602, -inf
      %v5487 = vrot.slane %v5486, 4
      %v5488 = vmax.f32 %v5486, %v5487
      %v5489 = vrot.slane %v5488, 2
      %v5490 = vmax.f32 %v5488, %v5489
      %v5491 = vrot.slane %v5490, 1
      %v5492 = vmax.f32 %v5490, %v5491
      %v5493 = vsel %vm3371, %v2604, -inf
      %v5494 = vrot.slane %v5493, 4
      %v5495 = vmax.f32 %v5493, %v5494
      %v5496 = vrot.slane %v5495, 2
      %v5497 = vmax.f32 %v5495, %v5496
      %v5498 = vrot.slane %v5497, 1
      %v5499 = vmax.f32 %v5497, %v5498
      %v5500 = vsel %vm3371, %v2612, -inf
      %v5501 = vrot.slane %v5500, 4
      %v5502 = vmax.f32 %v5500, %v5501
      %v5503 = vrot.slane %v5502, 2
      %v5504 = vmax.f32 %v5502, %v5503
      %v5505 = vrot.slane %v5504, 1
      %v5506 = vmax.f32 %v5504, %v5505
      %v5507 = vsel %vm3371, %v2620, -inf
      %v5508 = vrot.slane %v5507, 4
      %v5509 = vmax.f32 %v5507, %v5508
      %v5510 = vrot.slane %v5509, 2
      %v5511 = vmax.f32 %v5509, %v5510
      %v5512 = vrot.slane %v5511, 1
      %v5513 = vmax.f32 %v5511, %v5512
      %v5514 = vsel %vm3371, %v2619, -inf
      %v5515 = vrot.slane %v5514, 4
      %v5516 = vmax.f32 %v5514, %v5515
      %v5517 = vrot.slane %v5516, 2
      %v5518 = vmax.f32 %v5516, %v5517
      %v5519 = vrot.slane %v5518, 1
      %v5520 = vmax.f32 %v5518, %v5519
      %v5521 = vsel %vm3371, %v2621, -inf
      %v5522 = vrot.slane %v5521, 4
      %v5523 = vmax.f32 %v5521, %v5522
      %v5524 = vrot.slane %v5523, 2
      %v5525 = vmax.f32 %v5523, %v5524
      %v5526 = vrot.slane %v5525, 1
      %v5527 = vmax.f32 %v5525, %v5526
      %v5528 = vsel %vm3371, %v2629, -inf
      %v5529 = vrot.slane %v5528, 4
      %v5530 = vmax.f32 %v5528, %v5529
      %v5531 = vrot.slane %v5530, 2
      %v5532 = vmax.f32 %v5530, %v5531
      %v5533 = vrot.slane %v5532, 1
      %v5534 = vmax.f32 %v5532, %v5533
      %v5535 = vsel %vm3371, %v2637, -inf
      %v5536 = vrot.slane %v5535, 4
      %v5537 = vmax.f32 %v5535, %v5536
      %v5538 = vrot.slane %v5537, 2
      %v5539 = vmax.f32 %v5537, %v5538
      %v5540 = vrot.slane %v5539, 1
      %v5541 = vmax.f32 %v5539, %v5540
      %v5542 = vsel %vm3371, %v2636, -inf
      %v5543 = vrot.slane %v5542, 4
      %v5544 = vmax.f32 %v5542, %v5543
      %v5545 = vrot.slane %v5544, 2
      %v5546 = vmax.f32 %v5544, %v5545
      %v5547 = vrot.slane %v5546, 1
      %v5548 = vmax.f32 %v5546, %v5547
      %v5549 = vsel %vm3371, %v2638, -inf
      %v5550 = vrot.slane %v5549, 4
      %v5551 = vmax.f32 %v5549, %v5550
      %v5552 = vrot.slane %v5551, 2
      %v5553 = vmax.f32 %v5551, %v5552
      %v5554 = vrot.slane %v5553, 1
      %v5555 = vmax.f32 %v5553, %v5554
      %v5556 = vsel %vm3371, %v2646, -inf
      %v5557 = vrot.slane %v5556, 4
      %v5558 = vmax.f32 %v5556, %v5557
      %v5559 = vrot.slane %v5558, 2
      %v5560 = vmax.f32 %v5558, %v5559
      %v5561 = vrot.slane %v5560, 1
      %v5562 = vmax.f32 %v5560, %v5561
      %v5563 = vsel %vm3371, %v2654, -inf
      %v5564 = vrot.slane %v5563, 4
      %v5565 = vmax.f32 %v5563, %v5564
      %v5566 = vrot.slane %v5565, 2
      %v5567 = vmax.f32 %v5565, %v5566
      %v5568 = vrot.slane %v5567, 1
      %v5569 = vmax.f32 %v5567, %v5568
      %v5570 = vsel %vm3371, %v2653, -inf
      %v5571 = vrot.slane %v5570, 4
      %v5572 = vmax.f32 %v5570, %v5571
      %v5573 = vrot.slane %v5572, 2
      %v5574 = vmax.f32 %v5572, %v5573
      %v5575 = vrot.slane %v5574, 1
      %v5576 = vmax.f32 %v5574, %v5575
      %v5577 = vsel %vm3371, %v2655, -inf
      %v5578 = vrot.slane %v5577, 4
      %v5579 = vmax.f32 %v5577, %v5578
      %v5580 = vrot.slane %v5579, 2
      %v5581 = vmax.f32 %v5579, %v5580
      %v5582 = vrot.slane %v5581, 1
      %v5583 = vmax.f32 %v5581, %v5582
      %v5584 = vsel %vm3371, %v2663, -inf
      %v5585 = vrot.slane %v5584, 4
      %v5586 = vmax.f32 %v5584, %v5585
      %v5587 = vrot.slane %v5586, 2
      %v5588 = vmax.f32 %v5586, %v5587
      %v5589 = vrot.slane %v5588, 1
      %v5590 = vmax.f32 %v5588, %v5589
      %v5591 = vsel %vm3371, %v2671, -inf
      %v5592 = vrot.slane %v5591, 4
      %v5593 = vmax.f32 %v5591, %v5592
      %v5594 = vrot.slane %v5593, 2
      %v5595 = vmax.f32 %v5593, %v5594
      %v5596 = vrot.slane %v5595, 1
      %v5597 = vmax.f32 %v5595, %v5596
      %v5598 = vsel %vm3371, %v2670, -inf
      %v5599 = vrot.slane %v5598, 4
      %v5600 = vmax.f32 %v5598, %v5599
      %v5601 = vrot.slane %v5600, 2
      %v5602 = vmax.f32 %v5600, %v5601
      %v5603 = vrot.slane %v5602, 1
      %v5604 = vmax.f32 %v5602, %v5603
      %v5605 = vsel %vm3371, %v2672, -inf
      %v5606 = vrot.slane %v5605, 4
      %v5607 = vmax.f32 %v5605, %v5606
      %v5608 = vrot.slane %v5607, 2
      %v5609 = vmax.f32 %v5607, %v5608
      %v5610 = vrot.slane %v5609, 1
      %v5611 = vmax.f32 %v5609, %v5610
      %v5612 = vsel %vm3371, %v2680, -inf
      %v5613 = vrot.slane %v5612, 4
      %v5614 = vmax.f32 %v5612, %v5613
      %v5615 = vrot.slane %v5614, 2
      %v5616 = vmax.f32 %v5614, %v5615
      %v5617 = vrot.slane %v5616, 1
      %v5618 = vmax.f32 %v5616, %v5617
      %v5619 = vsel %vm3371, %v2688, -inf
      %v5620 = vrot.slane %v5619, 4
      %v5621 = vmax.f32 %v5619, %v5620
      %v5622 = vrot.slane %v5621, 2
      %v5623 = vmax.f32 %v5621, %v5622
      %v5624 = vrot.slane %v5623, 1
      %v5625 = vmax.f32 %v5623, %v5624
      %v5626 = vsel %vm3371, %v2687, -inf
      %v5627 = vrot.slane %v5626, 4
      %v5628 = vmax.f32 %v5626, %v5627
      %v5629 = vrot.slane %v5628, 2
      %v5630 = vmax.f32 %v5628, %v5629
      %v5631 = vrot.slane %v5630, 1
      %v5632 = vmax.f32 %v5630, %v5631
      %v5633 = vsel %vm3371, %v2689, -inf
      %v5634 = vrot.slane %v5633, 4
      %v5635 = vmax.f32 %v5633, %v5634
      %v5636 = vrot.slane %v5635, 2
      %v5637 = vmax.f32 %v5635, %v5636
      %v5638 = vrot.slane %v5637, 1
      %v5639 = vmax.f32 %v5637, %v5638
      %v5640 = vsel %vm3371, %v2697, -inf
      %v5641 = vrot.slane %v5640, 4
      %v5642 = vmax.f32 %v5640, %v5641
      %v5643 = vrot.slane %v5642, 2
      %v5644 = vmax.f32 %v5642, %v5643
      %v5645 = vrot.slane %v5644, 1
      %v5646 = vmax.f32 %v5644, %v5645
      %v5647 = vsel %vm3371, %v2705, -inf
      %v5648 = vrot.slane %v5647, 4
      %v5649 = vmax.f32 %v5647, %v5648
      %v5650 = vrot.slane %v5649, 2
      %v5651 = vmax.f32 %v5649, %v5650
      %v5652 = vrot.slane %v5651, 1
      %v5653 = vmax.f32 %v5651, %v5652
      %v5654 = vsel %vm3371, %v2704, -inf
      %v5655 = vrot.slane %v5654, 4
      %v5656 = vmax.f32 %v5654, %v5655
      %v5657 = vrot.slane %v5656, 2
      %v5658 = vmax.f32 %v5656, %v5657
      %v5659 = vrot.slane %v5658, 1
      %v5660 = vmax.f32 %v5658, %v5659
      %v5661 = vsel %vm3371, %v2706, -inf
      %v5662 = vrot.slane %v5661, 4
      %v5663 = vmax.f32 %v5661, %v5662
      %v5664 = vrot.slane %v5663, 2
      %v5665 = vmax.f32 %v5663, %v5664
      %v5666 = vrot.slane %v5665, 1
      %v5667 = vmax.f32 %v5665, %v5666
      %v5668 = vsel %vm3371, %v2714, -inf
      %v5669 = vrot.slane %v5668, 4
      %v5670 = vmax.f32 %v5668, %v5669
      %v5671 = vrot.slane %v5670, 2
      %v5672 = vmax.f32 %v5670, %v5671
      %v5673 = vrot.slane %v5672, 1
      %v5674 = vmax.f32 %v5672, %v5673
      %v5675 = vsel %vm3371, %v2722, -inf
      %v5676 = vrot.slane %v5675, 4
      %v5677 = vmax.f32 %v5675, %v5676
      %v5678 = vrot.slane %v5677, 2
      %v5679 = vmax.f32 %v5677, %v5678
      %v5680 = vrot.slane %v5679, 1
      %v5681 = vmax.f32 %v5679, %v5680
      %v5682 = vsel %vm3371, %v2721, -inf
      %v5683 = vrot.slane %v5682, 4
      %v5684 = vmax.f32 %v5682, %v5683
      %v5685 = vrot.slane %v5684, 2
      %v5686 = vmax.f32 %v5684, %v5685
      %v5687 = vrot.slane %v5686, 1
      %v5688 = vmax.f32 %v5686, %v5687
      %v5689 = vsel %vm3371, %v2723, -inf
      %v5690 = vrot.slane %v5689, 4
      %v5691 = vmax.f32 %v5689, %v5690
      %v5692 = vrot.slane %v5691, 2
      %v5693 = vmax.f32 %v5691, %v5692
      %v5694 = vrot.slane %v5693, 1
      %v5695 = vmax.f32 %v5693, %v5694
      %v5696 = vsel %vm3371, %v2731, -inf
      %v5697 = vrot.slane %v5696, 4
      %v5698 = vmax.f32 %v5696, %v5697
      %v5699 = vrot.slane %v5698, 2
      %v5700 = vmax.f32 %v5698, %v5699
      %v5701 = vrot.slane %v5700, 1
      %v5702 = vmax.f32 %v5700, %v5701
      %v5703 = vsel %vm3371, %v2739, -inf
      %v5704 = vrot.slane %v5703, 4
      %v5705 = vmax.f32 %v5703, %v5704
      %v5706 = vrot.slane %v5705, 2
      %v5707 = vmax.f32 %v5705, %v5706
      %v5708 = vrot.slane %v5707, 1
      %v5709 = vmax.f32 %v5707, %v5708
      %v5710 = vsel %vm3371, %v2738, -inf
      %v5711 = vrot.slane %v5710, 4
      %v5712 = vmax.f32 %v5710, %v5711
      %v5713 = vrot.slane %v5712, 2
      %v5714 = vmax.f32 %v5712, %v5713
      %v5715 = vrot.slane %v5714, 1
      %v5716 = vmax.f32 %v5714, %v5715
      %v5717 = vsel %vm3371, %v2740, -inf
      %v5718 = vrot.slane %v5717, 4
      %v5719 = vmax.f32 %v5717, %v5718
      %v5720 = vrot.slane %v5719, 2
      %v5721 = vmax.f32 %v5719, %v5720
      %v5722 = vrot.slane %v5721, 1
      %v5723 = vmax.f32 %v5721, %v5722
      %v5724 = vsel %vm3371, %v2748, -inf
      %v5725 = vrot.slane %v5724, 4
      %v5726 = vmax.f32 %v5724, %v5725
      %v5727 = vrot.slane %v5726, 2
      %v5728 = vmax.f32 %v5726, %v5727
      %v5729 = vrot.slane %v5728, 1
      %v5730 = vmax.f32 %v5728, %v5729
      %v5731 = vsel %vm3371, %v2756, -inf
      %v5732 = vrot.slane %v5731, 4
      %v5733 = vmax.f32 %v5731, %v5732
      %v5734 = vrot.slane %v5733, 2
      %v5735 = vmax.f32 %v5733, %v5734
      %v5736 = vrot.slane %v5735, 1
      %v5737 = vmax.f32 %v5735, %v5736
      %v5738 = vsel %vm3371, %v2755, -inf
      %v5739 = vrot.slane %v5738, 4
      %v5740 = vmax.f32 %v5738, %v5739
      %v5741 = vrot.slane %v5740, 2
      %v5742 = vmax.f32 %v5740, %v5741
      %v5743 = vrot.slane %v5742, 1
      %v5744 = vmax.f32 %v5742, %v5743
      %v5745 = vsel %vm3371, %v2757, -inf
      %v5746 = vrot.slane %v5745, 4
      %v5747 = vmax.f32 %v5745, %v5746
      %v5748 = vrot.slane %v5747, 2
      %v5749 = vmax.f32 %v5747, %v5748
      %v5750 = vrot.slane %v5749, 1
      %v5751 = vmax.f32 %v5749, %v5750
      %v5752 = vsel %vm3371, %v2765, -inf
      %v5753 = vrot.slane %v5752, 4
      %v5754 = vmax.f32 %v5752, %v5753
      %v5755 = vrot.slane %v5754, 2
      %v5756 = vmax.f32 %v5754, %v5755
      %v5757 = vrot.slane %v5756, 1
      %v5758 = vmax.f32 %v5756, %v5757
      %v5759 = vsel %vm3371, %v2773, -inf
      %v5760 = vrot.slane %v5759, 4
      %v5761 = vmax.f32 %v5759, %v5760
      %v5762 = vrot.slane %v5761, 2
      %v5763 = vmax.f32 %v5761, %v5762
      %v5764 = vrot.slane %v5763, 1
      %v5765 = vmax.f32 %v5763, %v5764
      %v5766 = vsel %vm3371, %v2772, -inf
      %v5767 = vrot.slane %v5766, 4
      %v5768 = vmax.f32 %v5766, %v5767
      %v5769 = vrot.slane %v5768, 2
      %v5770 = vmax.f32 %v5768, %v5769
      %v5771 = vrot.slane %v5770, 1
      %v5772 = vmax.f32 %v5770, %v5771
      %v5773 = vsel %vm3371, %v2774, -inf
      %v5774 = vrot.slane %v5773, 4
      %v5775 = vmax.f32 %v5773, %v5774
      %v5776 = vrot.slane %v5775, 2
      %v5777 = vmax.f32 %v5775, %v5776
      %v5778 = vrot.slane %v5777, 1
      %v5779 = vmax.f32 %v5777, %v5778
      %v5780 = vsel %vm3371, %v2782, -inf
      %v5781 = vrot.slane %v5780, 4
      %v5782 = vmax.f32 %v5780, %v5781
      %v5783 = vrot.slane %v5782, 2
      %v5784 = vmax.f32 %v5782, %v5783
      %v5785 = vrot.slane %v5784, 1
      %v5786 = vmax.f32 %v5784, %v5785
      %v5787 = vsel %vm3371, %v2790, -inf
      %v5788 = vrot.slane %v5787, 4
      %v5789 = vmax.f32 %v5787, %v5788
      %v5790 = vrot.slane %v5789, 2
      %v5791 = vmax.f32 %v5789, %v5790
      %v5792 = vrot.slane %v5791, 1
      %v5793 = vmax.f32 %v5791, %v5792
      %v5794 = vsel %vm3371, %v2789, -inf
      %v5795 = vrot.slane %v5794, 4
      %v5796 = vmax.f32 %v5794, %v5795
      %v5797 = vrot.slane %v5796, 2
      %v5798 = vmax.f32 %v5796, %v5797
      %v5799 = vrot.slane %v5798, 1
      %v5800 = vmax.f32 %v5798, %v5799
      %v5801 = vsel %vm3371, %v2791, -inf
      %v5802 = vrot.slane %v5801, 4
      %v5803 = vmax.f32 %v5801, %v5802
      %v5804 = vrot.slane %v5803, 2
      %v5805 = vmax.f32 %v5803, %v5804
      %v5806 = vrot.slane %v5805, 1
      %v5807 = vmax.f32 %v5805, %v5806
      %v5808 = vsel %vm3371, %v2799, -inf
      %v5809 = vrot.slane %v5808, 4
      %v5810 = vmax.f32 %v5808, %v5809
      %v5811 = vrot.slane %v5810, 2
      %v5812 = vmax.f32 %v5810, %v5811
      %v5813 = vrot.slane %v5812, 1
      %v5814 = vmax.f32 %v5812, %v5813
      %v5815 = vsel %vm3371, %v2807, -inf
      %v5816 = vrot.slane %v5815, 4
      %v5817 = vmax.f32 %v5815, %v5816
      %v5818 = vrot.slane %v5817, 2
      %v5819 = vmax.f32 %v5817, %v5818
      %v5820 = vrot.slane %v5819, 1
      %v5821 = vmax.f32 %v5819, %v5820
      %v5822 = vsel %vm3371, %v2806, -inf
      %v5823 = vrot.slane %v5822, 4
      %v5824 = vmax.f32 %v5822, %v5823
      %v5825 = vrot.slane %v5824, 2
      %v5826 = vmax.f32 %v5824, %v5825
      %v5827 = vrot.slane %v5826, 1
      %v5828 = vmax.f32 %v5826, %v5827
      %v5829 = vsel %vm3371, %v2808, -inf
      %v5830 = vrot.slane %v5829, 4
      %v5831 = vmax.f32 %v5829, %v5830
      %v5832 = vrot.slane %v5831, 2
      %v5833 = vmax.f32 %v5831, %v5832
      %v5834 = vrot.slane %v5833, 1
      %v5835 = vmax.f32 %v5833, %v5834
      %v5836 = vsel %vm3371, %v2816, -inf
      %v5837 = vrot.slane %v5836, 4
      %v5838 = vmax.f32 %v5836, %v5837
      %v5839 = vrot.slane %v5838, 2
      %v5840 = vmax.f32 %v5838, %v5839
      %v5841 = vrot.slane %v5840, 1
      %v5842 = vmax.f32 %v5840, %v5841
      %v5843 = vsel %vm3371, %v2824, -inf
      %v5844 = vrot.slane %v5843, 4
      %v5845 = vmax.f32 %v5843, %v5844
      %v5846 = vrot.slane %v5845, 2
      %v5847 = vmax.f32 %v5845, %v5846
      %v5848 = vrot.slane %v5847, 1
      %v5849 = vmax.f32 %v5847, %v5848
      %v5850 = vsel %vm3371, %v2823, -inf
      %v5851 = vrot.slane %v5850, 4
      %v5852 = vmax.f32 %v5850, %v5851
      %v5853 = vrot.slane %v5852, 2
      %v5854 = vmax.f32 %v5852, %v5853
      %v5855 = vrot.slane %v5854, 1
      %v5856 = vmax.f32 %v5854, %v5855
      %v5857 = vsel %vm3371, %v2825, -inf
      %v5858 = vrot.slane %v5857, 4
      %v5859 = vmax.f32 %v5857, %v5858
      %v5860 = vrot.slane %v5859, 2
      %v5861 = vmax.f32 %v5859, %v5860
      %v5862 = vrot.slane %v5861, 1
      %v5863 = vmax.f32 %v5861, %v5862
      %v5864 = vsel %vm3371, %v2833, -inf
      %v5865 = vrot.slane %v5864, 4
      %v5866 = vmax.f32 %v5864, %v5865
      %v5867 = vrot.slane %v5866, 2
      %v5868 = vmax.f32 %v5866, %v5867
      %v5869 = vrot.slane %v5868, 1
      %v5870 = vmax.f32 %v5868, %v5869
      %v5871 = vsel %vm3371, %v2841, -inf
      %v5872 = vrot.slane %v5871, 4
      %v5873 = vmax.f32 %v5871, %v5872
      %v5874 = vrot.slane %v5873, 2
      %v5875 = vmax.f32 %v5873, %v5874
      %v5876 = vrot.slane %v5875, 1
      %v5877 = vmax.f32 %v5875, %v5876
      %v5878 = vsel %vm3371, %v2840, -inf
      %v5879 = vrot.slane %v5878, 4
      %v5880 = vmax.f32 %v5878, %v5879
      %v5881 = vrot.slane %v5880, 2
      %v5882 = vmax.f32 %v5880, %v5881
      %v5883 = vrot.slane %v5882, 1
      %v5884 = vmax.f32 %v5882, %v5883
      %v5885 = vsel %vm3371, %v2842, -inf
      %v5886 = vrot.slane %v5885, 4
      %v5887 = vmax.f32 %v5885, %v5886
      %v5888 = vrot.slane %v5887, 2
      %v5889 = vmax.f32 %v5887, %v5888
      %v5890 = vrot.slane %v5889, 1
      %v5891 = vmax.f32 %v5889, %v5890
      %v5892 = vsel %vm3371, %v2850, -inf
      %v5893 = vrot.slane %v5892, 4
      %v5894 = vmax.f32 %v5892, %v5893
      %v5895 = vrot.slane %v5894, 2
      %v5896 = vmax.f32 %v5894, %v5895
      %v5897 = vrot.slane %v5896, 1
      %v5898 = vmax.f32 %v5896, %v5897
      %v5899 = vsel %vm3371, %v2858, -inf
      %v5900 = vrot.slane %v5899, 4
      %v5901 = vmax.f32 %v5899, %v5900
      %v5902 = vrot.slane %v5901, 2
      %v5903 = vmax.f32 %v5901, %v5902
      %v5904 = vrot.slane %v5903, 1
      %v5905 = vmax.f32 %v5903, %v5904
      %v5906 = vsel %vm3371, %v2857, -inf
      %v5907 = vrot.slane %v5906, 4
      %v5908 = vmax.f32 %v5906, %v5907
      %v5909 = vrot.slane %v5908, 2
      %v5910 = vmax.f32 %v5908, %v5909
      %v5911 = vrot.slane %v5910, 1
      %v5912 = vmax.f32 %v5910, %v5911
      %v5913 = vsel %vm3371, %v2859, -inf
      %v5914 = vrot.slane %v5913, 4
      %v5915 = vmax.f32 %v5913, %v5914
      %v5916 = vrot.slane %v5915, 2
      %v5917 = vmax.f32 %v5915, %v5916
      %v5918 = vrot.slane %v5917, 1
      %v5919 = vmax.f32 %v5917, %v5918
      %v5920 = vsel %vm3371, %v2867, -inf
      %v5921 = vrot.slane %v5920, 4
      %v5922 = vmax.f32 %v5920, %v5921
      %v5923 = vrot.slane %v5922, 2
      %v5924 = vmax.f32 %v5922, %v5923
      %v5925 = vrot.slane %v5924, 1
      %v5926 = vmax.f32 %v5924, %v5925
      %v5927 = vsel %vm3371, %v2875, -inf
      %v5928 = vrot.slane %v5927, 4
      %v5929 = vmax.f32 %v5927, %v5928
      %v5930 = vrot.slane %v5929, 2
      %v5931 = vmax.f32 %v5929, %v5930
      %v5932 = vrot.slane %v5931, 1
      %v5933 = vmax.f32 %v5931, %v5932
      %v5934 = vsel %vm3371, %v2874, -inf
      %v5935 = vrot.slane %v5934, 4
      %v5936 = vmax.f32 %v5934, %v5935
      %v5937 = vrot.slane %v5936, 2
      %v5938 = vmax.f32 %v5936, %v5937
      %v5939 = vrot.slane %v5938, 1
      %v5940 = vmax.f32 %v5938, %v5939
      %v5941 = vsel %vm3371, %v2876, -inf
      %v5942 = vrot.slane %v5941, 4
      %v5943 = vmax.f32 %v5941, %v5942
      %v5944 = vrot.slane %v5943, 2
      %v5945 = vmax.f32 %v5943, %v5944
      %v5946 = vrot.slane %v5945, 1
      %v5947 = vmax.f32 %v5945, %v5946
      %v5948 = vsel %vm3371, %v2884, -inf
      %v5949 = vrot.slane %v5948, 4
      %v5950 = vmax.f32 %v5948, %v5949
      %v5951 = vrot.slane %v5950, 2
      %v5952 = vmax.f32 %v5950, %v5951
      %v5953 = vrot.slane %v5952, 1
      %v5954 = vmax.f32 %v5952, %v5953
      %v5955 = vsel %vm3371, %v2892, -inf
      %v5956 = vrot.slane %v5955, 4
      %v5957 = vmax.f32 %v5955, %v5956
      %v5958 = vrot.slane %v5957, 2
      %v5959 = vmax.f32 %v5957, %v5958
      %v5960 = vrot.slane %v5959, 1
      %v5961 = vmax.f32 %v5959, %v5960
      %v5962 = vsel %vm3371, %v2891, -inf
      %v5963 = vrot.slane %v5962, 4
      %v5964 = vmax.f32 %v5962, %v5963
      %v5965 = vrot.slane %v5964, 2
      %v5966 = vmax.f32 %v5964, %v5965
      %v5967 = vrot.slane %v5966, 1
      %v5968 = vmax.f32 %v5966, %v5967
      %v5969 = vsel %vm3371, %v2893, -inf
      %v5970 = vrot.slane %v5969, 4
      %v5971 = vmax.f32 %v5969, %v5970
      %v5972 = vrot.slane %v5971, 2
      %v5973 = vmax.f32 %v5971, %v5972
      %v5974 = vrot.slane %v5973, 1
      %v5975 = vmax.f32 %v5973, %v5974
      %v5976 = vsel %vm3371, %v2901, -inf
      %v5977 = vrot.slane %v5976, 4
      %v5978 = vmax.f32 %v5976, %v5977
      %v5979 = vrot.slane %v5978, 2
      %v5980 = vmax.f32 %v5978, %v5979
      %v5981 = vrot.slane %v5980, 1
      %v5982 = vmax.f32 %v5980, %v5981
      %v5983 = vsel %vm3371, %v2909, -inf
      %v5984 = vrot.slane %v5983, 4
      %v5985 = vmax.f32 %v5983, %v5984
      %v5986 = vrot.slane %v5985, 2
      %v5987 = vmax.f32 %v5985, %v5986
      %v5988 = vrot.slane %v5987, 1
      %v5989 = vmax.f32 %v5987, %v5988
      %v5990 = vsel %vm3371, %v2908, -inf
      %v5991 = vrot.slane %v5990, 4
      %v5992 = vmax.f32 %v5990, %v5991
      %v5993 = vrot.slane %v5992, 2
      %v5994 = vmax.f32 %v5992, %v5993
      %v5995 = vrot.slane %v5994, 1
      %v5996 = vmax.f32 %v5994, %v5995
      %v5997 = vsel %vm3371, %v2910, -inf
      %v5998 = vrot.slane %v5997, 4
      %v5999 = vmax.f32 %v5997, %v5998
      %v6000 = vrot.slane %v5999, 2
      %v6001 = vmax.f32 %v5999, %v6000
      %v6002 = vrot.slane %v6001, 1
      %v6003 = vmax.f32 %v6001, %v6002
      %v6004 = vsel %vm3371, %v2918, -inf
      %v6005 = vrot.slane %v6004, 4
      %v6006 = vmax.f32 %v6004, %v6005
      %v6007 = vrot.slane %v6006, 2
      %v6008 = vmax.f32 %v6006, %v6007
      %v6009 = vrot.slane %v6008, 1
      %v6010 = vmax.f32 %v6008, %v6009
      %v6011 = vsel %vm3371, %v2926, -inf
      %v6012 = vrot.slane %v6011, 4
      %v6013 = vmax.f32 %v6011, %v6012
      %v6014 = vrot.slane %v6013, 2
      %v6015 = vmax.f32 %v6013, %v6014
      %v6016 = vrot.slane %v6015, 1
      %v6017 = vmax.f32 %v6015, %v6016
      %v6018 = vsel %vm3371, %v2925, -inf
      %v6019 = vrot.slane %v6018, 4
      %v6020 = vmax.f32 %v6018, %v6019
      %v6021 = vrot.slane %v6020, 2
      %v6022 = vmax.f32 %v6020, %v6021
      %v6023 = vrot.slane %v6022, 1
      %v6024 = vmax.f32 %v6022, %v6023
      %v6025 = vsel %vm3371, %v2927, -inf
      %v6026 = vrot.slane %v6025, 4
      %v6027 = vmax.f32 %v6025, %v6026
      %v6028 = vrot.slane %v6027, 2
      %v6029 = vmax.f32 %v6027, %v6028
      %v6030 = vrot.slane %v6029, 1
      %v6031 = vmax.f32 %v6029, %v6030
      %v6032 = vsel %vm3371, %v2935, -inf
      %v6033 = vrot.slane %v6032, 4
      %v6034 = vmax.f32 %v6032, %v6033
      %v6035 = vrot.slane %v6034, 2
      %v6036 = vmax.f32 %v6034, %v6035
      %v6037 = vrot.slane %v6036, 1
      %v6038 = vmax.f32 %v6036, %v6037
      %v6039 = vsel %vm3371, %v2943, -inf
      %v6040 = vrot.slane %v6039, 4
      %v6041 = vmax.f32 %v6039, %v6040
      %v6042 = vrot.slane %v6041, 2
      %v6043 = vmax.f32 %v6041, %v6042
      %v6044 = vrot.slane %v6043, 1
      %v6045 = vmax.f32 %v6043, %v6044
      %v6046 = vsel %vm3371, %v2942, -inf
      %v6047 = vrot.slane %v6046, 4
      %v6048 = vmax.f32 %v6046, %v6047
      %v6049 = vrot.slane %v6048, 2
      %v6050 = vmax.f32 %v6048, %v6049
      %v6051 = vrot.slane %v6050, 1
      %v6052 = vmax.f32 %v6050, %v6051
      %v6053 = vsel %vm3371, %v2944, -inf
      %v6054 = vrot.slane %v6053, 4
      %v6055 = vmax.f32 %v6053, %v6054
      %v6056 = vrot.slane %v6055, 2
      %v6057 = vmax.f32 %v6055, %v6056
      %v6058 = vrot.slane %v6057, 1
      %v6059 = vmax.f32 %v6057, %v6058
      %v6060 = vsel %vm3371, %v2952, -inf
      %v6061 = vrot.slane %v6060, 4
      %v6062 = vmax.f32 %v6060, %v6061
      %v6063 = vrot.slane %v6062, 2
      %v6064 = vmax.f32 %v6062, %v6063
      %v6065 = vrot.slane %v6064, 1
      %v6066 = vmax.f32 %v6064, %v6065
      %v6067 = vsel %vm3371, %v2960, -inf
      %v6068 = vrot.slane %v6067, 4
      %v6069 = vmax.f32 %v6067, %v6068
      %v6070 = vrot.slane %v6069, 2
      %v6071 = vmax.f32 %v6069, %v6070
      %v6072 = vrot.slane %v6071, 1
      %v6073 = vmax.f32 %v6071, %v6072
      %v6074 = vsel %vm3371, %v2959, -inf
      %v6075 = vrot.slane %v6074, 4
      %v6076 = vmax.f32 %v6074, %v6075
      %v6077 = vrot.slane %v6076, 2
      %v6078 = vmax.f32 %v6076, %v6077
      %v6079 = vrot.slane %v6078, 1
      %v6080 = vmax.f32 %v6078, %v6079
      %v6081 = vsel %vm3371, %v2961, -inf
      %v6082 = vrot.slane %v6081, 4
      %v6083 = vmax.f32 %v6081, %v6082
      %v6084 = vrot.slane %v6083, 2
      %v6085 = vmax.f32 %v6083, %v6084
      %v6086 = vrot.slane %v6085, 1
      %v6087 = vmax.f32 %v6085, %v6086
      %v6088 = vsel %vm3371, %v2969, -inf
      %v6089 = vrot.slane %v6088, 4
      %v6090 = vmax.f32 %v6088, %v6089
      %v6091 = vrot.slane %v6090, 2
      %v6092 = vmax.f32 %v6090, %v6091
      %v6093 = vrot.slane %v6092, 1
      %v6094 = vmax.f32 %v6092, %v6093
      %v6095 = vsel %vm3371, %v2977, -inf
      %v6096 = vrot.slane %v6095, 4
      %v6097 = vmax.f32 %v6095, %v6096
      %v6098 = vrot.slane %v6097, 2
      %v6099 = vmax.f32 %v6097, %v6098
      %v6100 = vrot.slane %v6099, 1
      %v6101 = vmax.f32 %v6099, %v6100
      %v6102 = vsel %vm3371, %v2976, -inf
      %v6103 = vrot.slane %v6102, 4
      %v6104 = vmax.f32 %v6102, %v6103
      %v6105 = vrot.slane %v6104, 2
      %v6106 = vmax.f32 %v6104, %v6105
      %v6107 = vrot.slane %v6106, 1
      %v6108 = vmax.f32 %v6106, %v6107
      %v6109 = vsel %vm3371, %v2978, -inf
      %v6110 = vrot.slane %v6109, 4
      %v6111 = vmax.f32 %v6109, %v6110
      %v6112 = vrot.slane %v6111, 2
      %v6113 = vmax.f32 %v6111, %v6112
      %v6114 = vrot.slane %v6113, 1
      %v6115 = vmax.f32 %v6113, %v6114
      %v6116 = vmax.f32 %v3378, %v3476
      %v6117 = vmax.f32 %v3385, %v3483
      %v6118 = vmax.f32 %v3392, %v3490
      %v6119 = vmax.f32 %v3399, %v3497
      %v6120 = vmax.f32 %v3406, %v3504
      %v6121 = vmax.f32 %v3413, %v3511
      %v6122 = vmax.f32 %v3420, %v3518
      %v6123 = vmax.f32 %v3427, %v3525
      %v6124 = vmax.f32 %v3434, %v3532
      %v6125 = vmax.f32 %v3441, %v3539
      %v6126 = vmax.f32 %v3448, %v3546
      %v6127 = vmax.f32 %v3455, %v3553
      %v6128 = vmax.f32 %v3462, %v3560
      %v6129 = vmax.f32 %v3469, %v3567
      %v6130 = vmax.f32 %v3574, %v3672
      %v6131 = vmax.f32 %v3581, %v3679
      %v6132 = vmax.f32 %v3588, %v3686
      %v6133 = vmax.f32 %v3595, %v3693
      %v6134 = vmax.f32 %v3602, %v3700
      %v6135 = vmax.f32 %v3609, %v3707
      %v6136 = vmax.f32 %v3616, %v3714
      %v6137 = vmax.f32 %v3623, %v3721
      %v6138 = vmax.f32 %v3630, %v3728
      %v6139 = vmax.f32 %v3637, %v3735
      %v6140 = vmax.f32 %v3644, %v3742
      %v6141 = vmax.f32 %v3651, %v3749
      %v6142 = vmax.f32 %v3658, %v3756
      %v6143 = vmax.f32 %v3665, %v3763
      %v6144 = vmax.f32 %v3770, %v3868
      %v6145 = vmax.f32 %v3777, %v3875
      %v6146 = vmax.f32 %v3784, %v3882
      %v6147 = vmax.f32 %v3791, %v3889
      %v6148 = vmax.f32 %v3798, %v3896
      %v6149 = vmax.f32 %v3805, %v3903
      %v6150 = vmax.f32 %v3812, %v3910
      %v6151 = vmax.f32 %v3819, %v3917
      %v6152 = vmax.f32 %v3826, %v3924
      %v6153 = vmax.f32 %v3833, %v3931
      %v6154 = vmax.f32 %v3840, %v3938
      %v6155 = vmax.f32 %v3847, %v3945
      %v6156 = vmax.f32 %v3854, %v3952
      %v6157 = vmax.f32 %v3861, %v3959
      %v6158 = vmax.f32 %v3966, %v4064
      %v6159 = vmax.f32 %v3973, %v4071
      %v6160 = vmax.f32 %v3980, %v4078
      %v6161 = vmax.f32 %v3987, %v4085
      %v6162 = vmax.f32 %v3994, %v4092
      %v6163 = vmax.f32 %v4001, %v4099
      %v6164 = vmax.f32 %v4008, %v4106
      %v6165 = vmax.f32 %v4015, %v4113
      %v6166 = vmax.f32 %v4022, %v4120
      %v6167 = vmax.f32 %v4029, %v4127
      %v6168 = vmax.f32 %v4036, %v4134
      %v6169 = vmax.f32 %v4043, %v4141
      %v6170 = vmax.f32 %v4050, %v4148
      %v6171 = vmax.f32 %v4057, %v4155
      %v6172 = vmax.f32 %v4162, %v4260
      %v6173 = vmax.f32 %v4169, %v4267
      %v6174 = vmax.f32 %v4176, %v4274
      %v6175 = vmax.f32 %v4183, %v4281
      %v6176 = vmax.f32 %v4190, %v4288
      %v6177 = vmax.f32 %v4197, %v4295
      %v6178 = vmax.f32 %v4204, %v4302
      %v6179 = vmax.f32 %v4211, %v4309
      %v6180 = vmax.f32 %v4218, %v4316
      %v6181 = vmax.f32 %v4225, %v4323
      %v6182 = vmax.f32 %v4232, %v4330
      %v6183 = vmax.f32 %v4239, %v4337
      %v6184 = vmax.f32 %v4246, %v4344
      %v6185 = vmax.f32 %v4253, %v4351
      %v6186 = vmax.f32 %v4358, %v4456
      %v6187 = vmax.f32 %v4365, %v4463
      %v6188 = vmax.f32 %v4372, %v4470
      %v6189 = vmax.f32 %v4379, %v4477
      %v6190 = vmax.f32 %v4386, %v4484
      %v6191 = vmax.f32 %v4393, %v4491
      %v6192 = vmax.f32 %v4400, %v4498
      %v6193 = vmax.f32 %v4407, %v4505
      %v6194 = vmax.f32 %v4414, %v4512
      %v6195 = vmax.f32 %v4421, %v4519
      %v6196 = vmax.f32 %v4428, %v4526
      %v6197 = vmax.f32 %v4435, %v4533
      %v6198 = vmax.f32 %v4442, %v4540
      %v6199 = vmax.f32 %v4449, %v4547
      %v6200 = vmax.f32 %v4554, %v4652
      %v6201 = vmax.f32 %v4561, %v4659
      %v6202 = vmax.f32 %v4568, %v4666
      %v6203 = vmax.f32 %v4575, %v4673
      %v6204 = vmax.f32 %v4582, %v4680
      %v6205 = vmax.f32 %v4589, %v4687
      %v6206 = vmax.f32 %v4596, %v4694
      %v6207 = vmax.f32 %v4603, %v4701
      %v6208 = vmax.f32 %v4610, %v4708
      %v6209 = vmax.f32 %v4617, %v4715
      %v6210 = vmax.f32 %v4624, %v4722
      %v6211 = vmax.f32 %v4631, %v4729
      %v6212 = vmax.f32 %v4638, %v4736
      %v6213 = vmax.f32 %v4645, %v4743
      %v6214 = vmax.f32 %v4750, %v4848
      %v6215 = vmax.f32 %v4757, %v4855
      %v6216 = vmax.f32 %v4764, %v4862
      %v6217 = vmax.f32 %v4771, %v4869
      %v6218 = vmax.f32 %v4778, %v4876
      %v6219 = vmax.f32 %v4785, %v4883
      %v6220 = vmax.f32 %v4792, %v4890
      %v6221 = vmax.f32 %v4799, %v4897
      %v6222 = vmax.f32 %v4806, %v4904
      %v6223 = vmax.f32 %v4813, %v4911
      %v6224 = vmax.f32 %v4820, %v4918
      %v6225 = vmax.f32 %v4827, %v4925
      %v6226 = vmax.f32 %v4834, %v4932
      %v6227 = vmax.f32 %v4841, %v4939
      %v6228 = vmax.f32 %v4946, %v5044
      %v6229 = vmax.f32 %v4953, %v5051
      %v6230 = vmax.f32 %v4960, %v5058
      %v6231 = vmax.f32 %v4967, %v5065
      %v6232 = vmax.f32 %v4974, %v5072
      %v6233 = vmax.f32 %v4981, %v5079
      %v6234 = vmax.f32 %v4988, %v5086
      %v6235 = vmax.f32 %v4995, %v5093
      %v6236 = vmax.f32 %v5002, %v5100
      %v6237 = vmax.f32 %v5009, %v5107
      %v6238 = vmax.f32 %v5016, %v5114
      %v6239 = vmax.f32 %v5023, %v5121
      %v6240 = vmax.f32 %v5030, %v5128
      %v6241 = vmax.f32 %v5037, %v5135
      %v6242 = vmax.f32 %v5142, %v5240
      %v6243 = vmax.f32 %v5149, %v5247
      %v6244 = vmax.f32 %v5156, %v5254
      %v6245 = vmax.f32 %v5163, %v5261
      %v6246 = vmax.f32 %v5170, %v5268
      %v6247 = vmax.f32 %v5177, %v5275
      %v6248 = vmax.f32 %v5184, %v5282
      %v6249 = vmax.f32 %v5191, %v5289
      %v6250 = vmax.f32 %v5198, %v5296
      %v6251 = vmax.f32 %v5205, %v5303
      %v6252 = vmax.f32 %v5212, %v5310
      %v6253 = vmax.f32 %v5219, %v5317
      %v6254 = vmax.f32 %v5226, %v5324
      %v6255 = vmax.f32 %v5233, %v5331
      %v6256 = vmax.f32 %v5338, %v5436
      %v6257 = vmax.f32 %v5345, %v5443
      %v6258 = vmax.f32 %v5352, %v5450
      %v6259 = vmax.f32 %v5359, %v5457
      %v6260 = vmax.f32 %v5366, %v5464
      %v6261 = vmax.f32 %v5373, %v5471
      %v6262 = vmax.f32 %v5380, %v5478
      %v6263 = vmax.f32 %v5387, %v5485
      %v6264 = vmax.f32 %v5394, %v5492
      %v6265 = vmax.f32 %v5401, %v5499
      %v6266 = vmax.f32 %v5408, %v5506
      %v6267 = vmax.f32 %v5415, %v5513
      %v6268 = vmax.f32 %v5422, %v5520
      %v6269 = vmax.f32 %v5429, %v5527
      %v6270 = vmax.f32 %v5534, %v5632
      %v6271 = vmax.f32 %v5541, %v5639
      %v6272 = vmax.f32 %v5548, %v5646
      %v6273 = vmax.f32 %v5555, %v5653
      %v6274 = vmax.f32 %v5562, %v5660
      %v6275 = vmax.f32 %v5569, %v5667
      %v6276 = vmax.f32 %v5576, %v5674
      %v6277 = vmax.f32 %v5583, %v5681
      %v6278 = vmax.f32 %v5590, %v5688
      %v6279 = vmax.f32 %v5597, %v5695
      %v6280 = vmax.f32 %v5604, %v5702
      %v6281 = vmax.f32 %v5611, %v5709
      %v6282 = vmax.f32 %v5618, %v5716
      %v6283 = vmax.f32 %v5625, %v5723
      %v6284 = vmax.f32 %v5730, %v5828
      %v6285 = vmax.f32 %v5737, %v5835
      %v6286 = vmax.f32 %v5744, %v5842
      %v6287 = vmax.f32 %v5751, %v5849
      %v6288 = vmax.f32 %v5758, %v5856
      %v6289 = vmax.f32 %v5765, %v5863
      %v6290 = vmax.f32 %v5772, %v5870
      %v6291 = vmax.f32 %v5779, %v5877
      %v6292 = vmax.f32 %v5786, %v5884
      %v6293 = vmax.f32 %v5793, %v5891
      %v6294 = vmax.f32 %v5800, %v5898
      %v6295 = vmax.f32 %v5807, %v5905
      %v6296 = vmax.f32 %v5814, %v5912
      %v6297 = vmax.f32 %v5821, %v5919
      %v6298 = vmax.f32 %v5926, %v6024
      %v6299 = vmax.f32 %v5933, %v6031
      %v6300 = vmax.f32 %v5940, %v6038
      %v6301 = vmax.f32 %v5947, %v6045
      %v6302 = vmax.f32 %v5954, %v6052
      %v6303 = vmax.f32 %v5961, %v6059
      %v6304 = vmax.f32 %v5968, %v6066
      %v6305 = vmax.f32 %v5975, %v6073
      %v6306 = vmax.f32 %v5982, %v6080
      %v6307 = vmax.f32 %v5989, %v6087
      %v6308 = vmax.f32 %v5996, %v6094
      %v6309 = vmax.f32 %v6003, %v6101
      %v6310 = vmax.f32 %v6010, %v6108
      %v6311 = vmax.f32 %v6017, %v6115
      %vm6508 = vcmask 1041409
      %v6509 = vsel %vm6508, %v6117, %v6116
      %vm6510 = vcmask 1042434
      %v6511 = vsel %vm6510, %v6118, %v6509
      %vm6512 = vcmask 1043459
      %v6513 = vsel %vm6512, %v6119, %v6511
      %vm6514 = vcmask 1044484
      %v6515 = vsel %vm6514, %v6120, %v6513
      %vm6516 = vcmask 1045509
      %v6517 = vsel %vm6516, %v6121, %v6515
      %vm6518 = vcmask 1046534
      %v6519 = vsel %vm6518, %v6122, %v6517
      %vm6520 = vcmask 1047559
      %v6521 = vsel %vm6520, %v6123, %v6519
      %v6522 = vsel %vm6508, %v6125, %v6124
      %v6523 = vsel %vm6510, %v6126, %v6522
      %v6524 = vsel %vm6512, %v6127, %v6523
      %v6525 = vsel %vm6514, %v6128, %v6524
      %v6526 = vsel %vm6516, %v6129, %v6525
      %v6527 = vsel %vm6508, %v6131, %v6130
      %v6528 = vsel %vm6510, %v6132, %v6527
      %v6529 = vsel %vm6512, %v6133, %v6528
      %v6530 = vsel %vm6514, %v6134, %v6529
      %v6531 = vsel %vm6516, %v6135, %v6530
      %v6532 = vsel %vm6518, %v6136, %v6531
      %v6533 = vsel %vm6520, %v6137, %v6532
      %v6534 = vsel %vm6508, %v6139, %v6138
      %v6535 = vsel %vm6510, %v6140, %v6534
      %v6536 = vsel %vm6512, %v6141, %v6535
      %v6537 = vsel %vm6514, %v6142, %v6536
      %v6538 = vsel %vm6516, %v6143, %v6537
      %v6539 = vsel %vm6508, %v6145, %v6144
      %v6540 = vsel %vm6510, %v6146, %v6539
      %v6541 = vsel %vm6512, %v6147, %v6540
      %v6542 = vsel %vm6514, %v6148, %v6541
      %v6543 = vsel %vm6516, %v6149, %v6542
      %v6544 = vsel %vm6518, %v6150, %v6543
      %v6545 = vsel %vm6520, %v6151, %v6544
      %v6546 = vsel %vm6508, %v6153, %v6152
      %v6547 = vsel %vm6510, %v6154, %v6546
      %v6548 = vsel %vm6512, %v6155, %v6547
      %v6549 = vsel %vm6514, %v6156, %v6548
      %v6550 = vsel %vm6516, %v6157, %v6549
      %v6551 = vsel %vm6508, %v6159, %v6158
      %v6552 = vsel %vm6510, %v6160, %v6551
      %v6553 = vsel %vm6512, %v6161, %v6552
      %v6554 = vsel %vm6514, %v6162, %v6553
      %v6555 = vsel %vm6516, %v6163, %v6554
      %v6556 = vsel %vm6518, %v6164, %v6555
      %v6557 = vsel %vm6520, %v6165, %v6556
      %v6558 = vsel %vm6508, %v6167, %v6166
      %v6559 = vsel %vm6510, %v6168, %v6558
      %v6560 = vsel %vm6512, %v6169, %v6559
      %v6561 = vsel %vm6514, %v6170, %v6560
      %v6562 = vsel %vm6516, %v6171, %v6561
      %v6563 = vsel %vm6508, %v6173, %v6172
      %v6564 = vsel %vm6510, %v6174, %v6563
      %v6565 = vsel %vm6512, %v6175, %v6564
      %v6566 = vsel %vm6514, %v6176, %v6565
      %v6567 = vsel %vm6516, %v6177, %v6566
      %v6568 = vsel %vm6518, %v6178, %v6567
      %v6569 = vsel %vm6520, %v6179, %v6568
      %v6570 = vsel %vm6508, %v6181, %v6180
      %v6571 = vsel %vm6510, %v6182, %v6570
      %v6572 = vsel %vm6512, %v6183, %v6571
      %v6573 = vsel %vm6514, %v6184, %v6572
      %v6574 = vsel %vm6516, %v6185, %v6573
      %v6575 = vsel %vm6508, %v6187, %v6186
      %v6576 = vsel %vm6510, %v6188, %v6575
      %v6577 = vsel %vm6512, %v6189, %v6576
      %v6578 = vsel %vm6514, %v6190, %v6577
      %v6579 = vsel %vm6516, %v6191, %v6578
      %v6580 = vsel %vm6518, %v6192, %v6579
      %v6581 = vsel %vm6520, %v6193, %v6580
      %v6582 = vsel %vm6508, %v6195, %v6194
      %v6583 = vsel %vm6510, %v6196, %v6582
      %v6584 = vsel %vm6512, %v6197, %v6583
      %v6585 = vsel %vm6514, %v6198, %v6584
      %v6586 = vsel %vm6516, %v6199, %v6585
      %v6587 = vsel %vm6508, %v6201, %v6200
      %v6588 = vsel %vm6510, %v6202, %v6587
      %v6589 = vsel %vm6512, %v6203, %v6588
      %v6590 = vsel %vm6514, %v6204, %v6589
      %v6591 = vsel %vm6516, %v6205, %v6590
      %v6592 = vsel %vm6518, %v6206, %v6591
      %v6593 = vsel %vm6520, %v6207, %v6592
      %v6594 = vsel %vm6508, %v6209, %v6208
      %v6595 = vsel %vm6510, %v6210, %v6594
      %v6596 = vsel %vm6512, %v6211, %v6595
      %v6597 = vsel %vm6514, %v6212, %v6596
      %v6598 = vsel %vm6516, %v6213, %v6597
      %v6599 = vsel %vm6508, %v6215, %v6214
      %v6600 = vsel %vm6510, %v6216, %v6599
      %v6601 = vsel %vm6512, %v6217, %v6600
      %v6602 = vsel %vm6514, %v6218, %v6601
      %v6603 = vsel %vm6516, %v6219, %v6602
      %v6604 = vsel %vm6518, %v6220, %v6603
      %v6605 = vsel %vm6520, %v6221, %v6604
      %v6606 = vsel %vm6508, %v6223, %v6222
      %v6607 = vsel %vm6510, %v6224, %v6606
      %v6608 = vsel %vm6512, %v6225, %v6607
      %v6609 = vsel %vm6514, %v6226, %v6608
      %v6610 = vsel %vm6516, %v6227, %v6609
      %v6611 = vsel %vm6508, %v6229, %v6228
      %v6612 = vsel %vm6510, %v6230, %v6611
      %v6613 = vsel %vm6512, %v6231, %v6612
      %v6614 = vsel %vm6514, %v6232, %v6613
      %v6615 = vsel %vm6516, %v6233, %v6614
      %v6616 = vsel %vm6518, %v6234, %v6615
      %v6617 = vsel %vm6520, %v6235, %v6616
      %v6618 = vsel %vm6508, %v6237, %v6236
      %v6619 = vsel %vm6510, %v6238, %v6618
      %v6620 = vsel %vm6512, %v6239, %v6619
      %v6621 = vsel %vm6514, %v6240, %v6620
      %v6622 = vsel %vm6516, %v6241, %v6621
      %v6623 = vsel %vm6508, %v6243, %v6242
      %v6624 = vsel %vm6510, %v6244, %v6623
      %v6625 = vsel %vm6512, %v6245, %v6624
      %v6626 = vsel %vm6514, %v6246, %v6625
      %v6627 = vsel %vm6516, %v6247, %v6626
      %v6628 = vsel %vm6518, %v6248, %v6627
      %v6629 = vsel %vm6520, %v6249, %v6628
      %v6630 = vsel %vm6508, %v6251, %v6250
      %v6631 = vsel %vm6510, %v6252, %v6630
      %v6632 = vsel %vm6512, %v6253, %v6631
      %v6633 = vsel %vm6514, %v6254, %v6632
      %v6634 = vsel %vm6516, %v6255, %v6633
      %v6635 = vsel %vm6508, %v6257, %v6256
      %v6636 = vsel %vm6510, %v6258, %v6635
      %v6637 = vsel %vm6512, %v6259, %v6636
      %v6638 = vsel %vm6514, %v6260, %v6637
      %v6639 = vsel %vm6516, %v6261, %v6638
      %v6640 = vsel %vm6518, %v6262, %v6639
      %v6641 = vsel %vm6520, %v6263, %v6640
      %v6642 = vsel %vm6508, %v6265, %v6264
      %v6643 = vsel %vm6510, %v6266, %v6642
      %v6644 = vsel %vm6512, %v6267, %v6643
      %v6645 = vsel %vm6514, %v6268, %v6644
      %v6646 = vsel %vm6516, %v6269, %v6645
      %v6647 = vsel %vm6508, %v6271, %v6270
      %v6648 = vsel %vm6510, %v6272, %v6647
      %v6649 = vsel %vm6512, %v6273, %v6648
      %v6650 = vsel %vm6514, %v6274, %v6649
      %v6651 = vsel %vm6516, %v6275, %v6650
      %v6652 = vsel %vm6518, %v6276, %v6651
      %v6653 = vsel %vm6520, %v6277, %v6652
      %v6654 = vsel %vm6508, %v6279, %v6278
      %v6655 = vsel %vm6510, %v6280, %v6654
      %v6656 = vsel %vm6512, %v6281, %v6655
      %v6657 = vsel %vm6514, %v6282, %v6656
      %v6658 = vsel %vm6516, %v6283, %v6657
      %v6659 = vsel %vm6508, %v6285, %v6284
      %v6660 = vsel %vm6510, %v6286, %v6659
      %v6661 = vsel %vm6512, %v6287, %v6660
      %v6662 = vsel %vm6514, %v6288, %v6661
      %v6663 = vsel %vm6516, %v6289, %v6662
      %v6664 = vsel %vm6518, %v6290, %v6663
      %v6665 = vsel %vm6520, %v6291, %v6664
      %v6666 = vsel %vm6508, %v6293, %v6292
      %v6667 = vsel %vm6510, %v6294, %v6666
      %v6668 = vsel %vm6512, %v6295, %v6667
      %v6669 = vsel %vm6514, %v6296, %v6668
      %v6670 = vsel %vm6516, %v6297, %v6669
      %v6671 = vsel %vm6508, %v6299, %v6298
      %v6672 = vsel %vm6510, %v6300, %v6671
      %v6673 = vsel %vm6512, %v6301, %v6672
      %v6674 = vsel %vm6514, %v6302, %v6673
      %v6675 = vsel %vm6516, %v6303, %v6674
      %v6676 = vsel %vm6518, %v6304, %v6675
      %v6677 = vsel %vm6520, %v6305, %v6676
      %v6678 = vsel %vm6508, %v6307, %v6306
      %v6679 = vsel %vm6510, %v6308, %v6678
      %v6680 = vsel %vm6512, %v6309, %v6679
      %v6681 = vsel %vm6514, %v6310, %v6680
      %v6682 = vsel %vm6516, %v6311, %v6681
      %6711 = vst [vmem:[%s170] sm:$0xff] %v6521
      %6712 = vst [vmem:[%s170 + $0x8] sm:$0x3f] %v6526
      %6713 = vst [vmem:[%s170 + $0x10] sm:$0xff] %v6533
      %6714 = vst [vmem:[%s170 + $0x18] sm:$0x3f] %v6538
      %6715 = vst [vmem:[%s170 + $0x20] sm:$0xff] %v6545
      %6716 = vst [vmem:[%s170 + $0x28] sm:$0x3f] %v6550
      %6717 = vst [vmem:[%s170 + $0x30] sm:$0xff] %v6557
      %6718 = vst [vmem:[%s170 + $0x38] sm:$0x3f] %v6562
      %6719 = vst [vmem:[%s170 + $0x40] sm:$0xff] %v6569
      %6720 = vst [vmem:[%s170 + $0x48] sm:$0x3f] %v6574
      %6721 = vst [vmem:[%s170 + $0x50] sm:$0xff] %v6581
      %6722 = vst [vmem:[%s170 + $0x58] sm:$0x3f] %v6586
      %6723 = vst [vmem:[%s170 + $0x60] sm:$0xff] %v6593
      %6724 = vst [vmem:[%s170 + $0x68] sm:$0x3f] %v6598
      %6725 = vst [vmem:[%s170 + $0x70] sm:$0xff] %v6605
      %6726 = vst [vmem:[%s170 + $0x78] sm:$0x3f] %v6610
      %6727 = vst [vmem:[%s170 + $0x80] sm:$0xff] %v6617
      %6728 = vst [vmem:[%s170 + $0x88] sm:$0x3f] %v6622
      %6729 = vst [vmem:[%s170 + $0x90] sm:$0xff] %v6629
      %6730 = vst [vmem:[%s170 + $0x98] sm:$0x3f] %v6634
      %6731 = vst [vmem:[%s170 + $0xa0] sm:$0xff] %v6641
      %6732 = vst [vmem:[%s170 + $0xa8] sm:$0x3f] %v6646
      %6733 = vst [vmem:[%s170 + $0xb0] sm:$0xff] %v6653
      %6734 = vst [vmem:[%s170 + $0xb8] sm:$0x3f] %v6658
      %6735 = vst [vmem:[%s170 + $0xc0] sm:$0xff] %v6665
      %6736 = vst [vmem:[%s170 + $0xc8] sm:$0x3f] %v6670
      %6737 = vst [vmem:[%s170 + $0xd0] sm:$0xff] %v6677
      %6738 = vst [vmem:[%s170 + $0xd8] sm:$0x3f] %v6682
      %p6739 = scmp.lt.s32.totalorder %s14, 1
      %s6740 = scalar_select %p6739, %s14, 1
      %s6741 = smul.addr %s6740, 28
      %s6742 = smul.addr %s6741, 8
      %s6743 = scalar_lea.vmem %s3, %s6742
      // Predicated region
      $region33: #{lenet_forward.3} parent=31 // pred_check
        %p6744 = pneg %p100
      $region34: #{lenet_forward.3} parent=31 // pred_check_branch
        %6746 = sbr.rel (%p6744) target = $region36
      $region35: #{lenet_forward.3} parent=31 // pred_region
        _
      $region36: #{lenet_forward.3} parent=31 // pred_fallthru
        _
    $region32: #{lenet_forward.3} parent=5 // pred_fallthru
      _
    %p6747 = scmp.le.s32.totalorder 2, %s9
    // Predicated region
    $region37: #{lenet_forward.3} parent=5 // pred_check
      %p6748 = pneg %p6747
    $region38: #{lenet_forward.3} parent=5 // pred_check_branch
      %6750 = sbr.rel (%p6748) target = $region40
    $region39: #{lenet_forward.3} parent=5 // pred_region
      %s6751 = ssub.s32 %s9, 2
      // Predicated region
      $region41: #{lenet_forward.3} parent=39 // pred_check
        %p6752 = pneg %p106
      $region42: #{lenet_forward.3} parent=39 // pred_check_branch
        %6754 = sbr.rel (%p6752) target = $region44
      $region43: #{lenet_forward.3} parent=39 // pred_region
        %p6755 = scmp.lt.s32.totalorder %s15, 1
        %s6756 = scalar_select %p6755, %s15, 1
        %s6757 = smul.addr %s6756, 28
        %s6758 = smul.addr %s6757, 8
        %s6759 = scalar_lea.vmem %s3, %s6758
      $region44: #{lenet_forward.3} parent=39 // pred_fallthru
        _
    $region40: #{lenet_forward.3} parent=5 // pred_fallthru
      _
  $region6: #{lenet_forward.3} parent=0 // loop_footer
    %s13 = sadd.s32 1, %s9
  $region7: #{lenet_forward.3} parent=0 // loop_footer_branch
    %8 = sbr.rel target = $region3
  $region8: #{lenet_forward.3} parent=0 // loop_exit
    _

// kernel: lenet_forward.5
$region0: #{lenet_forward.5}
  #allocation0 [shape = 'u32[]', space=smem, size = 0x4, offset = 0x4, fixed_abs, tag = 'smem constant byte address 0x4 - core index']
  #allocation1 [shape = 'u32[144,128]{1,0:T(1,128)}', space=vmem, size = 0x12000, scoped, tag = 'internal scratch']
  %s0 = inlined_call_operand.vmem [shape: bf16[2,400], index: 0, kind: input, shape index: {}]
  %s1 = inlined_call_operand.vmem [shape: bf16[400,128], index: 1, kind: input, shape index: {}]
  %s2 = inlined_call_operand.vmem [shape: f32[1,128], index: 2, kind: input, shape index: {}]
  %s3 = inlined_call_operand.vmem [shape: bf16[128,128], index: 3, kind: input, shape index: {}]
  %s4 = inlined_call_operand.vmem [shape: f32[1,128], index: 4, kind: input, shape index: {}]
  %s5 = inlined_call_operand.vmem [shape: bf16[128,128], index: 5, kind: input, shape index: {}]
  %s6 = inlined_call_operand.vmem [shape: f32[1,128], index: 6, kind: input, shape index: {}]
  %s7 = inlined_call_operand.hbm [shape: f32[2,128], index: 7, kind: output, shape index: {}]
  %s8 = sld [smem:[#allocation0]]
  $region38: #{lenet_forward.5} parent=0
    _
  %s10 = ssub.s32 1, %s8
  %s11 = scalar_select 0, %s10, %s8
  $region1: #{lenet_forward.5} parent=0
    #allocation2 [shape = 'u8[1024]{0}', space=vmem, size = 0x400, scoped, tag = 'output window, operand 0, single buffered']
    #allocation3 [shape = 's32[1]{0}', space=sflag, size = 0x4, scoped, tag = 'scoped memory for lenet_forward.5']
    %12 = vsyncpa [#allocation3], 0
    // Predicated region
    $region2: #{lenet_forward.5} parent=1 // pred_check
      _
    $region3: #{lenet_forward.5} parent=1 // pred_check_branch
      %14 = sbr.rel (0) target = $region5
    $region4: #{lenet_forward.5} parent=1 // pred_region
      _
    $region5: #{lenet_forward.5} parent=1 // pred_fallthru
      _
    // Predicated region
    $region6: #{lenet_forward.5} parent=1 // pred_check
      _
    $region7: #{lenet_forward.5} parent=1 // pred_check_branch
      %16 = sbr.rel (0) target = $region9
    $region8: #{lenet_forward.5} parent=1 // pred_region
      _
    $region9: #{lenet_forward.5} parent=1 // pred_fallthru
      _
    // Predicated region
    $region10: #{lenet_forward.5} parent=1 // pred_check
      _
    $region11: #{lenet_forward.5} parent=1 // pred_check_branch
      %18 = sbr.rel (0) target = $region13
    $region12: #{lenet_forward.5} parent=1 // pred_region
      _
    $region13: #{lenet_forward.5} parent=1 // pred_fallthru
      _
    // Predicated region
    $region14: #{lenet_forward.5} parent=1 // pred_check
      _
    $region15: #{lenet_forward.5} parent=1 // pred_check_branch
      %20 = sbr.rel (0) target = $region17
    $region16: #{lenet_forward.5} parent=1 // pred_region
      _
    $region17: #{lenet_forward.5} parent=1 // pred_fallthru
      _
    // Predicated region
    $region18: #{lenet_forward.5} parent=1 // pred_check
      _
    $region19: #{lenet_forward.5} parent=1 // pred_check_branch
      %22 = sbr.rel (0) target = $region21
    $region20: #{lenet_forward.5} parent=1 // pred_region
      _
    $region21: #{lenet_forward.5} parent=1 // pred_fallthru
      _
    // Predicated region
    $region22: #{lenet_forward.5} parent=1 // pred_check
      _
    $region23: #{lenet_forward.5} parent=1 // pred_check_branch
      %24 = sbr.rel (0) target = $region25
    $region24: #{lenet_forward.5} parent=1 // pred_region
      _
    $region25: #{lenet_forward.5} parent=1 // pred_fallthru
      _
    // Predicated region
    $region26: #{lenet_forward.5} parent=1 // pred_check
      _
    $region27: #{lenet_forward.5} parent=1 // pred_check_branch
      %26 = sbr.rel (0) target = $region29
    $region28: #{lenet_forward.5} parent=1 // pred_region
      _
    $region29: #{lenet_forward.5} parent=1 // pred_fallthru
      _
    %v28 = vld [vmem:[%s0] sm:$0xf]
    %v29 = vld [vmem:[%s1] sm:$0xf]
    %v30 = vld [vmem:[%s1 + $0x4] sm:$0xf]
    %v31 = vld [vmem:[%s1 + $0x8] sm:$0xf]
    %v32 = vld [vmem:[%s1 + $0xc] sm:$0xf]
    %v33 = vld [vmem:[%s1 + $0x10] sm:$0xf]
    %v34 = vld [vmem:[%s1 + $0x14] sm:$0xf]
    %v35 = vld [vmem:[%s1 + $0x18] sm:$0xf]
    %v36 = vld [vmem:[%s1 + $0x1c] sm:$0xf]
    %v37 = vld [vmem:[%s1 + $0x20] sm:$0xf]
    %v38 = vld [vmem:[%s1 + $0x24] sm:$0xf]
    %v39 = vld [vmem:[%s1 + $0x28] sm:$0xf]
    %v40 = vld [vmem:[%s1 + $0x2c] sm:$0xf]
    %v41 = vld [vmem:[%s1 + $0x30] sm:$0xf]
    %v42 = vld [vmem:[%s1 + $0x34] sm:$0xf]
    %v43 = vld [vmem:[%s1 + $0x38] sm:$0xf]
    %v44 = vld [vmem:[%s1 + $0x3c] sm:$0xf]
    %v45 = vld [vmem:[%s1 + $0x40] sm:$0xf]
    %v46 = vld [vmem:[%s1 + $0x44] sm:$0xf]
    %v47 = vld [vmem:[%s1 + $0x48] sm:$0xf]
    %v48 = vld [vmem:[%s1 + $0x4c] sm:$0xf]
    %v49 = vld [vmem:[%s1 + $0x50] sm:$0xf]
    %v50 = vld [vmem:[%s1 + $0x54] sm:$0xf]
    %v51 = vld [vmem:[%s1 + $0x58] sm:$0xf]
    %v52 = vld [vmem:[%s1 + $0x5c] sm:$0xf]
    %v53 = vld [vmem:[%s1 + $0x60] sm:$0xf]
    %v54 = vld [vmem:[%s1 + $0x64] sm:$0xf]
    %v55 = vld [vmem:[%s1 + $0x68] sm:$0xf]
    %v56 = vld [vmem:[%s1 + $0x6c] sm:$0xf]
    %v57 = vld [vmem:[%s1 + $0x70] sm:$0xf]
    %v58 = vld [vmem:[%s1 + $0x74] sm:$0xf]
    %v59 = vld [vmem:[%s1 + $0x78] sm:$0xf]
    %v60 = vld [vmem:[%s1 + $0x7c] sm:$0xf]
    %v61 = vld [vmem:[%s1 + $0x80] sm:$0xf]
    %v62 = vld [vmem:[%s1 + $0x84] sm:$0xf]
    %v63 = vld [vmem:[%s1 + $0x88] sm:$0xf]
    %v64 = vld [vmem:[%s1 + $0x8c] sm:$0xf]
    %v65 = vld [vmem:[%s1 + $0x90] sm:$0xf]
    %v66 = vld [vmem:[%s1 + $0x94] sm:$0xf]
    %v67 = vld [vmem:[%s1 + $0x98] sm:$0xf]
    %v68 = vld [vmem:[%s1 + $0x9c] sm:$0xf]
    %v69 = vld [vmem:[%s1 + $0xa0] sm:$0xf]
    %v70 = vld [vmem:[%s1 + $0xa4] sm:$0xf]
    %v71 = vld [vmem:[%s1 + $0xa8] sm:$0xf]
    %v72 = vld [vmem:[%s1 + $0xac] sm:$0xf]
    %v73 = vld [vmem:[%s1 + $0xb0] sm:$0xf]
    %v74 = vld [vmem:[%s1 + $0xb4] sm:$0xf]
    %v75 = vld [vmem:[%s1 + $0xb8] sm:$0xf]
    %v76 = vld [vmem:[%s1 + $0xbc] sm:$0xf]
    %v77 = vld [vmem:[%s1 + $0xc0] sm:$0xf]
    %v78 = vld [vmem:[%s1 + $0xc4] sm:$0xf]
    %v79 = vld [vmem:[%s2] sm:$0x1]
    %v81 = vlaneseq
    %v82 = vshrl.u32 %v81, 7
    %v83 = vsub.s32 0, %v82
    %v84 = vrot.slane %v79, %v83
    %v88 = vunpack.c.l.s4 1966171168
    %v89 = vunpack.c.0.s8 %v88
    %v90 = vlaneseq
    %v91 = vshrl.u32 %v90, 7
    %v92 = vsub.s32 %v89, %v91
    %v93 = vrot.slane %v28, %v92
    %v94 = vcombine.high %v93, %v93
    %v96 = vunpack.c.l.s4 1966171168
    %v97 = vunpack.c.0.s8 %v96
    %v98 = vlaneseq
    %v99 = vshrl.u32 %v98, 7
    %v100 = vsub.s32 %v97, %v99
    %v101 = vrot.slane %v93, %v100
    %v103 = vunpack.c.l.s4 1966171168
    %v104 = vunpack.c.0.s8 %v103
    %v105 = vlaneseq
    %v106 = vshrl.u32 %v105, 7
    %v107 = vsub.s32 %v104, %v106
    %v108 = vrot.slane %v94, %v107
    %v109 = vcombine.high %v101, %v101
    %v110 = vcombine.high %v108, %v108
    %v164 = vunpack.c.l.b16 %v29
    %v165 = vunpack.c.l.b16 %v30
    %v166 = vunpack.c.l.b16 %v31
    %v167 = vunpack.c.l.b16 %v32
    %v168 = vunpack.c.l.b16 %v33
    %v169 = vunpack.c.l.b16 %v34
    %v170 = vunpack.c.l.b16 %v35
    %v171 = vunpack.c.l.b16 %v36
    %v172 = vunpack.c.l.b16 %v37
    %v173 = vunpack.c.l.b16 %v38
    %v174 = vunpack.c.l.b16 %v39
    %v175 = vunpack.c.l.b16 %v40
    %v176 = vunpack.c.l.b16 %v41
    %v177 = vunpack.c.l.b16 %v42
    %v178 = vunpack.c.l.b16 %v43
    %v179 = vunpack.c.l.b16 %v44
    %v180 = vunpack.c.l.b16 %v45
    %v181 = vunpack.c.l.b16 %v46
    %v182 = vunpack.c.l.b16 %v47
    %v183 = vunpack.c.l.b16 %v48
    %v184 = vunpack.c.l.b16 %v49
    %v185 = vunpack.c.l.b16 %v50
    %v186 = vunpack.c.l.b16 %v51
    %v187 = vunpack.c.l.b16 %v52
    %v188 = vunpack.c.l.b16 %v53
    %v189 = vunpack.c.l.b16 %v54
    %v190 = vunpack.c.l.b16 %v55
    %v191 = vunpack.c.l.b16 %v56
    %v192 = vunpack.c.l.b16 %v57
    %v193 = vunpack.c.l.b16 %v58
    %v194 = vunpack.c.l.b16 %v59
    %v195 = vunpack.c.l.b16 %v60
    %v196 = vunpack.c.l.b16 %v61
    %v197 = vunpack.c.l.b16 %v62
    %v198 = vunpack.c.l.b16 %v63
    %v199 = vunpack.c.l.b16 %v64
    %v200 = vunpack.c.l.b16 %v65
    %v201 = vunpack.c.l.b16 %v66
    %v202 = vunpack.c.l.b16 %v67
    %v203 = vunpack.c.l.b16 %v68
    %v204 = vunpack.c.l.b16 %v69
    %v205 = vunpack.c.l.b16 %v70
    %v206 = vunpack.c.l.b16 %v71
    %v207 = vunpack.c.l.b16 %v72
    %v208 = vunpack.c.l.b16 %v73
    %v209 = vunpack.c.l.b16 %v74
    %v210 = vunpack.c.l.b16 %v75
    %v211 = vunpack.c.l.b16 %v76
    %v212 = vunpack.c.l.b16 %v77
    %v213 = vunpack.c.l.b16 %v78
    %v214 = vpack.c.b16 %v165, %v164
    %v215 = vpack.c.b16 %v167, %v166
    %v216 = vpack.c.b16 %v169, %v168
    %v217 = vpack.c.b16 %v171, %v170
    %v218 = vpack.c.b16 %v173, %v172
    %v219 = vpack.c.b16 %v175, %v174
    %v220 = vpack.c.b16 %v177, %v176
    %v221 = vpack.c.b16 %v179, %v178
    %v222 = vpack.c.b16 %v181, %v180
    %v223 = vpack.c.b16 %v183, %v182
    %v224 = vpack.c.b16 %v185, %v184
    %v225 = vpack.c.b16 %v187, %v186
    %v226 = vpack.c.b16 %v189, %v188
    %v227 = vpack.c.b16 %v191, %v190
    %v228 = vpack.c.b16 %v193, %v192
    %v229 = vpack.c.b16 %v195, %v194
    %v230 = vpack.c.b16 %v197, %v196
    %v231 = vpack.c.b16 %v199, %v198
    %v232 = vpack.c.b16 %v201, %v200
    %v233 = vpack.c.b16 %v203, %v202
    %v234 = vpack.c.b16 %v205, %v204
    %v235 = vpack.c.b16 %v207, %v206
    %v236 = vpack.c.b16 %v209, %v208
    %v237 = vpack.c.b16 %v211, %v210
    %v238 = vpack.c.b16 %v213, %v212
    %vm264 = vcmask 130048
    %v266 = vsel %vm264, %v110, 0
    %268 = vmatprep.subr.bf16.mxu0 0
    %269 = vmatpush1.bf16.msra.mxu0 %v214
    %270 = vmatprep.subr.bf16.mxu0 0
    %271 = vmatpush1.bf16.msra.mxu0 %v215
    %272 = vmatprep.subr.bf16.mxu0 0
    %273 = vmatpush1.bf16.msra.mxu0 %v216
    %274 = vmatprep.subr.bf16.mxu0 0
    %275 = vmatpush1.bf16.msra.mxu0 %v217
    %276 = vmatprep.subr.bf16.mxu0 0
    %277 = vmatpush1.bf16.msra.mxu0 %v218
    %278 = vmatprep.subr.bf16.mxu0 0
    %279 = vmatpush1.bf16.msra.mxu0 %v219
    %280 = vmatprep.subr.bf16.mxu0 0
    %281 = vmatpush1.bf16.msra.mxu0 %v220
    %282 = vmatprep.subr.bf16.mxu0 0
    %283 = vmatpush1.bf16.msra.mxu0 %v221
    %284 = vmatprep.subr.bf16.mxu0 0
    %285 = vmatpush1.bf16.msra.mxu0 %v222
    %286 = vmatprep.subr.bf16.mxu0 0
    %287 = vmatpush1.bf16.msra.mxu0 %v223
    %288 = vmatprep.subr.bf16.mxu0 0
    %289 = vmatpush1.bf16.msra.mxu0 %v224
    %290 = vmatprep.subr.bf16.mxu0 0
    %291 = vmatpush1.bf16.msra.mxu0 %v225
    %292 = vmatprep.subr.bf16.mxu0 0
    %293 = vmatpush1.bf16.msra.mxu0 %v226
    %294 = vmatprep.subr.bf16.mxu0 0
    %295 = vmatpush1.bf16.msra.mxu0 %v227
    %296 = vmatprep.subr.bf16.mxu0 0
    %297 = vmatpush1.bf16.msra.mxu0 %v228
    %298 = vmatprep.subr.bf16.mxu0 0
    %299 = vmatpush1.bf16.msra.mxu0 %v229
    %300 = vmatprep.mubr.bf16.mxu0 %v108
    %301 = vmatmul.mubr.bf16.gmra.mrb[0].mxu0 %v101
    %v302 = vpop.f32.mrb[0].mxu0
    %v303 = vadd.f32 %v84, %v302
    %v304 = vpop.f32.mrb[0].mxu0
    %v305 = vpop.f32.mrb[0].mxu0
    %v306 = vpop.f32.mrb[0].mxu0
    %307 = vdwg.mxu0
    %308 = vmatprep.subr.bf16.mxu0 0
    %309 = vmatpush1.bf16.msra.mxu0 %v230
    %310 = vmatprep.subr.bf16.mxu0 0
    %311 = vmatpush1.bf16.msra.mxu0 %v231
    %312 = vmatprep.subr.bf16.mxu0 0
    %313 = vmatpush1.bf16.msra.mxu0 %v232
    %314 = vmatprep.subr.bf16.mxu0 0
    %315 = vmatpush1.bf16.msra.mxu0 %v233
    %316 = vmatprep.subr.bf16.mxu0 0
    %317 = vmatpush1.bf16.msra.mxu0 %v234
    %318 = vmatprep.subr.bf16.mxu0 0
    %319 = vmatpush1.bf16.msra.mxu0 %v235
    %320 = vmatprep.subr.bf16.mxu0 0
    %321 = vmatpush1.bf16.msra.mxu0 %v236
    %322 = vmatprep.subr.bf16.mxu0 0
    %323 = vmatpush1.bf16.msra.mxu0 %v237
    %324 = vmatprep.subr.bf16.mxu0 0
    %325 = vmatpush1.bf16.msra.mxu0 %v238
    %326 = vmatprep.subr.bf16.mxu0 0
    %327 = vmatpush1.bf16.msra.mxu0 0
    %328 = vmatprep.subr.bf16.mxu0 0
    %329 = vmatpush1.bf16.msra.mxu0 0
    %330 = vmatprep.subr.bf16.mxu0 0
    %331 = vmatpush1.bf16.msra.mxu0 0
    %332 = vmatprep.subr.bf16.mxu0 0
    %333 = vmatpush1.bf16.msra.mxu0 0
    %334 = vmatprep.subr.bf16.mxu0 0
    %335 = vmatpush1.bf16.msra.mxu0 0
    %336 = vmatprep.subr.bf16.mxu0 0
    %337 = vmatpush1.bf16.msra.mxu0 0
    %338 = vmatprep.subr.bf16.mxu0 0
    %339 = vmatpush1.bf16.msra.mxu0 0
    %340 = vmatprep.mubr.bf16.mxu0 %v266
    %341 = vmatmul.mubr.bf16.gmra.mrb[0].mxu0 %v109
    %v342 = vpop.f32.mrb[0].mxu0
    %v343 = vadd.f32 %v303, %v342
    %v344 = vpop.f32.mrb[0].mxu0
    %v345 = vpop.f32.mrb[0].mxu0
    %v346 = vpop.f32.mrb[0].mxu0
    %347 = vdwg.mxu0
    %v348 = vmax.f32 %v343, 0.0
    %v349 = vpack.c.bf16 %v348, %v348
    %v350 = vld [vmem:[%s3] sm:$0xf]
    %v351 = vld [vmem:[%s3 + $0x4] sm:$0xf]
    %v352 = vld [vmem:[%s3 + $0x8] sm:$0xf]
    %v353 = vld [vmem:[%s3 + $0xc] sm:$0xf]
    %v354 = vld [vmem:[%s3 + $0x10] sm:$0xf]
    %v355 = vld [vmem:[%s3 + $0x14] sm:$0xf]
    %v356 = vld [vmem:[%s3 + $0x18] sm:$0xf]
    %v357 = vld [vmem:[%s3 + $0x1c] sm:$0xf]
    %v358 = vld [vmem:[%s3 + $0x20] sm:$0xf]
    %v359 = vld [vmem:[%s3 + $0x24] sm:$0xf]
    %v360 = vld [vmem:[%s3 + $0x28] sm:$0xf]
    %v361 = vld [vmem:[%s3 + $0x2c] sm:$0xf]
    %v362 = vld [vmem:[%s3 + $0x30] sm:$0xf]
    %v363 = vld [vmem:[%s3 + $0x34] sm:$0xf]
    %v364 = vld [vmem:[%s3 + $0x38] sm:$0xf]
    %v365 = vld [vmem:[%s3 + $0x3c] sm:$0xf]
    %v366 = vld [vmem:[%s4] sm:$0x1]
    %v368 = vlaneseq
    %v369 = vshrl.u32 %v368, 7
    %v370 = vsub.s32 0, %v369
    %v371 = vrot.slane %v366, %v370
    %v389 = vunpack.c.l.b16 %v350
    %v390 = vunpack.c.l.b16 %v351
    %v391 = vunpack.c.l.b16 %v352
    %v392 = vunpack.c.l.b16 %v353
    %v393 = vunpack.c.l.b16 %v354
    %v394 = vunpack.c.l.b16 %v355
    %v395 = vunpack.c.l.b16 %v356
    %v396 = vunpack.c.l.b16 %v357
    %v397 = vunpack.c.l.b16 %v358
    %v398 = vunpack.c.l.b16 %v359
    %v399 = vunpack.c.l.b16 %v360
    %v400 = vunpack.c.l.b16 %v361
    %v401 = vunpack.c.l.b16 %v362
    %v402 = vunpack.c.l.b16 %v363
    %v403 = vunpack.c.l.b16 %v364
    %v404 = vunpack.c.l.b16 %v365
    %v405 = vpack.c.b16 %v390, %v389
    %v406 = vpack.c.b16 %v392, %v391
    %v407 = vpack.c.b16 %v394, %v393
    %v408 = vpack.c.b16 %v396, %v395
    %v409 = vpack.c.b16 %v398, %v397
    %v410 = vpack.c.b16 %v400, %v399
    %v411 = vpack.c.b16 %v402, %v401
    %v412 = vpack.c.b16 %v404, %v403
    %421 = vmatprep.subr.bf16.mxu0 0
    %422 = vmatpush1.bf16.msra.mxu0 %v405
    %423 = vmatprep.subr.bf16.mxu0 0
    %424 = vmatpush1.bf16.msra.mxu0 %v406
    %425 = vmatprep.subr.bf16.mxu0 0
    %426 = vmatpush1.bf16.msra.mxu0 %v407
    %427 = vmatprep.subr.bf16.mxu0 0
    %428 = vmatpush1.bf16.msra.mxu0 %v408
    %429 = vmatprep.subr.bf16.mxu0 0
    %430 = vmatpush1.bf16.msra.mxu0 %v409
    %431 = vmatprep.subr.bf16.mxu0 0
    %432 = vmatpush1.bf16.msra.mxu0 %v410
    %433 = vmatprep.subr.bf16.mxu0 0
    %434 = vmatpush1.bf16.msra.mxu0 %v411
    %435 = vmatprep.subr.bf16.mxu0 0
    %436 = vmatpush1.bf16.msra.mxu0 %v412
    %437 = vmatprep.subr.bf16.mxu0 0
    %438 = vmatpush1.bf16.msra.mxu0 0
    %439 = vmatprep.subr.bf16.mxu0 0
    %440 = vmatpush1.bf16.msra.mxu0 0
    %441 = vmatprep.subr.bf16.mxu0 0
    %442 = vmatpush1.bf16.msra.mxu0 0
    %443 = vmatprep.subr.bf16.mxu0 0
    %444 = vmatpush1.bf16.msra.mxu0 0
    %445 = vmatprep.subr.bf16.mxu0 0
    %446 = vmatpush1.bf16.msra.mxu0 0
    %447 = vmatprep.subr.bf16.mxu0 0
    %448 = vmatpush1.bf16.msra.mxu0 0
    %449 = vmatprep.subr.bf16.mxu0 0
    %450 = vmatpush1.bf16.msra.mxu0 0
    %451 = vmatprep.subr.bf16.mxu0 0
    %452 = vmatpush1.bf16.msra.mxu0 0
    %453 = vmatprep.mubr.bf16.mxu0 0
    %454 = vmatmul.mubr.bf16.gmra.mrb[0].mxu0 %v349
    %v455 = vpop.f32.mrb[0].mxu0
    %v456 = vadd.f32 %v371, %v455
    %v457 = vpop.f32.mrb[0].mxu0
    %v458 = vpop.f32.mrb[0].mxu0
    %v459 = vpop.f32.mrb[0].mxu0
    %460 = vdwg.mxu0
    %v461 = vmax.f32 %v456, 0.0
    %v462 = vpack.c.bf16 %v461, %v461
    %v463 = vld [vmem:[%s5] sm:$0xf]
    %v464 = vld [vmem:[%s5 + $0x4] sm:$0xf]
    %v465 = vld [vmem:[%s5 + $0x8] sm:$0xf]
    %v466 = vld [vmem:[%s5 + $0xc] sm:$0xf]
    %v467 = vld [vmem:[%s5 + $0x10] sm:$0xf]
    %v468 = vld [vmem:[%s5 + $0x14] sm:$0xf]
    %v469 = vld [vmem:[%s5 + $0x18] sm:$0xf]
    %v470 = vld [vmem:[%s5 + $0x1c] sm:$0xf]
    %v471 = vld [vmem:[%s5 + $0x20] sm:$0xf]
    %v472 = vld [vmem:[%s5 + $0x24] sm:$0xf]
    %v473 = vld [vmem:[%s5 + $0x28] sm:$0xf]
    %v474 = vld [vmem:[%s5 + $0x2c] sm:$0xf]
    %v475 = vld [vmem:[%s5 + $0x30] sm:$0xf]
    %v476 = vld [vmem:[%s5 + $0x34] sm:$0xf]
    %v477 = vld [vmem:[%s5 + $0x38] sm:$0xf]
    %v478 = vld [vmem:[%s5 + $0x3c] sm:$0xf]
    %v479 = vld [vmem:[%s6] sm:$0x1]
    %v481 = vlaneseq
    %v482 = vshrl.u32 %v481, 7
    %v483 = vsub.s32 0, %v482
    %v484 = vrot.slane %v479, %v483
    %v502 = vunpack.c.l.b16 %v463
    %v503 = vunpack.c.l.b16 %v464
    %v504 = vunpack.c.l.b16 %v465
    %v505 = vunpack.c.l.b16 %v466
    %v506 = vunpack.c.l.b16 %v467
    %v507 = vunpack.c.l.b16 %v468
    %v508 = vunpack.c.l.b16 %v469
    %v509 = vunpack.c.l.b16 %v470
    %v510 = vunpack.c.l.b16 %v471
    %v511 = vunpack.c.l.b16 %v472
    %v512 = vunpack.c.l.b16 %v473
    %v513 = vunpack.c.l.b16 %v474
    %v514 = vunpack.c.l.b16 %v475
    %v515 = vunpack.c.l.b16 %v476
    %v516 = vunpack.c.l.b16 %v477
    %v517 = vunpack.c.l.b16 %v478
    %v518 = vpack.c.b16 %v503, %v502
    %v519 = vpack.c.b16 %v505, %v504
    %v520 = vpack.c.b16 %v507, %v506
    %v521 = vpack.c.b16 %v509, %v508
    %v522 = vpack.c.b16 %v511, %v510
    %v523 = vpack.c.b16 %v513, %v512
    %v524 = vpack.c.b16 %v515, %v514
    %v525 = vpack.c.b16 %v517, %v516
    %534 = vmatprep.subr.bf16.mxu0 0
    %535 = vmatpush1.bf16.msra.mxu0 %v518
    %536 = vmatprep.subr.bf16.mxu0 0
    %537 = vmatpush1.bf16.msra.mxu0 %v519
    %538 = vmatprep.subr.bf16.mxu0 0
    %539 = vmatpush1.bf16.msra.mxu0 %v520
    %540 = vmatprep.subr.bf16.mxu0 0
    %541 = vmatpush1.bf16.msra.mxu0 %v521
    %542 = vmatprep.subr.bf16.mxu0 0
    %543 = vmatpush1.bf16.msra.mxu0 %v522
    %544 = vmatprep.subr.bf16.mxu0 0
    %545 = vmatpush1.bf16.msra.mxu0 %v523
    %546 = vmatprep.subr.bf16.mxu0 0
    %547 = vmatpush1.bf16.msra.mxu0 %v524
    %548 = vmatprep.subr.bf16.mxu0 0
    %549 = vmatpush1.bf16.msra.mxu0 %v525
    %550 = vmatprep.subr.bf16.mxu0 0
    %551 = vmatpush1.bf16.msra.mxu0 0
    %552 = vmatprep.subr.bf16.mxu0 0
    %553 = vmatpush1.bf16.msra.mxu0 0
    %554 = vmatprep.subr.bf16.mxu0 0
    %555 = vmatpush1.bf16.msra.mxu0 0
    %556 = vmatprep.subr.bf16.mxu0 0
    %557 = vmatpush1.bf16.msra.mxu0 0
    %558 = vmatprep.subr.bf16.mxu0 0
    %559 = vmatpush1.bf16.msra.mxu0 0
    %560 = vmatprep.subr.bf16.mxu0 0
    %561 = vmatpush1.bf16.msra.mxu0 0
    %562 = vmatprep.subr.bf16.mxu0 0
    %563 = vmatpush1.bf16.msra.mxu0 0
    %564 = vmatprep.subr.bf16.mxu0 0
    %565 = vmatpush1.bf16.msra.mxu0 0
    %566 = vmatprep.mubr.bf16.mxu0 0
    %567 = vmatmul.mubr.bf16.gmra.mrb[0].mxu0 %v462
    %v568 = vpop.f32.mrb[0].mxu0
    %v569 = vadd.f32 %v484, %v568
    %v570 = vpop.f32.mrb[0].mxu0
    %v571 = vpop.f32.mrb[0].mxu0
    %v572 = vpop.f32.mrb[0].mxu0
    %573 = vdwg.mxu0
    %574 = vst [vmem:[#allocation2] sm:$0x3] %v569
    // Predicated region
    $region30: #{lenet_forward.5} parent=1 // pred_check
      _
    $region31: #{lenet_forward.5} parent=1 // pred_check_branch
      %576 = sbr.rel (0) target = $region33
    $region32: #{lenet_forward.5} parent=1 // pred_region
      %s578 = ssub.s32 32, 32
      %579 = vsyncadd [#allocation3], %s578
      %s581 = sshll.u32 [#allocation2], 4
      %s582 = int_to_ptr.vmem [resolvable:$true] %s581
      %584 = dma.vmem_to_hbm [thread:$0]  %s582, 32, %s7, [#allocation3]
    $region33: #{lenet_forward.5} parent=1 // pred_fallthru
      _
    // Predicated region
    $region34: #{lenet_forward.5} parent=1 // pred_check
      _
    $region35: #{lenet_forward.5} parent=1 // pred_check_branch
      %586 = sbr.rel (0) target = $region37
    $region36: #{lenet_forward.5} parent=1 // pred_region
      %587 = dma.done [#allocation3], 32
    $region37: #{lenet_forward.5} parent=1 // pred_fallthru
      _
    %588 = vsyncpa [#allocation3], 1

</llo_original>
